<compile_context>
chip_gen: v6e
topology: v6e:2x2x1
jax: 0.10.0
libtpu: 0.0.40
codegen_flags: <defaults>
</compile_context>

<pallas_src>
import math
from functools import partial

import jax
import jax.numpy as jnp
from jax.experimental import pallas as pl
from jax.experimental.pallas import tpu as pltpu

_MXU_DTYPE = jnp.bfloat16   # MXU operand dtype (accumulation is always f32)
_LANES = 128


# ----------------------------- Pallas kernels --------------------------------

def _matmul_bias_relu_kernel(a_ref, b_ref, bias_ref, o_ref):
    """Fused (im2col patches @ weights) + bias + ReLU for the two strided stem convs."""
    acc = jnp.dot(a_ref[...], b_ref[...], preferred_element_type=jnp.float32)
    o_ref[...] = jnp.maximum(acc + bias_ref[...], 0.0)


def _conv_s1_kernel(*refs, kh, kw, ho, wo, relu, add_residual):
    """Fused stride-1 conv for one batch image per grid program.

    In-kernel im2col: the padded (Hp, Wp, Cin) tile sits in VMEM once; each of the
    KH*KW taps is a contiguous slice -> (Ho*Wo, Cin) view -> MXU dot, accumulated in
    f32. Epilogue: + bias, optional residual add, optional ReLU, one lane-dense store.
    """
    if add_residual:
        x_ref, w_ref, b_ref, r_ref, o_ref = refs
    else:
        x_ref, w_ref, b_ref, o_ref = refs
        r_ref = None

    cin = x_ref.shape[-1]
    cout = o_ref.shape[-1]
    m = ho * wo
    x = x_ref[0]                                             # (Hp, Wp, Cin) f32
    acc = jnp.zeros((m, cout), jnp.float32)
    for i in range(kh):                                      # static unroll over taps
        for j in range(kw):
            xs = x[i:i + ho, j:j + wo, :].reshape(m, cin)    # contiguous slice, no HBM traffic
            acc = acc + jnp.dot(xs.astype(_MXU_DTYPE), w_ref[i * kw + j],
                                preferred_element_type=jnp.float32)
    acc = acc + b_ref[...]                                   # bias hoisted out of the tap loop
    if add_residual:
        acc = acc + r_ref[...]
    if relu:
        acc = jnp.maximum(acc, 0.0)
    o_ref[...] = acc


# ------------------------------- wrappers -------------------------------------

def _reflect_pad(x, pad):
    if pad == 0:
        return x
    return jnp.pad(x, ((0, 0), (pad, pad), (pad, pad), (0, 0)), mode="reflect")


def conv_strided(x, w, b, *, ksize, stride):
    """ConvLayer with stride>1 (+ fused bias/ReLU). Glue-side im2col (only the two
    tiny stem layers use this path), single fused matmul kernel, batch-parallel grid."""
    n, h, wdt, cin = x.shape
    pad = ksize // 2
    xp = _reflect_pad(x, pad)
    hp, wp = h + 2 * pad, wdt + 2 * pad
    ho = (hp - ksize) // stride + 1
    wo = (wp - ksize) // stride + 1

    cols = []
    for i in range(ksize):
        for j in range(ksize):
            cols.append(xp[:, i:i + stride * (ho - 1) + 1:stride,
                           j:j + stride * (wo - 1) + 1:stride, :])
    patches = jnp.stack(cols, axis=3).reshape(n * ho * wo, ksize * ksize * cin)
    patches = patches.astype(_MXU_DTYPE)                     # halves the patch DMA bytes
    wmat = w.reshape(ksize * ksize * cin, -1).astype(_MXU_DTYPE)
    k, cout = wmat.shape
    mb = ho * wo

    out = pl.pallas_call(
        _matmul_bias_relu_kernel,
        grid=(n,),
        out_shape=jax.ShapeDtypeStruct((n * mb, cout), jnp.float32),
        in_specs=[pl.BlockSpec((mb, k), lambda nb: (nb, 0)),
                  pl.BlockSpec((k, cout), lambda nb: (0, 0)),
                  pl.BlockSpec((1, cout), lambda nb: (0, 0))],
        out_specs=pl.BlockSpec((mb, cout), lambda nb: (nb, 0)),
        compiler_params=pltpu.CompilerParams(dimension_semantics=("parallel",)),
    )(patches, wmat, b.reshape(1, cout).astype(jnp.float32))
    return out.reshape(n, ho, wo, cout)


def conv_stride1(x, w, b, *, ksize, relu, residual=None):
    """ConvLayer with stride 1: reflection pad in glue, then ONE fused Pallas kernel
    (in-kernel im2col + bias + optional residual add + optional ReLU)."""
    n, h, wdt, cin = x.shape
    pad = ksize // 2
    xp = _reflect_pad(x, pad)
    hp, wp = h + 2 * pad, wdt + 2 * pad
    cout = w.shape[-1]
    taps = ksize * ksize
    wmat = w.reshape(taps, cin, cout).astype(_MXU_DTYPE)     # weights pre-cast once
    bias = b.reshape(1, cout).astype(jnp.float32)
    m = h * wdt

    in_specs = [pl.BlockSpec((1, hp, wp, cin), lambda nb: (nb, 0, 0, 0)),
                pl.BlockSpec((taps, cin, cout), lambda nb: (0, 0, 0)),
                pl.BlockSpec((1, cout), lambda nb: (0, 0))]
    args = [xp, wmat, bias]
    if residual is not None:
        in_specs.append(pl.BlockSpec((m, cout), lambda nb: (nb, 0)))
        args.append(residual.reshape(n * m, cout))

    out = pl.pallas_call(
        partial(_conv_s1_kernel, kh=ksize, kw=ksize, ho=h, wo=wdt,
                relu=relu, add_residual=residual is not None),
        grid=(n,),
        out_shape=jax.ShapeDtypeStruct((n * m, cout), jnp.float32),
        in_specs=in_specs,
        out_specs=pl.BlockSpec((m, cout), lambda nb: (nb, 0)),
        compiler_params=pltpu.CompilerParams(dimension_semantics=("parallel",)),
    )(*args)
    return out.reshape(n, h, wdt, cout)


# ------------------------------ parameters ------------------------------------

def _conv_init(key, ksize, cin, cout):
    kw_, kb_ = jax.random.split(key)
    bound = 1.0 / math.sqrt(ksize * ksize * cin)
    return {"w": jax.random.uniform(kw_, (ksize, ksize, cin, cout), jnp.float32, -bound, bound),
            "b": jax.random.uniform(kb_, (cout,), jnp.float32, -bound, bound)}


def init_params(key):
    ks = jax.random.split(key, 7)
    return {
        "conv1": _conv_init(ks[0], 5, 3, 32),
        "conv2": _conv_init(ks[1], 3, 32, 64),
        "conv3": _conv_init(ks[2], 3, 64, 128),
        "resid1": {"c1": _conv_init(ks[3], 3, 128, 128),
                   "c2": _conv_init(ks[4], 3, 128, 128)},
        "conv4": _conv_init(ks[5], 3, 128, 64),
        "conv5": _conv_init(ks[6], 1, 64, 1),
    }


# ------------------------------ forward pass -----------------------------------

def residual_feature_net(x, p):
    # x: NHWC float32
    x = conv_strided(x, p["conv1"]["w"], p["conv1"]["b"], ksize=5, stride=2)   # ReLU fused
    x = conv_strided(x, p["conv2"]["w"], p["conv2"]["b"], ksize=3, stride=2)   # ReLU fused
    x = conv_stride1(x, p["conv3"]["w"], p["conv3"]["b"], ksize=3, relu=True)

    # The PyTorch forward calls self.resid1 four times (resid2..4 are unused) — keep that.
    c1, c2 = p["resid1"]["c1"], p["resid1"]["c2"]
    for _ in range(4):
        res = x
        t = conv_stride1(x, c1["w"], c1["b"], ksize=3, relu=True)
        x = conv_stride1(t, c2["w"], c2["b"], ksize=3, relu=False, residual=res)

    x = conv_stride1(x, p["conv4"]["w"], p["conv4"]["b"], ksize=3, relu=True)

    # conv5 (1x1, Cout=1): pad Cout to 128 lanes so the in-kernel store is unmasked /
    # lane-dense (free on the MXU — min output tile is 128 lanes anyway), slice after.
    w5 = jnp.pad(p["conv5"]["w"], ((0, 0), (0, 0), (0, 0), (0, _LANES - 1)))
    b5 = jnp.pad(p["conv5"]["b"], ((0, _LANES - 1),))
    x = conv_stride1(x, w5, b5, ksize=1, relu=True)
    return x[..., :1]


# --------------------------------- main -----------------------------------------

if __name__ == "__main__":
    key = jax.random.PRNGKey(0)
    kx, kp = jax.random.split(key)

    # PyTorch-convention NCHW input, transposed to the NHWC kernel layout.
    x_nchw = jax.random.normal(kx, (2, 3, 32, 32), jnp.float32)
    x = jnp.transpose(x_nchw, (0, 2, 3, 1))          # (2, 32, 32, 3)

    params = init_params(kp)
    out = jax.jit(residual_feature_net)(x, params)   # NHWC; NCHW equivalent is (2, 1, 8, 8)
    out = jax.block_until_ready(out)

    assert out.shape == (2, 8, 8, 1), out.shape
    assert bool(jnp.all(jnp.isfinite(out)))
    assert bool(jnp.all(out >= 0.0))                 # final ReLU
    print("KERNEL_OK")
</pallas_src>

<mosaic_0001>
module attributes {stable_mosaic.version = 11 : i64} {
  func.func @_matmul_bias_relu_kernel(%arg0: i32, %arg1: memref<256x75xbf16, #tpu.memory_space<vmem>>, %arg2: memref<75x32xbf16, #tpu.memory_space<vmem>>, %arg3: memref<1x32xf32, #tpu.memory_space<vmem>>, %arg4: memref<256x32xf32, #tpu.memory_space<vmem>>) attributes {dimension_semantics = [#tpu.dimension_semantics<parallel>], iteration_bounds = array<i64: 2>, scalar_prefetch = 0 : i64, scratch_operands = 0 : i64, tpu.core_type = #tpu.core_type<tc>, window_params = [{transform_indices = @transform_0, window_bounds = array<i64: 256, 75>}, {pipeline_mode = #tpu.pipeline_mode<synchronous>, transform_indices = @transform_1, window_bounds = array<i64: 75, 32>}, {pipeline_mode = #tpu.pipeline_mode<synchronous>, transform_indices = @transform_2, window_bounds = array<i64: 1, 32>}, {transform_indices = @transform_3, window_bounds = array<i64: 256, 32>}]} {
    %c0 = arith.constant 0 : index
    %c0_0 = arith.constant 0 : index
    %0 = vector.load %arg1[%c0, %c0_0] : memref<256x75xbf16, #tpu.memory_space<vmem>>, vector<256x75xbf16>
    %c0_1 = arith.constant 0 : index
    %c0_2 = arith.constant 0 : index
    %1 = vector.load %arg2[%c0_1, %c0_2] : memref<75x32xbf16, #tpu.memory_space<vmem>>, vector<75x32xbf16>
    %cst = arith.constant dense<0.000000e+00> : vector<256x32xf32>
    %2 = tpu.matmul %0, %1, %cst {dimension_numbers = #tpu.dot_dimension_numbers<[1], [0], [0], [1], [0, 0, 1, 1], [], []>} : vector<256x75xbf16>, vector<75x32xbf16>, vector<256x32xf32> -> vector<256x32xf32>
    %c0_3 = arith.constant 0 : index
    %c0_4 = arith.constant 0 : index
    %3 = vector.load %arg3[%c0_3, %c0_4] : memref<1x32xf32, #tpu.memory_space<vmem>>, vector<1x32xf32>
    %4 = vector.broadcast %3 : vector<1x32xf32> to vector<256x32xf32>
    %5 = arith.addf %2, %4 : vector<256x32xf32>
    %cst_5 = arith.constant 0.000000e+00 : f32
    %6 = vector.broadcast %cst_5 : f32 to vector<256x32xf32>
    %7 = arith.maximumf %5, %6 : vector<256x32xf32>
    %c0_6 = arith.constant 0 : index
    %c0_7 = arith.constant 0 : index
    %8 = vector.load %arg4[%c0_6, %c0_7] : memref<256x32xf32, #tpu.memory_space<vmem>>, vector<256x32xf32>
    tpu.vector_store %arg4[%c0_6, %c0_7], %7 {strides = array<i32>} : memref<256x32xf32, #tpu.memory_space<vmem>>, vector<256x32xf32>,
    return
  }
  func.func @transform_0(%arg0: i32) -> (i32, i32) {
    %c0_i32 = arith.constant 0 : i32
    %c0_i32_0 = arith.constant 0 : i32
    return %arg0, %c0_i32 : i32, i32
  }
  func.func @transform_1(%arg0: i32) -> (i32, i32) {
    %c0_i32 = arith.constant 0 : i32
    %c0_i32_0 = arith.constant 0 : i32
    %c0_i32_1 = arith.constant 0 : i32
    return %c0_i32, %c0_i32_0 : i32, i32
  }
  func.func @transform_2(%arg0: i32) -> (i32, i32) {
    %c0_i32 = arith.constant 0 : i32
    %c0_i32_0 = arith.constant 0 : i32
    %c0_i32_1 = arith.constant 0 : i32
    return %c0_i32, %c0_i32_0 : i32, i32
  }
  func.func @transform_3(%arg0: i32) -> (i32, i32) {
    %c0_i32 = arith.constant 0 : i32
    %c0_i32_0 = arith.constant 0 : i32
    return %arg0, %c0_i32 : i32, i32
  }
}

module attributes {stable_mosaic.version = 11 : i64} {
  func.func @_matmul_bias_relu_kernel(%arg0: i32, %arg1: memref<64x288xbf16, #tpu.memory_space<vmem>>, %arg2: memref<288x64xbf16, #tpu.memory_space<vmem>>, %arg3: memref<1x64xf32, #tpu.memory_space<vmem>>, %arg4: memref<64x64xf32, #tpu.memory_space<vmem>>) attributes {dimension_semantics = [#tpu.dimension_semantics<parallel>], iteration_bounds = array<i64: 2>, scalar_prefetch = 0 : i64, scratch_operands = 0 : i64, tpu.core_type = #tpu.core_type<tc>, window_params = [{transform_indices = @transform_0, window_bounds = array<i64: 64, 288>}, {pipeline_mode = #tpu.pipeline_mode<synchronous>, transform_indices = @transform_1, window_bounds = array<i64: 288, 64>}, {pipeline_mode = #tpu.pipeline_mode<synchronous>, transform_indices = @transform_2, window_bounds = array<i64: 1, 64>}, {transform_indices = @transform_3, window_bounds = array<i64: 64, 64>}]} {
    %c0 = arith.constant 0 : index
    %c0_0 = arith.constant 0 : index
    %0 = vector.load %arg1[%c0, %c0_0] : memref<64x288xbf16, #tpu.memory_space<vmem>>, vector<64x288xbf16>
    %c0_1 = arith.constant 0 : index
    %c0_2 = arith.constant 0 : index
    %1 = vector.load %arg2[%c0_1, %c0_2] : memref<288x64xbf16, #tpu.memory_space<vmem>>, vector<288x64xbf16>
    %cst = arith.constant dense<0.000000e+00> : vector<64x64xf32>
    %2 = tpu.matmul %0, %1, %cst {dimension_numbers = #tpu.dot_dimension_numbers<[1], [0], [0], [1], [0, 0, 1, 1], [], []>} : vector<64x288xbf16>, vector<288x64xbf16>, vector<64x64xf32> -> vector<64x64xf32>
    %c0_3 = arith.constant 0 : index
    %c0_4 = arith.constant 0 : index
    %3 = vector.load %arg3[%c0_3, %c0_4] : memref<1x64xf32, #tpu.memory_space<vmem>>, vector<1x64xf32>
    %4 = vector.broadcast %3 : vector<1x64xf32> to vector<64x64xf32>
    %5 = arith.addf %2, %4 : vector<64x64xf32>
    %cst_5 = arith.constant 0.000000e+00 : f32
    %6 = vector.broadcast %cst_5 : f32 to vector<64x64xf32>
    %7 = arith.maximumf %5, %6 : vector<64x64xf32>
    %c0_6 = arith.constant 0 : index
    %c0_7 = arith.constant 0 : index
    %8 = vector.load %arg4[%c0_6, %c0_7] : memref<64x64xf32, #tpu.memory_space<vmem>>, vector<64x64xf32>
    tpu.vector_store %arg4[%c0_6, %c0_7], %7 {strides = array<i32>} : memref<64x64xf32, #tpu.memory_space<vmem>>, vector<64x64xf32>,
    return
  }
  func.func @transform_0(%arg0: i32) -> (i32, i32) {
    %c0_i32 = arith.constant 0 : i32
    %c0_i32_0 = arith.constant 0 : i32
    return %arg0, %c0_i32 : i32, i32
  }
  func.func @transform_1(%arg0: i32) -> (i32, i32) {
    %c0_i32 = arith.constant 0 : i32
    %c0_i32_0 = arith.constant 0 : i32
    %c0_i32_1 = arith.constant 0 : i32
    return %c0_i32, %c0_i32_0 : i32, i32
  }
  func.func @transform_2(%arg0: i32) -> (i32, i32) {
    %c0_i32 = arith.constant 0 : i32
    %c0_i32_0 = arith.constant 0 : i32
    %c0_i32_1 = arith.constant 0 : i32
    return %c0_i32, %c0_i32_0 : i32, i32
  }
  func.func @transform_3(%arg0: i32) -> (i32, i32) {
    %c0_i32 = arith.constant 0 : i32
    %c0_i32_0 = arith.constant 0 : i32
    return %arg0, %c0_i32 : i32, i32
  }
}

module attributes {stable_mosaic.version = 11 : i64} {
  func.func @_conv_s1_kernel(%arg0: i32, %arg1: memref<1x10x10x64xf32, #tpu.memory_space<vmem>>, %arg2: memref<9x64x128xbf16, #tpu.memory_space<vmem>>, %arg3: memref<1x128xf32, #tpu.memory_space<vmem>>, %arg4: memref<64x128xf32, #tpu.memory_space<vmem>>) attributes {dimension_semantics = [#tpu.dimension_semantics<parallel>], iteration_bounds = array<i64: 2>, scalar_prefetch = 0 : i64, scratch_operands = 0 : i64, tpu.core_type = #tpu.core_type<tc>, window_params = [{transform_indices = @transform_0, window_bounds = array<i64: 1, 10, 10, 64>}, {pipeline_mode = #tpu.pipeline_mode<synchronous>, transform_indices = @transform_1, window_bounds = array<i64: 9, 64, 128>}, {pipeline_mode = #tpu.pipeline_mode<synchronous>, transform_indices = @transform_2, window_bounds = array<i64: 1, 128>}, {transform_indices = @transform_3, window_bounds = array<i64: 64, 128>}]} {
    %c0 = arith.constant 0 : index
    %c0_0 = arith.constant 0 : index
    %c0_1 = arith.constant 0 : index
    %c0_2 = arith.constant 0 : index
    %0 = vector.load %arg1[%c0, %c0_0, %c0_1, %c0_2] : memref<1x10x10x64xf32, #tpu.memory_space<vmem>>, vector<1x10x10x64xf32>
    %1 = vector.shape_cast %0 : vector<1x10x10x64xf32> to vector<10x10x64xf32>
    %cst = arith.constant 0.000000e+00 : f32
    %2 = vector.broadcast %cst : f32 to vector<64x128xf32>
    %3 = vector.extract_strided_slice %1 {offsets = [0, 0, 0], sizes = [8, 8, 64], strides = [1, 1, 1]} : vector<10x10x64xf32> to vector<8x8x64xf32>
    %4 = vector.shape_cast %3 : vector<8x8x64xf32> to vector<64x64xf32>
    %5 = arith.truncf %4 : vector<64x64xf32> to vector<64x64xbf16>
    %c0_3 = arith.constant 0 : index
    %c0_4 = arith.constant 0 : index
    %c0_5 = arith.constant 0 : index
    %6 = vector.load %arg2[%c0_3, %c0_4, %c0_5] : memref<9x64x128xbf16, #tpu.memory_space<vmem>>, vector<1x64x128xbf16>
    %7 = vector.shape_cast %6 : vector<1x64x128xbf16> to vector<64x128xbf16>
    %cst_6 = arith.constant dense<0.000000e+00> : vector<64x128xf32>
    %8 = tpu.matmul %5, %7, %cst_6 {dimension_numbers = #tpu.dot_dimension_numbers<[1], [0], [0], [1], [0, 0, 1, 1], [], []>} : vector<64x64xbf16>, vector<64x128xbf16>, vector<64x128xf32> -> vector<64x128xf32>
    %9 = arith.addf %2, %8 : vector<64x128xf32>
    %10 = vector.extract_strided_slice %1 {offsets = [0, 1, 0], sizes = [8, 8, 64], strides = [1, 1, 1]} : vector<10x10x64xf32> to vector<8x8x64xf32>
    %11 = vector.shape_cast %10 : vector<8x8x64xf32> to vector<64x64xf32>
    %12 = arith.truncf %11 : vector<64x64xf32> to vector<64x64xbf16>
    %c1 = arith.constant 1 : index
    %c0_7 = arith.constant 0 : index
    %c0_8 = arith.constant 0 : index
    %13 = vector.load %arg2[%c1, %c0_7, %c0_8] : memref<9x64x128xbf16, #tpu.memory_space<vmem>>, vector<1x64x128xbf16>
    %14 = vector.shape_cast %13 : vector<1x64x128xbf16> to vector<64x128xbf16>
    %cst_9 = arith.constant dense<0.000000e+00> : vector<64x128xf32>
    %15 = tpu.matmul %12, %14, %cst_9 {dimension_numbers = #tpu.dot_dimension_numbers<[1], [0], [0], [1], [0, 0, 1, 1], [], []>} : vector<64x64xbf16>, vector<64x128xbf16>, vector<64x128xf32> -> vector<64x128xf32>
    %16 = arith.addf %9, %15 : vector<64x128xf32>
    %17 = vector.extract_strided_slice %1 {offsets = [0, 2, 0], sizes = [8, 8, 64], strides = [1, 1, 1]} : vector<10x10x64xf32> to vector<8x8x64xf32>
    %18 = vector.shape_cast %17 : vector<8x8x64xf32> to vector<64x64xf32>
    %19 = arith.truncf %18 : vector<64x64xf32> to vector<64x64xbf16>
    %c2 = arith.constant 2 : index
    %c0_10 = arith.constant 0 : index
    %c0_11 = arith.constant 0 : index
    %20 = vector.load %arg2[%c2, %c0_10, %c0_11] : memref<9x64x128xbf16, #tpu.memory_space<vmem>>, vector<1x64x128xbf16>
    %21 = vector.shape_cast %20 : vector<1x64x128xbf16> to vector<64x128xbf16>
    %cst_12 = arith.constant dense<0.000000e+00> : vector<64x128xf32>
    %22 = tpu.matmul %19, %21, %cst_12 {dimension_numbers = #tpu.dot_dimension_numbers<[1], [0], [0], [1], [0, 0, 1, 1], [], []>} : vector<64x64xbf16>, vector<64x128xbf16>, vector<64x128xf32> -> vector<64x128xf32>
    %23 = arith.addf %16, %22 : vector<64x128xf32>
    %24 = vector.extract_strided_slice %1 {offsets = [1, 0, 0], sizes = [8, 8, 64], strides = [1, 1, 1]} : vector<10x10x64xf32> to vector<8x8x64xf32>
    %25 = vector.shape_cast %24 : vector<8x8x64xf32> to vector<64x64xf32>
    %26 = arith.truncf %25 : vector<64x64xf32> to vector<64x64xbf16>
    %c3 = arith.constant 3 : index
    %c0_13 = arith.constant 0 : index
    %c0_14 = arith.constant 0 : index
    %27 = vector.load %arg2[%c3, %c0_13, %c0_14] : memref<9x64x128xbf16, #tpu.memory_space<vmem>>, vector<1x64x128xbf16>
    %28 = vector.shape_cast %27 : vector<1x64x128xbf16> to vector<64x128xbf16>
    %cst_15 = arith.constant dense<0.000000e+00> : vector<64x128xf32>
    %29 = tpu.matmul %26, %28, %cst_15 {dimension_numbers = #tpu.dot_dimension_numbers<[1], [0], [0], [1], [0, 0, 1, 1], [], []>} : vector<64x64xbf16>, vector<64x128xbf16>, vector<64x128xf32> -> vector<64x128xf32>
    %30 = arith.addf %23, %29 : vector<64x128xf32>
    %31 = vector.extract_strided_slice %1 {offsets = [1, 1, 0], sizes = [8, 8, 64], strides = [1, 1, 1]} : vector<10x10x64xf32> to vector<8x8x64xf32>
    %32 = vector.shape_cast %31 : vector<8x8x64xf32> to vector<64x64xf32>
    %33 = arith.truncf %32 : vector<64x64xf32> to vector<64x64xbf16>
    %c4 = arith.constant 4 : index
    %c0_16 = arith.constant 0 : index
    %c0_17 = arith.constant 0 : index
    %34 = vector.load %arg2[%c4, %c0_16, %c0_17] : memref<9x64x128xbf16, #tpu.memory_space<vmem>>, vector<1x64x128xbf16>
    %35 = vector.shape_cast %34 : vector<1x64x128xbf16> to vector<64x128xbf16>
    %cst_18 = arith.constant dense<0.000000e+00> : vector<64x128xf32>
    %36 = tpu.matmul %33, %35, %cst_18 {dimension_numbers = #tpu.dot_dimension_numbers<[1], [0], [0], [1], [0, 0, 1, 1], [], []>} : vector<64x64xbf16>, vector<64x128xbf16>, vector<64x128xf32> -> vector<64x128xf32>
    %37 = arith.addf %30, %36 : vector<64x128xf32>
    %38 = vector.extract_strided_slice %1 {offsets = [1, 2, 0], sizes = [8, 8, 64], strides = [1, 1, 1]} : vector<10x10x64xf32> to vector<8x8x64xf32>
    %39 = vector.shape_cast %38 : vector<8x8x64xf32> to vector<64x64xf32>
    %40 = arith.truncf %39 : vector<64x64xf32> to vector<64x64xbf16>
    %c5 = arith.constant 5 : index
    %c0_19 = arith.constant 0 : index
    %c0_20 = arith.constant 0 : index
    %41 = vector.load %arg2[%c5, %c0_19, %c0_20] : memref<9x64x128xbf16, #tpu.memory_space<vmem>>, vector<1x64x128xbf16>
    %42 = vector.shape_cast %41 : vector<1x64x128xbf16> to vector<64x128xbf16>
    %cst_21 = arith.constant dense<0.000000e+00> : vector<64x128xf32>
    %43 = tpu.matmul %40, %42, %cst_21 {dimension_numbers = #tpu.dot_dimension_numbers<[1], [0], [0], [1], [0, 0, 1, 1], [], []>} : vector<64x64xbf16>, vector<64x128xbf16>, vector<64x128xf32> -> vector<64x128xf32>
    %44 = arith.addf %37, %43 : vector<64x128xf32>
    %45 = vector.extract_strided_slice %1 {offsets = [2, 0, 0], sizes = [8, 8, 64], strides = [1, 1, 1]} : vector<10x10x64xf32> to vector<8x8x64xf32>
    %46 = vector.shape_cast %45 : vector<8x8x64xf32> to vector<64x64xf32>
    %47 = arith.truncf %46 : vector<64x64xf32> to vector<64x64xbf16>
    %c6 = arith.constant 6 : index
    %c0_22 = arith.constant 0 : index
    %c0_23 = arith.constant 0 : index
    %48 = vector.load %arg2[%c6, %c0_22, %c0_23] : memref<9x64x128xbf16, #tpu.memory_space<vmem>>, vector<1x64x128xbf16>
    %49 = vector.shape_cast %48 : vector<1x64x128xbf16> to vector<64x128xbf16>
    %cst_24 = arith.constant dense<0.000000e+00> : vector<64x128xf32>
    %50 = tpu.matmul %47, %49, %cst_24 {dimension_numbers = #tpu.dot_dimension_numbers<[1], [0], [0], [1], [0, 0, 1, 1], [], []>} : vector<64x64xbf16>, vector<64x128xbf16>, vector<64x128xf32> -> vector<64x128xf32>
    %51 = arith.addf %44, %50 : vector<64x128xf32>
    %52 = vector.extract_strided_slice %1 {offsets = [2, 1, 0], sizes = [8, 8, 64], strides = [1, 1, 1]} : vector<10x10x64xf32> to vector<8x8x64xf32>
    %53 = vector.shape_cast %52 : vector<8x8x64xf32> to vector<64x64xf32>
    %54 = arith.truncf %53 : vector<64x64xf32> to vector<64x64xbf16>
    %c7 = arith.constant 7 : index
    %c0_25 = arith.constant 0 : index
    %c0_26 = arith.constant 0 : index
    %55 = vector.load %arg2[%c7, %c0_25, %c0_26] : memref<9x64x128xbf16, #tpu.memory_space<vmem>>, vector<1x64x128xbf16>
    %56 = vector.shape_cast %55 : vector<1x64x128xbf16> to vector<64x128xbf16>
    %cst_27 = arith.constant dense<0.000000e+00> : vector<64x128xf32>
    %57 = tpu.matmul %54, %56, %cst_27 {dimension_numbers = #tpu.dot_dimension_numbers<[1], [0], [0], [1], [0, 0, 1, 1], [], []>} : vector<64x64xbf16>, vector<64x128xbf16>, vector<64x128xf32> -> vector<64x128xf32>
    %58 = arith.addf %51, %57 : vector<64x128xf32>
    %59 = vector.extract_strided_slice %1 {offsets = [2, 2, 0], sizes = [8, 8, 64], strides = [1, 1, 1]} : vector<10x10x64xf32> to vector<8x8x64xf32>
    %60 = vector.shape_cast %59 : vector<8x8x64xf32> to vector<64x64xf32>
    %61 = arith.truncf %60 : vector<64x64xf32> to vector<64x64xbf16>
    %c8 = arith.constant 8 : index
    %c0_28 = arith.constant 0 : index
    %c0_29 = arith.constant 0 : index
    %62 = vector.load %arg2[%c8, %c0_28, %c0_29] : memref<9x64x128xbf16, #tpu.memory_space<vmem>>, vector<1x64x128xbf16>
    %63 = vector.shape_cast %62 : vector<1x64x128xbf16> to vector<64x128xbf16>
    %cst_30 = arith.constant dense<0.000000e+00> : vector<64x128xf32>
    %64 = tpu.matmul %61, %63, %cst_30 {dimension_numbers = #tpu.dot_dimension_numbers<[1], [0], [0], [1], [0, 0, 1, 1], [], []>} : vector<64x64xbf16>, vector<64x128xbf16>, vector<64x128xf32> -> vector<64x128xf32>
    %65 = arith.addf %58, %64 : vector<64x128xf32>
    %c0_31 = arith.constant 0 : index
    %c0_32 = arith.constant 0 : index
    %66 = vector.load %arg3[%c0_31, %c0_32] : memref<1x128xf32, #tpu.memory_space<vmem>>, vector<1x128xf32>
    %67 = vector.broadcast %66 : vector<1x128xf32> to vector<64x128xf32>
    %68 = arith.addf %65, %67 : vector<64x128xf32>
    %cst_33 = arith.constant 0.000000e+00 : f32
    %69 = vector.broadcast %cst_33 : f32 to vector<64x128xf32>
    %70 = arith.maximumf %68, %69 : vector<64x128xf32>
    %c0_34 = arith.constant 0 : index
    %c0_35 = arith.constant 0 : index
    %71 = vector.load %arg4[%c0_34, %c0_35] : memref<64x128xf32, #tpu.memory_space<vmem>>, vector<64x128xf32>
    tpu.vector_store %arg4[%c0_34, %c0_35], %70 {strides = array<i32>} : memref<64x128xf32, #tpu.memory_space<vmem>>, vector<64x128xf32>,
    return
  }
  func.func @transform_0(%arg0: i32) -> (i32, i32, i32, i32) {
    %c0_i32 = arith.constant 0 : i32
    %c0_i32_0 = arith.constant 0 : i32
    %c0_i32_1 = arith.constant 0 : i32
    %c0_i32_2 = arith.constant 0 : i32
    return %arg0, %c0_i32, %c0_i32_0, %c0_i32_1 : i32, i32, i32, i32
  }
  func.func @transform_1(%arg0: i32) -> (i32, i32, i32) {
    %c0_i32 = arith.constant 0 : i32
    %c0_i32_0 = arith.constant 0 : i32
    %c0_i32_1 = arith.constant 0 : i32
    %c0_i32_2 = arith.constant 0 : i32
    return %c0_i32, %c0_i32_0, %c0_i32_1 : i32, i32, i32
  }
  func.func @transform_2(%arg0: i32) -> (i32, i32) {
    %c0_i32 = arith.constant 0 : i32
    %c0_i32_0 = arith.constant 0 : i32
    %c0_i32_1 = arith.constant 0 : i32
    return %c0_i32, %c0_i32_0 : i32, i32
  }
  func.func @transform_3(%arg0: i32) -> (i32, i32) {
    %c0_i32 = arith.constant 0 : i32
    %c0_i32_0 = arith.constant 0 : i32
    return %arg0, %c0_i32 : i32, i32
  }
}

module attributes {stable_mosaic.version = 11 : i64} {
  func.func @_conv_s1_kernel(%arg0: i32, %arg1: memref<1x10x10x128xf32, #tpu.memory_space<vmem>>, %arg2: memref<9x128x128xbf16, #tpu.memory_space<vmem>>, %arg3: memref<1x128xf32, #tpu.memory_space<vmem>>, %arg4: memref<64x128xf32, #tpu.memory_space<vmem>>) attributes {dimension_semantics = [#tpu.dimension_semantics<parallel>], iteration_bounds = array<i64: 2>, scalar_prefetch = 0 : i64, scratch_operands = 0 : i64, tpu.core_type = #tpu.core_type<tc>, window_params = [{transform_indices = @transform_0, window_bounds = array<i64: 1, 10, 10, 128>}, {pipeline_mode = #tpu.pipeline_mode<synchronous>, transform_indices = @transform_1, window_bounds = array<i64: 9, 128, 128>}, {pipeline_mode = #tpu.pipeline_mode<synchronous>, transform_indices = @transform_2, window_bounds = array<i64: 1, 128>}, {transform_indices = @transform_3, window_bounds = array<i64: 64, 128>}]} {
    %c0 = arith.constant 0 : index
    %c0_0 = arith.constant 0 : index
    %c0_1 = arith.constant 0 : index
    %c0_2 = arith.constant 0 : index
    %0 = vector.load %arg1[%c0, %c0_0, %c0_1, %c0_2] : memref<1x10x10x128xf32, #tpu.memory_space<vmem>>, vector<1x10x10x128xf32>
    %1 = vector.shape_cast %0 : vector<1x10x10x128xf32> to vector<10x10x128xf32>
    %cst = arith.constant 0.000000e+00 : f32
    %2 = vector.broadcast %cst : f32 to vector<64x128xf32>
    %3 = vector.extract_strided_slice %1 {offsets = [0, 0, 0], sizes = [8, 8, 128], strides = [1, 1, 1]} : vector<10x10x128xf32> to vector<8x8x128xf32>
    %4 = vector.shape_cast %3 : vector<8x8x128xf32> to vector<64x128xf32>
    %5 = arith.truncf %4 : vector<64x128xf32> to vector<64x128xbf16>
    %c0_3 = arith.constant 0 : index
    %c0_4 = arith.constant 0 : index
    %c0_5 = arith.constant 0 : index
    %6 = vector.load %arg2[%c0_3, %c0_4, %c0_5] : memref<9x128x128xbf16, #tpu.memory_space<vmem>>, vector<1x128x128xbf16>
    %7 = vector.shape_cast %6 : vector<1x128x128xbf16> to vector<128x128xbf16>
    %cst_6 = arith.constant dense<0.000000e+00> : vector<64x128xf32>
    %8 = tpu.matmul %5, %7, %cst_6 {dimension_numbers = #tpu.dot_dimension_numbers<[1], [0], [0], [1], [0, 0, 1, 1], [], []>} : vector<64x128xbf16>, vector<128x128xbf16>, vector<64x128xf32> -> vector<64x128xf32>
    %9 = arith.addf %2, %8 : vector<64x128xf32>
    %10 = vector.extract_strided_slice %1 {offsets = [0, 1, 0], sizes = [8, 8, 128], strides = [1, 1, 1]} : vector<10x10x128xf32> to vector<8x8x128xf32>
    %11 = vector.shape_cast %10 : vector<8x8x128xf32> to vector<64x128xf32>
    %12 = arith.truncf %11 : vector<64x128xf32> to vector<64x128xbf16>
    %c1 = arith.constant 1 : index
    %c0_7 = arith.constant 0 : index
    %c0_8 = arith.constant 0 : index
    %13 = vector.load %arg2[%c1, %c0_7, %c0_8] : memref<9x128x128xbf16, #tpu.memory_space<vmem>>, vector<1x128x128xbf16>
    %14 = vector.shape_cast %13 : vector<1x128x128xbf16> to vector<128x128xbf16>
    %cst_9 = arith.constant dense<0.000000e+00> : vector<64x128xf32>
    %15 = tpu.matmul %12, %14, %cst_9 {dimension_numbers = #tpu.dot_dimension_numbers<[1], [0], [0], [1], [0, 0, 1, 1], [], []>} : vector<64x128xbf16>, vector<128x128xbf16>, vector<64x128xf32> -> vector<64x128xf32>
    %16 = arith.addf %9, %15 : vector<64x128xf32>
    %17 = vector.extract_strided_slice %1 {offsets = [0, 2, 0], sizes = [8, 8, 128], strides = [1, 1, 1]} : vector<10x10x128xf32> to vector<8x8x128xf32>
    %18 = vector.shape_cast %17 : vector<8x8x128xf32> to vector<64x128xf32>
    %19 = arith.truncf %18 : vector<64x128xf32> to vector<64x128xbf16>
    %c2 = arith.constant 2 : index
    %c0_10 = arith.constant 0 : index
    %c0_11 = arith.constant 0 : index
    %20 = vector.load %arg2[%c2, %c0_10, %c0_11] : memref<9x128x128xbf16, #tpu.memory_space<vmem>>, vector<1x128x128xbf16>
    %21 = vector.shape_cast %20 : vector<1x128x128xbf16> to vector<128x128xbf16>
    %cst_12 = arith.constant dense<0.000000e+00> : vector<64x128xf32>
    %22 = tpu.matmul %19, %21, %cst_12 {dimension_numbers = #tpu.dot_dimension_numbers<[1], [0], [0], [1], [0, 0, 1, 1], [], []>} : vector<64x128xbf16>, vector<128x128xbf16>, vector<64x128xf32> -> vector<64x128xf32>
    %23 = arith.addf %16, %22 : vector<64x128xf32>
    %24 = vector.extract_strided_slice %1 {offsets = [1, 0, 0], sizes = [8, 8, 128], strides = [1, 1, 1]} : vector<10x10x128xf32> to vector<8x8x128xf32>
    %25 = vector.shape_cast %24 : vector<8x8x128xf32> to vector<64x128xf32>
    %26 = arith.truncf %25 : vector<64x128xf32> to vector<64x128xbf16>
    %c3 = arith.constant 3 : index
    %c0_13 = arith.constant 0 : index
    %c0_14 = arith.constant 0 : index
    %27 = vector.load %arg2[%c3, %c0_13, %c0_14] : memref<9x128x128xbf16, #tpu.memory_space<vmem>>, vector<1x128x128xbf16>
    %28 = vector.shape_cast %27 : vector<1x128x128xbf16> to vector<128x128xbf16>
    %cst_15 = arith.constant dense<0.000000e+00> : vector<64x128xf32>
    %29 = tpu.matmul %26, %28, %cst_15 {dimension_numbers = #tpu.dot_dimension_numbers<[1], [0], [0], [1], [0, 0, 1, 1], [], []>} : vector<64x128xbf16>, vector<128x128xbf16>, vector<64x128xf32> -> vector<64x128xf32>
    %30 = arith.addf %23, %29 : vector<64x128xf32>
    %31 = vector.extract_strided_slice %1 {offsets = [1, 1, 0], sizes = [8, 8, 128], strides = [1, 1, 1]} : vector<10x10x128xf32> to vector<8x8x128xf32>
    %32 = vector.shape_cast %31 : vector<8x8x128xf32> to vector<64x128xf32>
    %33 = arith.truncf %32 : vector<64x128xf32> to vector<64x128xbf16>
    %c4 = arith.constant 4 : index
    %c0_16 = arith.constant 0 : index
    %c0_17 = arith.constant 0 : index
    %34 = vector.load %arg2[%c4, %c0_16, %c0_17] : memref<9x128x128xbf16, #tpu.memory_space<vmem>>, vector<1x128x128xbf16>
    %35 = vector.shape_cast %34 : vector<1x128x128xbf16> to vector<128x128xbf16>
    %cst_18 = arith.constant dense<0.000000e+00> : vector<64x128xf32>
    %36 = tpu.matmul %33, %35, %cst_18 {dimension_numbers = #tpu.dot_dimension_numbers<[1], [0], [0], [1], [0, 0, 1, 1], [], []>} : vector<64x128xbf16>, vector<128x128xbf16>, vector<64x128xf32> -> vector<64x128xf32>
    %37 = arith.addf %30, %36 : vector<64x128xf32>
    %38 = vector.extract_strided_slice %1 {offsets = [1, 2, 0], sizes = [8, 8, 128], strides = [1, 1, 1]} : vector<10x10x128xf32> to vector<8x8x128xf32>
    %39 = vector.shape_cast %38 : vector<8x8x128xf32> to vector<64x128xf32>
    %40 = arith.truncf %39 : vector<64x128xf32> to vector<64x128xbf16>
    %c5 = arith.constant 5 : index
    %c0_19 = arith.constant 0 : index
    %c0_20 = arith.constant 0 : index
    %41 = vector.load %arg2[%c5, %c0_19, %c0_20] : memref<9x128x128xbf16, #tpu.memory_space<vmem>>, vector<1x128x128xbf16>
    %42 = vector.shape_cast %41 : vector<1x128x128xbf16> to vector<128x128xbf16>
    %cst_21 = arith.constant dense<0.000000e+00> : vector<64x128xf32>
    %43 = tpu.matmul %40, %42, %cst_21 {dimension_numbers = #tpu.dot_dimension_numbers<[1], [0], [0], [1], [0, 0, 1, 1], [], []>} : vector<64x128xbf16>, vector<128x128xbf16>, vector<64x128xf32> -> vector<64x128xf32>
    %44 = arith.addf %37, %43 : vector<64x128xf32>
    %45 = vector.extract_strided_slice %1 {offsets = [2, 0, 0], sizes = [8, 8, 128], strides = [1, 1, 1]} : vector<10x10x128xf32> to vector<8x8x128xf32>
    %46 = vector.shape_cast %45 : vector<8x8x128xf32> to vector<64x128xf32>
    %47 = arith.truncf %46 : vector<64x128xf32> to vector<64x128xbf16>
    %c6 = arith.constant 6 : index
    %c0_22 = arith.constant 0 : index
    %c0_23 = arith.constant 0 : index
    %48 = vector.load %arg2[%c6, %c0_22, %c0_23] : memref<9x128x128xbf16, #tpu.memory_space<vmem>>, vector<1x128x128xbf16>
    %49 = vector.shape_cast %48 : vector<1x128x128xbf16> to vector<128x128xbf16>
    %cst_24 = arith.constant dense<0.000000e+00> : vector<64x128xf32>
    %50 = tpu.matmul %47, %49, %cst_24 {dimension_numbers = #tpu.dot_dimension_numbers<[1], [0], [0], [1], [0, 0, 1, 1], [], []>} : vector<64x128xbf16>, vector<128x128xbf16>, vector<64x128xf32> -> vector<64x128xf32>
    %51 = arith.addf %44, %50 : vector<64x128xf32>
    %52 = vector.extract_strided_slice %1 {offsets = [2, 1, 0], sizes = [8, 8, 128], strides = [1, 1, 1]} : vector<10x10x128xf32> to vector<8x8x128xf32>
    %53 = vector.shape_cast %52 : vector<8x8x128xf32> to vector<64x128xf32>
    %54 = arith.truncf %53 : vector<64x128xf32> to vector<64x128xbf16>
    %c7 = arith.constant 7 : index
    %c0_25 = arith.constant 0 : index
    %c0_26 = arith.constant 0 : index
    %55 = vector.load %arg2[%c7, %c0_25, %c0_26] : memref<9x128x128xbf16, #tpu.memory_space<vmem>>, vector<1x128x128xbf16>
    %56 = vector.shape_cast %55 : vector<1x128x128xbf16> to vector<128x128xbf16>
    %cst_27 = arith.constant dense<0.000000e+00> : vector<64x128xf32>
    %57 = tpu.matmul %54, %56, %cst_27 {dimension_numbers = #tpu.dot_dimension_numbers<[1], [0], [0], [1], [0, 0, 1, 1], [], []>} : vector<64x128xbf16>, vector<128x128xbf16>, vector<64x128xf32> -> vector<64x128xf32>
    %58 = arith.addf %51, %57 : vector<64x128xf32>
    %59 = vector.extract_strided_slice %1 {offsets = [2, 2, 0], sizes = [8, 8, 128], strides = [1, 1, 1]} : vector<10x10x128xf32> to vector<8x8x128xf32>
    %60 = vector.shape_cast %59 : vector<8x8x128xf32> to vector<64x128xf32>
    %61 = arith.truncf %60 : vector<64x128xf32> to vector<64x128xbf16>
    %c8 = arith.constant 8 : index
    %c0_28 = arith.constant 0 : index
    %c0_29 = arith.constant 0 : index
    %62 = vector.load %arg2[%c8, %c0_28, %c0_29] : memref<9x128x128xbf16, #tpu.memory_space<vmem>>, vector<1x128x128xbf16>
    %63 = vector.shape_cast %62 : vector<1x128x128xbf16> to vector<128x128xbf16>
    %cst_30 = arith.constant dense<0.000000e+00> : vector<64x128xf32>
    %64 = tpu.matmul %61, %63, %cst_30 {dimension_numbers = #tpu.dot_dimension_numbers<[1], [0], [0], [1], [0, 0, 1, 1], [], []>} : vector<64x128xbf16>, vector<128x128xbf16>, vector<64x128xf32> -> vector<64x128xf32>
    %65 = arith.addf %58, %64 : vector<64x128xf32>
    %c0_31 = arith.constant 0 : index
    %c0_32 = arith.constant 0 : index
    %66 = vector.load %arg3[%c0_31, %c0_32] : memref<1x128xf32, #tpu.memory_space<vmem>>, vector<1x128xf32>
    %67 = vector.broadcast %66 : vector<1x128xf32> to vector<64x128xf32>
    %68 = arith.addf %65, %67 : vector<64x128xf32>
    %cst_33 = arith.constant 0.000000e+00 : f32
    %69 = vector.broadcast %cst_33 : f32 to vector<64x128xf32>
    %70 = arith.maximumf %68, %69 : vector<64x128xf32>
    %c0_34 = arith.constant 0 : index
    %c0_35 = arith.constant 0 : index
    %71 = vector.load %arg4[%c0_34, %c0_35] : memref<64x128xf32, #tpu.memory_space<vmem>>, vector<64x128xf32>
    tpu.vector_store %arg4[%c0_34, %c0_35], %70 {strides = array<i32>} : memref<64x128xf32, #tpu.memory_space<vmem>>, vector<64x128xf32>,
    return
  }
  func.func @transform_0(%arg0: i32) -> (i32, i32, i32, i32) {
    %c0_i32 = arith.constant 0 : i32
    %c0_i32_0 = arith.constant 0 : i32
    %c0_i32_1 = arith.constant 0 : i32
    %c0_i32_2 = arith.constant 0 : i32
    return %arg0, %c0_i32, %c0_i32_0, %c0_i32_1 : i32, i32, i32, i32
  }
  func.func @transform_1(%arg0: i32) -> (i32, i32, i32) {
    %c0_i32 = arith.constant 0 : i32
    %c0_i32_0 = arith.constant 0 : i32
    %c0_i32_1 = arith.constant 0 : i32
    %c0_i32_2 = arith.constant 0 : i32
    return %c0_i32, %c0_i32_0, %c0_i32_1 : i32, i32, i32
  }
  func.func @transform_2(%arg0: i32) -> (i32, i32) {
    %c0_i32 = arith.constant 0 : i32
    %c0_i32_0 = arith.constant 0 : i32
    %c0_i32_1 = arith.constant 0 : i32
    return %c0_i32, %c0_i32_0 : i32, i32
  }
  func.func @transform_3(%arg0: i32) -> (i32, i32) {
    %c0_i32 = arith.constant 0 : i32
    %c0_i32_0 = arith.constant 0 : i32
    return %arg0, %c0_i32 : i32, i32
  }
}

module attributes {stable_mosaic.version = 11 : i64} {
  func.func @_conv_s1_kernel(%arg0: i32, %arg1: memref<1x10x10x128xf32, #tpu.memory_space<vmem>>, %arg2: memref<9x128x128xbf16, #tpu.memory_space<vmem>>, %arg3: memref<1x128xf32, #tpu.memory_space<vmem>>, %arg4: memref<64x128xf32, #tpu.memory_space<vmem>>, %arg5: memref<64x128xf32, #tpu.memory_space<vmem>>) attributes {dimension_semantics = [#tpu.dimension_semantics<parallel>], iteration_bounds = array<i64: 2>, scalar_prefetch = 0 : i64, scratch_operands = 0 : i64, tpu.core_type = #tpu.core_type<tc>, window_params = [{transform_indices = @transform_0, window_bounds = array<i64: 1, 10, 10, 128>}, {pipeline_mode = #tpu.pipeline_mode<synchronous>, transform_indices = @transform_1, window_bounds = array<i64: 9, 128, 128>}, {pipeline_mode = #tpu.pipeline_mode<synchronous>, transform_indices = @transform_2, window_bounds = array<i64: 1, 128>}, {transform_indices = @transform_3, window_bounds = array<i64: 64, 128>}, {transform_indices = @transform_4, window_bounds = array<i64: 64, 128>}]} {
    %c0 = arith.constant 0 : index
    %c0_0 = arith.constant 0 : index
    %c0_1 = arith.constant 0 : index
    %c0_2 = arith.constant 0 : index
    %0 = vector.load %arg1[%c0, %c0_0, %c0_1, %c0_2] : memref<1x10x10x128xf32, #tpu.memory_space<vmem>>, vector<1x10x10x128xf32>
    %1 = vector.shape_cast %0 : vector<1x10x10x128xf32> to vector<10x10x128xf32>
    %cst = arith.constant 0.000000e+00 : f32
    %2 = vector.broadcast %cst : f32 to vector<64x128xf32>
    %3 = vector.extract_strided_slice %1 {offsets = [0, 0, 0], sizes = [8, 8, 128], strides = [1, 1, 1]} : vector<10x10x128xf32> to vector<8x8x128xf32>
    %4 = vector.shape_cast %3 : vector<8x8x128xf32> to vector<64x128xf32>
    %5 = arith.truncf %4 : vector<64x128xf32> to vector<64x128xbf16>
    %c0_3 = arith.constant 0 : index
    %c0_4 = arith.constant 0 : index
    %c0_5 = arith.constant 0 : index
    %6 = vector.load %arg2[%c0_3, %c0_4, %c0_5] : memref<9x128x128xbf16, #tpu.memory_space<vmem>>, vector<1x128x128xbf16>
    %7 = vector.shape_cast %6 : vector<1x128x128xbf16> to vector<128x128xbf16>
    %cst_6 = arith.constant dense<0.000000e+00> : vector<64x128xf32>
    %8 = tpu.matmul %5, %7, %cst_6 {dimension_numbers = #tpu.dot_dimension_numbers<[1], [0], [0], [1], [0, 0, 1, 1], [], []>} : vector<64x128xbf16>, vector<128x128xbf16>, vector<64x128xf32> -> vector<64x128xf32>
    %9 = arith.addf %2, %8 : vector<64x128xf32>
    %10 = vector.extract_strided_slice %1 {offsets = [0, 1, 0], sizes = [8, 8, 128], strides = [1, 1, 1]} : vector<10x10x128xf32> to vector<8x8x128xf32>
    %11 = vector.shape_cast %10 : vector<8x8x128xf32> to vector<64x128xf32>
    %12 = arith.truncf %11 : vector<64x128xf32> to vector<64x128xbf16>
    %c1 = arith.constant 1 : index
    %c0_7 = arith.constant 0 : index
    %c0_8 = arith.constant 0 : index
    %13 = vector.load %arg2[%c1, %c0_7, %c0_8] : memref<9x128x128xbf16, #tpu.memory_space<vmem>>, vector<1x128x128xbf16>
    %14 = vector.shape_cast %13 : vector<1x128x128xbf16> to vector<128x128xbf16>
    %cst_9 = arith.constant dense<0.000000e+00> : vector<64x128xf32>
    %15 = tpu.matmul %12, %14, %cst_9 {dimension_numbers = #tpu.dot_dimension_numbers<[1], [0], [0], [1], [0, 0, 1, 1], [], []>} : vector<64x128xbf16>, vector<128x128xbf16>, vector<64x128xf32> -> vector<64x128xf32>
    %16 = arith.addf %9, %15 : vector<64x128xf32>
    %17 = vector.extract_strided_slice %1 {offsets = [0, 2, 0], sizes = [8, 8, 128], strides = [1, 1, 1]} : vector<10x10x128xf32> to vector<8x8x128xf32>
    %18 = vector.shape_cast %17 : vector<8x8x128xf32> to vector<64x128xf32>
    %19 = arith.truncf %18 : vector<64x128xf32> to vector<64x128xbf16>
    %c2 = arith.constant 2 : index
    %c0_10 = arith.constant 0 : index
    %c0_11 = arith.constant 0 : index
    %20 = vector.load %arg2[%c2, %c0_10, %c0_11] : memref<9x128x128xbf16, #tpu.memory_space<vmem>>, vector<1x128x128xbf16>
    %21 = vector.shape_cast %20 : vector<1x128x128xbf16> to vector<128x128xbf16>
    %cst_12 = arith.constant dense<0.000000e+00> : vector<64x128xf32>
    %22 = tpu.matmul %19, %21, %cst_12 {dimension_numbers = #tpu.dot_dimension_numbers<[1], [0], [0], [1], [0, 0, 1, 1], [], []>} : vector<64x128xbf16>, vector<128x128xbf16>, vector<64x128xf32> -> vector<64x128xf32>
    %23 = arith.addf %16, %22 : vector<64x128xf32>
    %24 = vector.extract_strided_slice %1 {offsets = [1, 0, 0], sizes = [8, 8, 128], strides = [1, 1, 1]} : vector<10x10x128xf32> to vector<8x8x128xf32>
    %25 = vector.shape_cast %24 : vector<8x8x128xf32> to vector<64x128xf32>
    %26 = arith.truncf %25 : vector<64x128xf32> to vector<64x128xbf16>
    %c3 = arith.constant 3 : index
    %c0_13 = arith.constant 0 : index
    %c0_14 = arith.constant 0 : index
    %27 = vector.load %arg2[%c3, %c0_13, %c0_14] : memref<9x128x128xbf16, #tpu.memory_space<vmem>>, vector<1x128x128xbf16>
    %28 = vector.shape_cast %27 : vector<1x128x128xbf16> to vector<128x128xbf16>
    %cst_15 = arith.constant dense<0.000000e+00> : vector<64x128xf32>
    %29 = tpu.matmul %26, %28, %cst_15 {dimension_numbers = #tpu.dot_dimension_numbers<[1], [0], [0], [1], [0, 0, 1, 1], [], []>} : vector<64x128xbf16>, vector<128x128xbf16>, vector<64x128xf32> -> vector<64x128xf32>
    %30 = arith.addf %23, %29 : vector<64x128xf32>
    %31 = vector.extract_strided_slice %1 {offsets = [1, 1, 0], sizes = [8, 8, 128], strides = [1, 1, 1]} : vector<10x10x128xf32> to vector<8x8x128xf32>
    %32 = vector.shape_cast %31 : vector<8x8x128xf32> to vector<64x128xf32>
    %33 = arith.truncf %32 : vector<64x128xf32> to vector<64x128xbf16>
    %c4 = arith.constant 4 : index
    %c0_16 = arith.constant 0 : index
    %c0_17 = arith.constant 0 : index
    %34 = vector.load %arg2[%c4, %c0_16, %c0_17] : memref<9x128x128xbf16, #tpu.memory_space<vmem>>, vector<1x128x128xbf16>
    %35 = vector.shape_cast %34 : vector<1x128x128xbf16> to vector<128x128xbf16>
    %cst_18 = arith.constant dense<0.000000e+00> : vector<64x128xf32>
    %36 = tpu.matmul %33, %35, %cst_18 {dimension_numbers = #tpu.dot_dimension_numbers<[1], [0], [0], [1], [0, 0, 1, 1], [], []>} : vector<64x128xbf16>, vector<128x128xbf16>, vector<64x128xf32> -> vector<64x128xf32>
    %37 = arith.addf %30, %36 : vector<64x128xf32>
    %38 = vector.extract_strided_slice %1 {offsets = [1, 2, 0], sizes = [8, 8, 128], strides = [1, 1, 1]} : vector<10x10x128xf32> to vector<8x8x128xf32>
    %39 = vector.shape_cast %38 : vector<8x8x128xf32> to vector<64x128xf32>
    %40 = arith.truncf %39 : vector<64x128xf32> to vector<64x128xbf16>
    %c5 = arith.constant 5 : index
    %c0_19 = arith.constant 0 : index
    %c0_20 = arith.constant 0 : index
    %41 = vector.load %arg2[%c5, %c0_19, %c0_20] : memref<9x128x128xbf16, #tpu.memory_space<vmem>>, vector<1x128x128xbf16>
    %42 = vector.shape_cast %41 : vector<1x128x128xbf16> to vector<128x128xbf16>
    %cst_21 = arith.constant dense<0.000000e+00> : vector<64x128xf32>
    %43 = tpu.matmul %40, %42, %cst_21 {dimension_numbers = #tpu.dot_dimension_numbers<[1], [0], [0], [1], [0, 0, 1, 1], [], []>} : vector<64x128xbf16>, vector<128x128xbf16>, vector<64x128xf32> -> vector<64x128xf32>
    %44 = arith.addf %37, %43 : vector<64x128xf32>
    %45 = vector.extract_strided_slice %1 {offsets = [2, 0, 0], sizes = [8, 8, 128], strides = [1, 1, 1]} : vector<10x10x128xf32> to vector<8x8x128xf32>
    %46 = vector.shape_cast %45 : vector<8x8x128xf32> to vector<64x128xf32>
    %47 = arith.truncf %46 : vector<64x128xf32> to vector<64x128xbf16>
    %c6 = arith.constant 6 : index
    %c0_22 = arith.constant 0 : index
    %c0_23 = arith.constant 0 : index
    %48 = vector.load %arg2[%c6, %c0_22, %c0_23] : memref<9x128x128xbf16, #tpu.memory_space<vmem>>, vector<1x128x128xbf16>
    %49 = vector.shape_cast %48 : vector<1x128x128xbf16> to vector<128x128xbf16>
    %cst_24 = arith.constant dense<0.000000e+00> : vector<64x128xf32>
    %50 = tpu.matmul %47, %49, %cst_24 {dimension_numbers = #tpu.dot_dimension_numbers<[1], [0], [0], [1], [0, 0, 1, 1], [], []>} : vector<64x128xbf16>, vector<128x128xbf16>, vector<64x128xf32> -> vector<64x128xf32>
    %51 = arith.addf %44, %50 : vector<64x128xf32>
    %52 = vector.extract_strided_slice %1 {offsets = [2, 1, 0], sizes = [8, 8, 128], strides = [1, 1, 1]} : vector<10x10x128xf32> to vector<8x8x128xf32>
    %53 = vector.shape_cast %52 : vector<8x8x128xf32> to vector<64x128xf32>
    %54 = arith.truncf %53 : vector<64x128xf32> to vector<64x128xbf16>
    %c7 = arith.constant 7 : index
    %c0_25 = arith.constant 0 : index
    %c0_26 = arith.constant 0 : index
    %55 = vector.load %arg2[%c7, %c0_25, %c0_26] : memref<9x128x128xbf16, #tpu.memory_space<vmem>>, vector<1x128x128xbf16>
    %56 = vector.shape_cast %55 : vector<1x128x128xbf16> to vector<128x128xbf16>
    %cst_27 = arith.constant dense<0.000000e+00> : vector<64x128xf32>
    %57 = tpu.matmul %54, %56, %cst_27 {dimension_numbers = #tpu.dot_dimension_numbers<[1], [0], [0], [1], [0, 0, 1, 1], [], []>} : vector<64x128xbf16>, vector<128x128xbf16>, vector<64x128xf32> -> vector<64x128xf32>
    %58 = arith.addf %51, %57 : vector<64x128xf32>
    %59 = vector.extract_strided_slice %1 {offsets = [2, 2, 0], sizes = [8, 8, 128], strides = [1, 1, 1]} : vector<10x10x128xf32> to vector<8x8x128xf32>
    %60 = vector.shape_cast %59 : vector<8x8x128xf32> to vector<64x128xf32>
    %61 = arith.truncf %60 : vector<64x128xf32> to vector<64x128xbf16>
    %c8 = arith.constant 8 : index
    %c0_28 = arith.constant 0 : index
    %c0_29 = arith.constant 0 : index
    %62 = vector.load %arg2[%c8, %c0_28, %c0_29] : memref<9x128x128xbf16, #tpu.memory_space<vmem>>, vector<1x128x128xbf16>
    %63 = vector.shape_cast %62 : vector<1x128x128xbf16> to vector<128x128xbf16>
    %cst_30 = arith.constant dense<0.000000e+00> : vector<64x128xf32>
    %64 = tpu.matmul %61, %63, %cst_30 {dimension_numbers = #tpu.dot_dimension_numbers<[1], [0], [0], [1], [0, 0, 1, 1], [], []>} : vector<64x128xbf16>, vector<128x128xbf16>, vector<64x128xf32> -> vector<64x128xf32>
    %65 = arith.addf %58, %64 : vector<64x128xf32>
    %c0_31 = arith.constant 0 : index
    %c0_32 = arith.constant 0 : index
    %66 = vector.load %arg3[%c0_31, %c0_32] : memref<1x128xf32, #tpu.memory_space<vmem>>, vector<1x128xf32>
    %67 = vector.broadcast %66 : vector<1x128xf32> to vector<64x128xf32>
    %68 = arith.addf %65, %67 : vector<64x128xf32>
    %c0_33 = arith.constant 0 : index
    %c0_34 = arith.constant 0 : index
    %69 = vector.load %arg4[%c0_33, %c0_34] : memref<64x128xf32, #tpu.memory_space<vmem>>, vector<64x128xf32>
    %70 = arith.addf %68, %69 : vector<64x128xf32>
    %c0_35 = arith.constant 0 : index
    %c0_36 = arith.constant 0 : index
    %71 = vector.load %arg5[%c0_35, %c0_36] : memref<64x128xf32, #tpu.memory_space<vmem>>, vector<64x128xf32>
    tpu.vector_store %arg5[%c0_35, %c0_36], %70 {strides = array<i32>} : memref<64x128xf32, #tpu.memory_space<vmem>>, vector<64x128xf32>,
    return
  }
  func.func @transform_0(%arg0: i32) -> (i32, i32, i32, i32) {
    %c0_i32 = arith.constant 0 : i32
    %c0_i32_0 = arith.constant 0 : i32
    %c0_i32_1 = arith.constant 0 : i32
    %c0_i32_2 = arith.constant 0 : i32
    return %arg0, %c0_i32, %c0_i32_0, %c0_i32_1 : i32, i32, i32, i32
  }
  func.func @transform_1(%arg0: i32) -> (i32, i32, i32) {
    %c0_i32 = arith.constant 0 : i32
    %c0_i32_0 = arith.constant 0 : i32
    %c0_i32_1 = arith.constant 0 : i32
    %c0_i32_2 = arith.constant 0 : i32
    return %c0_i32, %c0_i32_0, %c0_i32_1 : i32, i32, i32
  }
  func.func @transform_2(%arg0: i32) -> (i32, i32) {
    %c0_i32 = arith.constant 0 : i32
    %c0_i32_0 = arith.constant 0 : i32
    %c0_i32_1 = arith.constant 0 : i32
    return %c0_i32, %c0_i32_0 : i32, i32
  }
  func.func @transform_3(%arg0: i32) -> (i32, i32) {
    %c0_i32 = arith.constant 0 : i32
    %c0_i32_0 = arith.constant 0 : i32
    return %arg0, %c0_i32 : i32, i32
  }
  func.func @transform_4(%arg0: i32) -> (i32, i32) {
    %c0_i32 = arith.constant 0 : i32
    %c0_i32_0 = arith.constant 0 : i32
    return %arg0, %c0_i32 : i32, i32
  }
}

module attributes {stable_mosaic.version = 11 : i64} {
  func.func @_conv_s1_kernel(%arg0: i32, %arg1: memref<1x10x10x128xf32, #tpu.memory_space<vmem>>, %arg2: memref<9x128x64xbf16, #tpu.memory_space<vmem>>, %arg3: memref<1x64xf32, #tpu.memory_space<vmem>>, %arg4: memref<64x64xf32, #tpu.memory_space<vmem>>) attributes {dimension_semantics = [#tpu.dimension_semantics<parallel>], iteration_bounds = array<i64: 2>, scalar_prefetch = 0 : i64, scratch_operands = 0 : i64, tpu.core_type = #tpu.core_type<tc>, window_params = [{transform_indices = @transform_0, window_bounds = array<i64: 1, 10, 10, 128>}, {pipeline_mode = #tpu.pipeline_mode<synchronous>, transform_indices = @transform_1, window_bounds = array<i64: 9, 128, 64>}, {pipeline_mode = #tpu.pipeline_mode<synchronous>, transform_indices = @transform_2, window_bounds = array<i64: 1, 64>}, {transform_indices = @transform_3, window_bounds = array<i64: 64, 64>}]} {
    %c0 = arith.constant 0 : index
    %c0_0 = arith.constant 0 : index
    %c0_1 = arith.constant 0 : index
    %c0_2 = arith.constant 0 : index
    %0 = vector.load %arg1[%c0, %c0_0, %c0_1, %c0_2] : memref<1x10x10x128xf32, #tpu.memory_space<vmem>>, vector<1x10x10x128xf32>
    %1 = vector.shape_cast %0 : vector<1x10x10x128xf32> to vector<10x10x128xf32>
    %cst = arith.constant 0.000000e+00 : f32
    %2 = vector.broadcast %cst : f32 to vector<64x64xf32>
    %3 = vector.extract_strided_slice %1 {offsets = [0, 0, 0], sizes = [8, 8, 128], strides = [1, 1, 1]} : vector<10x10x128xf32> to vector<8x8x128xf32>
    %4 = vector.shape_cast %3 : vector<8x8x128xf32> to vector<64x128xf32>
    %5 = arith.truncf %4 : vector<64x128xf32> to vector<64x128xbf16>
    %c0_3 = arith.constant 0 : index
    %c0_4 = arith.constant 0 : index
    %c0_5 = arith.constant 0 : index
    %6 = vector.load %arg2[%c0_3, %c0_4, %c0_5] : memref<9x128x64xbf16, #tpu.memory_space<vmem>>, vector<1x128x64xbf16>
    %7 = vector.shape_cast %6 : vector<1x128x64xbf16> to vector<128x64xbf16>
    %cst_6 = arith.constant dense<0.000000e+00> : vector<64x64xf32>
    %8 = tpu.matmul %5, %7, %cst_6 {dimension_numbers = #tpu.dot_dimension_numbers<[1], [0], [0], [1], [0, 0, 1, 1], [], []>} : vector<64x128xbf16>, vector<128x64xbf16>, vector<64x64xf32> -> vector<64x64xf32>
    %9 = arith.addf %2, %8 : vector<64x64xf32>
    %10 = vector.extract_strided_slice %1 {offsets = [0, 1, 0], sizes = [8, 8, 128], strides = [1, 1, 1]} : vector<10x10x128xf32> to vector<8x8x128xf32>
    %11 = vector.shape_cast %10 : vector<8x8x128xf32> to vector<64x128xf32>
    %12 = arith.truncf %11 : vector<64x128xf32> to vector<64x128xbf16>
    %c1 = arith.constant 1 : index
    %c0_7 = arith.constant 0 : index
    %c0_8 = arith.constant 0 : index
    %13 = vector.load %arg2[%c1, %c0_7, %c0_8] : memref<9x128x64xbf16, #tpu.memory_space<vmem>>, vector<1x128x64xbf16>
    %14 = vector.shape_cast %13 : vector<1x128x64xbf16> to vector<128x64xbf16>
    %cst_9 = arith.constant dense<0.000000e+00> : vector<64x64xf32>
    %15 = tpu.matmul %12, %14, %cst_9 {dimension_numbers = #tpu.dot_dimension_numbers<[1], [0], [0], [1], [0, 0, 1, 1], [], []>} : vector<64x128xbf16>, vector<128x64xbf16>, vector<64x64xf32> -> vector<64x64xf32>
    %16 = arith.addf %9, %15 : vector<64x64xf32>
    %17 = vector.extract_strided_slice %1 {offsets = [0, 2, 0], sizes = [8, 8, 128], strides = [1, 1, 1]} : vector<10x10x128xf32> to vector<8x8x128xf32>
    %18 = vector.shape_cast %17 : vector<8x8x128xf32> to vector<64x128xf32>
    %19 = arith.truncf %18 : vector<64x128xf32> to vector<64x128xbf16>
    %c2 = arith.constant 2 : index
    %c0_10 = arith.constant 0 : index
    %c0_11 = arith.constant 0 : index
    %20 = vector.load %arg2[%c2, %c0_10, %c0_11] : memref<9x128x64xbf16, #tpu.memory_space<vmem>>, vector<1x128x64xbf16>
    %21 = vector.shape_cast %20 : vector<1x128x64xbf16> to vector<128x64xbf16>
    %cst_12 = arith.constant dense<0.000000e+00> : vector<64x64xf32>
    %22 = tpu.matmul %19, %21, %cst_12 {dimension_numbers = #tpu.dot_dimension_numbers<[1], [0], [0], [1], [0, 0, 1, 1], [], []>} : vector<64x128xbf16>, vector<128x64xbf16>, vector<64x64xf32> -> vector<64x64xf32>
    %23 = arith.addf %16, %22 : vector<64x64xf32>
    %24 = vector.extract_strided_slice %1 {offsets = [1, 0, 0], sizes = [8, 8, 128], strides = [1, 1, 1]} : vector<10x10x128xf32> to vector<8x8x128xf32>
    %25 = vector.shape_cast %24 : vector<8x8x128xf32> to vector<64x128xf32>
    %26 = arith.truncf %25 : vector<64x128xf32> to vector<64x128xbf16>
    %c3 = arith.constant 3 : index
    %c0_13 = arith.constant 0 : index
    %c0_14 = arith.constant 0 : index
    %27 = vector.load %arg2[%c3, %c0_13, %c0_14] : memref<9x128x64xbf16, #tpu.memory_space<vmem>>, vector<1x128x64xbf16>
    %28 = vector.shape_cast %27 : vector<1x128x64xbf16> to vector<128x64xbf16>
    %cst_15 = arith.constant dense<0.000000e+00> : vector<64x64xf32>
    %29 = tpu.matmul %26, %28, %cst_15 {dimension_numbers = #tpu.dot_dimension_numbers<[1], [0], [0], [1], [0, 0, 1, 1], [], []>} : vector<64x128xbf16>, vector<128x64xbf16>, vector<64x64xf32> -> vector<64x64xf32>
    %30 = arith.addf %23, %29 : vector<64x64xf32>
    %31 = vector.extract_strided_slice %1 {offsets = [1, 1, 0], sizes = [8, 8, 128], strides = [1, 1, 1]} : vector<10x10x128xf32> to vector<8x8x128xf32>
    %32 = vector.shape_cast %31 : vector<8x8x128xf32> to vector<64x128xf32>
    %33 = arith.truncf %32 : vector<64x128xf32> to vector<64x128xbf16>
    %c4 = arith.constant 4 : index
    %c0_16 = arith.constant 0 : index
    %c0_17 = arith.constant 0 : index
    %34 = vector.load %arg2[%c4, %c0_16, %c0_17] : memref<9x128x64xbf16, #tpu.memory_space<vmem>>, vector<1x128x64xbf16>
    %35 = vector.shape_cast %34 : vector<1x128x64xbf16> to vector<128x64xbf16>
    %cst_18 = arith.constant dense<0.000000e+00> : vector<64x64xf32>
    %36 = tpu.matmul %33, %35, %cst_18 {dimension_numbers = #tpu.dot_dimension_numbers<[1], [0], [0], [1], [0, 0, 1, 1], [], []>} : vector<64x128xbf16>, vector<128x64xbf16>, vector<64x64xf32> -> vector<64x64xf32>
    %37 = arith.addf %30, %36 : vector<64x64xf32>
    %38 = vector.extract_strided_slice %1 {offsets = [1, 2, 0], sizes = [8, 8, 128], strides = [1, 1, 1]} : vector<10x10x128xf32> to vector<8x8x128xf32>
    %39 = vector.shape_cast %38 : vector<8x8x128xf32> to vector<64x128xf32>
    %40 = arith.truncf %39 : vector<64x128xf32> to vector<64x128xbf16>
    %c5 = arith.constant 5 : index
    %c0_19 = arith.constant 0 : index
    %c0_20 = arith.constant 0 : index
    %41 = vector.load %arg2[%c5, %c0_19, %c0_20] : memref<9x128x64xbf16, #tpu.memory_space<vmem>>, vector<1x128x64xbf16>
    %42 = vector.shape_cast %41 : vector<1x128x64xbf16> to vector<128x64xbf16>
    %cst_21 = arith.constant dense<0.000000e+00> : vector<64x64xf32>
    %43 = tpu.matmul %40, %42, %cst_21 {dimension_numbers = #tpu.dot_dimension_numbers<[1], [0], [0], [1], [0, 0, 1, 1], [], []>} : vector<64x128xbf16>, vector<128x64xbf16>, vector<64x64xf32> -> vector<64x64xf32>
    %44 = arith.addf %37, %43 : vector<64x64xf32>
    %45 = vector.extract_strided_slice %1 {offsets = [2, 0, 0], sizes = [8, 8, 128], strides = [1, 1, 1]} : vector<10x10x128xf32> to vector<8x8x128xf32>
    %46 = vector.shape_cast %45 : vector<8x8x128xf32> to vector<64x128xf32>
    %47 = arith.truncf %46 : vector<64x128xf32> to vector<64x128xbf16>
    %c6 = arith.constant 6 : index
    %c0_22 = arith.constant 0 : index
    %c0_23 = arith.constant 0 : index
    %48 = vector.load %arg2[%c6, %c0_22, %c0_23] : memref<9x128x64xbf16, #tpu.memory_space<vmem>>, vector<1x128x64xbf16>
    %49 = vector.shape_cast %48 : vector<1x128x64xbf16> to vector<128x64xbf16>
    %cst_24 = arith.constant dense<0.000000e+00> : vector<64x64xf32>
    %50 = tpu.matmul %47, %49, %cst_24 {dimension_numbers = #tpu.dot_dimension_numbers<[1], [0], [0], [1], [0, 0, 1, 1], [], []>} : vector<64x128xbf16>, vector<128x64xbf16>, vector<64x64xf32> -> vector<64x64xf32>
    %51 = arith.addf %44, %50 : vector<64x64xf32>
    %52 = vector.extract_strided_slice %1 {offsets = [2, 1, 0], sizes = [8, 8, 128], strides = [1, 1, 1]} : vector<10x10x128xf32> to vector<8x8x128xf32>
    %53 = vector.shape_cast %52 : vector<8x8x128xf32> to vector<64x128xf32>
    %54 = arith.truncf %53 : vector<64x128xf32> to vector<64x128xbf16>
    %c7 = arith.constant 7 : index
    %c0_25 = arith.constant 0 : index
    %c0_26 = arith.constant 0 : index
    %55 = vector.load %arg2[%c7, %c0_25, %c0_26] : memref<9x128x64xbf16, #tpu.memory_space<vmem>>, vector<1x128x64xbf16>
    %56 = vector.shape_cast %55 : vector<1x128x64xbf16> to vector<128x64xbf16>
    %cst_27 = arith.constant dense<0.000000e+00> : vector<64x64xf32>
    %57 = tpu.matmul %54, %56, %cst_27 {dimension_numbers = #tpu.dot_dimension_numbers<[1], [0], [0], [1], [0, 0, 1, 1], [], []>} : vector<64x128xbf16>, vector<128x64xbf16>, vector<64x64xf32> -> vector<64x64xf32>
    %58 = arith.addf %51, %57 : vector<64x64xf32>
    %59 = vector.extract_strided_slice %1 {offsets = [2, 2, 0], sizes = [8, 8, 128], strides = [1, 1, 1]} : vector<10x10x128xf32> to vector<8x8x128xf32>
    %60 = vector.shape_cast %59 : vector<8x8x128xf32> to vector<64x128xf32>
    %61 = arith.truncf %60 : vector<64x128xf32> to vector<64x128xbf16>
    %c8 = arith.constant 8 : index
    %c0_28 = arith.constant 0 : index
    %c0_29 = arith.constant 0 : index
    %62 = vector.load %arg2[%c8, %c0_28, %c0_29] : memref<9x128x64xbf16, #tpu.memory_space<vmem>>, vector<1x128x64xbf16>
    %63 = vector.shape_cast %62 : vector<1x128x64xbf16> to vector<128x64xbf16>
    %cst_30 = arith.constant dense<0.000000e+00> : vector<64x64xf32>
    %64 = tpu.matmul %61, %63, %cst_30 {dimension_numbers = #tpu.dot_dimension_numbers<[1], [0], [0], [1], [0, 0, 1, 1], [], []>} : vector<64x128xbf16>, vector<128x64xbf16>, vector<64x64xf32> -> vector<64x64xf32>
    %65 = arith.addf %58, %64 : vector<64x64xf32>
    %c0_31 = arith.constant 0 : index
    %c0_32 = arith.constant 0 : index
    %66 = vector.load %arg3[%c0_31, %c0_32] : memref<1x64xf32, #tpu.memory_space<vmem>>, vector<1x64xf32>
    %67 = vector.broadcast %66 : vector<1x64xf32> to vector<64x64xf32>
    %68 = arith.addf %65, %67 : vector<64x64xf32>
    %cst_33 = arith.constant 0.000000e+00 : f32
    %69 = vector.broadcast %cst_33 : f32 to vector<64x64xf32>
    %70 = arith.maximumf %68, %69 : vector<64x64xf32>
    %c0_34 = arith.constant 0 : index
    %c0_35 = arith.constant 0 : index
    %71 = vector.load %arg4[%c0_34, %c0_35] : memref<64x64xf32, #tpu.memory_space<vmem>>, vector<64x64xf32>
    tpu.vector_store %arg4[%c0_34, %c0_35], %70 {strides = array<i32>} : memref<64x64xf32, #tpu.memory_space<vmem>>, vector<64x64xf32>,
    return
  }
  func.func @transform_0(%arg0: i32) -> (i32, i32, i32, i32) {
    %c0_i32 = arith.constant 0 : i32
    %c0_i32_0 = arith.constant 0 : i32
    %c0_i32_1 = arith.constant 0 : i32
    %c0_i32_2 = arith.constant 0 : i32
    return %arg0, %c0_i32, %c0_i32_0, %c0_i32_1 : i32, i32, i32, i32
  }
  func.func @transform_1(%arg0: i32) -> (i32, i32, i32) {
    %c0_i32 = arith.constant 0 : i32
    %c0_i32_0 = arith.constant 0 : i32
    %c0_i32_1 = arith.constant 0 : i32
    %c0_i32_2 = arith.constant 0 : i32
    return %c0_i32, %c0_i32_0, %c0_i32_1 : i32, i32, i32
  }
  func.func @transform_2(%arg0: i32) -> (i32, i32) {
    %c0_i32 = arith.constant 0 : i32
    %c0_i32_0 = arith.constant 0 : i32
    %c0_i32_1 = arith.constant 0 : i32
    return %c0_i32, %c0_i32_0 : i32, i32
  }
  func.func @transform_3(%arg0: i32) -> (i32, i32) {
    %c0_i32 = arith.constant 0 : i32
    %c0_i32_0 = arith.constant 0 : i32
    return %arg0, %c0_i32 : i32, i32
  }
}

module attributes {stable_mosaic.version = 11 : i64} {
  func.func @_conv_s1_kernel(%arg0: i32, %arg1: memref<1x8x8x64xf32, #tpu.memory_space<vmem>>, %arg2: memref<1x64x128xbf16, #tpu.memory_space<vmem>>, %arg3: memref<1x128xf32, #tpu.memory_space<vmem>>, %arg4: memref<64x128xf32, #tpu.memory_space<vmem>>) attributes {dimension_semantics = [#tpu.dimension_semantics<parallel>], iteration_bounds = array<i64: 2>, scalar_prefetch = 0 : i64, scratch_operands = 0 : i64, tpu.core_type = #tpu.core_type<tc>, window_params = [{transform_indices = @transform_0, window_bounds = array<i64: 1, 8, 8, 64>}, {pipeline_mode = #tpu.pipeline_mode<synchronous>, transform_indices = @transform_1, window_bounds = array<i64: 1, 64, 128>}, {pipeline_mode = #tpu.pipeline_mode<synchronous>, transform_indices = @transform_2, window_bounds = array<i64: 1, 128>}, {transform_indices = @transform_3, window_bounds = array<i64: 64, 128>}]} {
    %c0 = arith.constant 0 : index
    %c0_0 = arith.constant 0 : index
    %c0_1 = arith.constant 0 : index
    %c0_2 = arith.constant 0 : index
    %0 = vector.load %arg1[%c0, %c0_0, %c0_1, %c0_2] : memref<1x8x8x64xf32, #tpu.memory_space<vmem>>, vector<1x8x8x64xf32>
    %1 = vector.shape_cast %0 : vector<1x8x8x64xf32> to vector<8x8x64xf32>
    %cst = arith.constant 0.000000e+00 : f32
    %2 = vector.broadcast %cst : f32 to vector<64x128xf32>
    %3 = vector.shape_cast %1 : vector<8x8x64xf32> to vector<64x64xf32>
    %4 = arith.truncf %3 : vector<64x64xf32> to vector<64x64xbf16>
    %c0_3 = arith.constant 0 : index
    %c0_4 = arith.constant 0 : index
    %c0_5 = arith.constant 0 : index
    %5 = vector.load %arg2[%c0_3, %c0_4, %c0_5] : memref<1x64x128xbf16, #tpu.memory_space<vmem>>, vector<1x64x128xbf16>
    %6 = vector.shape_cast %5 : vector<1x64x128xbf16> to vector<64x128xbf16>
    %cst_6 = arith.constant dense<0.000000e+00> : vector<64x128xf32>
    %7 = tpu.matmul %4, %6, %cst_6 {dimension_numbers = #tpu.dot_dimension_numbers<[1], [0], [0], [1], [0, 0, 1, 1], [], []>} : vector<64x64xbf16>, vector<64x128xbf16>, vector<64x128xf32> -> vector<64x128xf32>
    %8 = arith.addf %2, %7 : vector<64x128xf32>
    %c0_7 = arith.constant 0 : index
    %c0_8 = arith.constant 0 : index
    %9 = vector.load %arg3[%c0_7, %c0_8] : memref<1x128xf32, #tpu.memory_space<vmem>>, vector<1x128xf32>
    %10 = vector.broadcast %9 : vector<1x128xf32> to vector<64x128xf32>
    %11 = arith.addf %8, %10 : vector<64x128xf32>
    %cst_9 = arith.constant 0.000000e+00 : f32
    %12 = vector.broadcast %cst_9 : f32 to vector<64x128xf32>
    %13 = arith.maximumf %11, %12 : vector<64x128xf32>
    %c0_10 = arith.constant 0 : index
    %c0_11 = arith.constant 0 : index
    %14 = vector.load %arg4[%c0_10, %c0_11] : memref<64x128xf32, #tpu.memory_space<vmem>>, vector<64x128xf32>
    tpu.vector_store %arg4[%c0_10, %c0_11], %13 {strides = array<i32>} : memref<64x128xf32, #tpu.memory_space<vmem>>, vector<64x128xf32>,
    return
  }
  func.func @transform_0(%arg0: i32) -> (i32, i32, i32, i32) {
    %c0_i32 = arith.constant 0 : i32
    %c0_i32_0 = arith.constant 0 : i32
    %c0_i32_1 = arith.constant 0 : i32
    %c0_i32_2 = arith.constant 0 : i32
    return %arg0, %c0_i32, %c0_i32_0, %c0_i32_1 : i32, i32, i32, i32
  }
  func.func @transform_1(%arg0: i32) -> (i32, i32, i32) {
    %c0_i32 = arith.constant 0 : i32
    %c0_i32_0 = arith.constant 0 : i32
    %c0_i32_1 = arith.constant 0 : i32
    %c0_i32_2 = arith.constant 0 : i32
    return %c0_i32, %c0_i32_0, %c0_i32_1 : i32, i32, i32
  }
  func.func @transform_2(%arg0: i32) -> (i32, i32) {
    %c0_i32 = arith.constant 0 : i32
    %c0_i32_0 = arith.constant 0 : i32
    %c0_i32_1 = arith.constant 0 : i32
    return %c0_i32, %c0_i32_0 : i32, i32
  }
  func.func @transform_3(%arg0: i32) -> (i32, i32) {
    %c0_i32 = arith.constant 0 : i32
    %c0_i32_0 = arith.constant 0 : i32
    return %arg0, %c0_i32 : i32, i32
  }
}

</mosaic_0001>

<llo_original>
// kernel: residual_feature_net.13
$region0: #{residual_feature_net.13}
  #allocation0 [shape = 'u32[]', space=smem, size = 0x4, offset = 0x4, fixed_abs, tag = 'smem constant byte address 0x4 - core index']
  #allocation1 [shape = 'u32[144,128]{1,0:T(1,128)}', space=vmem, size = 0x12000, scoped, tag = 'internal scratch']
  %s0 = inlined_call_operand.vmem [shape: bf16[512,75], index: 0, kind: input, shape index: {}]
  %s1 = inlined_call_operand.vmem [shape: bf16[75,32], index: 1, kind: input, shape index: {}]
  %s2 = inlined_call_operand.vmem [shape: f32[1,32], index: 2, kind: input, shape index: {}]
  %s3 = inlined_call_operand.vmem [shape: f32[512,32], index: 3, kind: output, shape index: {}]
  %s4 = sld [smem:[#allocation0]]
  $region45: #{residual_feature_net.13} parent=0
    _
  %s6 = ssub.s32 1, %s4
  %s7 = scalar_select 0, %s6, %s4
  loop: start=0, step=1, limit=4
  $region2: #{residual_feature_net.13} parent=0 // loop_pre_header
    _
  $region3: #{residual_feature_net.13} parent=0 // loop_header
    %s9 = sphi 0, %s13
    %p10 = scmp.ge.s32.totalorder %s9, 4
    %s19 = sphi 0, %s21
    %s22 = sphi 0, %s19
    %s23 = sphi 0, %s22
    %s39 = sphi 0, %s23
    %s43 = sphi 0, %s43
    %s45 = sphi 0, %s43
    %s46 = sphi 0, %s45
    %s60 = sphi 0, %s46
    %s64 = sphi 0, %s64
    %s66 = sphi 0, %s64
    %s67 = sphi 0, %s66
    %s81 = sphi 0, %s67
    %s87 = sphi 0, %s89
    %s90 = sphi 0, %s87
    %s91 = sphi 0, %s90
    %s107 = sphi 0, %s91
  $region4: #{residual_feature_net.13} parent=0 // loop_header_branch
    %12 = sbr.rel (%p10) target = $region8
  $region5: #{residual_feature_net.13} parent=0 // loop_body
    %s14 = ssub.s32 %s9, 1
    %s15 = ssub.s32 %s9, 2
    %s16 = sadd.s32 %s9, 1
    %s17 = ssub.s32 %s9, %s16
    %p18 = scmp.eq.s32.totalorder %s17, 0
    %s20 = sadd.s32 %s19, 1
    %s21 = scalar_select %p18, %s19, %s20
    %p24 = pneg %p18
    %p25 = scmp.eq.s32.totalorder %s9, 1
    %p26 = por %p24, %p25
    %p27 = scmp.ne.s32.totalorder %s19, %s22
    %p28 = scmp.eq.s32.totalorder %s9, 0
    %p29 = por %p27, %p28
    %p30 = scmp.ne.s32.totalorder %s19, %s22
    %p31 = scmp.eq.s32.totalorder %s14, 1
    %p32 = por %p30, %p31
    %p33 = scmp.ne.s32.totalorder %s22, %s23
    %p34 = scmp.eq.s32.totalorder %s14, 0
    %p35 = por %p33, %p34
    %p36 = scmp.ne.s32.totalorder %s22, %s23
    %p37 = scmp.eq.s32.totalorder %s15, 1
    %p38 = por %p36, %p37
    %p40 = scmp.ne.s32.totalorder %s23, %s39
    %p41 = scmp.eq.s32.totalorder %s15, 0
    %p42 = por %p40, %p41
    %s44 = sadd.s32 %s43, 1
    %p47 = scmp.eq.s32.totalorder %s9, 1
    %p48 = scmp.ne.s32.totalorder %s43, %s45
    %p49 = scmp.eq.s32.totalorder %s9, 0
    %p50 = por %p48, %p49
    %p51 = scmp.ne.s32.totalorder %s43, %s45
    %p52 = scmp.eq.s32.totalorder %s14, 1
    %p53 = por %p51, %p52
    %p54 = scmp.ne.s32.totalorder %s45, %s46
    %p55 = scmp.eq.s32.totalorder %s14, 0
    %p56 = por %p54, %p55
    %p57 = scmp.ne.s32.totalorder %s45, %s46
    %p58 = scmp.eq.s32.totalorder %s15, 1
    %p59 = por %p57, %p58
    %p61 = scmp.ne.s32.totalorder %s46, %s60
    %p62 = scmp.eq.s32.totalorder %s15, 0
    %p63 = por %p61, %p62
    %s65 = sadd.s32 %s64, 1
    %p68 = scmp.eq.s32.totalorder %s9, 1
    %p69 = scmp.ne.s32.totalorder %s64, %s66
    %p70 = scmp.eq.s32.totalorder %s9, 0
    %p71 = por %p69, %p70
    %p72 = scmp.ne.s32.totalorder %s64, %s66
    %p73 = scmp.eq.s32.totalorder %s14, 1
    %p74 = por %p72, %p73
    %p75 = scmp.ne.s32.totalorder %s66, %s67
    %p76 = scmp.eq.s32.totalorder %s14, 0
    %p77 = por %p75, %p76
    %p78 = scmp.ne.s32.totalorder %s66, %s67
    %p79 = scmp.eq.s32.totalorder %s15, 1
    %p80 = por %p78, %p79
    %p82 = scmp.ne.s32.totalorder %s67, %s81
    %p83 = scmp.eq.s32.totalorder %s15, 0
    %p84 = por %p82, %p83
    %s85 = ssub.s32 %s9, %s16
    %p86 = scmp.eq.s32.totalorder %s85, 0
    %s88 = sadd.s32 %s87, 1
    %s89 = scalar_select %p86, %s87, %s88
    %p92 = pneg %p86
    %p93 = scmp.eq.s32.totalorder %s9, 1
    %p94 = por %p92, %p93
    %p95 = scmp.ne.s32.totalorder %s87, %s90
    %p96 = scmp.eq.s32.totalorder %s9, 0
    %p97 = por %p95, %p96
    %p98 = scmp.ne.s32.totalorder %s87, %s90
    %p99 = scmp.eq.s32.totalorder %s14, 1
    %p100 = por %p98, %p99
    %p101 = scmp.ne.s32.totalorder %s90, %s91
    %p102 = scmp.eq.s32.totalorder %s14, 0
    %p103 = por %p101, %p102
    %p104 = scmp.ne.s32.totalorder %s90, %s91
    %p105 = scmp.eq.s32.totalorder %s15, 1
    %p106 = por %p104, %p105
    %p108 = scmp.ne.s32.totalorder %s91, %s107
    %p109 = scmp.eq.s32.totalorder %s15, 0
    %p110 = por %p108, %p109
    %p111 = scmp.le.s32.totalorder 1, %s9
    %p112 = scmp.lt.s32.totalorder %s9, 3
    %p113 = pnand %p111, %p112
    %p114 = pneg %p113
    // Predicated region
    $region9: #{residual_feature_net.13} parent=5 // pred_check
      _
    $region10: #{residual_feature_net.13} parent=5 // pred_check_branch
      %116 = sbr.rel (%p113) target = $region12
    $region11: #{residual_feature_net.13} parent=5 // pred_region
      %s117 = ssub.s32 %s9, 1
      // Predicated region
      $region13: #{residual_feature_net.13} parent=11 // pred_check
        %p118 = pneg %p56
      $region14: #{residual_feature_net.13} parent=11 // pred_check_branch
        %120 = sbr.rel (%p118) target = $region16
      $region15: #{residual_feature_net.13} parent=11 // pred_region
        _
      $region16: #{residual_feature_net.13} parent=11 // pred_fallthru
        _
      // Predicated region
      $region17: #{residual_feature_net.13} parent=11 // pred_check
        %p121 = pneg %p77
      $region18: #{residual_feature_net.13} parent=11 // pred_check_branch
        %123 = sbr.rel (%p121) target = $region20
      $region19: #{residual_feature_net.13} parent=11 // pred_region
        _
      $region20: #{residual_feature_net.13} parent=11 // pred_fallthru
        _
    $region12: #{residual_feature_net.13} parent=5 // pred_fallthru
      _
    %p124 = scmp.lt.s32.totalorder %s9, 2
    // Predicated region
    $region21: #{residual_feature_net.13} parent=5 // pred_check
      %p125 = pneg %p124
    $region22: #{residual_feature_net.13} parent=5 // pred_check_branch
      %127 = sbr.rel (%p125) target = $region24
    $region23: #{residual_feature_net.13} parent=5 // pred_region
      // Predicated region
      $region25: #{residual_feature_net.13} parent=23 // pred_check
        %p128 = pneg %p29
      $region26: #{residual_feature_net.13} parent=23 // pred_check_branch
        %130 = sbr.rel (%p128) target = $region28
      $region27: #{residual_feature_net.13} parent=23 // pred_region
        %s131 = smul.u32 32, %s9
        %p132 = scmp.lt.s32.totalorder %s131, 63
        %s133 = scalar_select %p132, %s131, 63
        %s134 = smul.addr %s133, 4
        %s135 = scalar_lea.vmem %s0, %s134
        %s136 = smul.u32 32, %s9
      $region28: #{residual_feature_net.13} parent=23 // pred_fallthru
        _
    $region24: #{residual_feature_net.13} parent=5 // pred_fallthru
      _
    %p137 = scmp.le.s32.totalorder 1, %s9
    %p138 = scmp.lt.s32.totalorder %s9, 3
    %p139 = pnand %p137, %p138
    %p140 = pneg %p139
    // Predicated region
    $region29: #{residual_feature_net.13} parent=5 // pred_check
      _
    $region30: #{residual_feature_net.13} parent=5 // pred_check_branch
      %142 = sbr.rel (%p139) target = $region32
    $region31: #{residual_feature_net.13} parent=5 // pred_region
      %s143 = ssub.s32 %s9, 1
      %s144 = smul.u32 32, %s14
      %p145 = scmp.lt.s32.totalorder %s144, 63
      %s146 = scalar_select %p145, %s144, 63
      %s147 = smul.addr %s146, 4
      %s148 = scalar_lea.vmem %s0, %s147
      %p149 = pneg %p35
      %p150 = pneg %p32
      %p151 = pneg %p56
      %p152 = pneg %p53
      %p153 = pneg %p77
      %p154 = pneg %p74
      %p155 = pneg %p103
      %p156 = pneg %p100
      %s157 = smul.u32 32, %s14
      %p158 = scmp.lt.s32.totalorder %s157, 63
      %s159 = scalar_select %p158, %s157, 63
      %s160 = smul.addr %s159, 8
      %s161 = scalar_lea.vmem %s3, %s160
      %s162 = smul.u32 32, %s14
      %p163 = scmp.lt.s32.totalorder %s162, 63
      %s164 = scalar_select %p163, %s162, 63
      %s165 = smul.addr %s164, 4
      %s166 = scalar_lea.vmem %s0, %s165
      %s167 = smul.u32 32, %s14
      %s168 = smul.u32 32, %s14
      %p169 = scmp.lt.s32.totalorder %s168, 63
      %s170 = scalar_select %p169, %s168, 63
      %s171 = smul.addr %s170, 8
      %s172 = scalar_lea.vmem %s3, %s171
      %s173 = smul.u32 32, %s14
      %v175 = vld [vmem:[%s166] sm:$0xf]
      %v176 = vld [vmem:[%s166 + $0x4] sm:$0xf]
      %v177 = vld [vmem:[%s166 + $0x8] sm:$0xf]
      %v178 = vld [vmem:[%s166 + $0xc] sm:$0xf]
      %v179 = vld [vmem:[%s166 + $0x10] sm:$0xf]
      %v180 = vld [vmem:[%s166 + $0x14] sm:$0xf]
      %v181 = vld [vmem:[%s166 + $0x18] sm:$0xf]
      %v182 = vld [vmem:[%s166 + $0x1c] sm:$0xf]
      %v183 = vld [vmem:[%s166 + $0x20] sm:$0xf]
      %v184 = vld [vmem:[%s166 + $0x24] sm:$0xf]
      %v185 = vld [vmem:[%s166 + $0x28] sm:$0xf]
      %v186 = vld [vmem:[%s166 + $0x2c] sm:$0xf]
      %v187 = vld [vmem:[%s166 + $0x30] sm:$0xf]
      %v188 = vld [vmem:[%s166 + $0x34] sm:$0xf]
      %v189 = vld [vmem:[%s166 + $0x38] sm:$0xf]
      %v190 = vld [vmem:[%s166 + $0x3c] sm:$0xf]
      %v191 = vld [vmem:[%s166 + $0x40] sm:$0xf]
      %v192 = vld [vmem:[%s166 + $0x44] sm:$0xf]
      %v193 = vld [vmem:[%s166 + $0x48] sm:$0xf]
      %v194 = vld [vmem:[%s166 + $0x4c] sm:$0xf]
      %v195 = vld [vmem:[%s166 + $0x50] sm:$0xf]
      %v196 = vld [vmem:[%s166 + $0x54] sm:$0xf]
      %v197 = vld [vmem:[%s166 + $0x58] sm:$0xf]
      %v198 = vld [vmem:[%s166 + $0x5c] sm:$0xf]
      %v199 = vld [vmem:[%s166 + $0x60] sm:$0xf]
      %v200 = vld [vmem:[%s166 + $0x64] sm:$0xf]
      %v201 = vld [vmem:[%s166 + $0x68] sm:$0xf]
      %v202 = vld [vmem:[%s166 + $0x6c] sm:$0xf]
      %v203 = vld [vmem:[%s166 + $0x70] sm:$0xf]
      %v204 = vld [vmem:[%s166 + $0x74] sm:$0xf]
      %v205 = vld [vmem:[%s166 + $0x78] sm:$0xf]
      %v206 = vld [vmem:[%s166 + $0x7c] sm:$0xf]
      %v207 = vld [vmem:[%s1] sm:$0xf]
      %v208 = vld [vmem:[%s1 + $0x4] sm:$0xf]
      %v209 = vld [vmem:[%s1 + $0x8] sm:$0xf]
      %v210 = vld [vmem:[%s1 + $0xc] sm:$0xf]
      %v211 = vld [vmem:[%s1 + $0x10] sm:$0xf]
      %v212 = vld [vmem:[%s1 + $0x14] sm:$0xf]
      %v213 = vld [vmem:[%s1 + $0x18] sm:$0xf]
      %v214 = vld [vmem:[%s1 + $0x1c] sm:$0xf]
      %v215 = vld [vmem:[%s1 + $0x20] sm:$0xf]
      %v216 = vld [vmem:[%s1 + $0x24] sm:$0x3]
      %v217 = vld [vmem:[%s2] sm:$0x1]
      %v219 = vlaneseq
      %v220 = vshrl.u32 %v219, 7
      %v221 = vsub.s32 0, %v220
      %v222 = vrot.slane %v217, %v221
      %v256 = vunpack.c.l.b16 %v175
      %v257 = vunpack.c.l.b16 %v176
      %v258 = vunpack.c.l.b16 %v177
      %v259 = vunpack.c.l.b16 %v178
      %v260 = vunpack.c.l.b16 %v179
      %v261 = vunpack.c.l.b16 %v180
      %v262 = vunpack.c.l.b16 %v181
      %v263 = vunpack.c.l.b16 %v182
      %v264 = vunpack.c.l.b16 %v183
      %v265 = vunpack.c.l.b16 %v184
      %v266 = vunpack.c.l.b16 %v185
      %v267 = vunpack.c.l.b16 %v186
      %v268 = vunpack.c.l.b16 %v187
      %v269 = vunpack.c.l.b16 %v188
      %v270 = vunpack.c.l.b16 %v189
      %v271 = vunpack.c.l.b16 %v190
      %v272 = vunpack.c.l.b16 %v191
      %v273 = vunpack.c.l.b16 %v192
      %v274 = vunpack.c.l.b16 %v193
      %v275 = vunpack.c.l.b16 %v194
      %v276 = vunpack.c.l.b16 %v195
      %v277 = vunpack.c.l.b16 %v196
      %v278 = vunpack.c.l.b16 %v197
      %v279 = vunpack.c.l.b16 %v198
      %v280 = vunpack.c.l.b16 %v199
      %v281 = vunpack.c.l.b16 %v200
      %v282 = vunpack.c.l.b16 %v201
      %v283 = vunpack.c.l.b16 %v202
      %v284 = vunpack.c.l.b16 %v203
      %v285 = vunpack.c.l.b16 %v204
      %v286 = vunpack.c.l.b16 %v205
      %v287 = vunpack.c.l.b16 %v206
      %v288 = vpack.c.b16 %v257, %v256
      %v289 = vpack.c.b16 %v259, %v258
      %v290 = vpack.c.b16 %v261, %v260
      %v291 = vpack.c.b16 %v263, %v262
      %v292 = vpack.c.b16 %v265, %v264
      %v293 = vpack.c.b16 %v267, %v266
      %v294 = vpack.c.b16 %v269, %v268
      %v295 = vpack.c.b16 %v271, %v270
      %v296 = vpack.c.b16 %v273, %v272
      %v297 = vpack.c.b16 %v275, %v274
      %v298 = vpack.c.b16 %v277, %v276
      %v299 = vpack.c.b16 %v279, %v278
      %v300 = vpack.c.b16 %v281, %v280
      %v301 = vpack.c.b16 %v283, %v282
      %v302 = vpack.c.b16 %v285, %v284
      %v303 = vpack.c.b16 %v287, %v286
      %v314 = vunpack.c.l.b16 %v207
      %v315 = vunpack.c.l.b16 %v208
      %v316 = vunpack.c.l.b16 %v209
      %v317 = vunpack.c.l.b16 %v210
      %v318 = vunpack.c.l.b16 %v211
      %v319 = vunpack.c.l.b16 %v212
      %v320 = vunpack.c.l.b16 %v213
      %v321 = vunpack.c.l.b16 %v214
      %v322 = vunpack.c.l.b16 %v215
      %v323 = vunpack.c.l.b16 %v216
      %v324 = vpack.c.b16 %v315, %v314
      %v325 = vpack.c.b16 %v317, %v316
      %v326 = vpack.c.b16 %v319, %v318
      %v327 = vpack.c.b16 %v321, %v320
      %v328 = vpack.c.b16 %v323, %v322
      %vm333 = vcmask 613376
      %v335 = vsel %vm333, %v288, 0
      %v338 = vsel %vm333, %v289, 0
      %v341 = vsel %vm333, %v290, 0
      %v344 = vsel %vm333, %v291, 0
      %v347 = vsel %vm333, %v292, 0
      %v350 = vsel %vm333, %v293, 0
      %v353 = vsel %vm333, %v294, 0
      %v356 = vsel %vm333, %v295, 0
      %v359 = vsel %vm333, %v296, 0
      %v362 = vsel %vm333, %v297, 0
      %v365 = vsel %vm333, %v298, 0
      %v368 = vsel %vm333, %v299, 0
      %v371 = vsel %vm333, %v300, 0
      %v374 = vsel %vm333, %v301, 0
      %v377 = vsel %vm333, %v302, 0
      %v380 = vsel %vm333, %v303, 0
      %vm382 = vcmask 1044480
      %vm383 = vcmask 1045504
      %v384 = vsel %vm382, 4294967295, 65535
      %v385 = vsel %vm383, %v384, 0
      %v387 = vand.u32 %v328, %v385
      %389 = vmatprep.subr.bf16.mxu0 0
      %390 = vmatpush1.bf16.msra.mxu0 0
      %391 = vmatprep.subr.bf16.mxu0 0
      %392 = vmatpush1.bf16.msra.mxu0 0
      %393 = vmatprep.subr.bf16.mxu0 0
      %394 = vmatpush1.bf16.msra.mxu0 0
      %395 = vmatprep.subr.bf16.mxu0 0
      %396 = vmatpush1.bf16.msra.mxu0 %v387
      %397 = vmatprep.subr.bf16.mxu0 0
      %398 = vmatpush1.bf16.msra.mxu0 %v327
      %399 = vmatprep.subr.bf16.mxu0 0
      %400 = vmatpush1.bf16.msra.mxu0 %v326
      %401 = vmatprep.subr.bf16.mxu0 0
      %402 = vmatpush1.bf16.msra.mxu0 %v325
      %403 = vmatprep.subr.bf16.mxu0 0
      %404 = vmatpush1.bf16.msra.mxu0 %v324
      %405 = vmatprep.subr.bf16.mxu0 0
      %406 = vmatpush2.bf16.msra.mxu0 0
      %407 = vmatprep.subr.bf16.mxu0 0
      %408 = vmatpush2.bf16.msra.mxu0 0
      %409 = vmatprep.subr.bf16.mxu0 0
      %410 = vmatpush2.bf16.msra.mxu0 0
      %411 = vmatprep.subr.bf16.mxu0 0
      %412 = vmatpush2.bf16.msra.mxu0 0
      %413 = vmatprep.subr.bf16.mxu0 0
      %414 = vmatpush2.bf16.msra.mxu0 0
      %415 = vmatprep.subr.bf16.mxu0 0
      %416 = vmatpush2.bf16.msra.mxu0 0
      %417 = vmatprep.subr.bf16.mxu0 0
      %418 = vmatpush2.bf16.msra.mxu0 0
      %419 = vmatprep.subr.bf16.mxu0 0
      %420 = vmatpush2.bf16.msra.mxu0 0
      %421 = vmatprep.mubr.bf16.mxu0 0
      %422 = vmatmul.mubr.bf16.gmra.mxu0 %v335
      %v423 = vpop.f32.mrf.mxu0
      %v424 = vadd.f32 %v222, %v423
      %v425 = vpop.f32.mrf.mxu0
      %v426 = vpop.f32.mrf.mxu0
      %v427 = vadd.f32 %v222, %v426
      %v428 = vpop.f32.mrf.mxu0
      %429 = vmatprep.mubr.bf16.mxu0 0
      %430 = vmatmul.mubr.bf16.gmra.mxu0 %v338
      %v431 = vpop.f32.mrf.mxu0
      %v432 = vadd.f32 %v222, %v431
      %v433 = vpop.f32.mrf.mxu0
      %v434 = vpop.f32.mrf.mxu0
      %v435 = vadd.f32 %v222, %v434
      %v436 = vpop.f32.mrf.mxu0
      %437 = vmatprep.mubr.bf16.mxu0 0
      %438 = vmatmul.mubr.bf16.gmra.mxu0 %v341
      %v439 = vpop.f32.mrf.mxu0
      %v440 = vadd.f32 %v222, %v439
      %v441 = vpop.f32.mrf.mxu0
      %v442 = vpop.f32.mrf.mxu0
      %v443 = vadd.f32 %v222, %v442
      %v444 = vpop.f32.mrf.mxu0
      %445 = vmatprep.mubr.bf16.mxu0 0
      %446 = vmatmul.mubr.bf16.gmra.mxu0 %v344
      %v447 = vpop.f32.mrf.mxu0
      %v448 = vadd.f32 %v222, %v447
      %v449 = vpop.f32.mrf.mxu0
      %v450 = vpop.f32.mrf.mxu0
      %v451 = vadd.f32 %v222, %v450
      %v452 = vpop.f32.mrf.mxu0
      %453 = vmatprep.mubr.bf16.mxu0 0
      %454 = vmatmul.mubr.bf16.gmra.mxu0 %v347
      %v455 = vpop.f32.mrf.mxu0
      %v456 = vadd.f32 %v222, %v455
      %v457 = vpop.f32.mrf.mxu0
      %v458 = vpop.f32.mrf.mxu0
      %v459 = vadd.f32 %v222, %v458
      %v460 = vpop.f32.mrf.mxu0
      %461 = vmatprep.mubr.bf16.mxu0 0
      %462 = vmatmul.mubr.bf16.gmra.mxu0 %v350
      %v463 = vpop.f32.mrf.mxu0
      %v464 = vadd.f32 %v222, %v463
      %v465 = vpop.f32.mrf.mxu0
      %v466 = vpop.f32.mrf.mxu0
      %v467 = vadd.f32 %v222, %v466
      %v468 = vpop.f32.mrf.mxu0
      %469 = vmatprep.mubr.bf16.mxu0 0
      %470 = vmatmul.mubr.bf16.gmra.mxu0 %v353
      %v471 = vpop.f32.mrf.mxu0
      %v472 = vadd.f32 %v222, %v471
      %v473 = vpop.f32.mrf.mxu0
      %v474 = vpop.f32.mrf.mxu0
      %v475 = vadd.f32 %v222, %v474
      %v476 = vpop.f32.mrf.mxu0
      %477 = vmatprep.mubr.bf16.mxu0 0
      %478 = vmatmul.mubr.bf16.gmra.mxu0 %v356
      %v479 = vpop.f32.mrf.mxu0
      %v480 = vadd.f32 %v222, %v479
      %v481 = vpop.f32.mrf.mxu0
      %v482 = vpop.f32.mrf.mxu0
      %v483 = vadd.f32 %v222, %v482
      %v484 = vpop.f32.mrf.mxu0
      %485 = vmatprep.mubr.bf16.mxu0 0
      %486 = vmatmul.mubr.bf16.gmra.mxu0 %v359
      %v487 = vpop.f32.mrf.mxu0
      %v488 = vadd.f32 %v222, %v487
      %v489 = vpop.f32.mrf.mxu0
      %v490 = vpop.f32.mrf.mxu0
      %v491 = vadd.f32 %v222, %v490
      %v492 = vpop.f32.mrf.mxu0
      %493 = vmatprep.mubr.bf16.mxu0 0
      %494 = vmatmul.mubr.bf16.gmra.mxu0 %v362
      %v495 = vpop.f32.mrf.mxu0
      %v496 = vadd.f32 %v222, %v495
      %v497 = vpop.f32.mrf.mxu0
      %v498 = vpop.f32.mrf.mxu0
      %v499 = vadd.f32 %v222, %v498
      %v500 = vpop.f32.mrf.mxu0
      %501 = vmatprep.mubr.bf16.mxu0 0
      %502 = vmatmul.mubr.bf16.gmra.mxu0 %v365
      %v503 = vpop.f32.mrf.mxu0
      %v504 = vadd.f32 %v222, %v503
      %v505 = vpop.f32.mrf.mxu0
      %v506 = vpop.f32.mrf.mxu0
      %v507 = vadd.f32 %v222, %v506
      %v508 = vpop.f32.mrf.mxu0
      %509 = vmatprep.mubr.bf16.mxu0 0
      %510 = vmatmul.mubr.bf16.gmra.mxu0 %v368
      %v511 = vpop.f32.mrf.mxu0
      %v512 = vadd.f32 %v222, %v511
      %v513 = vpop.f32.mrf.mxu0
      %v514 = vpop.f32.mrf.mxu0
      %v515 = vadd.f32 %v222, %v514
      %v516 = vpop.f32.mrf.mxu0
      %517 = vmatprep.mubr.bf16.mxu0 0
      %518 = vmatmul.mubr.bf16.gmra.mxu0 %v371
      %v519 = vpop.f32.mrf.mxu0
      %v520 = vadd.f32 %v222, %v519
      %v521 = vpop.f32.mrf.mxu0
      %v522 = vpop.f32.mrf.mxu0
      %v523 = vadd.f32 %v222, %v522
      %v524 = vpop.f32.mrf.mxu0
      %525 = vmatprep.mubr.bf16.mxu0 0
      %526 = vmatmul.mubr.bf16.gmra.mxu0 %v374
      %v527 = vpop.f32.mrf.mxu0
      %v528 = vadd.f32 %v222, %v527
      %v529 = vpop.f32.mrf.mxu0
      %v530 = vpop.f32.mrf.mxu0
      %v531 = vadd.f32 %v222, %v530
      %v532 = vpop.f32.mrf.mxu0
      %533 = vmatprep.mubr.bf16.mxu0 0
      %534 = vmatmul.mubr.bf16.gmra.mxu0 %v377
      %v535 = vpop.f32.mrf.mxu0
      %v536 = vadd.f32 %v222, %v535
      %v537 = vpop.f32.mrf.mxu0
      %v538 = vpop.f32.mrf.mxu0
      %v539 = vadd.f32 %v222, %v538
      %v540 = vpop.f32.mrf.mxu0
      %541 = vmatprep.mubr.bf16.mxu0 0
      %542 = vmatmul.mubr.bf16.gmra.mxu0 %v380
      %v543 = vpop.f32.mrf.mxu0
      %v544 = vadd.f32 %v222, %v543
      %v545 = vpop.f32.mrf.mxu0
      %v546 = vpop.f32.mrf.mxu0
      %v547 = vadd.f32 %v222, %v546
      %v548 = vpop.f32.mrf.mxu0
      %549 = vdwg.mxu0
      %v550 = vmax.f32 %v424, 0.0
      %v551 = vmax.f32 %v427, 0.0
      %v552 = vmax.f32 %v432, 0.0
      %v553 = vmax.f32 %v435, 0.0
      %v554 = vmax.f32 %v440, 0.0
      %v555 = vmax.f32 %v443, 0.0
      %v556 = vmax.f32 %v448, 0.0
      %v557 = vmax.f32 %v451, 0.0
      %v558 = vmax.f32 %v456, 0.0
      %v559 = vmax.f32 %v459, 0.0
      %v560 = vmax.f32 %v464, 0.0
      %v561 = vmax.f32 %v467, 0.0
      %v562 = vmax.f32 %v472, 0.0
      %v563 = vmax.f32 %v475, 0.0
      %v564 = vmax.f32 %v480, 0.0
      %v565 = vmax.f32 %v483, 0.0
      %v566 = vmax.f32 %v488, 0.0
      %v567 = vmax.f32 %v491, 0.0
      %v568 = vmax.f32 %v496, 0.0
      %v569 = vmax.f32 %v499, 0.0
      %v570 = vmax.f32 %v504, 0.0
      %v571 = vmax.f32 %v507, 0.0
      %v572 = vmax.f32 %v512, 0.0
      %v573 = vmax.f32 %v515, 0.0
      %v574 = vmax.f32 %v520, 0.0
      %v575 = vmax.f32 %v523, 0.0
      %v576 = vmax.f32 %v528, 0.0
      %v577 = vmax.f32 %v531, 0.0
      %v578 = vmax.f32 %v536, 0.0
      %v579 = vmax.f32 %v539, 0.0
      %v580 = vmax.f32 %v544, 0.0
      %v581 = vmax.f32 %v547, 0.0
      %vm582 = vcmask 261120
      %583 = vst.msk [vmem:[%s172] sm:$0xff] %vm582, %v550
      %584 = vst.msk [vmem:[%s172 + $0x8] sm:$0xff] %vm582, %v551
      %585 = vst.msk [vmem:[%s172 + $0x10] sm:$0xff] %vm582, %v552
      %586 = vst.msk [vmem:[%s172 + $0x18] sm:$0xff] %vm582, %v553
      %587 = vst.msk [vmem:[%s172 + $0x20] sm:$0xff] %vm582, %v554
      %588 = vst.msk [vmem:[%s172 + $0x28] sm:$0xff] %vm582, %v555
      %589 = vst.msk [vmem:[%s172 + $0x30] sm:$0xff] %vm582, %v556
      %590 = vst.msk [vmem:[%s172 + $0x38] sm:$0xff] %vm582, %v557
      %591 = vst.msk [vmem:[%s172 + $0x40] sm:$0xff] %vm582, %v558
      %592 = vst.msk [vmem:[%s172 + $0x48] sm:$0xff] %vm582, %v559
      %593 = vst.msk [vmem:[%s172 + $0x50] sm:$0xff] %vm582, %v560
      %594 = vst.msk [vmem:[%s172 + $0x58] sm:$0xff] %vm582, %v561
      %595 = vst.msk [vmem:[%s172 + $0x60] sm:$0xff] %vm582, %v562
      %596 = vst.msk [vmem:[%s172 + $0x68] sm:$0xff] %vm582, %v563
      %597 = vst.msk [vmem:[%s172 + $0x70] sm:$0xff] %vm582, %v564
      %598 = vst.msk [vmem:[%s172 + $0x78] sm:$0xff] %vm582, %v565
      %599 = vst.msk [vmem:[%s172 + $0x80] sm:$0xff] %vm582, %v566
      %600 = vst.msk [vmem:[%s172 + $0x88] sm:$0xff] %vm582, %v567
      %601 = vst.msk [vmem:[%s172 + $0x90] sm:$0xff] %vm582, %v568
      %602 = vst.msk [vmem:[%s172 + $0x98] sm:$0xff] %vm582, %v569
      %603 = vst.msk [vmem:[%s172 + $0xa0] sm:$0xff] %vm582, %v570
      %604 = vst.msk [vmem:[%s172 + $0xa8] sm:$0xff] %vm582, %v571
      %605 = vst.msk [vmem:[%s172 + $0xb0] sm:$0xff] %vm582, %v572
      %606 = vst.msk [vmem:[%s172 + $0xb8] sm:$0xff] %vm582, %v573
      %607 = vst.msk [vmem:[%s172 + $0xc0] sm:$0xff] %vm582, %v574
      %608 = vst.msk [vmem:[%s172 + $0xc8] sm:$0xff] %vm582, %v575
      %609 = vst.msk [vmem:[%s172 + $0xd0] sm:$0xff] %vm582, %v576
      %610 = vst.msk [vmem:[%s172 + $0xd8] sm:$0xff] %vm582, %v577
      %611 = vst.msk [vmem:[%s172 + $0xe0] sm:$0xff] %vm582, %v578
      %612 = vst.msk [vmem:[%s172 + $0xe8] sm:$0xff] %vm582, %v579
      %613 = vst.msk [vmem:[%s172 + $0xf0] sm:$0xff] %vm582, %v580
      %614 = vst.msk [vmem:[%s172 + $0xf8] sm:$0xff] %vm582, %v581
      %s615 = smul.u32 32, %s14
      %p616 = scmp.lt.s32.totalorder %s615, 63
      %s617 = scalar_select %p616, %s615, 63
      %s618 = smul.addr %s617, 8
      %s619 = scalar_lea.vmem %s3, %s618
      // Predicated region
      $region33: #{residual_feature_net.13} parent=31 // pred_check
        %p620 = pneg %p100
      $region34: #{residual_feature_net.13} parent=31 // pred_check_branch
        %622 = sbr.rel (%p620) target = $region36
      $region35: #{residual_feature_net.13} parent=31 // pred_region
        %s623 = smul.u32 32, %s14
      $region36: #{residual_feature_net.13} parent=31 // pred_fallthru
        _
    $region32: #{residual_feature_net.13} parent=5 // pred_fallthru
      _
    %p624 = scmp.le.s32.totalorder 2, %s9
    // Predicated region
    $region37: #{residual_feature_net.13} parent=5 // pred_check
      %p625 = pneg %p624
    $region38: #{residual_feature_net.13} parent=5 // pred_check_branch
      %627 = sbr.rel (%p625) target = $region40
    $region39: #{residual_feature_net.13} parent=5 // pred_region
      %s628 = ssub.s32 %s9, 2
      // Predicated region
      $region41: #{residual_feature_net.13} parent=39 // pred_check
        %p629 = pneg %p106
      $region42: #{residual_feature_net.13} parent=39 // pred_check_branch
        %631 = sbr.rel (%p629) target = $region44
      $region43: #{residual_feature_net.13} parent=39 // pred_region
        %s632 = smul.u32 32, %s15
        %p633 = scmp.lt.s32.totalorder %s632, 63
        %s634 = scalar_select %p633, %s632, 63
        %s635 = smul.addr %s634, 8
        %s636 = scalar_lea.vmem %s3, %s635
      $region44: #{residual_feature_net.13} parent=39 // pred_fallthru
        _
    $region40: #{residual_feature_net.13} parent=5 // pred_fallthru
      _
  $region6: #{residual_feature_net.13} parent=0 // loop_footer
    %s13 = sadd.s32 1, %s9
  $region7: #{residual_feature_net.13} parent=0 // loop_footer_branch
    %8 = sbr.rel target = $region3
  $region8: #{residual_feature_net.13} parent=0 // loop_exit
    _

// kernel: residual_feature_net.14
$region0: #{residual_feature_net.14}
  #allocation0 [shape = 'u32[]', space=smem, size = 0x4, offset = 0x4, fixed_abs, tag = 'smem constant byte address 0x4 - core index']
  #allocation1 [shape = 'u32[144,128]{1,0:T(1,128)}', space=vmem, size = 0x12000, scoped, tag = 'internal scratch']
  %s0 = inlined_call_operand.vmem [shape: bf16[128,288], index: 0, kind: input, shape index: {}]
  %s1 = inlined_call_operand.vmem [shape: bf16[288,64], index: 1, kind: input, shape index: {}]
  %s2 = inlined_call_operand.vmem [shape: f32[1,64], index: 2, kind: input, shape index: {}]
  %s3 = inlined_call_operand.vmem [shape: f32[128,64], index: 3, kind: output, shape index: {}]
  %s4 = sld [smem:[#allocation0]]
  $region45: #{residual_feature_net.14} parent=0
    _
  %s6 = ssub.s32 1, %s4
  %s7 = scalar_select 0, %s6, %s4
  loop: start=0, step=1, limit=4
  $region2: #{residual_feature_net.14} parent=0 // loop_pre_header
    _
  $region3: #{residual_feature_net.14} parent=0 // loop_header
    %s9 = sphi 0, %s13
    %p10 = scmp.ge.s32.totalorder %s9, 4
    %s19 = sphi 0, %s21
    %s22 = sphi 0, %s19
    %s23 = sphi 0, %s22
    %s39 = sphi 0, %s23
    %s43 = sphi 0, %s43
    %s45 = sphi 0, %s43
    %s46 = sphi 0, %s45
    %s60 = sphi 0, %s46
    %s64 = sphi 0, %s64
    %s66 = sphi 0, %s64
    %s67 = sphi 0, %s66
    %s81 = sphi 0, %s67
    %s87 = sphi 0, %s89
    %s90 = sphi 0, %s87
    %s91 = sphi 0, %s90
    %s107 = sphi 0, %s91
  $region4: #{residual_feature_net.14} parent=0 // loop_header_branch
    %12 = sbr.rel (%p10) target = $region8
  $region5: #{residual_feature_net.14} parent=0 // loop_body
    %s14 = ssub.s32 %s9, 1
    %s15 = ssub.s32 %s9, 2
    %s16 = sadd.s32 %s9, 1
    %s17 = ssub.s32 %s9, %s16
    %p18 = scmp.eq.s32.totalorder %s17, 0
    %s20 = sadd.s32 %s19, 1
    %s21 = scalar_select %p18, %s19, %s20
    %p24 = pneg %p18
    %p25 = scmp.eq.s32.totalorder %s9, 1
    %p26 = por %p24, %p25
    %p27 = scmp.ne.s32.totalorder %s19, %s22
    %p28 = scmp.eq.s32.totalorder %s9, 0
    %p29 = por %p27, %p28
    %p30 = scmp.ne.s32.totalorder %s19, %s22
    %p31 = scmp.eq.s32.totalorder %s14, 1
    %p32 = por %p30, %p31
    %p33 = scmp.ne.s32.totalorder %s22, %s23
    %p34 = scmp.eq.s32.totalorder %s14, 0
    %p35 = por %p33, %p34
    %p36 = scmp.ne.s32.totalorder %s22, %s23
    %p37 = scmp.eq.s32.totalorder %s15, 1
    %p38 = por %p36, %p37
    %p40 = scmp.ne.s32.totalorder %s23, %s39
    %p41 = scmp.eq.s32.totalorder %s15, 0
    %p42 = por %p40, %p41
    %s44 = sadd.s32 %s43, 1
    %p47 = scmp.eq.s32.totalorder %s9, 1
    %p48 = scmp.ne.s32.totalorder %s43, %s45
    %p49 = scmp.eq.s32.totalorder %s9, 0
    %p50 = por %p48, %p49
    %p51 = scmp.ne.s32.totalorder %s43, %s45
    %p52 = scmp.eq.s32.totalorder %s14, 1
    %p53 = por %p51, %p52
    %p54 = scmp.ne.s32.totalorder %s45, %s46
    %p55 = scmp.eq.s32.totalorder %s14, 0
    %p56 = por %p54, %p55
    %p57 = scmp.ne.s32.totalorder %s45, %s46
    %p58 = scmp.eq.s32.totalorder %s15, 1
    %p59 = por %p57, %p58
    %p61 = scmp.ne.s32.totalorder %s46, %s60
    %p62 = scmp.eq.s32.totalorder %s15, 0
    %p63 = por %p61, %p62
    %s65 = sadd.s32 %s64, 1
    %p68 = scmp.eq.s32.totalorder %s9, 1
    %p69 = scmp.ne.s32.totalorder %s64, %s66
    %p70 = scmp.eq.s32.totalorder %s9, 0
    %p71 = por %p69, %p70
    %p72 = scmp.ne.s32.totalorder %s64, %s66
    %p73 = scmp.eq.s32.totalorder %s14, 1
    %p74 = por %p72, %p73
    %p75 = scmp.ne.s32.totalorder %s66, %s67
    %p76 = scmp.eq.s32.totalorder %s14, 0
    %p77 = por %p75, %p76
    %p78 = scmp.ne.s32.totalorder %s66, %s67
    %p79 = scmp.eq.s32.totalorder %s15, 1
    %p80 = por %p78, %p79
    %p82 = scmp.ne.s32.totalorder %s67, %s81
    %p83 = scmp.eq.s32.totalorder %s15, 0
    %p84 = por %p82, %p83
    %s85 = ssub.s32 %s9, %s16
    %p86 = scmp.eq.s32.totalorder %s85, 0
    %s88 = sadd.s32 %s87, 1
    %s89 = scalar_select %p86, %s87, %s88
    %p92 = pneg %p86
    %p93 = scmp.eq.s32.totalorder %s9, 1
    %p94 = por %p92, %p93
    %p95 = scmp.ne.s32.totalorder %s87, %s90
    %p96 = scmp.eq.s32.totalorder %s9, 0
    %p97 = por %p95, %p96
    %p98 = scmp.ne.s32.totalorder %s87, %s90
    %p99 = scmp.eq.s32.totalorder %s14, 1
    %p100 = por %p98, %p99
    %p101 = scmp.ne.s32.totalorder %s90, %s91
    %p102 = scmp.eq.s32.totalorder %s14, 0
    %p103 = por %p101, %p102
    %p104 = scmp.ne.s32.totalorder %s90, %s91
    %p105 = scmp.eq.s32.totalorder %s15, 1
    %p106 = por %p104, %p105
    %p108 = scmp.ne.s32.totalorder %s91, %s107
    %p109 = scmp.eq.s32.totalorder %s15, 0
    %p110 = por %p108, %p109
    %p111 = scmp.le.s32.totalorder 1, %s9
    %p112 = scmp.lt.s32.totalorder %s9, 3
    %p113 = pnand %p111, %p112
    %p114 = pneg %p113
    // Predicated region
    $region9: #{residual_feature_net.14} parent=5 // pred_check
      _
    $region10: #{residual_feature_net.14} parent=5 // pred_check_branch
      %116 = sbr.rel (%p113) target = $region12
    $region11: #{residual_feature_net.14} parent=5 // pred_region
      %s117 = ssub.s32 %s9, 1
      // Predicated region
      $region13: #{residual_feature_net.14} parent=11 // pred_check
        %p118 = pneg %p56
      $region14: #{residual_feature_net.14} parent=11 // pred_check_branch
        %120 = sbr.rel (%p118) target = $region16
      $region15: #{residual_feature_net.14} parent=11 // pred_region
        _
      $region16: #{residual_feature_net.14} parent=11 // pred_fallthru
        _
      // Predicated region
      $region17: #{residual_feature_net.14} parent=11 // pred_check
        %p121 = pneg %p77
      $region18: #{residual_feature_net.14} parent=11 // pred_check_branch
        %123 = sbr.rel (%p121) target = $region20
      $region19: #{residual_feature_net.14} parent=11 // pred_region
        _
      $region20: #{residual_feature_net.14} parent=11 // pred_fallthru
        _
    $region12: #{residual_feature_net.14} parent=5 // pred_fallthru
      _
    %p124 = scmp.lt.s32.totalorder %s9, 2
    // Predicated region
    $region21: #{residual_feature_net.14} parent=5 // pred_check
      %p125 = pneg %p124
    $region22: #{residual_feature_net.14} parent=5 // pred_check_branch
      %127 = sbr.rel (%p125) target = $region24
    $region23: #{residual_feature_net.14} parent=5 // pred_region
      // Predicated region
      $region25: #{residual_feature_net.14} parent=23 // pred_check
        %p128 = pneg %p29
      $region26: #{residual_feature_net.14} parent=23 // pred_check_branch
        %130 = sbr.rel (%p128) target = $region28
      $region27: #{residual_feature_net.14} parent=23 // pred_region
        %s131 = smul.u32 8, %s9
        %p132 = scmp.lt.s32.totalorder %s131, 15
        %s133 = scalar_select %p132, %s131, 15
        %s134 = smul.addr %s133, 3
        %s135 = smul.addr %s134, 4
        %s136 = scalar_lea.vmem %s0, %s135
        %s137 = smul.u32 8, %s9
      $region28: #{residual_feature_net.14} parent=23 // pred_fallthru
        _
    $region24: #{residual_feature_net.14} parent=5 // pred_fallthru
      _
    %p138 = scmp.le.s32.totalorder 1, %s9
    %p139 = scmp.lt.s32.totalorder %s9, 3
    %p140 = pnand %p138, %p139
    %p141 = pneg %p140
    // Predicated region
    $region29: #{residual_feature_net.14} parent=5 // pred_check
      _
    $region30: #{residual_feature_net.14} parent=5 // pred_check_branch
      %143 = sbr.rel (%p140) target = $region32
    $region31: #{residual_feature_net.14} parent=5 // pred_region
      %s144 = ssub.s32 %s9, 1
      %s145 = smul.u32 8, %s14
      %p146 = scmp.lt.s32.totalorder %s145, 15
      %s147 = scalar_select %p146, %s145, 15
      %s148 = smul.addr %s147, 3
      %s149 = smul.addr %s148, 4
      %s150 = scalar_lea.vmem %s0, %s149
      %p151 = pneg %p35
      %p152 = pneg %p32
      %p153 = pneg %p56
      %p154 = pneg %p53
      %p155 = pneg %p77
      %p156 = pneg %p74
      %p157 = pneg %p103
      %p158 = pneg %p100
      %s159 = smul.u32 8, %s14
      %p160 = scmp.lt.s32.totalorder %s159, 15
      %s161 = scalar_select %p160, %s159, 15
      %s162 = smul.addr %s161, 8
      %s163 = scalar_lea.vmem %s3, %s162
      %s164 = smul.u32 8, %s14
      %p165 = scmp.lt.s32.totalorder %s164, 15
      %s166 = scalar_select %p165, %s164, 15
      %s167 = smul.addr %s166, 3
      %s168 = smul.addr %s167, 4
      %s169 = scalar_lea.vmem %s0, %s168
      %s170 = smul.u32 8, %s14
      %s171 = smul.u32 8, %s14
      %p172 = scmp.lt.s32.totalorder %s171, 15
      %s173 = scalar_select %p172, %s171, 15
      %s174 = smul.addr %s173, 8
      %s175 = scalar_lea.vmem %s3, %s174
      %s176 = smul.u32 8, %s14
      %v178 = vld [vmem:[%s169] sm:$0xff]
      %v179 = vld [vmem:[%s169 + $0x8] sm:$0xf]
      %v180 = vld [vmem:[%s169 + $0xc] sm:$0xff]
      %v181 = vld [vmem:[%s169 + $0x14] sm:$0xf]
      %v182 = vld [vmem:[%s169 + $0x18] sm:$0xff]
      %v183 = vld [vmem:[%s169 + $0x20] sm:$0xf]
      %v184 = vld [vmem:[%s169 + $0x24] sm:$0xff]
      %v185 = vld [vmem:[%s169 + $0x2c] sm:$0xf]
      %v186 = vld [vmem:[%s169 + $0x30] sm:$0xff]
      %v187 = vld [vmem:[%s169 + $0x38] sm:$0xf]
      %v188 = vld [vmem:[%s169 + $0x3c] sm:$0xff]
      %v189 = vld [vmem:[%s169 + $0x44] sm:$0xf]
      %v190 = vld [vmem:[%s169 + $0x48] sm:$0xff]
      %v191 = vld [vmem:[%s169 + $0x50] sm:$0xf]
      %v192 = vld [vmem:[%s169 + $0x54] sm:$0xff]
      %v193 = vld [vmem:[%s169 + $0x5c] sm:$0xf]
      %v194 = vld [vmem:[%s1] sm:$0xf]
      %v195 = vld [vmem:[%s1 + $0x4] sm:$0xf]
      %v196 = vld [vmem:[%s1 + $0x8] sm:$0xf]
      %v197 = vld [vmem:[%s1 + $0xc] sm:$0xf]
      %v198 = vld [vmem:[%s1 + $0x10] sm:$0xf]
      %v199 = vld [vmem:[%s1 + $0x14] sm:$0xf]
      %v200 = vld [vmem:[%s1 + $0x18] sm:$0xf]
      %v201 = vld [vmem:[%s1 + $0x1c] sm:$0xf]
      %v202 = vld [vmem:[%s1 + $0x20] sm:$0xf]
      %v203 = vld [vmem:[%s1 + $0x24] sm:$0xf]
      %v204 = vld [vmem:[%s1 + $0x28] sm:$0xf]
      %v205 = vld [vmem:[%s1 + $0x2c] sm:$0xf]
      %v206 = vld [vmem:[%s1 + $0x30] sm:$0xf]
      %v207 = vld [vmem:[%s1 + $0x34] sm:$0xf]
      %v208 = vld [vmem:[%s1 + $0x38] sm:$0xf]
      %v209 = vld [vmem:[%s1 + $0x3c] sm:$0xf]
      %v210 = vld [vmem:[%s1 + $0x40] sm:$0xf]
      %v211 = vld [vmem:[%s1 + $0x44] sm:$0xf]
      %v212 = vld [vmem:[%s1 + $0x48] sm:$0xf]
      %v213 = vld [vmem:[%s1 + $0x4c] sm:$0xf]
      %v214 = vld [vmem:[%s1 + $0x50] sm:$0xf]
      %v215 = vld [vmem:[%s1 + $0x54] sm:$0xf]
      %v216 = vld [vmem:[%s1 + $0x58] sm:$0xf]
      %v217 = vld [vmem:[%s1 + $0x5c] sm:$0xf]
      %v218 = vld [vmem:[%s1 + $0x60] sm:$0xf]
      %v219 = vld [vmem:[%s1 + $0x64] sm:$0xf]
      %v220 = vld [vmem:[%s1 + $0x68] sm:$0xf]
      %v221 = vld [vmem:[%s1 + $0x6c] sm:$0xf]
      %v222 = vld [vmem:[%s1 + $0x70] sm:$0xf]
      %v223 = vld [vmem:[%s1 + $0x74] sm:$0xf]
      %v224 = vld [vmem:[%s1 + $0x78] sm:$0xf]
      %v225 = vld [vmem:[%s1 + $0x7c] sm:$0xf]
      %v226 = vld [vmem:[%s1 + $0x80] sm:$0xf]
      %v227 = vld [vmem:[%s1 + $0x84] sm:$0xf]
      %v228 = vld [vmem:[%s1 + $0x88] sm:$0xf]
      %v229 = vld [vmem:[%s1 + $0x8c] sm:$0xf]
      %v230 = vld [vmem:[%s2] sm:$0x1]
      %v232 = vlaneseq
      %v233 = vshrl.u32 %v232, 7
      %v234 = vsub.s32 0, %v233
      %v235 = vrot.slane %v230, %v234
      %v253 = vunpack.c.l.b16 %v178
      %v254 = vunpack.c.h.b16 %v178
      %v255 = vunpack.c.l.b16 %v179
      %v256 = vunpack.c.l.b16 %v180
      %v257 = vunpack.c.h.b16 %v180
      %v258 = vunpack.c.l.b16 %v181
      %v259 = vunpack.c.l.b16 %v182
      %v260 = vunpack.c.h.b16 %v182
      %v261 = vunpack.c.l.b16 %v183
      %v262 = vunpack.c.l.b16 %v184
      %v263 = vunpack.c.h.b16 %v184
      %v264 = vunpack.c.l.b16 %v185
      %v265 = vunpack.c.l.b16 %v186
      %v266 = vunpack.c.h.b16 %v186
      %v267 = vunpack.c.l.b16 %v187
      %v268 = vunpack.c.l.b16 %v188
      %v269 = vunpack.c.h.b16 %v188
      %v270 = vunpack.c.l.b16 %v189
      %v271 = vunpack.c.l.b16 %v190
      %v272 = vunpack.c.h.b16 %v190
      %v273 = vunpack.c.l.b16 %v191
      %v274 = vunpack.c.l.b16 %v192
      %v275 = vunpack.c.h.b16 %v192
      %v276 = vunpack.c.l.b16 %v193
      %v277 = vpack.c.b16 %v256, %v253
      %v278 = vpack.c.b16 %v257, %v254
      %v279 = vpack.c.b16 %v258, %v255
      %v280 = vpack.c.b16 %v262, %v259
      %v281 = vpack.c.b16 %v263, %v260
      %v282 = vpack.c.b16 %v264, %v261
      %v283 = vpack.c.b16 %v268, %v265
      %v284 = vpack.c.b16 %v269, %v266
      %v285 = vpack.c.b16 %v270, %v267
      %v286 = vpack.c.b16 %v274, %v271
      %v287 = vpack.c.b16 %v275, %v272
      %v288 = vpack.c.b16 %v276, %v273
      %v333 = vunpack.c.l.b16 %v194
      %v334 = vunpack.c.l.b16 %v195
      %v335 = vunpack.c.l.b16 %v196
      %v336 = vunpack.c.l.b16 %v197
      %v337 = vunpack.c.l.b16 %v198
      %v338 = vunpack.c.l.b16 %v199
      %v339 = vunpack.c.l.b16 %v200
      %v340 = vunpack.c.l.b16 %v201
      %v341 = vunpack.c.l.b16 %v202
      %v342 = vunpack.c.l.b16 %v203
      %v343 = vunpack.c.l.b16 %v204
      %v344 = vunpack.c.l.b16 %v205
      %v345 = vunpack.c.l.b16 %v206
      %v346 = vunpack.c.l.b16 %v207
      %v347 = vunpack.c.l.b16 %v208
      %v348 = vunpack.c.l.b16 %v209
      %v349 = vunpack.c.l.b16 %v210
      %v350 = vunpack.c.l.b16 %v211
      %v351 = vunpack.c.l.b16 %v212
      %v352 = vunpack.c.l.b16 %v213
      %v353 = vunpack.c.l.b16 %v214
      %v354 = vunpack.c.l.b16 %v215
      %v355 = vunpack.c.l.b16 %v216
      %v356 = vunpack.c.l.b16 %v217
      %v357 = vunpack.c.l.b16 %v218
      %v358 = vunpack.c.l.b16 %v219
      %v359 = vunpack.c.l.b16 %v220
      %v360 = vunpack.c.l.b16 %v221
      %v361 = vunpack.c.l.b16 %v222
      %v362 = vunpack.c.l.b16 %v223
      %v363 = vunpack.c.l.b16 %v224
      %v364 = vunpack.c.l.b16 %v225
      %v365 = vunpack.c.l.b16 %v226
      %v366 = vunpack.c.l.b16 %v227
      %v367 = vunpack.c.l.b16 %v228
      %v368 = vunpack.c.l.b16 %v229
      %v369 = vpack.c.b16 %v334, %v333
      %v370 = vpack.c.b16 %v336, %v335
      %v371 = vpack.c.b16 %v338, %v337
      %v372 = vpack.c.b16 %v340, %v339
      %v373 = vpack.c.b16 %v342, %v341
      %v374 = vpack.c.b16 %v344, %v343
      %v375 = vpack.c.b16 %v346, %v345
      %v376 = vpack.c.b16 %v348, %v347
      %v377 = vpack.c.b16 %v350, %v349
      %v378 = vpack.c.b16 %v352, %v351
      %v379 = vpack.c.b16 %v354, %v353
      %v380 = vpack.c.b16 %v356, %v355
      %v381 = vpack.c.b16 %v358, %v357
      %v382 = vpack.c.b16 %v360, %v359
      %v383 = vpack.c.b16 %v362, %v361
      %v384 = vpack.c.b16 %v364, %v363
      %v385 = vpack.c.b16 %v366, %v365
      %v386 = vpack.c.b16 %v368, %v367
      %vm405 = vcmask 261120
      %v407 = vsel %vm405, %v279, 0
      %v410 = vsel %vm405, %v282, 0
      %v413 = vsel %vm405, %v285, 0
      %v416 = vsel %vm405, %v288, 0
      %418 = vmatprep.subr.bf16.mxu0 0
      %419 = vmatpush1.bf16.msra.mxu0 %v376
      %420 = vmatprep.subr.bf16.mxu0 0
      %421 = vmatpush1.bf16.msra.mxu0 %v375
      %422 = vmatprep.subr.bf16.mxu0 0
      %423 = vmatpush1.bf16.msra.mxu0 %v374
      %424 = vmatprep.subr.bf16.mxu0 0
      %425 = vmatpush1.bf16.msra.mxu0 %v373
      %426 = vmatprep.subr.bf16.mxu0 0
      %427 = vmatpush1.bf16.msra.mxu0 %v372
      %428 = vmatprep.subr.bf16.mxu0 0
      %429 = vmatpush1.bf16.msra.mxu0 %v371
      %430 = vmatprep.subr.bf16.mxu0 0
      %431 = vmatpush1.bf16.msra.mxu0 %v370
      %432 = vmatprep.subr.bf16.mxu0 0
      %433 = vmatpush1.bf16.msra.mxu0 %v369
      %434 = vmatprep.subr.bf16.mxu0 0
      %435 = vmatpush2.bf16.msra.mxu0 %v384
      %436 = vmatprep.subr.bf16.mxu0 0
      %437 = vmatpush2.bf16.msra.mxu0 %v383
      %438 = vmatprep.subr.bf16.mxu0 0
      %439 = vmatpush2.bf16.msra.mxu0 %v382
      %440 = vmatprep.subr.bf16.mxu0 0
      %441 = vmatpush2.bf16.msra.mxu0 %v381
      %442 = vmatprep.subr.bf16.mxu0 0
      %443 = vmatpush2.bf16.msra.mxu0 %v380
      %444 = vmatprep.subr.bf16.mxu0 0
      %445 = vmatpush2.bf16.msra.mxu0 %v379
      %446 = vmatprep.subr.bf16.mxu0 0
      %447 = vmatpush2.bf16.msra.mxu0 %v378
      %448 = vmatprep.subr.bf16.mxu0 0
      %449 = vmatpush2.bf16.msra.mxu0 %v377
      %450 = vmatprep.mubr.bf16.mxu0 %v278
      %451 = vmatmul.mubr.bf16.gmra.mxu0 %v277
      %v452 = vpop.f32.mrf.mxu0
      %v453 = vadd.f32 %v235, %v452
      %v454 = vpop.f32.mrf.mxu0
      %v455 = vpop.f32.mrf.mxu0
      %v456 = vadd.f32 %v235, %v455
      %v457 = vpop.f32.mrf.mxu0
      %458 = vmatprep.mubr.bf16.mxu0 %v281
      %459 = vmatmul.mubr.bf16.gmra.mxu0 %v280
      %v460 = vpop.f32.mrf.mxu0
      %v461 = vadd.f32 %v235, %v460
      %v462 = vpop.f32.mrf.mxu0
      %v463 = vpop.f32.mrf.mxu0
      %v464 = vadd.f32 %v235, %v463
      %v465 = vpop.f32.mrf.mxu0
      %466 = vmatprep.mubr.bf16.mxu0 %v284
      %467 = vmatmul.mubr.bf16.gmra.mxu0 %v283
      %v468 = vpop.f32.mrf.mxu0
      %v469 = vadd.f32 %v235, %v468
      %v470 = vpop.f32.mrf.mxu0
      %v471 = vpop.f32.mrf.mxu0
      %v472 = vadd.f32 %v235, %v471
      %v473 = vpop.f32.mrf.mxu0
      %474 = vmatprep.mubr.bf16.mxu0 %v287
      %475 = vmatmul.mubr.bf16.gmra.mxu0 %v286
      %v476 = vpop.f32.mrf.mxu0
      %v477 = vadd.f32 %v235, %v476
      %v478 = vpop.f32.mrf.mxu0
      %v479 = vpop.f32.mrf.mxu0
      %v480 = vadd.f32 %v235, %v479
      %v481 = vpop.f32.mrf.mxu0
      %482 = vdwg.mxu0
      %483 = vmatprep.subr.bf16.mxu0 0
      %484 = vmatpush1.bf16.msra.mxu0 0
      %485 = vmatprep.subr.bf16.mxu0 0
      %486 = vmatpush1.bf16.msra.mxu0 0
      %487 = vmatprep.subr.bf16.mxu0 0
      %488 = vmatpush1.bf16.msra.mxu0 0
      %489 = vmatprep.subr.bf16.mxu0 0
      %490 = vmatpush1.bf16.msra.mxu0 0
      %491 = vmatprep.subr.bf16.mxu0 0
      %492 = vmatpush1.bf16.msra.mxu0 0
      %493 = vmatprep.subr.bf16.mxu0 0
      %494 = vmatpush1.bf16.msra.mxu0 0
      %495 = vmatprep.subr.bf16.mxu0 0
      %496 = vmatpush1.bf16.msra.mxu0 %v386
      %497 = vmatprep.subr.bf16.mxu0 0
      %498 = vmatpush1.bf16.msra.mxu0 %v385
      %499 = vmatprep.subr.bf16.mxu0 0
      %500 = vmatpush2.bf16.msra.mxu0 0
      %501 = vmatprep.subr.bf16.mxu0 0
      %502 = vmatpush2.bf16.msra.mxu0 0
      %503 = vmatprep.subr.bf16.mxu0 0
      %504 = vmatpush2.bf16.msra.mxu0 0
      %505 = vmatprep.subr.bf16.mxu0 0
      %506 = vmatpush2.bf16.msra.mxu0 0
      %507 = vmatprep.subr.bf16.mxu0 0
      %508 = vmatpush2.bf16.msra.mxu0 0
      %509 = vmatprep.subr.bf16.mxu0 0
      %510 = vmatpush2.bf16.msra.mxu0 0
      %511 = vmatprep.subr.bf16.mxu0 0
      %512 = vmatpush2.bf16.msra.mxu0 0
      %513 = vmatprep.subr.bf16.mxu0 0
      %514 = vmatpush2.bf16.msra.mxu0 0
      %515 = vmatprep.mubr.bf16.mxu0 0
      %516 = vmatmul.mubr.bf16.gmra.mxu0 %v407
      %v517 = vpop.f32.mrf.mxu0
      %v518 = vadd.f32 %v453, %v517
      %v519 = vpop.f32.mrf.mxu0
      %v520 = vpop.f32.mrf.mxu0
      %v521 = vadd.f32 %v456, %v520
      %v522 = vpop.f32.mrf.mxu0
      %523 = vmatprep.mubr.bf16.mxu0 0
      %524 = vmatmul.mubr.bf16.gmra.mxu0 %v410
      %v525 = vpop.f32.mrf.mxu0
      %v526 = vadd.f32 %v461, %v525
      %v527 = vpop.f32.mrf.mxu0
      %v528 = vpop.f32.mrf.mxu0
      %v529 = vadd.f32 %v464, %v528
      %v530 = vpop.f32.mrf.mxu0
      %531 = vmatprep.mubr.bf16.mxu0 0
      %532 = vmatmul.mubr.bf16.gmra.mxu0 %v413
      %v533 = vpop.f32.mrf.mxu0
      %v534 = vadd.f32 %v469, %v533
      %v535 = vpop.f32.mrf.mxu0
      %v536 = vpop.f32.mrf.mxu0
      %v537 = vadd.f32 %v472, %v536
      %v538 = vpop.f32.mrf.mxu0
      %539 = vmatprep.mubr.bf16.mxu0 0
      %540 = vmatmul.mubr.bf16.gmra.mxu0 %v416
      %v541 = vpop.f32.mrf.mxu0
      %v542 = vadd.f32 %v477, %v541
      %v543 = vpop.f32.mrf.mxu0
      %v544 = vpop.f32.mrf.mxu0
      %v545 = vadd.f32 %v480, %v544
      %v546 = vpop.f32.mrf.mxu0
      %547 = vdwg.mxu0
      %v548 = vmax.f32 %v518, 0.0
      %v549 = vmax.f32 %v521, 0.0
      %v550 = vmax.f32 %v526, 0.0
      %v551 = vmax.f32 %v529, 0.0
      %v552 = vmax.f32 %v534, 0.0
      %v553 = vmax.f32 %v537, 0.0
      %v554 = vmax.f32 %v542, 0.0
      %v555 = vmax.f32 %v545, 0.0
      %vm556 = vcmask 523264
      %557 = vst.msk [vmem:[%s175] sm:$0xff] %vm556, %v548
      %558 = vst.msk [vmem:[%s175 + $0x8] sm:$0xff] %vm556, %v549
      %559 = vst.msk [vmem:[%s175 + $0x10] sm:$0xff] %vm556, %v550
      %560 = vst.msk [vmem:[%s175 + $0x18] sm:$0xff] %vm556, %v551
      %561 = vst.msk [vmem:[%s175 + $0x20] sm:$0xff] %vm556, %v552
      %562 = vst.msk [vmem:[%s175 + $0x28] sm:$0xff] %vm556, %v553
      %563 = vst.msk [vmem:[%s175 + $0x30] sm:$0xff] %vm556, %v554
      %564 = vst.msk [vmem:[%s175 + $0x38] sm:$0xff] %vm556, %v555
      %s565 = smul.u32 8, %s14
      %p566 = scmp.lt.s32.totalorder %s565, 15
      %s567 = scalar_select %p566, %s565, 15
      %s568 = smul.addr %s567, 8
      %s569 = scalar_lea.vmem %s3, %s568
      // Predicated region
      $region33: #{residual_feature_net.14} parent=31 // pred_check
        %p570 = pneg %p100
      $region34: #{residual_feature_net.14} parent=31 // pred_check_branch
        %572 = sbr.rel (%p570) target = $region36
      $region35: #{residual_feature_net.14} parent=31 // pred_region
        %s573 = smul.u32 8, %s14
      $region36: #{residual_feature_net.14} parent=31 // pred_fallthru
        _
    $region32: #{residual_feature_net.14} parent=5 // pred_fallthru
      _
    %p574 = scmp.le.s32.totalorder 2, %s9
    // Predicated region
    $region37: #{residual_feature_net.14} parent=5 // pred_check
      %p575 = pneg %p574
    $region38: #{residual_feature_net.14} parent=5 // pred_check_branch
      %577 = sbr.rel (%p575) target = $region40
    $region39: #{residual_feature_net.14} parent=5 // pred_region
      %s578 = ssub.s32 %s9, 2
      // Predicated region
      $region41: #{residual_feature_net.14} parent=39 // pred_check
        %p579 = pneg %p106
      $region42: #{residual_feature_net.14} parent=39 // pred_check_branch
        %581 = sbr.rel (%p579) target = $region44
      $region43: #{residual_feature_net.14} parent=39 // pred_region
        %s582 = smul.u32 8, %s15
        %p583 = scmp.lt.s32.totalorder %s582, 15
        %s584 = scalar_select %p583, %s582, 15
        %s585 = smul.addr %s584, 8
        %s586 = scalar_lea.vmem %s3, %s585
      $region44: #{residual_feature_net.14} parent=39 // pred_fallthru
        _
    $region40: #{residual_feature_net.14} parent=5 // pred_fallthru
      _
  $region6: #{residual_feature_net.14} parent=0 // loop_footer
    %s13 = sadd.s32 1, %s9
  $region7: #{residual_feature_net.14} parent=0 // loop_footer_branch
    %8 = sbr.rel target = $region3
  $region8: #{residual_feature_net.14} parent=0 // loop_exit
    _

// kernel: residual_feature_net.15
$region0: #{residual_feature_net.15}
  #allocation0 [shape = 'u32[]', space=smem, size = 0x4, offset = 0x4, fixed_abs, tag = 'smem constant byte address 0x4 - core index']
  #allocation1 [shape = 'u32[144,128]{1,0:T(1,128)}', space=vmem, size = 0x12000, scoped, tag = 'internal scratch']
  %s0 = inlined_call_operand.vmem [shape: f32[2,10,10,64], index: 0, kind: input, shape index: {}]
  %s1 = inlined_call_operand.vmem [shape: bf16[9,64,128], index: 1, kind: input, shape index: {}]
  %s2 = inlined_call_operand.vmem [shape: f32[1,128], index: 2, kind: input, shape index: {}]
  %s3 = inlined_call_operand.vmem [shape: f32[128,128], index: 3, kind: output, shape index: {}]
  %s4 = sld [smem:[#allocation0]]
  $region45: #{residual_feature_net.15} parent=0
    _
  %s6 = ssub.s32 1, %s4
  %s7 = scalar_select 0, %s6, %s4
  loop: start=0, step=1, limit=4
  $region2: #{residual_feature_net.15} parent=0 // loop_pre_header
    _
  $region3: #{residual_feature_net.15} parent=0 // loop_header
    %s9 = sphi 0, %s13
    %p10 = scmp.ge.s32.totalorder %s9, 4
    %s19 = sphi 0, %s21
    %s22 = sphi 0, %s19
    %s23 = sphi 0, %s22
    %s39 = sphi 0, %s23
    %s43 = sphi 0, %s43
    %s45 = sphi 0, %s43
    %s46 = sphi 0, %s45
    %s60 = sphi 0, %s46
    %s64 = sphi 0, %s64
    %s66 = sphi 0, %s64
    %s67 = sphi 0, %s66
    %s81 = sphi 0, %s67
    %s87 = sphi 0, %s89
    %s90 = sphi 0, %s87
    %s91 = sphi 0, %s90
    %s107 = sphi 0, %s91
  $region4: #{residual_feature_net.15} parent=0 // loop_header_branch
    %12 = sbr.rel (%p10) target = $region8
  $region5: #{residual_feature_net.15} parent=0 // loop_body
    %s14 = ssub.s32 %s9, 1
    %s15 = ssub.s32 %s9, 2
    %s16 = sadd.s32 %s9, 1
    %s17 = ssub.s32 %s9, %s16
    %p18 = scmp.eq.s32.totalorder %s17, 0
    %s20 = sadd.s32 %s19, 1
    %s21 = scalar_select %p18, %s19, %s20
    %p24 = pneg %p18
    %p25 = scmp.eq.s32.totalorder %s9, 1
    %p26 = por %p24, %p25
    %p27 = scmp.ne.s32.totalorder %s19, %s22
    %p28 = scmp.eq.s32.totalorder %s9, 0
    %p29 = por %p27, %p28
    %p30 = scmp.ne.s32.totalorder %s19, %s22
    %p31 = scmp.eq.s32.totalorder %s14, 1
    %p32 = por %p30, %p31
    %p33 = scmp.ne.s32.totalorder %s22, %s23
    %p34 = scmp.eq.s32.totalorder %s14, 0
    %p35 = por %p33, %p34
    %p36 = scmp.ne.s32.totalorder %s22, %s23
    %p37 = scmp.eq.s32.totalorder %s15, 1
    %p38 = por %p36, %p37
    %p40 = scmp.ne.s32.totalorder %s23, %s39
    %p41 = scmp.eq.s32.totalorder %s15, 0
    %p42 = por %p40, %p41
    %s44 = sadd.s32 %s43, 1
    %p47 = scmp.eq.s32.totalorder %s9, 1
    %p48 = scmp.ne.s32.totalorder %s43, %s45
    %p49 = scmp.eq.s32.totalorder %s9, 0
    %p50 = por %p48, %p49
    %p51 = scmp.ne.s32.totalorder %s43, %s45
    %p52 = scmp.eq.s32.totalorder %s14, 1
    %p53 = por %p51, %p52
    %p54 = scmp.ne.s32.totalorder %s45, %s46
    %p55 = scmp.eq.s32.totalorder %s14, 0
    %p56 = por %p54, %p55
    %p57 = scmp.ne.s32.totalorder %s45, %s46
    %p58 = scmp.eq.s32.totalorder %s15, 1
    %p59 = por %p57, %p58
    %p61 = scmp.ne.s32.totalorder %s46, %s60
    %p62 = scmp.eq.s32.totalorder %s15, 0
    %p63 = por %p61, %p62
    %s65 = sadd.s32 %s64, 1
    %p68 = scmp.eq.s32.totalorder %s9, 1
    %p69 = scmp.ne.s32.totalorder %s64, %s66
    %p70 = scmp.eq.s32.totalorder %s9, 0
    %p71 = por %p69, %p70
    %p72 = scmp.ne.s32.totalorder %s64, %s66
    %p73 = scmp.eq.s32.totalorder %s14, 1
    %p74 = por %p72, %p73
    %p75 = scmp.ne.s32.totalorder %s66, %s67
    %p76 = scmp.eq.s32.totalorder %s14, 0
    %p77 = por %p75, %p76
    %p78 = scmp.ne.s32.totalorder %s66, %s67
    %p79 = scmp.eq.s32.totalorder %s15, 1
    %p80 = por %p78, %p79
    %p82 = scmp.ne.s32.totalorder %s67, %s81
    %p83 = scmp.eq.s32.totalorder %s15, 0
    %p84 = por %p82, %p83
    %s85 = ssub.s32 %s9, %s16
    %p86 = scmp.eq.s32.totalorder %s85, 0
    %s88 = sadd.s32 %s87, 1
    %s89 = scalar_select %p86, %s87, %s88
    %p92 = pneg %p86
    %p93 = scmp.eq.s32.totalorder %s9, 1
    %p94 = por %p92, %p93
    %p95 = scmp.ne.s32.totalorder %s87, %s90
    %p96 = scmp.eq.s32.totalorder %s9, 0
    %p97 = por %p95, %p96
    %p98 = scmp.ne.s32.totalorder %s87, %s90
    %p99 = scmp.eq.s32.totalorder %s14, 1
    %p100 = por %p98, %p99
    %p101 = scmp.ne.s32.totalorder %s90, %s91
    %p102 = scmp.eq.s32.totalorder %s14, 0
    %p103 = por %p101, %p102
    %p104 = scmp.ne.s32.totalorder %s90, %s91
    %p105 = scmp.eq.s32.totalorder %s15, 1
    %p106 = por %p104, %p105
    %p108 = scmp.ne.s32.totalorder %s91, %s107
    %p109 = scmp.eq.s32.totalorder %s15, 0
    %p110 = por %p108, %p109
    %p111 = scmp.le.s32.totalorder 1, %s9
    %p112 = scmp.lt.s32.totalorder %s9, 3
    %p113 = pnand %p111, %p112
    %p114 = pneg %p113
    // Predicated region
    $region9: #{residual_feature_net.15} parent=5 // pred_check
      _
    $region10: #{residual_feature_net.15} parent=5 // pred_check_branch
      %116 = sbr.rel (%p113) target = $region12
    $region11: #{residual_feature_net.15} parent=5 // pred_region
      %s117 = ssub.s32 %s9, 1
      // Predicated region
      $region13: #{residual_feature_net.15} parent=11 // pred_check
        %p118 = pneg %p56
      $region14: #{residual_feature_net.15} parent=11 // pred_check_branch
        %120 = sbr.rel (%p118) target = $region16
      $region15: #{residual_feature_net.15} parent=11 // pred_region
        _
      $region16: #{residual_feature_net.15} parent=11 // pred_fallthru
        _
      // Predicated region
      $region17: #{residual_feature_net.15} parent=11 // pred_check
        %p121 = pneg %p77
      $region18: #{residual_feature_net.15} parent=11 // pred_check_branch
        %123 = sbr.rel (%p121) target = $region20
      $region19: #{residual_feature_net.15} parent=11 // pred_region
        _
      $region20: #{residual_feature_net.15} parent=11 // pred_fallthru
        _
    $region12: #{residual_feature_net.15} parent=5 // pred_fallthru
      _
    %p124 = scmp.lt.s32.totalorder %s9, 2
    // Predicated region
    $region21: #{residual_feature_net.15} parent=5 // pred_check
      %p125 = pneg %p124
    $region22: #{residual_feature_net.15} parent=5 // pred_check_branch
      %127 = sbr.rel (%p125) target = $region24
    $region23: #{residual_feature_net.15} parent=5 // pred_region
      // Predicated region
      $region25: #{residual_feature_net.15} parent=23 // pred_check
        %p128 = pneg %p29
      $region26: #{residual_feature_net.15} parent=23 // pred_check_branch
        %130 = sbr.rel (%p128) target = $region28
      $region27: #{residual_feature_net.15} parent=23 // pred_region
        %p131 = scmp.lt.s32.totalorder %s9, 1
        %s132 = scalar_select %p131, %s9, 1
        %s133 = smul.addr %s132, 20
        %s134 = smul.addr %s133, 8
        %s135 = scalar_lea.vmem %s0, %s134
      $region28: #{residual_feature_net.15} parent=23 // pred_fallthru
        _
    $region24: #{residual_feature_net.15} parent=5 // pred_fallthru
      _
    %p136 = scmp.le.s32.totalorder 1, %s9
    %p137 = scmp.lt.s32.totalorder %s9, 3
    %p138 = pnand %p136, %p137
    %p139 = pneg %p138
    // Predicated region
    $region29: #{residual_feature_net.15} parent=5 // pred_check
      _
    $region30: #{residual_feature_net.15} parent=5 // pred_check_branch
      %141 = sbr.rel (%p138) target = $region32
    $region31: #{residual_feature_net.15} parent=5 // pred_region
      %s142 = ssub.s32 %s9, 1
      %p143 = scmp.lt.s32.totalorder %s14, 1
      %s144 = scalar_select %p143, %s14, 1
      %s145 = smul.addr %s144, 20
      %s146 = smul.addr %s145, 8
      %s147 = scalar_lea.vmem %s0, %s146
      %p148 = pneg %p35
      %p149 = pneg %p32
      %p150 = pneg %p56
      %p151 = pneg %p53
      %p152 = pneg %p77
      %p153 = pneg %p74
      %p154 = pneg %p103
      %p155 = pneg %p100
      %s156 = smul.u32 8, %s14
      %p157 = scmp.lt.s32.totalorder %s156, 15
      %s158 = scalar_select %p157, %s156, 15
      %s159 = smul.addr %s158, 8
      %s160 = scalar_lea.vmem %s3, %s159
      %p161 = scmp.lt.s32.totalorder %s14, 1
      %s162 = scalar_select %p161, %s14, 1
      %s163 = smul.addr %s162, 20
      %s164 = smul.addr %s163, 8
      %s165 = scalar_lea.vmem %s0, %s164
      %s166 = smul.u32 8, %s14
      %p167 = scmp.lt.s32.totalorder %s166, 15
      %s168 = scalar_select %p167, %s166, 15
      %s169 = smul.addr %s168, 8
      %s170 = scalar_lea.vmem %s3, %s169
      %s171 = smul.u32 8, %s14
      %v173 = vld [vmem:[%s165] sm:$0xff]
      %v174 = vld [vmem:[%s165 + $0x8] sm:$0x3]
      %v175 = vld [vmem:[%s165 + $0x10] sm:$0xff]
      %v176 = vld [vmem:[%s165 + $0x18] sm:$0x3]
      %v177 = vld [vmem:[%s165 + $0x20] sm:$0xff]
      %v178 = vld [vmem:[%s165 + $0x28] sm:$0x3]
      %v179 = vld [vmem:[%s165 + $0x30] sm:$0xff]
      %v180 = vld [vmem:[%s165 + $0x38] sm:$0x3]
      %v181 = vld [vmem:[%s165 + $0x40] sm:$0xff]
      %v182 = vld [vmem:[%s165 + $0x48] sm:$0x3]
      %v183 = vld [vmem:[%s165 + $0x50] sm:$0xff]
      %v184 = vld [vmem:[%s165 + $0x58] sm:$0x3]
      %v185 = vld [vmem:[%s165 + $0x60] sm:$0xff]
      %v186 = vld [vmem:[%s165 + $0x68] sm:$0x3]
      %v187 = vld [vmem:[%s165 + $0x70] sm:$0xff]
      %v188 = vld [vmem:[%s165 + $0x78] sm:$0x3]
      %v189 = vld [vmem:[%s165 + $0x80] sm:$0xff]
      %v190 = vld [vmem:[%s165 + $0x88] sm:$0x3]
      %v191 = vld [vmem:[%s165 + $0x90] sm:$0xff]
      %v192 = vld [vmem:[%s165 + $0x98] sm:$0x3]
      %v193 = vpack.c.bf16 %v175, %v173
      %v194 = vpack.c.bf16 %v179, %v177
      %v195 = vpack.c.bf16 %v183, %v181
      %v196 = vpack.c.bf16 %v187, %v185
      %v197 = vld [vmem:[%s1] sm:$0xf]
      %v198 = vld [vmem:[%s1 + $0x4] sm:$0xf]
      %v199 = vld [vmem:[%s1 + $0x8] sm:$0xf]
      %v200 = vld [vmem:[%s1 + $0xc] sm:$0xf]
      %v201 = vld [vmem:[%s1 + $0x10] sm:$0xf]
      %v202 = vld [vmem:[%s1 + $0x14] sm:$0xf]
      %v203 = vld [vmem:[%s1 + $0x18] sm:$0xf]
      %v204 = vld [vmem:[%s1 + $0x1c] sm:$0xf]
      %vm221 = vcmask 1046528
      %v222 = vrot.slane %v173, 1
      %v223 = vrot.slane %v174, 1
      %v224 = vsel %vm221, %v222, %v223
      %v225 = vrot.slane %v175, 1
      %v226 = vrot.slane %v176, 1
      %v227 = vsel %vm221, %v225, %v226
      %v228 = vrot.slane %v177, 1
      %v229 = vrot.slane %v178, 1
      %v230 = vsel %vm221, %v228, %v229
      %v231 = vrot.slane %v179, 1
      %v232 = vrot.slane %v180, 1
      %v233 = vsel %vm221, %v231, %v232
      %v234 = vrot.slane %v181, 1
      %v235 = vrot.slane %v182, 1
      %v236 = vsel %vm221, %v234, %v235
      %v237 = vrot.slane %v183, 1
      %v238 = vrot.slane %v184, 1
      %v239 = vsel %vm221, %v237, %v238
      %v240 = vrot.slane %v185, 1
      %v241 = vrot.slane %v186, 1
      %v242 = vsel %vm221, %v240, %v241
      %v243 = vrot.slane %v187, 1
      %v244 = vrot.slane %v188, 1
      %v245 = vsel %vm221, %v243, %v244
      %v254 = vpack.c.bf16 %v227, %v224
      %v255 = vpack.c.bf16 %v233, %v230
      %v256 = vpack.c.bf16 %v239, %v236
      %v257 = vpack.c.bf16 %v245, %v242
      %s258 = scalar_lea.vmem %s1, 32
      %v259 = vld [vmem:[%s258] sm:$0xf]
      %v260 = vld [vmem:[%s258 + $0x4] sm:$0xf]
      %v261 = vld [vmem:[%s258 + $0x8] sm:$0xf]
      %v262 = vld [vmem:[%s258 + $0xc] sm:$0xf]
      %v263 = vld [vmem:[%s258 + $0x10] sm:$0xf]
      %v264 = vld [vmem:[%s258 + $0x14] sm:$0xf]
      %v265 = vld [vmem:[%s258 + $0x18] sm:$0xf]
      %v266 = vld [vmem:[%s258 + $0x1c] sm:$0xf]
      %v275 = vunpack.c.l.b16 %v259
      %v276 = vunpack.c.l.b16 %v260
      %v277 = vunpack.c.l.b16 %v261
      %v278 = vunpack.c.l.b16 %v262
      %v279 = vunpack.c.l.b16 %v263
      %v280 = vunpack.c.l.b16 %v264
      %v281 = vunpack.c.l.b16 %v265
      %v282 = vunpack.c.l.b16 %v266
      %v283 = vpack.c.b16 %v276, %v275
      %v284 = vpack.c.b16 %v278, %v277
      %v285 = vpack.c.b16 %v280, %v279
      %v286 = vpack.c.b16 %v282, %v281
      %vm291 = vcmask 523264
      %v293 = vsel %vm291, %v254, 0
      %v296 = vsel %vm291, %v255, 0
      %v299 = vsel %vm291, %v256, 0
      %v302 = vsel %vm291, %v257, 0
      %304 = vmatprep.subr.bf16.mxu0 0
      %305 = vmatpush1.bf16.msra.mxu0 0
      %306 = vmatprep.subr.bf16.mxu0 0
      %307 = vmatpush1.bf16.msra.mxu0 0
      %308 = vmatprep.subr.bf16.mxu0 0
      %309 = vmatpush1.bf16.msra.mxu0 0
      %310 = vmatprep.subr.bf16.mxu0 0
      %311 = vmatpush1.bf16.msra.mxu0 0
      %312 = vmatprep.subr.bf16.mxu0 0
      %313 = vmatpush1.bf16.msra.mxu0 %v286
      %314 = vmatprep.subr.bf16.mxu0 0
      %315 = vmatpush1.bf16.msra.mxu0 %v285
      %316 = vmatprep.subr.bf16.mxu0 0
      %317 = vmatpush1.bf16.msra.mxu0 %v284
      %318 = vmatprep.subr.bf16.mxu0 0
      %319 = vmatpush1.bf16.msra.mxu0 %v283
      %320 = vmatprep.subr.bf16.mxu0 0
      %321 = vmatpush2.bf16.msra.mxu0 0
      %322 = vmatprep.subr.bf16.mxu0 0
      %323 = vmatpush2.bf16.msra.mxu0 0
      %324 = vmatprep.subr.bf16.mxu0 0
      %325 = vmatpush2.bf16.msra.mxu0 0
      %326 = vmatprep.subr.bf16.mxu0 0
      %327 = vmatpush2.bf16.msra.mxu0 0
      %328 = vmatprep.subr.bf16.mxu0 0
      %329 = vmatpush2.bf16.msra.mxu0 0
      %330 = vmatprep.subr.bf16.mxu0 0
      %331 = vmatpush2.bf16.msra.mxu0 0
      %332 = vmatprep.subr.bf16.mxu0 0
      %333 = vmatpush2.bf16.msra.mxu0 0
      %334 = vmatprep.subr.bf16.mxu0 0
      %335 = vmatpush2.bf16.msra.mxu0 0
      %336 = vmatprep.mubr.bf16.mxu0 0
      %337 = vmatmul.mubr.bf16.gmra.mxu0 %v293
      %v338 = vpop.f32.mrf.mxu0
      %v339 = vadd.f32 0.0, %v338
      %v340 = vpop.f32.mrf.mxu0
      %v341 = vpop.f32.mrf.mxu0
      %v342 = vadd.f32 0.0, %v341
      %v343 = vpop.f32.mrf.mxu0
      %344 = vmatprep.mubr.bf16.mxu0 0
      %345 = vmatmul.mubr.bf16.gmra.mxu0 %v296
      %v346 = vpop.f32.mrf.mxu0
      %v347 = vadd.f32 0.0, %v346
      %v348 = vpop.f32.mrf.mxu0
      %v349 = vpop.f32.mrf.mxu0
      %v350 = vadd.f32 0.0, %v349
      %v351 = vpop.f32.mrf.mxu0
      %352 = vmatprep.mubr.bf16.mxu0 0
      %353 = vmatmul.mubr.bf16.gmra.mxu0 %v299
      %v354 = vpop.f32.mrf.mxu0
      %v355 = vadd.f32 0.0, %v354
      %v356 = vpop.f32.mrf.mxu0
      %v357 = vpop.f32.mrf.mxu0
      %v358 = vadd.f32 0.0, %v357
      %v359 = vpop.f32.mrf.mxu0
      %360 = vmatprep.mubr.bf16.mxu0 0
      %361 = vmatmul.mubr.bf16.gmra.mxu0 %v302
      %v362 = vpop.f32.mrf.mxu0
      %v363 = vadd.f32 0.0, %v362
      %v364 = vpop.f32.mrf.mxu0
      %v365 = vpop.f32.mrf.mxu0
      %v366 = vadd.f32 0.0, %v365
      %v367 = vpop.f32.mrf.mxu0
      %368 = vdwg.mxu0
      %v377 = vunpack.c.l.b16 %v197
      %v378 = vunpack.c.l.b16 %v198
      %v379 = vunpack.c.l.b16 %v199
      %v380 = vunpack.c.l.b16 %v200
      %v381 = vunpack.c.l.b16 %v201
      %v382 = vunpack.c.l.b16 %v202
      %v383 = vunpack.c.l.b16 %v203
      %v384 = vunpack.c.l.b16 %v204
      %v385 = vpack.c.b16 %v378, %v377
      %v386 = vpack.c.b16 %v380, %v379
      %v387 = vpack.c.b16 %v382, %v381
      %v388 = vpack.c.b16 %v384, %v383
      %v394 = vsel %vm291, %v193, 0
      %v397 = vsel %vm291, %v194, 0
      %v400 = vsel %vm291, %v195, 0
      %v403 = vsel %vm291, %v196, 0
      %405 = vmatprep.subr.bf16.mxu0 0
      %406 = vmatpush1.bf16.msra.mxu0 0
      %407 = vmatprep.subr.bf16.mxu0 0
      %408 = vmatpush1.bf16.msra.mxu0 0
      %409 = vmatprep.subr.bf16.mxu0 0
      %410 = vmatpush1.bf16.msra.mxu0 0
      %411 = vmatprep.subr.bf16.mxu0 0
      %412 = vmatpush1.bf16.msra.mxu0 0
      %413 = vmatprep.subr.bf16.mxu0 0
      %414 = vmatpush1.bf16.msra.mxu0 %v388
      %415 = vmatprep.subr.bf16.mxu0 0
      %416 = vmatpush1.bf16.msra.mxu0 %v387
      %417 = vmatprep.subr.bf16.mxu0 0
      %418 = vmatpush1.bf16.msra.mxu0 %v386
      %419 = vmatprep.subr.bf16.mxu0 0
      %420 = vmatpush1.bf16.msra.mxu0 %v385
      %421 = vmatprep.subr.bf16.mxu0 0
      %422 = vmatpush2.bf16.msra.mxu0 0
      %423 = vmatprep.subr.bf16.mxu0 0
      %424 = vmatpush2.bf16.msra.mxu0 0
      %425 = vmatprep.subr.bf16.mxu0 0
      %426 = vmatpush2.bf16.msra.mxu0 0
      %427 = vmatprep.subr.bf16.mxu0 0
      %428 = vmatpush2.bf16.msra.mxu0 0
      %429 = vmatprep.subr.bf16.mxu0 0
      %430 = vmatpush2.bf16.msra.mxu0 0
      %431 = vmatprep.subr.bf16.mxu0 0
      %432 = vmatpush2.bf16.msra.mxu0 0
      %433 = vmatprep.subr.bf16.mxu0 0
      %434 = vmatpush2.bf16.msra.mxu0 0
      %435 = vmatprep.subr.bf16.mxu0 0
      %436 = vmatpush2.bf16.msra.mxu0 0
      %437 = vmatprep.mubr.bf16.mxu0 0
      %438 = vmatmul.mubr.bf16.gmra.mxu0 %v394
      %v439 = vpop.f32.mrf.mxu0
      %v440 = vadd.f32 %v339, %v439
      %v441 = vpop.f32.mrf.mxu0
      %v442 = vpop.f32.mrf.mxu0
      %v443 = vadd.f32 %v342, %v442
      %v444 = vpop.f32.mrf.mxu0
      %445 = vmatprep.mubr.bf16.mxu0 0
      %446 = vmatmul.mubr.bf16.gmra.mxu0 %v397
      %v447 = vpop.f32.mrf.mxu0
      %v448 = vadd.f32 %v347, %v447
      %v449 = vpop.f32.mrf.mxu0
      %v450 = vpop.f32.mrf.mxu0
      %v451 = vadd.f32 %v350, %v450
      %v452 = vpop.f32.mrf.mxu0
      %453 = vmatprep.mubr.bf16.mxu0 0
      %454 = vmatmul.mubr.bf16.gmra.mxu0 %v400
      %v455 = vpop.f32.mrf.mxu0
      %v456 = vadd.f32 %v355, %v455
      %v457 = vpop.f32.mrf.mxu0
      %v458 = vpop.f32.mrf.mxu0
      %v459 = vadd.f32 %v358, %v458
      %v460 = vpop.f32.mrf.mxu0
      %461 = vmatprep.mubr.bf16.mxu0 0
      %462 = vmatmul.mubr.bf16.gmra.mxu0 %v403
      %v463 = vpop.f32.mrf.mxu0
      %v464 = vadd.f32 %v363, %v463
      %v465 = vpop.f32.mrf.mxu0
      %v466 = vpop.f32.mrf.mxu0
      %v467 = vadd.f32 %v366, %v466
      %v468 = vpop.f32.mrf.mxu0
      %469 = vdwg.mxu0
      %vm470 = vcmask 1045504
      %v471 = vrot.slane %v173, 2
      %v472 = vrot.slane %v174, 2
      %v473 = vsel %vm470, %v471, %v472
      %v474 = vrot.slane %v175, 2
      %v475 = vrot.slane %v176, 2
      %v476 = vsel %vm470, %v474, %v475
      %v477 = vrot.slane %v177, 2
      %v478 = vrot.slane %v178, 2
      %v479 = vsel %vm470, %v477, %v478
      %v480 = vrot.slane %v179, 2
      %v481 = vrot.slane %v180, 2
      %v482 = vsel %vm470, %v480, %v481
      %v483 = vrot.slane %v181, 2
      %v484 = vrot.slane %v182, 2
      %v485 = vsel %vm470, %v483, %v484
      %v486 = vrot.slane %v183, 2
      %v487 = vrot.slane %v184, 2
      %v488 = vsel %vm470, %v486, %v487
      %v489 = vrot.slane %v185, 2
      %v490 = vrot.slane %v186, 2
      %v491 = vsel %vm470, %v489, %v490
      %v492 = vrot.slane %v187, 2
      %v493 = vrot.slane %v188, 2
      %v494 = vsel %vm470, %v492, %v493
      %v503 = vpack.c.bf16 %v476, %v473
      %v504 = vpack.c.bf16 %v482, %v479
      %v505 = vpack.c.bf16 %v488, %v485
      %v506 = vpack.c.bf16 %v494, %v491
      %s507 = scalar_lea.vmem %s1, 64
      %v508 = vld [vmem:[%s507] sm:$0xf]
      %v509 = vld [vmem:[%s507 + $0x4] sm:$0xf]
      %v510 = vld [vmem:[%s507 + $0x8] sm:$0xf]
      %v511 = vld [vmem:[%s507 + $0xc] sm:$0xf]
      %v512 = vld [vmem:[%s507 + $0x10] sm:$0xf]
      %v513 = vld [vmem:[%s507 + $0x14] sm:$0xf]
      %v514 = vld [vmem:[%s507 + $0x18] sm:$0xf]
      %v515 = vld [vmem:[%s507 + $0x1c] sm:$0xf]
      %v524 = vunpack.c.l.b16 %v508
      %v525 = vunpack.c.l.b16 %v509
      %v526 = vunpack.c.l.b16 %v510
      %v527 = vunpack.c.l.b16 %v511
      %v528 = vunpack.c.l.b16 %v512
      %v529 = vunpack.c.l.b16 %v513
      %v530 = vunpack.c.l.b16 %v514
      %v531 = vunpack.c.l.b16 %v515
      %v532 = vpack.c.b16 %v525, %v524
      %v533 = vpack.c.b16 %v527, %v526
      %v534 = vpack.c.b16 %v529, %v528
      %v535 = vpack.c.b16 %v531, %v530
      %v541 = vsel %vm291, %v503, 0
      %v544 = vsel %vm291, %v504, 0
      %v547 = vsel %vm291, %v505, 0
      %v550 = vsel %vm291, %v506, 0
      %552 = vmatprep.subr.bf16.mxu0 0
      %553 = vmatpush1.bf16.msra.mxu0 0
      %554 = vmatprep.subr.bf16.mxu0 0
      %555 = vmatpush1.bf16.msra.mxu0 0
      %556 = vmatprep.subr.bf16.mxu0 0
      %557 = vmatpush1.bf16.msra.mxu0 0
      %558 = vmatprep.subr.bf16.mxu0 0
      %559 = vmatpush1.bf16.msra.mxu0 0
      %560 = vmatprep.subr.bf16.mxu0 0
      %561 = vmatpush1.bf16.msra.mxu0 %v535
      %562 = vmatprep.subr.bf16.mxu0 0
      %563 = vmatpush1.bf16.msra.mxu0 %v534
      %564 = vmatprep.subr.bf16.mxu0 0
      %565 = vmatpush1.bf16.msra.mxu0 %v533
      %566 = vmatprep.subr.bf16.mxu0 0
      %567 = vmatpush1.bf16.msra.mxu0 %v532
      %568 = vmatprep.subr.bf16.mxu0 0
      %569 = vmatpush2.bf16.msra.mxu0 0
      %570 = vmatprep.subr.bf16.mxu0 0
      %571 = vmatpush2.bf16.msra.mxu0 0
      %572 = vmatprep.subr.bf16.mxu0 0
      %573 = vmatpush2.bf16.msra.mxu0 0
      %574 = vmatprep.subr.bf16.mxu0 0
      %575 = vmatpush2.bf16.msra.mxu0 0
      %576 = vmatprep.subr.bf16.mxu0 0
      %577 = vmatpush2.bf16.msra.mxu0 0
      %578 = vmatprep.subr.bf16.mxu0 0
      %579 = vmatpush2.bf16.msra.mxu0 0
      %580 = vmatprep.subr.bf16.mxu0 0
      %581 = vmatpush2.bf16.msra.mxu0 0
      %582 = vmatprep.subr.bf16.mxu0 0
      %583 = vmatpush2.bf16.msra.mxu0 0
      %584 = vmatprep.mubr.bf16.mxu0 0
      %585 = vmatmul.mubr.bf16.gmra.mxu0 %v541
      %v586 = vpop.f32.mrf.mxu0
      %v587 = vadd.f32 0.0, %v586
      %v588 = vpop.f32.mrf.mxu0
      %v589 = vpop.f32.mrf.mxu0
      %v590 = vadd.f32 0.0, %v589
      %v591 = vpop.f32.mrf.mxu0
      %592 = vmatprep.mubr.bf16.mxu0 0
      %593 = vmatmul.mubr.bf16.gmra.mxu0 %v544
      %v594 = vpop.f32.mrf.mxu0
      %v595 = vadd.f32 0.0, %v594
      %v596 = vpop.f32.mrf.mxu0
      %v597 = vpop.f32.mrf.mxu0
      %v598 = vadd.f32 0.0, %v597
      %v599 = vpop.f32.mrf.mxu0
      %600 = vmatprep.mubr.bf16.mxu0 0
      %601 = vmatmul.mubr.bf16.gmra.mxu0 %v547
      %v602 = vpop.f32.mrf.mxu0
      %v603 = vadd.f32 0.0, %v602
      %v604 = vpop.f32.mrf.mxu0
      %v605 = vpop.f32.mrf.mxu0
      %v606 = vadd.f32 0.0, %v605
      %v607 = vpop.f32.mrf.mxu0
      %608 = vmatprep.mubr.bf16.mxu0 0
      %609 = vmatmul.mubr.bf16.gmra.mxu0 %v550
      %v610 = vpop.f32.mrf.mxu0
      %v611 = vadd.f32 0.0, %v610
      %v612 = vpop.f32.mrf.mxu0
      %v613 = vpop.f32.mrf.mxu0
      %v614 = vadd.f32 0.0, %v613
      %v615 = vpop.f32.mrf.mxu0
      %616 = vdwg.mxu0
      %v617 = vadd.f32 %v440, %v587
      %v618 = vadd.f32 %v443, %v590
      %v619 = vadd.f32 %v448, %v595
      %v620 = vadd.f32 %v451, %v598
      %v621 = vadd.f32 %v456, %v603
      %v622 = vadd.f32 %v459, %v606
      %v623 = vadd.f32 %v464, %v611
      %v624 = vadd.f32 %v467, %v614
      %v625 = vpack.c.bf16 %v177, %v175
      %v626 = vpack.c.bf16 %v181, %v179
      %v627 = vpack.c.bf16 %v185, %v183
      %v628 = vpack.c.bf16 %v189, %v187
      %s629 = scalar_lea.vmem %s1, 96
      %v630 = vld [vmem:[%s629] sm:$0xf]
      %v631 = vld [vmem:[%s629 + $0x4] sm:$0xf]
      %v632 = vld [vmem:[%s629 + $0x8] sm:$0xf]
      %v633 = vld [vmem:[%s629 + $0xc] sm:$0xf]
      %v634 = vld [vmem:[%s629 + $0x10] sm:$0xf]
      %v635 = vld [vmem:[%s629 + $0x14] sm:$0xf]
      %v636 = vld [vmem:[%s629 + $0x18] sm:$0xf]
      %v637 = vld [vmem:[%s629 + $0x1c] sm:$0xf]
      %v646 = vunpack.c.l.b16 %v630
      %v647 = vunpack.c.l.b16 %v631
      %v648 = vunpack.c.l.b16 %v632
      %v649 = vunpack.c.l.b16 %v633
      %v650 = vunpack.c.l.b16 %v634
      %v651 = vunpack.c.l.b16 %v635
      %v652 = vunpack.c.l.b16 %v636
      %v653 = vunpack.c.l.b16 %v637
      %v654 = vpack.c.b16 %v647, %v646
      %v655 = vpack.c.b16 %v649, %v648
      %v656 = vpack.c.b16 %v651, %v650
      %v657 = vpack.c.b16 %v653, %v652
      %v663 = vsel %vm291, %v625, 0
      %v666 = vsel %vm291, %v626, 0
      %v669 = vsel %vm291, %v627, 0
      %v672 = vsel %vm291, %v628, 0
      %674 = vmatprep.subr.bf16.mxu0 0
      %675 = vmatpush1.bf16.msra.mxu0 0
      %676 = vmatprep.subr.bf16.mxu0 0
      %677 = vmatpush1.bf16.msra.mxu0 0
      %678 = vmatprep.subr.bf16.mxu0 0
      %679 = vmatpush1.bf16.msra.mxu0 0
      %680 = vmatprep.subr.bf16.mxu0 0
      %681 = vmatpush1.bf16.msra.mxu0 0
      %682 = vmatprep.subr.bf16.mxu0 0
      %683 = vmatpush1.bf16.msra.mxu0 %v657
      %684 = vmatprep.subr.bf16.mxu0 0
      %685 = vmatpush1.bf16.msra.mxu0 %v656
      %686 = vmatprep.subr.bf16.mxu0 0
      %687 = vmatpush1.bf16.msra.mxu0 %v655
      %688 = vmatprep.subr.bf16.mxu0 0
      %689 = vmatpush1.bf16.msra.mxu0 %v654
      %690 = vmatprep.subr.bf16.mxu0 0
      %691 = vmatpush2.bf16.msra.mxu0 0
      %692 = vmatprep.subr.bf16.mxu0 0
      %693 = vmatpush2.bf16.msra.mxu0 0
      %694 = vmatprep.subr.bf16.mxu0 0
      %695 = vmatpush2.bf16.msra.mxu0 0
      %696 = vmatprep.subr.bf16.mxu0 0
      %697 = vmatpush2.bf16.msra.mxu0 0
      %698 = vmatprep.subr.bf16.mxu0 0
      %699 = vmatpush2.bf16.msra.mxu0 0
      %700 = vmatprep.subr.bf16.mxu0 0
      %701 = vmatpush2.bf16.msra.mxu0 0
      %702 = vmatprep.subr.bf16.mxu0 0
      %703 = vmatpush2.bf16.msra.mxu0 0
      %704 = vmatprep.subr.bf16.mxu0 0
      %705 = vmatpush2.bf16.msra.mxu0 0
      %706 = vmatprep.mubr.bf16.mxu0 0
      %707 = vmatmul.mubr.bf16.gmra.mxu0 %v663
      %v708 = vpop.f32.mrf.mxu0
      %v709 = vadd.f32 0.0, %v708
      %v710 = vpop.f32.mrf.mxu0
      %v711 = vpop.f32.mrf.mxu0
      %v712 = vadd.f32 0.0, %v711
      %v713 = vpop.f32.mrf.mxu0
      %714 = vmatprep.mubr.bf16.mxu0 0
      %715 = vmatmul.mubr.bf16.gmra.mxu0 %v666
      %v716 = vpop.f32.mrf.mxu0
      %v717 = vadd.f32 0.0, %v716
      %v718 = vpop.f32.mrf.mxu0
      %v719 = vpop.f32.mrf.mxu0
      %v720 = vadd.f32 0.0, %v719
      %v721 = vpop.f32.mrf.mxu0
      %722 = vmatprep.mubr.bf16.mxu0 0
      %723 = vmatmul.mubr.bf16.gmra.mxu0 %v669
      %v724 = vpop.f32.mrf.mxu0
      %v725 = vadd.f32 0.0, %v724
      %v726 = vpop.f32.mrf.mxu0
      %v727 = vpop.f32.mrf.mxu0
      %v728 = vadd.f32 0.0, %v727
      %v729 = vpop.f32.mrf.mxu0
      %730 = vmatprep.mubr.bf16.mxu0 0
      %731 = vmatmul.mubr.bf16.gmra.mxu0 %v672
      %v732 = vpop.f32.mrf.mxu0
      %v733 = vadd.f32 0.0, %v732
      %v734 = vpop.f32.mrf.mxu0
      %v735 = vpop.f32.mrf.mxu0
      %v736 = vadd.f32 0.0, %v735
      %v737 = vpop.f32.mrf.mxu0
      %738 = vdwg.mxu0
      %v739 = vadd.f32 %v617, %v709
      %v740 = vadd.f32 %v618, %v712
      %v741 = vadd.f32 %v619, %v717
      %v742 = vadd.f32 %v620, %v720
      %v743 = vadd.f32 %v621, %v725
      %v744 = vadd.f32 %v622, %v728
      %v745 = vadd.f32 %v623, %v733
      %v746 = vadd.f32 %v624, %v736
      %v749 = vrot.slane %v189, 1
      %v750 = vrot.slane %v190, 1
      %v751 = vsel %vm221, %v749, %v750
      %v753 = vpack.c.bf16 %v230, %v227
      %v754 = vpack.c.bf16 %v236, %v233
      %v755 = vpack.c.bf16 %v242, %v239
      %v756 = vpack.c.bf16 %v751, %v245
      %s757 = scalar_lea.vmem %s1, 128
      %v758 = vld [vmem:[%s757] sm:$0xf]
      %v759 = vld [vmem:[%s757 + $0x4] sm:$0xf]
      %v760 = vld [vmem:[%s757 + $0x8] sm:$0xf]
      %v761 = vld [vmem:[%s757 + $0xc] sm:$0xf]
      %v762 = vld [vmem:[%s757 + $0x10] sm:$0xf]
      %v763 = vld [vmem:[%s757 + $0x14] sm:$0xf]
      %v764 = vld [vmem:[%s757 + $0x18] sm:$0xf]
      %v765 = vld [vmem:[%s757 + $0x1c] sm:$0xf]
      %v774 = vunpack.c.l.b16 %v758
      %v775 = vunpack.c.l.b16 %v759
      %v776 = vunpack.c.l.b16 %v760
      %v777 = vunpack.c.l.b16 %v761
      %v778 = vunpack.c.l.b16 %v762
      %v779 = vunpack.c.l.b16 %v763
      %v780 = vunpack.c.l.b16 %v764
      %v781 = vunpack.c.l.b16 %v765
      %v782 = vpack.c.b16 %v775, %v774
      %v783 = vpack.c.b16 %v777, %v776
      %v784 = vpack.c.b16 %v779, %v778
      %v785 = vpack.c.b16 %v781, %v780
      %v791 = vsel %vm291, %v753, 0
      %v794 = vsel %vm291, %v754, 0
      %v797 = vsel %vm291, %v755, 0
      %v800 = vsel %vm291, %v756, 0
      %802 = vmatprep.subr.bf16.mxu0 0
      %803 = vmatpush1.bf16.msra.mxu0 0
      %804 = vmatprep.subr.bf16.mxu0 0
      %805 = vmatpush1.bf16.msra.mxu0 0
      %806 = vmatprep.subr.bf16.mxu0 0
      %807 = vmatpush1.bf16.msra.mxu0 0
      %808 = vmatprep.subr.bf16.mxu0 0
      %809 = vmatpush1.bf16.msra.mxu0 0
      %810 = vmatprep.subr.bf16.mxu0 0
      %811 = vmatpush1.bf16.msra.mxu0 %v785
      %812 = vmatprep.subr.bf16.mxu0 0
      %813 = vmatpush1.bf16.msra.mxu0 %v784
      %814 = vmatprep.subr.bf16.mxu0 0
      %815 = vmatpush1.bf16.msra.mxu0 %v783
      %816 = vmatprep.subr.bf16.mxu0 0
      %817 = vmatpush1.bf16.msra.mxu0 %v782
      %818 = vmatprep.subr.bf16.mxu0 0
      %819 = vmatpush2.bf16.msra.mxu0 0
      %820 = vmatprep.subr.bf16.mxu0 0
      %821 = vmatpush2.bf16.msra.mxu0 0
      %822 = vmatprep.subr.bf16.mxu0 0
      %823 = vmatpush2.bf16.msra.mxu0 0
      %824 = vmatprep.subr.bf16.mxu0 0
      %825 = vmatpush2.bf16.msra.mxu0 0
      %826 = vmatprep.subr.bf16.mxu0 0
      %827 = vmatpush2.bf16.msra.mxu0 0
      %828 = vmatprep.subr.bf16.mxu0 0
      %829 = vmatpush2.bf16.msra.mxu0 0
      %830 = vmatprep.subr.bf16.mxu0 0
      %831 = vmatpush2.bf16.msra.mxu0 0
      %832 = vmatprep.subr.bf16.mxu0 0
      %833 = vmatpush2.bf16.msra.mxu0 0
      %834 = vmatprep.mubr.bf16.mxu0 0
      %835 = vmatmul.mubr.bf16.gmra.mxu0 %v791
      %v836 = vpop.f32.mrf.mxu0
      %v837 = vadd.f32 0.0, %v836
      %v838 = vpop.f32.mrf.mxu0
      %v839 = vpop.f32.mrf.mxu0
      %v840 = vadd.f32 0.0, %v839
      %v841 = vpop.f32.mrf.mxu0
      %842 = vmatprep.mubr.bf16.mxu0 0
      %843 = vmatmul.mubr.bf16.gmra.mxu0 %v794
      %v844 = vpop.f32.mrf.mxu0
      %v845 = vadd.f32 0.0, %v844
      %v846 = vpop.f32.mrf.mxu0
      %v847 = vpop.f32.mrf.mxu0
      %v848 = vadd.f32 0.0, %v847
      %v849 = vpop.f32.mrf.mxu0
      %850 = vmatprep.mubr.bf16.mxu0 0
      %851 = vmatmul.mubr.bf16.gmra.mxu0 %v797
      %v852 = vpop.f32.mrf.mxu0
      %v853 = vadd.f32 0.0, %v852
      %v854 = vpop.f32.mrf.mxu0
      %v855 = vpop.f32.mrf.mxu0
      %v856 = vadd.f32 0.0, %v855
      %v857 = vpop.f32.mrf.mxu0
      %858 = vmatprep.mubr.bf16.mxu0 0
      %859 = vmatmul.mubr.bf16.gmra.mxu0 %v800
      %v860 = vpop.f32.mrf.mxu0
      %v861 = vadd.f32 0.0, %v860
      %v862 = vpop.f32.mrf.mxu0
      %v863 = vpop.f32.mrf.mxu0
      %v864 = vadd.f32 0.0, %v863
      %v865 = vpop.f32.mrf.mxu0
      %866 = vdwg.mxu0
      %v867 = vadd.f32 %v739, %v837
      %v868 = vadd.f32 %v740, %v840
      %v869 = vadd.f32 %v741, %v845
      %v870 = vadd.f32 %v742, %v848
      %v871 = vadd.f32 %v743, %v853
      %v872 = vadd.f32 %v744, %v856
      %v873 = vadd.f32 %v745, %v861
      %v874 = vadd.f32 %v746, %v864
      %v875 = vrot.slane %v189, 2
      %v876 = vrot.slane %v190, 2
      %v877 = vsel %vm470, %v875, %v876
      %v879 = vpack.c.bf16 %v479, %v476
      %v880 = vpack.c.bf16 %v485, %v482
      %v881 = vpack.c.bf16 %v491, %v488
      %v882 = vpack.c.bf16 %v877, %v494
      %s883 = scalar_lea.vmem %s1, 160
      %v884 = vld [vmem:[%s883] sm:$0xf]
      %v885 = vld [vmem:[%s883 + $0x4] sm:$0xf]
      %v886 = vld [vmem:[%s883 + $0x8] sm:$0xf]
      %v887 = vld [vmem:[%s883 + $0xc] sm:$0xf]
      %v888 = vld [vmem:[%s883 + $0x10] sm:$0xf]
      %v889 = vld [vmem:[%s883 + $0x14] sm:$0xf]
      %v890 = vld [vmem:[%s883 + $0x18] sm:$0xf]
      %v891 = vld [vmem:[%s883 + $0x1c] sm:$0xf]
      %v900 = vunpack.c.l.b16 %v884
      %v901 = vunpack.c.l.b16 %v885
      %v902 = vunpack.c.l.b16 %v886
      %v903 = vunpack.c.l.b16 %v887
      %v904 = vunpack.c.l.b16 %v888
      %v905 = vunpack.c.l.b16 %v889
      %v906 = vunpack.c.l.b16 %v890
      %v907 = vunpack.c.l.b16 %v891
      %v908 = vpack.c.b16 %v901, %v900
      %v909 = vpack.c.b16 %v903, %v902
      %v910 = vpack.c.b16 %v905, %v904
      %v911 = vpack.c.b16 %v907, %v906
      %v917 = vsel %vm291, %v879, 0
      %v920 = vsel %vm291, %v880, 0
      %v923 = vsel %vm291, %v881, 0
      %v926 = vsel %vm291, %v882, 0
      %928 = vmatprep.subr.bf16.mxu0 0
      %929 = vmatpush1.bf16.msra.mxu0 0
      %930 = vmatprep.subr.bf16.mxu0 0
      %931 = vmatpush1.bf16.msra.mxu0 0
      %932 = vmatprep.subr.bf16.mxu0 0
      %933 = vmatpush1.bf16.msra.mxu0 0
      %934 = vmatprep.subr.bf16.mxu0 0
      %935 = vmatpush1.bf16.msra.mxu0 0
      %936 = vmatprep.subr.bf16.mxu0 0
      %937 = vmatpush1.bf16.msra.mxu0 %v911
      %938 = vmatprep.subr.bf16.mxu0 0
      %939 = vmatpush1.bf16.msra.mxu0 %v910
      %940 = vmatprep.subr.bf16.mxu0 0
      %941 = vmatpush1.bf16.msra.mxu0 %v909
      %942 = vmatprep.subr.bf16.mxu0 0
      %943 = vmatpush1.bf16.msra.mxu0 %v908
      %944 = vmatprep.subr.bf16.mxu0 0
      %945 = vmatpush2.bf16.msra.mxu0 0
      %946 = vmatprep.subr.bf16.mxu0 0
      %947 = vmatpush2.bf16.msra.mxu0 0
      %948 = vmatprep.subr.bf16.mxu0 0
      %949 = vmatpush2.bf16.msra.mxu0 0
      %950 = vmatprep.subr.bf16.mxu0 0
      %951 = vmatpush2.bf16.msra.mxu0 0
      %952 = vmatprep.subr.bf16.mxu0 0
      %953 = vmatpush2.bf16.msra.mxu0 0
      %954 = vmatprep.subr.bf16.mxu0 0
      %955 = vmatpush2.bf16.msra.mxu0 0
      %956 = vmatprep.subr.bf16.mxu0 0
      %957 = vmatpush2.bf16.msra.mxu0 0
      %958 = vmatprep.subr.bf16.mxu0 0
      %959 = vmatpush2.bf16.msra.mxu0 0
      %960 = vmatprep.mubr.bf16.mxu0 0
      %961 = vmatmul.mubr.bf16.gmra.mxu0 %v917
      %v962 = vpop.f32.mrf.mxu0
      %v963 = vadd.f32 0.0, %v962
      %v964 = vpop.f32.mrf.mxu0
      %v965 = vpop.f32.mrf.mxu0
      %v966 = vadd.f32 0.0, %v965
      %v967 = vpop.f32.mrf.mxu0
      %968 = vmatprep.mubr.bf16.mxu0 0
      %969 = vmatmul.mubr.bf16.gmra.mxu0 %v920
      %v970 = vpop.f32.mrf.mxu0
      %v971 = vadd.f32 0.0, %v970
      %v972 = vpop.f32.mrf.mxu0
      %v973 = vpop.f32.mrf.mxu0
      %v974 = vadd.f32 0.0, %v973
      %v975 = vpop.f32.mrf.mxu0
      %976 = vmatprep.mubr.bf16.mxu0 0
      %977 = vmatmul.mubr.bf16.gmra.mxu0 %v923
      %v978 = vpop.f32.mrf.mxu0
      %v979 = vadd.f32 0.0, %v978
      %v980 = vpop.f32.mrf.mxu0
      %v981 = vpop.f32.mrf.mxu0
      %v982 = vadd.f32 0.0, %v981
      %v983 = vpop.f32.mrf.mxu0
      %984 = vmatprep.mubr.bf16.mxu0 0
      %985 = vmatmul.mubr.bf16.gmra.mxu0 %v926
      %v986 = vpop.f32.mrf.mxu0
      %v987 = vadd.f32 0.0, %v986
      %v988 = vpop.f32.mrf.mxu0
      %v989 = vpop.f32.mrf.mxu0
      %v990 = vadd.f32 0.0, %v989
      %v991 = vpop.f32.mrf.mxu0
      %992 = vdwg.mxu0
      %v993 = vadd.f32 %v867, %v963
      %v994 = vadd.f32 %v868, %v966
      %v995 = vadd.f32 %v869, %v971
      %v996 = vadd.f32 %v870, %v974
      %v997 = vadd.f32 %v871, %v979
      %v998 = vadd.f32 %v872, %v982
      %v999 = vadd.f32 %v873, %v987
      %v1000 = vadd.f32 %v874, %v990
      %v1001 = vpack.c.bf16 %v191, %v189
      %s1002 = scalar_lea.vmem %s1, 192
      %v1003 = vld [vmem:[%s1002] sm:$0xf]
      %v1004 = vld [vmem:[%s1002 + $0x4] sm:$0xf]
      %v1005 = vld [vmem:[%s1002 + $0x8] sm:$0xf]
      %v1006 = vld [vmem:[%s1002 + $0xc] sm:$0xf]
      %v1007 = vld [vmem:[%s1002 + $0x10] sm:$0xf]
      %v1008 = vld [vmem:[%s1002 + $0x14] sm:$0xf]
      %v1009 = vld [vmem:[%s1002 + $0x18] sm:$0xf]
      %v1010 = vld [vmem:[%s1002 + $0x1c] sm:$0xf]
      %v1019 = vunpack.c.l.b16 %v1003
      %v1020 = vunpack.c.l.b16 %v1004
      %v1021 = vunpack.c.l.b16 %v1005
      %v1022 = vunpack.c.l.b16 %v1006
      %v1023 = vunpack.c.l.b16 %v1007
      %v1024 = vunpack.c.l.b16 %v1008
      %v1025 = vunpack.c.l.b16 %v1009
      %v1026 = vunpack.c.l.b16 %v1010
      %v1027 = vpack.c.b16 %v1020, %v1019
      %v1028 = vpack.c.b16 %v1022, %v1021
      %v1029 = vpack.c.b16 %v1024, %v1023
      %v1030 = vpack.c.b16 %v1026, %v1025
      %v1036 = vsel %vm291, %v1001, 0
      %1038 = vmatprep.subr.bf16.mxu0 0
      %1039 = vmatpush1.bf16.msra.mxu0 0
      %1040 = vmatprep.subr.bf16.mxu0 0
      %1041 = vmatpush1.bf16.msra.mxu0 0
      %1042 = vmatprep.subr.bf16.mxu0 0
      %1043 = vmatpush1.bf16.msra.mxu0 0
      %1044 = vmatprep.subr.bf16.mxu0 0
      %1045 = vmatpush1.bf16.msra.mxu0 0
      %1046 = vmatprep.subr.bf16.mxu0 0
      %1047 = vmatpush1.bf16.msra.mxu0 %v1030
      %1048 = vmatprep.subr.bf16.mxu0 0
      %1049 = vmatpush1.bf16.msra.mxu0 %v1029
      %1050 = vmatprep.subr.bf16.mxu0 0
      %1051 = vmatpush1.bf16.msra.mxu0 %v1028
      %1052 = vmatprep.subr.bf16.mxu0 0
      %1053 = vmatpush1.bf16.msra.mxu0 %v1027
      %1054 = vmatprep.subr.bf16.mxu0 0
      %1055 = vmatpush2.bf16.msra.mxu0 0
      %1056 = vmatprep.subr.bf16.mxu0 0
      %1057 = vmatpush2.bf16.msra.mxu0 0
      %1058 = vmatprep.subr.bf16.mxu0 0
      %1059 = vmatpush2.bf16.msra.mxu0 0
      %1060 = vmatprep.subr.bf16.mxu0 0
      %1061 = vmatpush2.bf16.msra.mxu0 0
      %1062 = vmatprep.subr.bf16.mxu0 0
      %1063 = vmatpush2.bf16.msra.mxu0 0
      %1064 = vmatprep.subr.bf16.mxu0 0
      %1065 = vmatpush2.bf16.msra.mxu0 0
      %1066 = vmatprep.subr.bf16.mxu0 0
      %1067 = vmatpush2.bf16.msra.mxu0 0
      %1068 = vmatprep.subr.bf16.mxu0 0
      %1069 = vmatpush2.bf16.msra.mxu0 0
      %1070 = vmatprep.mubr.bf16.mxu0 0
      %1071 = vmatmul.mubr.bf16.gmra.mxu0 %v397
      %v1072 = vpop.f32.mrf.mxu0
      %v1073 = vadd.f32 0.0, %v1072
      %v1074 = vpop.f32.mrf.mxu0
      %v1075 = vpop.f32.mrf.mxu0
      %v1076 = vadd.f32 0.0, %v1075
      %v1077 = vpop.f32.mrf.mxu0
      %1078 = vmatprep.mubr.bf16.mxu0 0
      %1079 = vmatmul.mubr.bf16.gmra.mxu0 %v400
      %v1080 = vpop.f32.mrf.mxu0
      %v1081 = vadd.f32 0.0, %v1080
      %v1082 = vpop.f32.mrf.mxu0
      %v1083 = vpop.f32.mrf.mxu0
      %v1084 = vadd.f32 0.0, %v1083
      %v1085 = vpop.f32.mrf.mxu0
      %1086 = vmatprep.mubr.bf16.mxu0 0
      %1087 = vmatmul.mubr.bf16.gmra.mxu0 %v403
      %v1088 = vpop.f32.mrf.mxu0
      %v1089 = vadd.f32 0.0, %v1088
      %v1090 = vpop.f32.mrf.mxu0
      %v1091 = vpop.f32.mrf.mxu0
      %v1092 = vadd.f32 0.0, %v1091
      %v1093 = vpop.f32.mrf.mxu0
      %1094 = vmatprep.mubr.bf16.mxu0 0
      %1095 = vmatmul.mubr.bf16.gmra.mxu0 %v1036
      %v1096 = vpop.f32.mrf.mxu0
      %v1097 = vadd.f32 0.0, %v1096
      %v1098 = vpop.f32.mrf.mxu0
      %v1099 = vpop.f32.mrf.mxu0
      %v1100 = vadd.f32 0.0, %v1099
      %v1101 = vpop.f32.mrf.mxu0
      %1102 = vdwg.mxu0
      %v1103 = vadd.f32 %v993, %v1073
      %v1104 = vadd.f32 %v994, %v1076
      %v1105 = vadd.f32 %v995, %v1081
      %v1106 = vadd.f32 %v996, %v1084
      %v1107 = vadd.f32 %v997, %v1089
      %v1108 = vadd.f32 %v998, %v1092
      %v1109 = vadd.f32 %v999, %v1097
      %v1110 = vadd.f32 %v1000, %v1100
      %v1113 = vrot.slane %v191, 1
      %v1114 = vrot.slane %v192, 1
      %v1115 = vsel %vm221, %v1113, %v1114
      %v1117 = vpack.c.bf16 %v1115, %v751
      %s1118 = scalar_lea.vmem %s1, 224
      %v1119 = vld [vmem:[%s1118] sm:$0xf]
      %v1120 = vld [vmem:[%s1118 + $0x4] sm:$0xf]
      %v1121 = vld [vmem:[%s1118 + $0x8] sm:$0xf]
      %v1122 = vld [vmem:[%s1118 + $0xc] sm:$0xf]
      %v1123 = vld [vmem:[%s1118 + $0x10] sm:$0xf]
      %v1124 = vld [vmem:[%s1118 + $0x14] sm:$0xf]
      %v1125 = vld [vmem:[%s1118 + $0x18] sm:$0xf]
      %v1126 = vld [vmem:[%s1118 + $0x1c] sm:$0xf]
      %v1135 = vunpack.c.l.b16 %v1119
      %v1136 = vunpack.c.l.b16 %v1120
      %v1137 = vunpack.c.l.b16 %v1121
      %v1138 = vunpack.c.l.b16 %v1122
      %v1139 = vunpack.c.l.b16 %v1123
      %v1140 = vunpack.c.l.b16 %v1124
      %v1141 = vunpack.c.l.b16 %v1125
      %v1142 = vunpack.c.l.b16 %v1126
      %v1143 = vpack.c.b16 %v1136, %v1135
      %v1144 = vpack.c.b16 %v1138, %v1137
      %v1145 = vpack.c.b16 %v1140, %v1139
      %v1146 = vpack.c.b16 %v1142, %v1141
      %v1152 = vsel %vm291, %v1117, 0
      %1154 = vmatprep.subr.bf16.mxu0 0
      %1155 = vmatpush1.bf16.msra.mxu0 0
      %1156 = vmatprep.subr.bf16.mxu0 0
      %1157 = vmatpush1.bf16.msra.mxu0 0
      %1158 = vmatprep.subr.bf16.mxu0 0
      %1159 = vmatpush1.bf16.msra.mxu0 0
      %1160 = vmatprep.subr.bf16.mxu0 0
      %1161 = vmatpush1.bf16.msra.mxu0 0
      %1162 = vmatprep.subr.bf16.mxu0 0
      %1163 = vmatpush1.bf16.msra.mxu0 %v1146
      %1164 = vmatprep.subr.bf16.mxu0 0
      %1165 = vmatpush1.bf16.msra.mxu0 %v1145
      %1166 = vmatprep.subr.bf16.mxu0 0
      %1167 = vmatpush1.bf16.msra.mxu0 %v1144
      %1168 = vmatprep.subr.bf16.mxu0 0
      %1169 = vmatpush1.bf16.msra.mxu0 %v1143
      %1170 = vmatprep.subr.bf16.mxu0 0
      %1171 = vmatpush2.bf16.msra.mxu0 0
      %1172 = vmatprep.subr.bf16.mxu0 0
      %1173 = vmatpush2.bf16.msra.mxu0 0
      %1174 = vmatprep.subr.bf16.mxu0 0
      %1175 = vmatpush2.bf16.msra.mxu0 0
      %1176 = vmatprep.subr.bf16.mxu0 0
      %1177 = vmatpush2.bf16.msra.mxu0 0
      %1178 = vmatprep.subr.bf16.mxu0 0
      %1179 = vmatpush2.bf16.msra.mxu0 0
      %1180 = vmatprep.subr.bf16.mxu0 0
      %1181 = vmatpush2.bf16.msra.mxu0 0
      %1182 = vmatprep.subr.bf16.mxu0 0
      %1183 = vmatpush2.bf16.msra.mxu0 0
      %1184 = vmatprep.subr.bf16.mxu0 0
      %1185 = vmatpush2.bf16.msra.mxu0 0
      %1186 = vmatprep.mubr.bf16.mxu0 0
      %1187 = vmatmul.mubr.bf16.gmra.mxu0 %v296
      %v1188 = vpop.f32.mrf.mxu0
      %v1189 = vadd.f32 0.0, %v1188
      %v1190 = vpop.f32.mrf.mxu0
      %v1191 = vpop.f32.mrf.mxu0
      %v1192 = vadd.f32 0.0, %v1191
      %v1193 = vpop.f32.mrf.mxu0
      %1194 = vmatprep.mubr.bf16.mxu0 0
      %1195 = vmatmul.mubr.bf16.gmra.mxu0 %v299
      %v1196 = vpop.f32.mrf.mxu0
      %v1197 = vadd.f32 0.0, %v1196
      %v1198 = vpop.f32.mrf.mxu0
      %v1199 = vpop.f32.mrf.mxu0
      %v1200 = vadd.f32 0.0, %v1199
      %v1201 = vpop.f32.mrf.mxu0
      %1202 = vmatprep.mubr.bf16.mxu0 0
      %1203 = vmatmul.mubr.bf16.gmra.mxu0 %v302
      %v1204 = vpop.f32.mrf.mxu0
      %v1205 = vadd.f32 0.0, %v1204
      %v1206 = vpop.f32.mrf.mxu0
      %v1207 = vpop.f32.mrf.mxu0
      %v1208 = vadd.f32 0.0, %v1207
      %v1209 = vpop.f32.mrf.mxu0
      %1210 = vmatprep.mubr.bf16.mxu0 0
      %1211 = vmatmul.mubr.bf16.gmra.mxu0 %v1152
      %v1212 = vpop.f32.mrf.mxu0
      %v1213 = vadd.f32 0.0, %v1212
      %v1214 = vpop.f32.mrf.mxu0
      %v1215 = vpop.f32.mrf.mxu0
      %v1216 = vadd.f32 0.0, %v1215
      %v1217 = vpop.f32.mrf.mxu0
      %1218 = vdwg.mxu0
      %v1219 = vadd.f32 %v1103, %v1189
      %v1220 = vadd.f32 %v1104, %v1192
      %v1221 = vadd.f32 %v1105, %v1197
      %v1222 = vadd.f32 %v1106, %v1200
      %v1223 = vadd.f32 %v1107, %v1205
      %v1224 = vadd.f32 %v1108, %v1208
      %v1225 = vadd.f32 %v1109, %v1213
      %v1226 = vadd.f32 %v1110, %v1216
      %v1227 = vrot.slane %v191, 2
      %v1228 = vrot.slane %v192, 2
      %v1229 = vsel %vm470, %v1227, %v1228
      %v1231 = vpack.c.bf16 %v1229, %v877
      %s1232 = scalar_lea.vmem %s1, 256
      %v1233 = vld [vmem:[%s1232] sm:$0xf]
      %v1234 = vld [vmem:[%s1232 + $0x4] sm:$0xf]
      %v1235 = vld [vmem:[%s1232 + $0x8] sm:$0xf]
      %v1236 = vld [vmem:[%s1232 + $0xc] sm:$0xf]
      %v1237 = vld [vmem:[%s1232 + $0x10] sm:$0xf]
      %v1238 = vld [vmem:[%s1232 + $0x14] sm:$0xf]
      %v1239 = vld [vmem:[%s1232 + $0x18] sm:$0xf]
      %v1240 = vld [vmem:[%s1232 + $0x1c] sm:$0xf]
      %v1249 = vunpack.c.l.b16 %v1233
      %v1250 = vunpack.c.l.b16 %v1234
      %v1251 = vunpack.c.l.b16 %v1235
      %v1252 = vunpack.c.l.b16 %v1236
      %v1253 = vunpack.c.l.b16 %v1237
      %v1254 = vunpack.c.l.b16 %v1238
      %v1255 = vunpack.c.l.b16 %v1239
      %v1256 = vunpack.c.l.b16 %v1240
      %v1257 = vpack.c.b16 %v1250, %v1249
      %v1258 = vpack.c.b16 %v1252, %v1251
      %v1259 = vpack.c.b16 %v1254, %v1253
      %v1260 = vpack.c.b16 %v1256, %v1255
      %v1266 = vsel %vm291, %v1231, 0
      %1268 = vmatprep.subr.bf16.mxu0 0
      %1269 = vmatpush1.bf16.msra.mxu0 0
      %1270 = vmatprep.subr.bf16.mxu0 0
      %1271 = vmatpush1.bf16.msra.mxu0 0
      %1272 = vmatprep.subr.bf16.mxu0 0
      %1273 = vmatpush1.bf16.msra.mxu0 0
      %1274 = vmatprep.subr.bf16.mxu0 0
      %1275 = vmatpush1.bf16.msra.mxu0 0
      %1276 = vmatprep.subr.bf16.mxu0 0
      %1277 = vmatpush1.bf16.msra.mxu0 %v1260
      %1278 = vmatprep.subr.bf16.mxu0 0
      %1279 = vmatpush1.bf16.msra.mxu0 %v1259
      %1280 = vmatprep.subr.bf16.mxu0 0
      %1281 = vmatpush1.bf16.msra.mxu0 %v1258
      %1282 = vmatprep.subr.bf16.mxu0 0
      %1283 = vmatpush1.bf16.msra.mxu0 %v1257
      %1284 = vmatprep.subr.bf16.mxu0 0
      %1285 = vmatpush2.bf16.msra.mxu0 0
      %1286 = vmatprep.subr.bf16.mxu0 0
      %1287 = vmatpush2.bf16.msra.mxu0 0
      %1288 = vmatprep.subr.bf16.mxu0 0
      %1289 = vmatpush2.bf16.msra.mxu0 0
      %1290 = vmatprep.subr.bf16.mxu0 0
      %1291 = vmatpush2.bf16.msra.mxu0 0
      %1292 = vmatprep.subr.bf16.mxu0 0
      %1293 = vmatpush2.bf16.msra.mxu0 0
      %1294 = vmatprep.subr.bf16.mxu0 0
      %1295 = vmatpush2.bf16.msra.mxu0 0
      %1296 = vmatprep.subr.bf16.mxu0 0
      %1297 = vmatpush2.bf16.msra.mxu0 0
      %1298 = vmatprep.subr.bf16.mxu0 0
      %1299 = vmatpush2.bf16.msra.mxu0 0
      %1300 = vmatprep.mubr.bf16.mxu0 0
      %1301 = vmatmul.mubr.bf16.gmra.mxu0 %v544
      %v1302 = vpop.f32.mrf.mxu0
      %v1303 = vadd.f32 0.0, %v1302
      %v1304 = vpop.f32.mrf.mxu0
      %v1305 = vpop.f32.mrf.mxu0
      %v1306 = vadd.f32 0.0, %v1305
      %v1307 = vpop.f32.mrf.mxu0
      %1308 = vmatprep.mubr.bf16.mxu0 0
      %1309 = vmatmul.mubr.bf16.gmra.mxu0 %v547
      %v1310 = vpop.f32.mrf.mxu0
      %v1311 = vadd.f32 0.0, %v1310
      %v1312 = vpop.f32.mrf.mxu0
      %v1313 = vpop.f32.mrf.mxu0
      %v1314 = vadd.f32 0.0, %v1313
      %v1315 = vpop.f32.mrf.mxu0
      %1316 = vmatprep.mubr.bf16.mxu0 0
      %1317 = vmatmul.mubr.bf16.gmra.mxu0 %v550
      %v1318 = vpop.f32.mrf.mxu0
      %v1319 = vadd.f32 0.0, %v1318
      %v1320 = vpop.f32.mrf.mxu0
      %v1321 = vpop.f32.mrf.mxu0
      %v1322 = vadd.f32 0.0, %v1321
      %v1323 = vpop.f32.mrf.mxu0
      %1324 = vmatprep.mubr.bf16.mxu0 0
      %1325 = vmatmul.mubr.bf16.gmra.mxu0 %v1266
      %v1326 = vpop.f32.mrf.mxu0
      %v1327 = vadd.f32 0.0, %v1326
      %v1328 = vpop.f32.mrf.mxu0
      %v1329 = vpop.f32.mrf.mxu0
      %v1330 = vadd.f32 0.0, %v1329
      %v1331 = vpop.f32.mrf.mxu0
      %1332 = vdwg.mxu0
      %v1333 = vadd.f32 %v1219, %v1303
      %v1334 = vadd.f32 %v1220, %v1306
      %v1335 = vadd.f32 %v1221, %v1311
      %v1336 = vadd.f32 %v1222, %v1314
      %v1337 = vadd.f32 %v1223, %v1319
      %v1338 = vadd.f32 %v1224, %v1322
      %v1339 = vadd.f32 %v1225, %v1327
      %v1340 = vadd.f32 %v1226, %v1330
      %v1341 = vld [vmem:[%s2] sm:$0x1]
      %v1343 = vlaneseq
      %v1344 = vshrl.u32 %v1343, 7
      %v1345 = vsub.s32 0, %v1344
      %v1346 = vrot.slane %v1341, %v1345
      %v1348 = vadd.f32 %v1333, %v1346
      %v1349 = vadd.f32 %v1334, %v1346
      %v1350 = vadd.f32 %v1335, %v1346
      %v1351 = vadd.f32 %v1336, %v1346
      %v1352 = vadd.f32 %v1337, %v1346
      %v1353 = vadd.f32 %v1338, %v1346
      %v1354 = vadd.f32 %v1339, %v1346
      %v1355 = vadd.f32 %v1340, %v1346
      %v1356 = vmax.f32 %v1348, 0.0
      %v1357 = vmax.f32 %v1349, 0.0
      %v1358 = vmax.f32 %v1350, 0.0
      %v1359 = vmax.f32 %v1351, 0.0
      %v1360 = vmax.f32 %v1352, 0.0
      %v1361 = vmax.f32 %v1353, 0.0
      %v1362 = vmax.f32 %v1354, 0.0
      %v1363 = vmax.f32 %v1355, 0.0
      %1364 = vst [vmem:[%s170] sm:$0xff] %v1356
      %1365 = vst [vmem:[%s170 + $0x8] sm:$0xff] %v1357
      %1366 = vst [vmem:[%s170 + $0x10] sm:$0xff] %v1358
      %1367 = vst [vmem:[%s170 + $0x18] sm:$0xff] %v1359
      %1368 = vst [vmem:[%s170 + $0x20] sm:$0xff] %v1360
      %1369 = vst [vmem:[%s170 + $0x28] sm:$0xff] %v1361
      %1370 = vst [vmem:[%s170 + $0x30] sm:$0xff] %v1362
      %1371 = vst [vmem:[%s170 + $0x38] sm:$0xff] %v1363
      %s1372 = smul.u32 8, %s14
      %p1373 = scmp.lt.s32.totalorder %s1372, 15
      %s1374 = scalar_select %p1373, %s1372, 15
      %s1375 = smul.addr %s1374, 8
      %s1376 = scalar_lea.vmem %s3, %s1375
      // Predicated region
      $region33: #{residual_feature_net.15} parent=31 // pred_check
        %p1377 = pneg %p100
      $region34: #{residual_feature_net.15} parent=31 // pred_check_branch
        %1379 = sbr.rel (%p1377) target = $region36
      $region35: #{residual_feature_net.15} parent=31 // pred_region
        %s1380 = smul.u32 8, %s14
      $region36: #{residual_feature_net.15} parent=31 // pred_fallthru
        _
    $region32: #{residual_feature_net.15} parent=5 // pred_fallthru
      _
    %p1381 = scmp.le.s32.totalorder 2, %s9
    // Predicated region
    $region37: #{residual_feature_net.15} parent=5 // pred_check
      %p1382 = pneg %p1381
    $region38: #{residual_feature_net.15} parent=5 // pred_check_branch
      %1384 = sbr.rel (%p1382) target = $region40
    $region39: #{residual_feature_net.15} parent=5 // pred_region
      %s1385 = ssub.s32 %s9, 2
      // Predicated region
      $region41: #{residual_feature_net.15} parent=39 // pred_check
        %p1386 = pneg %p106
      $region42: #{residual_feature_net.15} parent=39 // pred_check_branch
        %1388 = sbr.rel (%p1386) target = $region44
      $region43: #{residual_feature_net.15} parent=39 // pred_region
        %s1389 = smul.u32 8, %s15
        %p1390 = scmp.lt.s32.totalorder %s1389, 15
        %s1391 = scalar_select %p1390, %s1389, 15
        %s1392 = smul.addr %s1391, 8
        %s1393 = scalar_lea.vmem %s3, %s1392
      $region44: #{residual_feature_net.15} parent=39 // pred_fallthru
        _
    $region40: #{residual_feature_net.15} parent=5 // pred_fallthru
      _
  $region6: #{residual_feature_net.15} parent=0 // loop_footer
    %s13 = sadd.s32 1, %s9
  $region7: #{residual_feature_net.15} parent=0 // loop_footer_branch
    %8 = sbr.rel target = $region3
  $region8: #{residual_feature_net.15} parent=0 // loop_exit
    _

// kernel: residual_feature_net.17
$region0: #{residual_feature_net.17}
  #allocation0 [shape = 'u32[]', space=smem, size = 0x4, offset = 0x4, fixed_abs, tag = 'smem constant byte address 0x4 - core index']
  #allocation1 [shape = 'u32[144,128]{1,0:T(1,128)}', space=vmem, size = 0x12000, scoped, tag = 'internal scratch']
  %s0 = inlined_call_operand.vmem [shape: f32[2,10,10,128], index: 0, kind: input, shape index: {}]
  %s1 = inlined_call_operand.vmem [shape: bf16[9,128,128], index: 1, kind: input, shape index: {}]
  %s2 = inlined_call_operand.vmem [shape: f32[1,128], index: 2, kind: input, shape index: {}]
  %s3 = inlined_call_operand.vmem [shape: f32[128,128], index: 3, kind: input, shape index: {}]
  %s4 = inlined_call_operand.vmem [shape: f32[128,128], index: 4, kind: output, shape index: {}]
  %s5 = sld [smem:[#allocation0]]
  $region49: #{residual_feature_net.17} parent=0
    _
  %s7 = ssub.s32 1, %s5
  %s8 = scalar_select 0, %s7, %s5
  loop: start=0, step=1, limit=4
  $region2: #{residual_feature_net.17} parent=0 // loop_pre_header
    _
  $region3: #{residual_feature_net.17} parent=0 // loop_header
    %s10 = sphi 0, %s14
    %p11 = scmp.ge.s32.totalorder %s10, 4
    %s20 = sphi 0, %s22
    %s23 = sphi 0, %s20
    %s24 = sphi 0, %s23
    %s40 = sphi 0, %s24
    %s44 = sphi 0, %s44
    %s46 = sphi 0, %s44
    %s47 = sphi 0, %s46
    %s61 = sphi 0, %s47
    %s65 = sphi 0, %s65
    %s67 = sphi 0, %s65
    %s68 = sphi 0, %s67
    %s82 = sphi 0, %s68
    %s88 = sphi 0, %s90
    %s91 = sphi 0, %s88
    %s92 = sphi 0, %s91
    %s108 = sphi 0, %s92
    %s114 = sphi 0, %s116
    %s117 = sphi 0, %s114
    %s118 = sphi 0, %s117
    %s134 = sphi 0, %s118
  $region4: #{residual_feature_net.17} parent=0 // loop_header_branch
    %13 = sbr.rel (%p11) target = $region8
  $region5: #{residual_feature_net.17} parent=0 // loop_body
    %s15 = ssub.s32 %s10, 1
    %s16 = ssub.s32 %s10, 2
    %s17 = sadd.s32 %s10, 1
    %s18 = ssub.s32 %s10, %s17
    %p19 = scmp.eq.s32.totalorder %s18, 0
    %s21 = sadd.s32 %s20, 1
    %s22 = scalar_select %p19, %s20, %s21
    %p25 = pneg %p19
    %p26 = scmp.eq.s32.totalorder %s10, 1
    %p27 = por %p25, %p26
    %p28 = scmp.ne.s32.totalorder %s20, %s23
    %p29 = scmp.eq.s32.totalorder %s10, 0
    %p30 = por %p28, %p29
    %p31 = scmp.ne.s32.totalorder %s20, %s23
    %p32 = scmp.eq.s32.totalorder %s15, 1
    %p33 = por %p31, %p32
    %p34 = scmp.ne.s32.totalorder %s23, %s24
    %p35 = scmp.eq.s32.totalorder %s15, 0
    %p36 = por %p34, %p35
    %p37 = scmp.ne.s32.totalorder %s23, %s24
    %p38 = scmp.eq.s32.totalorder %s16, 1
    %p39 = por %p37, %p38
    %p41 = scmp.ne.s32.totalorder %s24, %s40
    %p42 = scmp.eq.s32.totalorder %s16, 0
    %p43 = por %p41, %p42
    %s45 = sadd.s32 %s44, 1
    %p48 = scmp.eq.s32.totalorder %s10, 1
    %p49 = scmp.ne.s32.totalorder %s44, %s46
    %p50 = scmp.eq.s32.totalorder %s10, 0
    %p51 = por %p49, %p50
    %p52 = scmp.ne.s32.totalorder %s44, %s46
    %p53 = scmp.eq.s32.totalorder %s15, 1
    %p54 = por %p52, %p53
    %p55 = scmp.ne.s32.totalorder %s46, %s47
    %p56 = scmp.eq.s32.totalorder %s15, 0
    %p57 = por %p55, %p56
    %p58 = scmp.ne.s32.totalorder %s46, %s47
    %p59 = scmp.eq.s32.totalorder %s16, 1
    %p60 = por %p58, %p59
    %p62 = scmp.ne.s32.totalorder %s47, %s61
    %p63 = scmp.eq.s32.totalorder %s16, 0
    %p64 = por %p62, %p63
    %s66 = sadd.s32 %s65, 1
    %p69 = scmp.eq.s32.totalorder %s10, 1
    %p70 = scmp.ne.s32.totalorder %s65, %s67
    %p71 = scmp.eq.s32.totalorder %s10, 0
    %p72 = por %p70, %p71
    %p73 = scmp.ne.s32.totalorder %s65, %s67
    %p74 = scmp.eq.s32.totalorder %s15, 1
    %p75 = por %p73, %p74
    %p76 = scmp.ne.s32.totalorder %s67, %s68
    %p77 = scmp.eq.s32.totalorder %s15, 0
    %p78 = por %p76, %p77
    %p79 = scmp.ne.s32.totalorder %s67, %s68
    %p80 = scmp.eq.s32.totalorder %s16, 1
    %p81 = por %p79, %p80
    %p83 = scmp.ne.s32.totalorder %s68, %s82
    %p84 = scmp.eq.s32.totalorder %s16, 0
    %p85 = por %p83, %p84
    %s86 = ssub.s32 %s10, %s17
    %p87 = scmp.eq.s32.totalorder %s86, 0
    %s89 = sadd.s32 %s88, 1
    %s90 = scalar_select %p87, %s88, %s89
    %p93 = pneg %p87
    %p94 = scmp.eq.s32.totalorder %s10, 1
    %p95 = por %p93, %p94
    %p96 = scmp.ne.s32.totalorder %s88, %s91
    %p97 = scmp.eq.s32.totalorder %s10, 0
    %p98 = por %p96, %p97
    %p99 = scmp.ne.s32.totalorder %s88, %s91
    %p100 = scmp.eq.s32.totalorder %s15, 1
    %p101 = por %p99, %p100
    %p102 = scmp.ne.s32.totalorder %s91, %s92
    %p103 = scmp.eq.s32.totalorder %s15, 0
    %p104 = por %p102, %p103
    %p105 = scmp.ne.s32.totalorder %s91, %s92
    %p106 = scmp.eq.s32.totalorder %s16, 1
    %p107 = por %p105, %p106
    %p109 = scmp.ne.s32.totalorder %s92, %s108
    %p110 = scmp.eq.s32.totalorder %s16, 0
    %p111 = por %p109, %p110
    %s112 = ssub.s32 %s10, %s17
    %p113 = scmp.eq.s32.totalorder %s112, 0
    %s115 = sadd.s32 %s114, 1
    %s116 = scalar_select %p113, %s114, %s115
    %p119 = pneg %p113
    %p120 = scmp.eq.s32.totalorder %s10, 1
    %p121 = por %p119, %p120
    %p122 = scmp.ne.s32.totalorder %s114, %s117
    %p123 = scmp.eq.s32.totalorder %s10, 0
    %p124 = por %p122, %p123
    %p125 = scmp.ne.s32.totalorder %s114, %s117
    %p126 = scmp.eq.s32.totalorder %s15, 1
    %p127 = por %p125, %p126
    %p128 = scmp.ne.s32.totalorder %s117, %s118
    %p129 = scmp.eq.s32.totalorder %s15, 0
    %p130 = por %p128, %p129
    %p131 = scmp.ne.s32.totalorder %s117, %s118
    %p132 = scmp.eq.s32.totalorder %s16, 1
    %p133 = por %p131, %p132
    %p135 = scmp.ne.s32.totalorder %s118, %s134
    %p136 = scmp.eq.s32.totalorder %s16, 0
    %p137 = por %p135, %p136
    %p138 = scmp.le.s32.totalorder 1, %s10
    %p139 = scmp.lt.s32.totalorder %s10, 3
    %p140 = pnand %p138, %p139
    %p141 = pneg %p140
    // Predicated region
    $region9: #{residual_feature_net.17} parent=5 // pred_check
      _
    $region10: #{residual_feature_net.17} parent=5 // pred_check_branch
      %143 = sbr.rel (%p140) target = $region12
    $region11: #{residual_feature_net.17} parent=5 // pred_region
      %s144 = ssub.s32 %s10, 1
      // Predicated region
      $region13: #{residual_feature_net.17} parent=11 // pred_check
        %p145 = pneg %p57
      $region14: #{residual_feature_net.17} parent=11 // pred_check_branch
        %147 = sbr.rel (%p145) target = $region16
      $region15: #{residual_feature_net.17} parent=11 // pred_region
        _
      $region16: #{residual_feature_net.17} parent=11 // pred_fallthru
        _
      // Predicated region
      $region17: #{residual_feature_net.17} parent=11 // pred_check
        %p148 = pneg %p78
      $region18: #{residual_feature_net.17} parent=11 // pred_check_branch
        %150 = sbr.rel (%p148) target = $region20
      $region19: #{residual_feature_net.17} parent=11 // pred_region
        _
      $region20: #{residual_feature_net.17} parent=11 // pred_fallthru
        _
    $region12: #{residual_feature_net.17} parent=5 // pred_fallthru
      _
    %p151 = scmp.lt.s32.totalorder %s10, 2
    // Predicated region
    $region21: #{residual_feature_net.17} parent=5 // pred_check
      %p152 = pneg %p151
    $region22: #{residual_feature_net.17} parent=5 // pred_check_branch
      %154 = sbr.rel (%p152) target = $region24
    $region23: #{residual_feature_net.17} parent=5 // pred_region
      // Predicated region
      $region25: #{residual_feature_net.17} parent=23 // pred_check
        %p155 = pneg %p30
      $region26: #{residual_feature_net.17} parent=23 // pred_check_branch
        %157 = sbr.rel (%p155) target = $region28
      $region27: #{residual_feature_net.17} parent=23 // pred_region
        %p158 = scmp.lt.s32.totalorder %s10, 1
        %s159 = scalar_select %p158, %s10, 1
        %s160 = smul.addr %s159, 20
        %s161 = smul.addr %s160, 8
        %s162 = scalar_lea.vmem %s0, %s161
      $region28: #{residual_feature_net.17} parent=23 // pred_fallthru
        _
      // Predicated region
      $region29: #{residual_feature_net.17} parent=23 // pred_check
        %p163 = pneg %p98
      $region30: #{residual_feature_net.17} parent=23 // pred_check_branch
        %165 = sbr.rel (%p163) target = $region32
      $region31: #{residual_feature_net.17} parent=23 // pred_region
        %s166 = smul.u32 8, %s10
        %p167 = scmp.lt.s32.totalorder %s166, 15
        %s168 = scalar_select %p167, %s166, 15
        %s169 = smul.addr %s168, 8
        %s170 = scalar_lea.vmem %s3, %s169
        %s171 = smul.u32 8, %s10
      $region32: #{residual_feature_net.17} parent=23 // pred_fallthru
        _
    $region24: #{residual_feature_net.17} parent=5 // pred_fallthru
      _
    %p172 = scmp.le.s32.totalorder 1, %s10
    %p173 = scmp.lt.s32.totalorder %s10, 3
    %p174 = pnand %p172, %p173
    %p175 = pneg %p174
    // Predicated region
    $region33: #{residual_feature_net.17} parent=5 // pred_check
      _
    $region34: #{residual_feature_net.17} parent=5 // pred_check_branch
      %177 = sbr.rel (%p174) target = $region36
    $region35: #{residual_feature_net.17} parent=5 // pred_region
      %s178 = ssub.s32 %s10, 1
      %p179 = scmp.lt.s32.totalorder %s15, 1
      %s180 = scalar_select %p179, %s15, 1
      %s181 = smul.addr %s180, 20
      %s182 = smul.addr %s181, 8
      %s183 = scalar_lea.vmem %s0, %s182
      %p184 = pneg %p36
      %p185 = pneg %p33
      %p186 = pneg %p57
      %p187 = pneg %p54
      %p188 = pneg %p78
      %p189 = pneg %p75
      %s190 = smul.u32 8, %s15
      %p191 = scmp.lt.s32.totalorder %s190, 15
      %s192 = scalar_select %p191, %s190, 15
      %s193 = smul.addr %s192, 8
      %s194 = scalar_lea.vmem %s3, %s193
      %p195 = pneg %p104
      %p196 = pneg %p101
      %p197 = pneg %p130
      %p198 = pneg %p127
      %s199 = smul.u32 8, %s15
      %p200 = scmp.lt.s32.totalorder %s199, 15
      %s201 = scalar_select %p200, %s199, 15
      %s202 = smul.addr %s201, 8
      %s203 = scalar_lea.vmem %s4, %s202
      %p204 = scmp.lt.s32.totalorder %s15, 1
      %s205 = scalar_select %p204, %s15, 1
      %s206 = smul.addr %s205, 20
      %s207 = smul.addr %s206, 8
      %s208 = scalar_lea.vmem %s0, %s207
      %s209 = smul.u32 8, %s15
      %p210 = scmp.lt.s32.totalorder %s209, 15
      %s211 = scalar_select %p210, %s209, 15
      %s212 = smul.addr %s211, 8
      %s213 = scalar_lea.vmem %s3, %s212
      %s214 = smul.u32 8, %s15
      %s215 = smul.u32 8, %s15
      %p216 = scmp.lt.s32.totalorder %s215, 15
      %s217 = scalar_select %p216, %s215, 15
      %s218 = smul.addr %s217, 8
      %s219 = scalar_lea.vmem %s4, %s218
      %s220 = smul.u32 8, %s15
      %v222 = vld [vmem:[%s208] sm:$0xff]
      %v223 = vld [vmem:[%s208 + $0x8] sm:$0x3]
      %v224 = vld [vmem:[%s208 + $0x10] sm:$0xff]
      %v225 = vld [vmem:[%s208 + $0x18] sm:$0x3]
      %v226 = vld [vmem:[%s208 + $0x20] sm:$0xff]
      %v227 = vld [vmem:[%s208 + $0x28] sm:$0x3]
      %v228 = vld [vmem:[%s208 + $0x30] sm:$0xff]
      %v229 = vld [vmem:[%s208 + $0x38] sm:$0x3]
      %v230 = vld [vmem:[%s208 + $0x40] sm:$0xff]
      %v231 = vld [vmem:[%s208 + $0x48] sm:$0x3]
      %v232 = vld [vmem:[%s208 + $0x50] sm:$0xff]
      %v233 = vld [vmem:[%s208 + $0x58] sm:$0x3]
      %v234 = vld [vmem:[%s208 + $0x60] sm:$0xff]
      %v235 = vld [vmem:[%s208 + $0x68] sm:$0x3]
      %v236 = vld [vmem:[%s208 + $0x70] sm:$0xff]
      %v237 = vld [vmem:[%s208 + $0x78] sm:$0x3]
      %v238 = vld [vmem:[%s208 + $0x80] sm:$0xff]
      %v239 = vld [vmem:[%s208 + $0x88] sm:$0x3]
      %v240 = vld [vmem:[%s208 + $0x90] sm:$0xff]
      %v241 = vld [vmem:[%s208 + $0x98] sm:$0x3]
      %v242 = vpack.c.bf16 %v224, %v222
      %v243 = vpack.c.bf16 %v228, %v226
      %v244 = vpack.c.bf16 %v232, %v230
      %v245 = vpack.c.bf16 %v236, %v234
      %v246 = vld [vmem:[%s1] sm:$0xf]
      %v247 = vld [vmem:[%s1 + $0x4] sm:$0xf]
      %v248 = vld [vmem:[%s1 + $0x8] sm:$0xf]
      %v249 = vld [vmem:[%s1 + $0xc] sm:$0xf]
      %v250 = vld [vmem:[%s1 + $0x10] sm:$0xf]
      %v251 = vld [vmem:[%s1 + $0x14] sm:$0xf]
      %v252 = vld [vmem:[%s1 + $0x18] sm:$0xf]
      %v253 = vld [vmem:[%s1 + $0x1c] sm:$0xf]
      %v254 = vld [vmem:[%s1 + $0x20] sm:$0xf]
      %v255 = vld [vmem:[%s1 + $0x24] sm:$0xf]
      %v256 = vld [vmem:[%s1 + $0x28] sm:$0xf]
      %v257 = vld [vmem:[%s1 + $0x2c] sm:$0xf]
      %v258 = vld [vmem:[%s1 + $0x30] sm:$0xf]
      %v259 = vld [vmem:[%s1 + $0x34] sm:$0xf]
      %v260 = vld [vmem:[%s1 + $0x38] sm:$0xf]
      %v261 = vld [vmem:[%s1 + $0x3c] sm:$0xf]
      %vm278 = vcmask 1046528
      %v279 = vrot.slane %v222, 1
      %v280 = vrot.slane %v223, 1
      %v281 = vsel %vm278, %v279, %v280
      %v282 = vrot.slane %v224, 1
      %v283 = vrot.slane %v225, 1
      %v284 = vsel %vm278, %v282, %v283
      %v285 = vrot.slane %v226, 1
      %v286 = vrot.slane %v227, 1
      %v287 = vsel %vm278, %v285, %v286
      %v288 = vrot.slane %v228, 1
      %v289 = vrot.slane %v229, 1
      %v290 = vsel %vm278, %v288, %v289
      %v291 = vrot.slane %v230, 1
      %v292 = vrot.slane %v231, 1
      %v293 = vsel %vm278, %v291, %v292
      %v294 = vrot.slane %v232, 1
      %v295 = vrot.slane %v233, 1
      %v296 = vsel %vm278, %v294, %v295
      %v297 = vrot.slane %v234, 1
      %v298 = vrot.slane %v235, 1
      %v299 = vsel %vm278, %v297, %v298
      %v300 = vrot.slane %v236, 1
      %v301 = vrot.slane %v237, 1
      %v302 = vsel %vm278, %v300, %v301
      %v311 = vpack.c.bf16 %v284, %v281
      %v312 = vpack.c.bf16 %v290, %v287
      %v313 = vpack.c.bf16 %v296, %v293
      %v314 = vpack.c.bf16 %v302, %v299
      %s315 = scalar_lea.vmem %s1, 64
      %v316 = vld [vmem:[%s315] sm:$0xf]
      %v317 = vld [vmem:[%s315 + $0x4] sm:$0xf]
      %v318 = vld [vmem:[%s315 + $0x8] sm:$0xf]
      %v319 = vld [vmem:[%s315 + $0xc] sm:$0xf]
      %v320 = vld [vmem:[%s315 + $0x10] sm:$0xf]
      %v321 = vld [vmem:[%s315 + $0x14] sm:$0xf]
      %v322 = vld [vmem:[%s315 + $0x18] sm:$0xf]
      %v323 = vld [vmem:[%s315 + $0x1c] sm:$0xf]
      %v324 = vld [vmem:[%s315 + $0x20] sm:$0xf]
      %v325 = vld [vmem:[%s315 + $0x24] sm:$0xf]
      %v326 = vld [vmem:[%s315 + $0x28] sm:$0xf]
      %v327 = vld [vmem:[%s315 + $0x2c] sm:$0xf]
      %v328 = vld [vmem:[%s315 + $0x30] sm:$0xf]
      %v329 = vld [vmem:[%s315 + $0x34] sm:$0xf]
      %v330 = vld [vmem:[%s315 + $0x38] sm:$0xf]
      %v331 = vld [vmem:[%s315 + $0x3c] sm:$0xf]
      %v348 = vunpack.c.l.b16 %v316
      %v349 = vunpack.c.l.b16 %v317
      %v350 = vunpack.c.l.b16 %v318
      %v351 = vunpack.c.l.b16 %v319
      %v352 = vunpack.c.l.b16 %v320
      %v353 = vunpack.c.l.b16 %v321
      %v354 = vunpack.c.l.b16 %v322
      %v355 = vunpack.c.l.b16 %v323
      %v356 = vunpack.c.l.b16 %v324
      %v357 = vunpack.c.l.b16 %v325
      %v358 = vunpack.c.l.b16 %v326
      %v359 = vunpack.c.l.b16 %v327
      %v360 = vunpack.c.l.b16 %v328
      %v361 = vunpack.c.l.b16 %v329
      %v362 = vunpack.c.l.b16 %v330
      %v363 = vunpack.c.l.b16 %v331
      %v364 = vpack.c.b16 %v349, %v348
      %v365 = vpack.c.b16 %v351, %v350
      %v366 = vpack.c.b16 %v353, %v352
      %v367 = vpack.c.b16 %v355, %v354
      %v368 = vpack.c.b16 %v357, %v356
      %v369 = vpack.c.b16 %v359, %v358
      %v370 = vpack.c.b16 %v361, %v360
      %v371 = vpack.c.b16 %v363, %v362
      %380 = vmatprep.subr.bf16.mxu0 0
      %381 = vmatpush1.bf16.msra.mxu0 %v371
      %382 = vmatprep.subr.bf16.mxu0 0
      %383 = vmatpush1.bf16.msra.mxu0 %v370
      %384 = vmatprep.subr.bf16.mxu0 0
      %385 = vmatpush1.bf16.msra.mxu0 %v369
      %386 = vmatprep.subr.bf16.mxu0 0
      %387 = vmatpush1.bf16.msra.mxu0 %v368
      %388 = vmatprep.subr.bf16.mxu0 0
      %389 = vmatpush1.bf16.msra.mxu0 %v367
      %390 = vmatprep.subr.bf16.mxu0 0
      %391 = vmatpush1.bf16.msra.mxu0 %v366
      %392 = vmatprep.subr.bf16.mxu0 0
      %393 = vmatpush1.bf16.msra.mxu0 %v365
      %394 = vmatprep.subr.bf16.mxu0 0
      %395 = vmatpush1.bf16.msra.mxu0 %v364
      %396 = vmatprep.subr.bf16.mxu0 0
      %397 = vmatpush2.bf16.msra.mxu0 0
      %398 = vmatprep.subr.bf16.mxu0 0
      %399 = vmatpush2.bf16.msra.mxu0 0
      %400 = vmatprep.subr.bf16.mxu0 0
      %401 = vmatpush2.bf16.msra.mxu0 0
      %402 = vmatprep.subr.bf16.mxu0 0
      %403 = vmatpush2.bf16.msra.mxu0 0
      %404 = vmatprep.subr.bf16.mxu0 0
      %405 = vmatpush2.bf16.msra.mxu0 0
      %406 = vmatprep.subr.bf16.mxu0 0
      %407 = vmatpush2.bf16.msra.mxu0 0
      %408 = vmatprep.subr.bf16.mxu0 0
      %409 = vmatpush2.bf16.msra.mxu0 0
      %410 = vmatprep.subr.bf16.mxu0 0
      %411 = vmatpush2.bf16.msra.mxu0 0
      %412 = vmatprep.mubr.bf16.mxu0 0
      %413 = vmatmul.mubr.bf16.gmra.mxu0 %v311
      %v414 = vpop.f32.mrf.mxu0
      %v415 = vadd.f32 0.0, %v414
      %v416 = vpop.f32.mrf.mxu0
      %v417 = vpop.f32.mrf.mxu0
      %v418 = vadd.f32 0.0, %v417
      %v419 = vpop.f32.mrf.mxu0
      %420 = vmatprep.mubr.bf16.mxu0 0
      %421 = vmatmul.mubr.bf16.gmra.mxu0 %v312
      %v422 = vpop.f32.mrf.mxu0
      %v423 = vadd.f32 0.0, %v422
      %v424 = vpop.f32.mrf.mxu0
      %v425 = vpop.f32.mrf.mxu0
      %v426 = vadd.f32 0.0, %v425
      %v427 = vpop.f32.mrf.mxu0
      %428 = vmatprep.mubr.bf16.mxu0 0
      %429 = vmatmul.mubr.bf16.gmra.mxu0 %v313
      %v430 = vpop.f32.mrf.mxu0
      %v431 = vadd.f32 0.0, %v430
      %v432 = vpop.f32.mrf.mxu0
      %v433 = vpop.f32.mrf.mxu0
      %v434 = vadd.f32 0.0, %v433
      %v435 = vpop.f32.mrf.mxu0
      %436 = vmatprep.mubr.bf16.mxu0 0
      %437 = vmatmul.mubr.bf16.gmra.mxu0 %v314
      %v438 = vpop.f32.mrf.mxu0
      %v439 = vadd.f32 0.0, %v438
      %v440 = vpop.f32.mrf.mxu0
      %v441 = vpop.f32.mrf.mxu0
      %v442 = vadd.f32 0.0, %v441
      %v443 = vpop.f32.mrf.mxu0
      %444 = vdwg.mxu0
      %v461 = vunpack.c.l.b16 %v246
      %v462 = vunpack.c.l.b16 %v247
      %v463 = vunpack.c.l.b16 %v248
      %v464 = vunpack.c.l.b16 %v249
      %v465 = vunpack.c.l.b16 %v250
      %v466 = vunpack.c.l.b16 %v251
      %v467 = vunpack.c.l.b16 %v252
      %v468 = vunpack.c.l.b16 %v253
      %v469 = vunpack.c.l.b16 %v254
      %v470 = vunpack.c.l.b16 %v255
      %v471 = vunpack.c.l.b16 %v256
      %v472 = vunpack.c.l.b16 %v257
      %v473 = vunpack.c.l.b16 %v258
      %v474 = vunpack.c.l.b16 %v259
      %v475 = vunpack.c.l.b16 %v260
      %v476 = vunpack.c.l.b16 %v261
      %v477 = vpack.c.b16 %v462, %v461
      %v478 = vpack.c.b16 %v464, %v463
      %v479 = vpack.c.b16 %v466, %v465
      %v480 = vpack.c.b16 %v468, %v467
      %v481 = vpack.c.b16 %v470, %v469
      %v482 = vpack.c.b16 %v472, %v471
      %v483 = vpack.c.b16 %v474, %v473
      %v484 = vpack.c.b16 %v476, %v475
      %493 = vmatprep.subr.bf16.mxu0 0
      %494 = vmatpush1.bf16.msra.mxu0 %v484
      %495 = vmatprep.subr.bf16.mxu0 0
      %496 = vmatpush1.bf16.msra.mxu0 %v483
      %497 = vmatprep.subr.bf16.mxu0 0
      %498 = vmatpush1.bf16.msra.mxu0 %v482
      %499 = vmatprep.subr.bf16.mxu0 0
      %500 = vmatpush1.bf16.msra.mxu0 %v481
      %501 = vmatprep.subr.bf16.mxu0 0
      %502 = vmatpush1.bf16.msra.mxu0 %v480
      %503 = vmatprep.subr.bf16.mxu0 0
      %504 = vmatpush1.bf16.msra.mxu0 %v479
      %505 = vmatprep.subr.bf16.mxu0 0
      %506 = vmatpush1.bf16.msra.mxu0 %v478
      %507 = vmatprep.subr.bf16.mxu0 0
      %508 = vmatpush1.bf16.msra.mxu0 %v477
      %509 = vmatprep.subr.bf16.mxu0 0
      %510 = vmatpush2.bf16.msra.mxu0 0
      %511 = vmatprep.subr.bf16.mxu0 0
      %512 = vmatpush2.bf16.msra.mxu0 0
      %513 = vmatprep.subr.bf16.mxu0 0
      %514 = vmatpush2.bf16.msra.mxu0 0
      %515 = vmatprep.subr.bf16.mxu0 0
      %516 = vmatpush2.bf16.msra.mxu0 0
      %517 = vmatprep.subr.bf16.mxu0 0
      %518 = vmatpush2.bf16.msra.mxu0 0
      %519 = vmatprep.subr.bf16.mxu0 0
      %520 = vmatpush2.bf16.msra.mxu0 0
      %521 = vmatprep.subr.bf16.mxu0 0
      %522 = vmatpush2.bf16.msra.mxu0 0
      %523 = vmatprep.subr.bf16.mxu0 0
      %524 = vmatpush2.bf16.msra.mxu0 0
      %525 = vmatprep.mubr.bf16.mxu0 0
      %526 = vmatmul.mubr.bf16.gmra.mxu0 %v242
      %v527 = vpop.f32.mrf.mxu0
      %v528 = vadd.f32 %v415, %v527
      %v529 = vpop.f32.mrf.mxu0
      %v530 = vpop.f32.mrf.mxu0
      %v531 = vadd.f32 %v418, %v530
      %v532 = vpop.f32.mrf.mxu0
      %533 = vmatprep.mubr.bf16.mxu0 0
      %534 = vmatmul.mubr.bf16.gmra.mxu0 %v243
      %v535 = vpop.f32.mrf.mxu0
      %v536 = vadd.f32 %v423, %v535
      %v537 = vpop.f32.mrf.mxu0
      %v538 = vpop.f32.mrf.mxu0
      %v539 = vadd.f32 %v426, %v538
      %v540 = vpop.f32.mrf.mxu0
      %541 = vmatprep.mubr.bf16.mxu0 0
      %542 = vmatmul.mubr.bf16.gmra.mxu0 %v244
      %v543 = vpop.f32.mrf.mxu0
      %v544 = vadd.f32 %v431, %v543
      %v545 = vpop.f32.mrf.mxu0
      %v546 = vpop.f32.mrf.mxu0
      %v547 = vadd.f32 %v434, %v546
      %v548 = vpop.f32.mrf.mxu0
      %549 = vmatprep.mubr.bf16.mxu0 0
      %550 = vmatmul.mubr.bf16.gmra.mxu0 %v245
      %v551 = vpop.f32.mrf.mxu0
      %v552 = vadd.f32 %v439, %v551
      %v553 = vpop.f32.mrf.mxu0
      %v554 = vpop.f32.mrf.mxu0
      %v555 = vadd.f32 %v442, %v554
      %v556 = vpop.f32.mrf.mxu0
      %557 = vdwg.mxu0
      %vm558 = vcmask 1045504
      %v559 = vrot.slane %v222, 2
      %v560 = vrot.slane %v223, 2
      %v561 = vsel %vm558, %v559, %v560
      %v562 = vrot.slane %v224, 2
      %v563 = vrot.slane %v225, 2
      %v564 = vsel %vm558, %v562, %v563
      %v565 = vrot.slane %v226, 2
      %v566 = vrot.slane %v227, 2
      %v567 = vsel %vm558, %v565, %v566
      %v568 = vrot.slane %v228, 2
      %v569 = vrot.slane %v229, 2
      %v570 = vsel %vm558, %v568, %v569
      %v571 = vrot.slane %v230, 2
      %v572 = vrot.slane %v231, 2
      %v573 = vsel %vm558, %v571, %v572
      %v574 = vrot.slane %v232, 2
      %v575 = vrot.slane %v233, 2
      %v576 = vsel %vm558, %v574, %v575
      %v577 = vrot.slane %v234, 2
      %v578 = vrot.slane %v235, 2
      %v579 = vsel %vm558, %v577, %v578
      %v580 = vrot.slane %v236, 2
      %v581 = vrot.slane %v237, 2
      %v582 = vsel %vm558, %v580, %v581
      %v591 = vpack.c.bf16 %v564, %v561
      %v592 = vpack.c.bf16 %v570, %v567
      %v593 = vpack.c.bf16 %v576, %v573
      %v594 = vpack.c.bf16 %v582, %v579
      %s595 = scalar_lea.vmem %s1, 128
      %v596 = vld [vmem:[%s595] sm:$0xf]
      %v597 = vld [vmem:[%s595 + $0x4] sm:$0xf]
      %v598 = vld [vmem:[%s595 + $0x8] sm:$0xf]
      %v599 = vld [vmem:[%s595 + $0xc] sm:$0xf]
      %v600 = vld [vmem:[%s595 + $0x10] sm:$0xf]
      %v601 = vld [vmem:[%s595 + $0x14] sm:$0xf]
      %v602 = vld [vmem:[%s595 + $0x18] sm:$0xf]
      %v603 = vld [vmem:[%s595 + $0x1c] sm:$0xf]
      %v604 = vld [vmem:[%s595 + $0x20] sm:$0xf]
      %v605 = vld [vmem:[%s595 + $0x24] sm:$0xf]
      %v606 = vld [vmem:[%s595 + $0x28] sm:$0xf]
      %v607 = vld [vmem:[%s595 + $0x2c] sm:$0xf]
      %v608 = vld [vmem:[%s595 + $0x30] sm:$0xf]
      %v609 = vld [vmem:[%s595 + $0x34] sm:$0xf]
      %v610 = vld [vmem:[%s595 + $0x38] sm:$0xf]
      %v611 = vld [vmem:[%s595 + $0x3c] sm:$0xf]
      %v628 = vunpack.c.l.b16 %v596
      %v629 = vunpack.c.l.b16 %v597
      %v630 = vunpack.c.l.b16 %v598
      %v631 = vunpack.c.l.b16 %v599
      %v632 = vunpack.c.l.b16 %v600
      %v633 = vunpack.c.l.b16 %v601
      %v634 = vunpack.c.l.b16 %v602
      %v635 = vunpack.c.l.b16 %v603
      %v636 = vunpack.c.l.b16 %v604
      %v637 = vunpack.c.l.b16 %v605
      %v638 = vunpack.c.l.b16 %v606
      %v639 = vunpack.c.l.b16 %v607
      %v640 = vunpack.c.l.b16 %v608
      %v641 = vunpack.c.l.b16 %v609
      %v642 = vunpack.c.l.b16 %v610
      %v643 = vunpack.c.l.b16 %v611
      %v644 = vpack.c.b16 %v629, %v628
      %v645 = vpack.c.b16 %v631, %v630
      %v646 = vpack.c.b16 %v633, %v632
      %v647 = vpack.c.b16 %v635, %v634
      %v648 = vpack.c.b16 %v637, %v636
      %v649 = vpack.c.b16 %v639, %v638
      %v650 = vpack.c.b16 %v641, %v640
      %v651 = vpack.c.b16 %v643, %v642
      %660 = vmatprep.subr.bf16.mxu0 0
      %661 = vmatpush1.bf16.msra.mxu0 %v651
      %662 = vmatprep.subr.bf16.mxu0 0
      %663 = vmatpush1.bf16.msra.mxu0 %v650
      %664 = vmatprep.subr.bf16.mxu0 0
      %665 = vmatpush1.bf16.msra.mxu0 %v649
      %666 = vmatprep.subr.bf16.mxu0 0
      %667 = vmatpush1.bf16.msra.mxu0 %v648
      %668 = vmatprep.subr.bf16.mxu0 0
      %669 = vmatpush1.bf16.msra.mxu0 %v647
      %670 = vmatprep.subr.bf16.mxu0 0
      %671 = vmatpush1.bf16.msra.mxu0 %v646
      %672 = vmatprep.subr.bf16.mxu0 0
      %673 = vmatpush1.bf16.msra.mxu0 %v645
      %674 = vmatprep.subr.bf16.mxu0 0
      %675 = vmatpush1.bf16.msra.mxu0 %v644
      %676 = vmatprep.subr.bf16.mxu0 0
      %677 = vmatpush2.bf16.msra.mxu0 0
      %678 = vmatprep.subr.bf16.mxu0 0
      %679 = vmatpush2.bf16.msra.mxu0 0
      %680 = vmatprep.subr.bf16.mxu0 0
      %681 = vmatpush2.bf16.msra.mxu0 0
      %682 = vmatprep.subr.bf16.mxu0 0
      %683 = vmatpush2.bf16.msra.mxu0 0
      %684 = vmatprep.subr.bf16.mxu0 0
      %685 = vmatpush2.bf16.msra.mxu0 0
      %686 = vmatprep.subr.bf16.mxu0 0
      %687 = vmatpush2.bf16.msra.mxu0 0
      %688 = vmatprep.subr.bf16.mxu0 0
      %689 = vmatpush2.bf16.msra.mxu0 0
      %690 = vmatprep.subr.bf16.mxu0 0
      %691 = vmatpush2.bf16.msra.mxu0 0
      %692 = vmatprep.mubr.bf16.mxu0 0
      %693 = vmatmul.mubr.bf16.gmra.mxu0 %v591
      %v694 = vpop.f32.mrf.mxu0
      %v695 = vadd.f32 0.0, %v694
      %v696 = vpop.f32.mrf.mxu0
      %v697 = vpop.f32.mrf.mxu0
      %v698 = vadd.f32 0.0, %v697
      %v699 = vpop.f32.mrf.mxu0
      %700 = vmatprep.mubr.bf16.mxu0 0
      %701 = vmatmul.mubr.bf16.gmra.mxu0 %v592
      %v702 = vpop.f32.mrf.mxu0
      %v703 = vadd.f32 0.0, %v702
      %v704 = vpop.f32.mrf.mxu0
      %v705 = vpop.f32.mrf.mxu0
      %v706 = vadd.f32 0.0, %v705
      %v707 = vpop.f32.mrf.mxu0
      %708 = vmatprep.mubr.bf16.mxu0 0
      %709 = vmatmul.mubr.bf16.gmra.mxu0 %v593
      %v710 = vpop.f32.mrf.mxu0
      %v711 = vadd.f32 0.0, %v710
      %v712 = vpop.f32.mrf.mxu0
      %v713 = vpop.f32.mrf.mxu0
      %v714 = vadd.f32 0.0, %v713
      %v715 = vpop.f32.mrf.mxu0
      %716 = vmatprep.mubr.bf16.mxu0 0
      %717 = vmatmul.mubr.bf16.gmra.mxu0 %v594
      %v718 = vpop.f32.mrf.mxu0
      %v719 = vadd.f32 0.0, %v718
      %v720 = vpop.f32.mrf.mxu0
      %v721 = vpop.f32.mrf.mxu0
      %v722 = vadd.f32 0.0, %v721
      %v723 = vpop.f32.mrf.mxu0
      %724 = vdwg.mxu0
      %v725 = vadd.f32 %v528, %v695
      %v726 = vadd.f32 %v531, %v698
      %v727 = vadd.f32 %v536, %v703
      %v728 = vadd.f32 %v539, %v706
      %v729 = vadd.f32 %v544, %v711
      %v730 = vadd.f32 %v547, %v714
      %v731 = vadd.f32 %v552, %v719
      %v732 = vadd.f32 %v555, %v722
      %v733 = vpack.c.bf16 %v226, %v224
      %v734 = vpack.c.bf16 %v230, %v228
      %v735 = vpack.c.bf16 %v234, %v232
      %v736 = vpack.c.bf16 %v238, %v236
      %s737 = scalar_lea.vmem %s1, 192
      %v738 = vld [vmem:[%s737] sm:$0xf]
      %v739 = vld [vmem:[%s737 + $0x4] sm:$0xf]
      %v740 = vld [vmem:[%s737 + $0x8] sm:$0xf]
      %v741 = vld [vmem:[%s737 + $0xc] sm:$0xf]
      %v742 = vld [vmem:[%s737 + $0x10] sm:$0xf]
      %v743 = vld [vmem:[%s737 + $0x14] sm:$0xf]
      %v744 = vld [vmem:[%s737 + $0x18] sm:$0xf]
      %v745 = vld [vmem:[%s737 + $0x1c] sm:$0xf]
      %v746 = vld [vmem:[%s737 + $0x20] sm:$0xf]
      %v747 = vld [vmem:[%s737 + $0x24] sm:$0xf]
      %v748 = vld [vmem:[%s737 + $0x28] sm:$0xf]
      %v749 = vld [vmem:[%s737 + $0x2c] sm:$0xf]
      %v750 = vld [vmem:[%s737 + $0x30] sm:$0xf]
      %v751 = vld [vmem:[%s737 + $0x34] sm:$0xf]
      %v752 = vld [vmem:[%s737 + $0x38] sm:$0xf]
      %v753 = vld [vmem:[%s737 + $0x3c] sm:$0xf]
      %v770 = vunpack.c.l.b16 %v738
      %v771 = vunpack.c.l.b16 %v739
      %v772 = vunpack.c.l.b16 %v740
      %v773 = vunpack.c.l.b16 %v741
      %v774 = vunpack.c.l.b16 %v742
      %v775 = vunpack.c.l.b16 %v743
      %v776 = vunpack.c.l.b16 %v744
      %v777 = vunpack.c.l.b16 %v745
      %v778 = vunpack.c.l.b16 %v746
      %v779 = vunpack.c.l.b16 %v747
      %v780 = vunpack.c.l.b16 %v748
      %v781 = vunpack.c.l.b16 %v749
      %v782 = vunpack.c.l.b16 %v750
      %v783 = vunpack.c.l.b16 %v751
      %v784 = vunpack.c.l.b16 %v752
      %v785 = vunpack.c.l.b16 %v753
      %v786 = vpack.c.b16 %v771, %v770
      %v787 = vpack.c.b16 %v773, %v772
      %v788 = vpack.c.b16 %v775, %v774
      %v789 = vpack.c.b16 %v777, %v776
      %v790 = vpack.c.b16 %v779, %v778
      %v791 = vpack.c.b16 %v781, %v780
      %v792 = vpack.c.b16 %v783, %v782
      %v793 = vpack.c.b16 %v785, %v784
      %802 = vmatprep.subr.bf16.mxu0 0
      %803 = vmatpush1.bf16.msra.mxu0 %v793
      %804 = vmatprep.subr.bf16.mxu0 0
      %805 = vmatpush1.bf16.msra.mxu0 %v792
      %806 = vmatprep.subr.bf16.mxu0 0
      %807 = vmatpush1.bf16.msra.mxu0 %v791
      %808 = vmatprep.subr.bf16.mxu0 0
      %809 = vmatpush1.bf16.msra.mxu0 %v790
      %810 = vmatprep.subr.bf16.mxu0 0
      %811 = vmatpush1.bf16.msra.mxu0 %v789
      %812 = vmatprep.subr.bf16.mxu0 0
      %813 = vmatpush1.bf16.msra.mxu0 %v788
      %814 = vmatprep.subr.bf16.mxu0 0
      %815 = vmatpush1.bf16.msra.mxu0 %v787
      %816 = vmatprep.subr.bf16.mxu0 0
      %817 = vmatpush1.bf16.msra.mxu0 %v786
      %818 = vmatprep.subr.bf16.mxu0 0
      %819 = vmatpush2.bf16.msra.mxu0 0
      %820 = vmatprep.subr.bf16.mxu0 0
      %821 = vmatpush2.bf16.msra.mxu0 0
      %822 = vmatprep.subr.bf16.mxu0 0
      %823 = vmatpush2.bf16.msra.mxu0 0
      %824 = vmatprep.subr.bf16.mxu0 0
      %825 = vmatpush2.bf16.msra.mxu0 0
      %826 = vmatprep.subr.bf16.mxu0 0
      %827 = vmatpush2.bf16.msra.mxu0 0
      %828 = vmatprep.subr.bf16.mxu0 0
      %829 = vmatpush2.bf16.msra.mxu0 0
      %830 = vmatprep.subr.bf16.mxu0 0
      %831 = vmatpush2.bf16.msra.mxu0 0
      %832 = vmatprep.subr.bf16.mxu0 0
      %833 = vmatpush2.bf16.msra.mxu0 0
      %834 = vmatprep.mubr.bf16.mxu0 0
      %835 = vmatmul.mubr.bf16.gmra.mxu0 %v733
      %v836 = vpop.f32.mrf.mxu0
      %v837 = vadd.f32 0.0, %v836
      %v838 = vpop.f32.mrf.mxu0
      %v839 = vpop.f32.mrf.mxu0
      %v840 = vadd.f32 0.0, %v839
      %v841 = vpop.f32.mrf.mxu0
      %842 = vmatprep.mubr.bf16.mxu0 0
      %843 = vmatmul.mubr.bf16.gmra.mxu0 %v734
      %v844 = vpop.f32.mrf.mxu0
      %v845 = vadd.f32 0.0, %v844
      %v846 = vpop.f32.mrf.mxu0
      %v847 = vpop.f32.mrf.mxu0
      %v848 = vadd.f32 0.0, %v847
      %v849 = vpop.f32.mrf.mxu0
      %850 = vmatprep.mubr.bf16.mxu0 0
      %851 = vmatmul.mubr.bf16.gmra.mxu0 %v735
      %v852 = vpop.f32.mrf.mxu0
      %v853 = vadd.f32 0.0, %v852
      %v854 = vpop.f32.mrf.mxu0
      %v855 = vpop.f32.mrf.mxu0
      %v856 = vadd.f32 0.0, %v855
      %v857 = vpop.f32.mrf.mxu0
      %858 = vmatprep.mubr.bf16.mxu0 0
      %859 = vmatmul.mubr.bf16.gmra.mxu0 %v736
      %v860 = vpop.f32.mrf.mxu0
      %v861 = vadd.f32 0.0, %v860
      %v862 = vpop.f32.mrf.mxu0
      %v863 = vpop.f32.mrf.mxu0
      %v864 = vadd.f32 0.0, %v863
      %v865 = vpop.f32.mrf.mxu0
      %866 = vdwg.mxu0
      %v867 = vadd.f32 %v725, %v837
      %v868 = vadd.f32 %v726, %v840
      %v869 = vadd.f32 %v727, %v845
      %v870 = vadd.f32 %v728, %v848
      %v871 = vadd.f32 %v729, %v853
      %v872 = vadd.f32 %v730, %v856
      %v873 = vadd.f32 %v731, %v861
      %v874 = vadd.f32 %v732, %v864
      %v877 = vrot.slane %v238, 1
      %v878 = vrot.slane %v239, 1
      %v879 = vsel %vm278, %v877, %v878
      %v881 = vpack.c.bf16 %v287, %v284
      %v882 = vpack.c.bf16 %v293, %v290
      %v883 = vpack.c.bf16 %v299, %v296
      %v884 = vpack.c.bf16 %v879, %v302
      %s885 = scalar_lea.vmem %s1, 256
      %v886 = vld [vmem:[%s885] sm:$0xf]
      %v887 = vld [vmem:[%s885 + $0x4] sm:$0xf]
      %v888 = vld [vmem:[%s885 + $0x8] sm:$0xf]
      %v889 = vld [vmem:[%s885 + $0xc] sm:$0xf]
      %v890 = vld [vmem:[%s885 + $0x10] sm:$0xf]
      %v891 = vld [vmem:[%s885 + $0x14] sm:$0xf]
      %v892 = vld [vmem:[%s885 + $0x18] sm:$0xf]
      %v893 = vld [vmem:[%s885 + $0x1c] sm:$0xf]
      %v894 = vld [vmem:[%s885 + $0x20] sm:$0xf]
      %v895 = vld [vmem:[%s885 + $0x24] sm:$0xf]
      %v896 = vld [vmem:[%s885 + $0x28] sm:$0xf]
      %v897 = vld [vmem:[%s885 + $0x2c] sm:$0xf]
      %v898 = vld [vmem:[%s885 + $0x30] sm:$0xf]
      %v899 = vld [vmem:[%s885 + $0x34] sm:$0xf]
      %v900 = vld [vmem:[%s885 + $0x38] sm:$0xf]
      %v901 = vld [vmem:[%s885 + $0x3c] sm:$0xf]
      %v918 = vunpack.c.l.b16 %v886
      %v919 = vunpack.c.l.b16 %v887
      %v920 = vunpack.c.l.b16 %v888
      %v921 = vunpack.c.l.b16 %v889
      %v922 = vunpack.c.l.b16 %v890
      %v923 = vunpack.c.l.b16 %v891
      %v924 = vunpack.c.l.b16 %v892
      %v925 = vunpack.c.l.b16 %v893
      %v926 = vunpack.c.l.b16 %v894
      %v927 = vunpack.c.l.b16 %v895
      %v928 = vunpack.c.l.b16 %v896
      %v929 = vunpack.c.l.b16 %v897
      %v930 = vunpack.c.l.b16 %v898
      %v931 = vunpack.c.l.b16 %v899
      %v932 = vunpack.c.l.b16 %v900
      %v933 = vunpack.c.l.b16 %v901
      %v934 = vpack.c.b16 %v919, %v918
      %v935 = vpack.c.b16 %v921, %v920
      %v936 = vpack.c.b16 %v923, %v922
      %v937 = vpack.c.b16 %v925, %v924
      %v938 = vpack.c.b16 %v927, %v926
      %v939 = vpack.c.b16 %v929, %v928
      %v940 = vpack.c.b16 %v931, %v930
      %v941 = vpack.c.b16 %v933, %v932
      %950 = vmatprep.subr.bf16.mxu0 0
      %951 = vmatpush1.bf16.msra.mxu0 %v941
      %952 = vmatprep.subr.bf16.mxu0 0
      %953 = vmatpush1.bf16.msra.mxu0 %v940
      %954 = vmatprep.subr.bf16.mxu0 0
      %955 = vmatpush1.bf16.msra.mxu0 %v939
      %956 = vmatprep.subr.bf16.mxu0 0
      %957 = vmatpush1.bf16.msra.mxu0 %v938
      %958 = vmatprep.subr.bf16.mxu0 0
      %959 = vmatpush1.bf16.msra.mxu0 %v937
      %960 = vmatprep.subr.bf16.mxu0 0
      %961 = vmatpush1.bf16.msra.mxu0 %v936
      %962 = vmatprep.subr.bf16.mxu0 0
      %963 = vmatpush1.bf16.msra.mxu0 %v935
      %964 = vmatprep.subr.bf16.mxu0 0
      %965 = vmatpush1.bf16.msra.mxu0 %v934
      %966 = vmatprep.subr.bf16.mxu0 0
      %967 = vmatpush2.bf16.msra.mxu0 0
      %968 = vmatprep.subr.bf16.mxu0 0
      %969 = vmatpush2.bf16.msra.mxu0 0
      %970 = vmatprep.subr.bf16.mxu0 0
      %971 = vmatpush2.bf16.msra.mxu0 0
      %972 = vmatprep.subr.bf16.mxu0 0
      %973 = vmatpush2.bf16.msra.mxu0 0
      %974 = vmatprep.subr.bf16.mxu0 0
      %975 = vmatpush2.bf16.msra.mxu0 0
      %976 = vmatprep.subr.bf16.mxu0 0
      %977 = vmatpush2.bf16.msra.mxu0 0
      %978 = vmatprep.subr.bf16.mxu0 0
      %979 = vmatpush2.bf16.msra.mxu0 0
      %980 = vmatprep.subr.bf16.mxu0 0
      %981 = vmatpush2.bf16.msra.mxu0 0
      %982 = vmatprep.mubr.bf16.mxu0 0
      %983 = vmatmul.mubr.bf16.gmra.mxu0 %v881
      %v984 = vpop.f32.mrf.mxu0
      %v985 = vadd.f32 0.0, %v984
      %v986 = vpop.f32.mrf.mxu0
      %v987 = vpop.f32.mrf.mxu0
      %v988 = vadd.f32 0.0, %v987
      %v989 = vpop.f32.mrf.mxu0
      %990 = vmatprep.mubr.bf16.mxu0 0
      %991 = vmatmul.mubr.bf16.gmra.mxu0 %v882
      %v992 = vpop.f32.mrf.mxu0
      %v993 = vadd.f32 0.0, %v992
      %v994 = vpop.f32.mrf.mxu0
      %v995 = vpop.f32.mrf.mxu0
      %v996 = vadd.f32 0.0, %v995
      %v997 = vpop.f32.mrf.mxu0
      %998 = vmatprep.mubr.bf16.mxu0 0
      %999 = vmatmul.mubr.bf16.gmra.mxu0 %v883
      %v1000 = vpop.f32.mrf.mxu0
      %v1001 = vadd.f32 0.0, %v1000
      %v1002 = vpop.f32.mrf.mxu0
      %v1003 = vpop.f32.mrf.mxu0
      %v1004 = vadd.f32 0.0, %v1003
      %v1005 = vpop.f32.mrf.mxu0
      %1006 = vmatprep.mubr.bf16.mxu0 0
      %1007 = vmatmul.mubr.bf16.gmra.mxu0 %v884
      %v1008 = vpop.f32.mrf.mxu0
      %v1009 = vadd.f32 0.0, %v1008
      %v1010 = vpop.f32.mrf.mxu0
      %v1011 = vpop.f32.mrf.mxu0
      %v1012 = vadd.f32 0.0, %v1011
      %v1013 = vpop.f32.mrf.mxu0
      %1014 = vdwg.mxu0
      %v1015 = vadd.f32 %v867, %v985
      %v1016 = vadd.f32 %v868, %v988
      %v1017 = vadd.f32 %v869, %v993
      %v1018 = vadd.f32 %v870, %v996
      %v1019 = vadd.f32 %v871, %v1001
      %v1020 = vadd.f32 %v872, %v1004
      %v1021 = vadd.f32 %v873, %v1009
      %v1022 = vadd.f32 %v874, %v1012
      %v1023 = vrot.slane %v238, 2
      %v1024 = vrot.slane %v239, 2
      %v1025 = vsel %vm558, %v1023, %v1024
      %v1027 = vpack.c.bf16 %v567, %v564
      %v1028 = vpack.c.bf16 %v573, %v570
      %v1029 = vpack.c.bf16 %v579, %v576
      %v1030 = vpack.c.bf16 %v1025, %v582
      %s1031 = scalar_lea.vmem %s1, 320
      %v1032 = vld [vmem:[%s1031] sm:$0xf]
      %v1033 = vld [vmem:[%s1031 + $0x4] sm:$0xf]
      %v1034 = vld [vmem:[%s1031 + $0x8] sm:$0xf]
      %v1035 = vld [vmem:[%s1031 + $0xc] sm:$0xf]
      %v1036 = vld [vmem:[%s1031 + $0x10] sm:$0xf]
      %v1037 = vld [vmem:[%s1031 + $0x14] sm:$0xf]
      %v1038 = vld [vmem:[%s1031 + $0x18] sm:$0xf]
      %v1039 = vld [vmem:[%s1031 + $0x1c] sm:$0xf]
      %v1040 = vld [vmem:[%s1031 + $0x20] sm:$0xf]
      %v1041 = vld [vmem:[%s1031 + $0x24] sm:$0xf]
      %v1042 = vld [vmem:[%s1031 + $0x28] sm:$0xf]
      %v1043 = vld [vmem:[%s1031 + $0x2c] sm:$0xf]
      %v1044 = vld [vmem:[%s1031 + $0x30] sm:$0xf]
      %v1045 = vld [vmem:[%s1031 + $0x34] sm:$0xf]
      %v1046 = vld [vmem:[%s1031 + $0x38] sm:$0xf]
      %v1047 = vld [vmem:[%s1031 + $0x3c] sm:$0xf]
      %v1064 = vunpack.c.l.b16 %v1032
      %v1065 = vunpack.c.l.b16 %v1033
      %v1066 = vunpack.c.l.b16 %v1034
      %v1067 = vunpack.c.l.b16 %v1035
      %v1068 = vunpack.c.l.b16 %v1036
      %v1069 = vunpack.c.l.b16 %v1037
      %v1070 = vunpack.c.l.b16 %v1038
      %v1071 = vunpack.c.l.b16 %v1039
      %v1072 = vunpack.c.l.b16 %v1040
      %v1073 = vunpack.c.l.b16 %v1041
      %v1074 = vunpack.c.l.b16 %v1042
      %v1075 = vunpack.c.l.b16 %v1043
      %v1076 = vunpack.c.l.b16 %v1044
      %v1077 = vunpack.c.l.b16 %v1045
      %v1078 = vunpack.c.l.b16 %v1046
      %v1079 = vunpack.c.l.b16 %v1047
      %v1080 = vpack.c.b16 %v1065, %v1064
      %v1081 = vpack.c.b16 %v1067, %v1066
      %v1082 = vpack.c.b16 %v1069, %v1068
      %v1083 = vpack.c.b16 %v1071, %v1070
      %v1084 = vpack.c.b16 %v1073, %v1072
      %v1085 = vpack.c.b16 %v1075, %v1074
      %v1086 = vpack.c.b16 %v1077, %v1076
      %v1087 = vpack.c.b16 %v1079, %v1078
      %1096 = vmatprep.subr.bf16.mxu0 0
      %1097 = vmatpush1.bf16.msra.mxu0 %v1087
      %1098 = vmatprep.subr.bf16.mxu0 0
      %1099 = vmatpush1.bf16.msra.mxu0 %v1086
      %1100 = vmatprep.subr.bf16.mxu0 0
      %1101 = vmatpush1.bf16.msra.mxu0 %v1085
      %1102 = vmatprep.subr.bf16.mxu0 0
      %1103 = vmatpush1.bf16.msra.mxu0 %v1084
      %1104 = vmatprep.subr.bf16.mxu0 0
      %1105 = vmatpush1.bf16.msra.mxu0 %v1083
      %1106 = vmatprep.subr.bf16.mxu0 0
      %1107 = vmatpush1.bf16.msra.mxu0 %v1082
      %1108 = vmatprep.subr.bf16.mxu0 0
      %1109 = vmatpush1.bf16.msra.mxu0 %v1081
      %1110 = vmatprep.subr.bf16.mxu0 0
      %1111 = vmatpush1.bf16.msra.mxu0 %v1080
      %1112 = vmatprep.subr.bf16.mxu0 0
      %1113 = vmatpush2.bf16.msra.mxu0 0
      %1114 = vmatprep.subr.bf16.mxu0 0
      %1115 = vmatpush2.bf16.msra.mxu0 0
      %1116 = vmatprep.subr.bf16.mxu0 0
      %1117 = vmatpush2.bf16.msra.mxu0 0
      %1118 = vmatprep.subr.bf16.mxu0 0
      %1119 = vmatpush2.bf16.msra.mxu0 0
      %1120 = vmatprep.subr.bf16.mxu0 0
      %1121 = vmatpush2.bf16.msra.mxu0 0
      %1122 = vmatprep.subr.bf16.mxu0 0
      %1123 = vmatpush2.bf16.msra.mxu0 0
      %1124 = vmatprep.subr.bf16.mxu0 0
      %1125 = vmatpush2.bf16.msra.mxu0 0
      %1126 = vmatprep.subr.bf16.mxu0 0
      %1127 = vmatpush2.bf16.msra.mxu0 0
      %1128 = vmatprep.mubr.bf16.mxu0 0
      %1129 = vmatmul.mubr.bf16.gmra.mxu0 %v1027
      %v1130 = vpop.f32.mrf.mxu0
      %v1131 = vadd.f32 0.0, %v1130
      %v1132 = vpop.f32.mrf.mxu0
      %v1133 = vpop.f32.mrf.mxu0
      %v1134 = vadd.f32 0.0, %v1133
      %v1135 = vpop.f32.mrf.mxu0
      %1136 = vmatprep.mubr.bf16.mxu0 0
      %1137 = vmatmul.mubr.bf16.gmra.mxu0 %v1028
      %v1138 = vpop.f32.mrf.mxu0
      %v1139 = vadd.f32 0.0, %v1138
      %v1140 = vpop.f32.mrf.mxu0
      %v1141 = vpop.f32.mrf.mxu0
      %v1142 = vadd.f32 0.0, %v1141
      %v1143 = vpop.f32.mrf.mxu0
      %1144 = vmatprep.mubr.bf16.mxu0 0
      %1145 = vmatmul.mubr.bf16.gmra.mxu0 %v1029
      %v1146 = vpop.f32.mrf.mxu0
      %v1147 = vadd.f32 0.0, %v1146
      %v1148 = vpop.f32.mrf.mxu0
      %v1149 = vpop.f32.mrf.mxu0
      %v1150 = vadd.f32 0.0, %v1149
      %v1151 = vpop.f32.mrf.mxu0
      %1152 = vmatprep.mubr.bf16.mxu0 0
      %1153 = vmatmul.mubr.bf16.gmra.mxu0 %v1030
      %v1154 = vpop.f32.mrf.mxu0
      %v1155 = vadd.f32 0.0, %v1154
      %v1156 = vpop.f32.mrf.mxu0
      %v1157 = vpop.f32.mrf.mxu0
      %v1158 = vadd.f32 0.0, %v1157
      %v1159 = vpop.f32.mrf.mxu0
      %1160 = vdwg.mxu0
      %v1161 = vadd.f32 %v1015, %v1131
      %v1162 = vadd.f32 %v1016, %v1134
      %v1163 = vadd.f32 %v1017, %v1139
      %v1164 = vadd.f32 %v1018, %v1142
      %v1165 = vadd.f32 %v1019, %v1147
      %v1166 = vadd.f32 %v1020, %v1150
      %v1167 = vadd.f32 %v1021, %v1155
      %v1168 = vadd.f32 %v1022, %v1158
      %v1169 = vpack.c.bf16 %v240, %v238
      %s1170 = scalar_lea.vmem %s1, 384
      %v1171 = vld [vmem:[%s1170] sm:$0xf]
      %v1172 = vld [vmem:[%s1170 + $0x4] sm:$0xf]
      %v1173 = vld [vmem:[%s1170 + $0x8] sm:$0xf]
      %v1174 = vld [vmem:[%s1170 + $0xc] sm:$0xf]
      %v1175 = vld [vmem:[%s1170 + $0x10] sm:$0xf]
      %v1176 = vld [vmem:[%s1170 + $0x14] sm:$0xf]
      %v1177 = vld [vmem:[%s1170 + $0x18] sm:$0xf]
      %v1178 = vld [vmem:[%s1170 + $0x1c] sm:$0xf]
      %v1179 = vld [vmem:[%s1170 + $0x20] sm:$0xf]
      %v1180 = vld [vmem:[%s1170 + $0x24] sm:$0xf]
      %v1181 = vld [vmem:[%s1170 + $0x28] sm:$0xf]
      %v1182 = vld [vmem:[%s1170 + $0x2c] sm:$0xf]
      %v1183 = vld [vmem:[%s1170 + $0x30] sm:$0xf]
      %v1184 = vld [vmem:[%s1170 + $0x34] sm:$0xf]
      %v1185 = vld [vmem:[%s1170 + $0x38] sm:$0xf]
      %v1186 = vld [vmem:[%s1170 + $0x3c] sm:$0xf]
      %v1203 = vunpack.c.l.b16 %v1171
      %v1204 = vunpack.c.l.b16 %v1172
      %v1205 = vunpack.c.l.b16 %v1173
      %v1206 = vunpack.c.l.b16 %v1174
      %v1207 = vunpack.c.l.b16 %v1175
      %v1208 = vunpack.c.l.b16 %v1176
      %v1209 = vunpack.c.l.b16 %v1177
      %v1210 = vunpack.c.l.b16 %v1178
      %v1211 = vunpack.c.l.b16 %v1179
      %v1212 = vunpack.c.l.b16 %v1180
      %v1213 = vunpack.c.l.b16 %v1181
      %v1214 = vunpack.c.l.b16 %v1182
      %v1215 = vunpack.c.l.b16 %v1183
      %v1216 = vunpack.c.l.b16 %v1184
      %v1217 = vunpack.c.l.b16 %v1185
      %v1218 = vunpack.c.l.b16 %v1186
      %v1219 = vpack.c.b16 %v1204, %v1203
      %v1220 = vpack.c.b16 %v1206, %v1205
      %v1221 = vpack.c.b16 %v1208, %v1207
      %v1222 = vpack.c.b16 %v1210, %v1209
      %v1223 = vpack.c.b16 %v1212, %v1211
      %v1224 = vpack.c.b16 %v1214, %v1213
      %v1225 = vpack.c.b16 %v1216, %v1215
      %v1226 = vpack.c.b16 %v1218, %v1217
      %1235 = vmatprep.subr.bf16.mxu0 0
      %1236 = vmatpush1.bf16.msra.mxu0 %v1226
      %1237 = vmatprep.subr.bf16.mxu0 0
      %1238 = vmatpush1.bf16.msra.mxu0 %v1225
      %1239 = vmatprep.subr.bf16.mxu0 0
      %1240 = vmatpush1.bf16.msra.mxu0 %v1224
      %1241 = vmatprep.subr.bf16.mxu0 0
      %1242 = vmatpush1.bf16.msra.mxu0 %v1223
      %1243 = vmatprep.subr.bf16.mxu0 0
      %1244 = vmatpush1.bf16.msra.mxu0 %v1222
      %1245 = vmatprep.subr.bf16.mxu0 0
      %1246 = vmatpush1.bf16.msra.mxu0 %v1221
      %1247 = vmatprep.subr.bf16.mxu0 0
      %1248 = vmatpush1.bf16.msra.mxu0 %v1220
      %1249 = vmatprep.subr.bf16.mxu0 0
      %1250 = vmatpush1.bf16.msra.mxu0 %v1219
      %1251 = vmatprep.subr.bf16.mxu0 0
      %1252 = vmatpush2.bf16.msra.mxu0 0
      %1253 = vmatprep.subr.bf16.mxu0 0
      %1254 = vmatpush2.bf16.msra.mxu0 0
      %1255 = vmatprep.subr.bf16.mxu0 0
      %1256 = vmatpush2.bf16.msra.mxu0 0
      %1257 = vmatprep.subr.bf16.mxu0 0
      %1258 = vmatpush2.bf16.msra.mxu0 0
      %1259 = vmatprep.subr.bf16.mxu0 0
      %1260 = vmatpush2.bf16.msra.mxu0 0
      %1261 = vmatprep.subr.bf16.mxu0 0
      %1262 = vmatpush2.bf16.msra.mxu0 0
      %1263 = vmatprep.subr.bf16.mxu0 0
      %1264 = vmatpush2.bf16.msra.mxu0 0
      %1265 = vmatprep.subr.bf16.mxu0 0
      %1266 = vmatpush2.bf16.msra.mxu0 0
      %1267 = vmatprep.mubr.bf16.mxu0 0
      %1268 = vmatmul.mubr.bf16.gmra.mxu0 %v243
      %v1269 = vpop.f32.mrf.mxu0
      %v1270 = vadd.f32 0.0, %v1269
      %v1271 = vpop.f32.mrf.mxu0
      %v1272 = vpop.f32.mrf.mxu0
      %v1273 = vadd.f32 0.0, %v1272
      %v1274 = vpop.f32.mrf.mxu0
      %1275 = vmatprep.mubr.bf16.mxu0 0
      %1276 = vmatmul.mubr.bf16.gmra.mxu0 %v244
      %v1277 = vpop.f32.mrf.mxu0
      %v1278 = vadd.f32 0.0, %v1277
      %v1279 = vpop.f32.mrf.mxu0
      %v1280 = vpop.f32.mrf.mxu0
      %v1281 = vadd.f32 0.0, %v1280
      %v1282 = vpop.f32.mrf.mxu0
      %1283 = vmatprep.mubr.bf16.mxu0 0
      %1284 = vmatmul.mubr.bf16.gmra.mxu0 %v245
      %v1285 = vpop.f32.mrf.mxu0
      %v1286 = vadd.f32 0.0, %v1285
      %v1287 = vpop.f32.mrf.mxu0
      %v1288 = vpop.f32.mrf.mxu0
      %v1289 = vadd.f32 0.0, %v1288
      %v1290 = vpop.f32.mrf.mxu0
      %1291 = vmatprep.mubr.bf16.mxu0 0
      %1292 = vmatmul.mubr.bf16.gmra.mxu0 %v1169
      %v1293 = vpop.f32.mrf.mxu0
      %v1294 = vadd.f32 0.0, %v1293
      %v1295 = vpop.f32.mrf.mxu0
      %v1296 = vpop.f32.mrf.mxu0
      %v1297 = vadd.f32 0.0, %v1296
      %v1298 = vpop.f32.mrf.mxu0
      %1299 = vdwg.mxu0
      %v1300 = vadd.f32 %v1161, %v1270
      %v1301 = vadd.f32 %v1162, %v1273
      %v1302 = vadd.f32 %v1163, %v1278
      %v1303 = vadd.f32 %v1164, %v1281
      %v1304 = vadd.f32 %v1165, %v1286
      %v1305 = vadd.f32 %v1166, %v1289
      %v1306 = vadd.f32 %v1167, %v1294
      %v1307 = vadd.f32 %v1168, %v1297
      %v1310 = vrot.slane %v240, 1
      %v1311 = vrot.slane %v241, 1
      %v1312 = vsel %vm278, %v1310, %v1311
      %v1314 = vpack.c.bf16 %v1312, %v879
      %s1315 = scalar_lea.vmem %s1, 448
      %v1316 = vld [vmem:[%s1315] sm:$0xf]
      %v1317 = vld [vmem:[%s1315 + $0x4] sm:$0xf]
      %v1318 = vld [vmem:[%s1315 + $0x8] sm:$0xf]
      %v1319 = vld [vmem:[%s1315 + $0xc] sm:$0xf]
      %v1320 = vld [vmem:[%s1315 + $0x10] sm:$0xf]
      %v1321 = vld [vmem:[%s1315 + $0x14] sm:$0xf]
      %v1322 = vld [vmem:[%s1315 + $0x18] sm:$0xf]
      %v1323 = vld [vmem:[%s1315 + $0x1c] sm:$0xf]
      %v1324 = vld [vmem:[%s1315 + $0x20] sm:$0xf]
      %v1325 = vld [vmem:[%s1315 + $0x24] sm:$0xf]
      %v1326 = vld [vmem:[%s1315 + $0x28] sm:$0xf]
      %v1327 = vld [vmem:[%s1315 + $0x2c] sm:$0xf]
      %v1328 = vld [vmem:[%s1315 + $0x30] sm:$0xf]
      %v1329 = vld [vmem:[%s1315 + $0x34] sm:$0xf]
      %v1330 = vld [vmem:[%s1315 + $0x38] sm:$0xf]
      %v1331 = vld [vmem:[%s1315 + $0x3c] sm:$0xf]
      %v1348 = vunpack.c.l.b16 %v1316
      %v1349 = vunpack.c.l.b16 %v1317
      %v1350 = vunpack.c.l.b16 %v1318
      %v1351 = vunpack.c.l.b16 %v1319
      %v1352 = vunpack.c.l.b16 %v1320
      %v1353 = vunpack.c.l.b16 %v1321
      %v1354 = vunpack.c.l.b16 %v1322
      %v1355 = vunpack.c.l.b16 %v1323
      %v1356 = vunpack.c.l.b16 %v1324
      %v1357 = vunpack.c.l.b16 %v1325
      %v1358 = vunpack.c.l.b16 %v1326
      %v1359 = vunpack.c.l.b16 %v1327
      %v1360 = vunpack.c.l.b16 %v1328
      %v1361 = vunpack.c.l.b16 %v1329
      %v1362 = vunpack.c.l.b16 %v1330
      %v1363 = vunpack.c.l.b16 %v1331
      %v1364 = vpack.c.b16 %v1349, %v1348
      %v1365 = vpack.c.b16 %v1351, %v1350
      %v1366 = vpack.c.b16 %v1353, %v1352
      %v1367 = vpack.c.b16 %v1355, %v1354
      %v1368 = vpack.c.b16 %v1357, %v1356
      %v1369 = vpack.c.b16 %v1359, %v1358
      %v1370 = vpack.c.b16 %v1361, %v1360
      %v1371 = vpack.c.b16 %v1363, %v1362
      %1380 = vmatprep.subr.bf16.mxu0 0
      %1381 = vmatpush1.bf16.msra.mxu0 %v1371
      %1382 = vmatprep.subr.bf16.mxu0 0
      %1383 = vmatpush1.bf16.msra.mxu0 %v1370
      %1384 = vmatprep.subr.bf16.mxu0 0
      %1385 = vmatpush1.bf16.msra.mxu0 %v1369
      %1386 = vmatprep.subr.bf16.mxu0 0
      %1387 = vmatpush1.bf16.msra.mxu0 %v1368
      %1388 = vmatprep.subr.bf16.mxu0 0
      %1389 = vmatpush1.bf16.msra.mxu0 %v1367
      %1390 = vmatprep.subr.bf16.mxu0 0
      %1391 = vmatpush1.bf16.msra.mxu0 %v1366
      %1392 = vmatprep.subr.bf16.mxu0 0
      %1393 = vmatpush1.bf16.msra.mxu0 %v1365
      %1394 = vmatprep.subr.bf16.mxu0 0
      %1395 = vmatpush1.bf16.msra.mxu0 %v1364
      %1396 = vmatprep.subr.bf16.mxu0 0
      %1397 = vmatpush2.bf16.msra.mxu0 0
      %1398 = vmatprep.subr.bf16.mxu0 0
      %1399 = vmatpush2.bf16.msra.mxu0 0
      %1400 = vmatprep.subr.bf16.mxu0 0
      %1401 = vmatpush2.bf16.msra.mxu0 0
      %1402 = vmatprep.subr.bf16.mxu0 0
      %1403 = vmatpush2.bf16.msra.mxu0 0
      %1404 = vmatprep.subr.bf16.mxu0 0
      %1405 = vmatpush2.bf16.msra.mxu0 0
      %1406 = vmatprep.subr.bf16.mxu0 0
      %1407 = vmatpush2.bf16.msra.mxu0 0
      %1408 = vmatprep.subr.bf16.mxu0 0
      %1409 = vmatpush2.bf16.msra.mxu0 0
      %1410 = vmatprep.subr.bf16.mxu0 0
      %1411 = vmatpush2.bf16.msra.mxu0 0
      %1412 = vmatprep.mubr.bf16.mxu0 0
      %1413 = vmatmul.mubr.bf16.gmra.mxu0 %v312
      %v1414 = vpop.f32.mrf.mxu0
      %v1415 = vadd.f32 0.0, %v1414
      %v1416 = vpop.f32.mrf.mxu0
      %v1417 = vpop.f32.mrf.mxu0
      %v1418 = vadd.f32 0.0, %v1417
      %v1419 = vpop.f32.mrf.mxu0
      %1420 = vmatprep.mubr.bf16.mxu0 0
      %1421 = vmatmul.mubr.bf16.gmra.mxu0 %v313
      %v1422 = vpop.f32.mrf.mxu0
      %v1423 = vadd.f32 0.0, %v1422
      %v1424 = vpop.f32.mrf.mxu0
      %v1425 = vpop.f32.mrf.mxu0
      %v1426 = vadd.f32 0.0, %v1425
      %v1427 = vpop.f32.mrf.mxu0
      %1428 = vmatprep.mubr.bf16.mxu0 0
      %1429 = vmatmul.mubr.bf16.gmra.mxu0 %v314
      %v1430 = vpop.f32.mrf.mxu0
      %v1431 = vadd.f32 0.0, %v1430
      %v1432 = vpop.f32.mrf.mxu0
      %v1433 = vpop.f32.mrf.mxu0
      %v1434 = vadd.f32 0.0, %v1433
      %v1435 = vpop.f32.mrf.mxu0
      %1436 = vmatprep.mubr.bf16.mxu0 0
      %1437 = vmatmul.mubr.bf16.gmra.mxu0 %v1314
      %v1438 = vpop.f32.mrf.mxu0
      %v1439 = vadd.f32 0.0, %v1438
      %v1440 = vpop.f32.mrf.mxu0
      %v1441 = vpop.f32.mrf.mxu0
      %v1442 = vadd.f32 0.0, %v1441
      %v1443 = vpop.f32.mrf.mxu0
      %1444 = vdwg.mxu0
      %v1445 = vadd.f32 %v1300, %v1415
      %v1446 = vadd.f32 %v1301, %v1418
      %v1447 = vadd.f32 %v1302, %v1423
      %v1448 = vadd.f32 %v1303, %v1426
      %v1449 = vadd.f32 %v1304, %v1431
      %v1450 = vadd.f32 %v1305, %v1434
      %v1451 = vadd.f32 %v1306, %v1439
      %v1452 = vadd.f32 %v1307, %v1442
      %v1453 = vrot.slane %v240, 2
      %v1454 = vrot.slane %v241, 2
      %v1455 = vsel %vm558, %v1453, %v1454
      %v1457 = vpack.c.bf16 %v1455, %v1025
      %s1458 = scalar_lea.vmem %s1, 512
      %v1459 = vld [vmem:[%s1458] sm:$0xf]
      %v1460 = vld [vmem:[%s1458 + $0x4] sm:$0xf]
      %v1461 = vld [vmem:[%s1458 + $0x8] sm:$0xf]
      %v1462 = vld [vmem:[%s1458 + $0xc] sm:$0xf]
      %v1463 = vld [vmem:[%s1458 + $0x10] sm:$0xf]
      %v1464 = vld [vmem:[%s1458 + $0x14] sm:$0xf]
      %v1465 = vld [vmem:[%s1458 + $0x18] sm:$0xf]
      %v1466 = vld [vmem:[%s1458 + $0x1c] sm:$0xf]
      %v1467 = vld [vmem:[%s1458 + $0x20] sm:$0xf]
      %v1468 = vld [vmem:[%s1458 + $0x24] sm:$0xf]
      %v1469 = vld [vmem:[%s1458 + $0x28] sm:$0xf]
      %v1470 = vld [vmem:[%s1458 + $0x2c] sm:$0xf]
      %v1471 = vld [vmem:[%s1458 + $0x30] sm:$0xf]
      %v1472 = vld [vmem:[%s1458 + $0x34] sm:$0xf]
      %v1473 = vld [vmem:[%s1458 + $0x38] sm:$0xf]
      %v1474 = vld [vmem:[%s1458 + $0x3c] sm:$0xf]
      %v1491 = vunpack.c.l.b16 %v1459
      %v1492 = vunpack.c.l.b16 %v1460
      %v1493 = vunpack.c.l.b16 %v1461
      %v1494 = vunpack.c.l.b16 %v1462
      %v1495 = vunpack.c.l.b16 %v1463
      %v1496 = vunpack.c.l.b16 %v1464
      %v1497 = vunpack.c.l.b16 %v1465
      %v1498 = vunpack.c.l.b16 %v1466
      %v1499 = vunpack.c.l.b16 %v1467
      %v1500 = vunpack.c.l.b16 %v1468
      %v1501 = vunpack.c.l.b16 %v1469
      %v1502 = vunpack.c.l.b16 %v1470
      %v1503 = vunpack.c.l.b16 %v1471
      %v1504 = vunpack.c.l.b16 %v1472
      %v1505 = vunpack.c.l.b16 %v1473
      %v1506 = vunpack.c.l.b16 %v1474
      %v1507 = vpack.c.b16 %v1492, %v1491
      %v1508 = vpack.c.b16 %v1494, %v1493
      %v1509 = vpack.c.b16 %v1496, %v1495
      %v1510 = vpack.c.b16 %v1498, %v1497
      %v1511 = vpack.c.b16 %v1500, %v1499
      %v1512 = vpack.c.b16 %v1502, %v1501
      %v1513 = vpack.c.b16 %v1504, %v1503
      %v1514 = vpack.c.b16 %v1506, %v1505
      %1523 = vmatprep.subr.bf16.mxu0 0
      %1524 = vmatpush1.bf16.msra.mxu0 %v1514
      %1525 = vmatprep.subr.bf16.mxu0 0
      %1526 = vmatpush1.bf16.msra.mxu0 %v1513
      %1527 = vmatprep.subr.bf16.mxu0 0
      %1528 = vmatpush1.bf16.msra.mxu0 %v1512
      %1529 = vmatprep.subr.bf16.mxu0 0
      %1530 = vmatpush1.bf16.msra.mxu0 %v1511
      %1531 = vmatprep.subr.bf16.mxu0 0
      %1532 = vmatpush1.bf16.msra.mxu0 %v1510
      %1533 = vmatprep.subr.bf16.mxu0 0
      %1534 = vmatpush1.bf16.msra.mxu0 %v1509
      %1535 = vmatprep.subr.bf16.mxu0 0
      %1536 = vmatpush1.bf16.msra.mxu0 %v1508
      %1537 = vmatprep.subr.bf16.mxu0 0
      %1538 = vmatpush1.bf16.msra.mxu0 %v1507
      %1539 = vmatprep.subr.bf16.mxu0 0
      %1540 = vmatpush2.bf16.msra.mxu0 0
      %1541 = vmatprep.subr.bf16.mxu0 0
      %1542 = vmatpush2.bf16.msra.mxu0 0
      %1543 = vmatprep.subr.bf16.mxu0 0
      %1544 = vmatpush2.bf16.msra.mxu0 0
      %1545 = vmatprep.subr.bf16.mxu0 0
      %1546 = vmatpush2.bf16.msra.mxu0 0
      %1547 = vmatprep.subr.bf16.mxu0 0
      %1548 = vmatpush2.bf16.msra.mxu0 0
      %1549 = vmatprep.subr.bf16.mxu0 0
      %1550 = vmatpush2.bf16.msra.mxu0 0
      %1551 = vmatprep.subr.bf16.mxu0 0
      %1552 = vmatpush2.bf16.msra.mxu0 0
      %1553 = vmatprep.subr.bf16.mxu0 0
      %1554 = vmatpush2.bf16.msra.mxu0 0
      %1555 = vmatprep.mubr.bf16.mxu0 0
      %1556 = vmatmul.mubr.bf16.gmra.mxu0 %v592
      %v1557 = vpop.f32.mrf.mxu0
      %v1558 = vadd.f32 0.0, %v1557
      %v1559 = vpop.f32.mrf.mxu0
      %v1560 = vpop.f32.mrf.mxu0
      %v1561 = vadd.f32 0.0, %v1560
      %v1562 = vpop.f32.mrf.mxu0
      %1563 = vmatprep.mubr.bf16.mxu0 0
      %1564 = vmatmul.mubr.bf16.gmra.mxu0 %v593
      %v1565 = vpop.f32.mrf.mxu0
      %v1566 = vadd.f32 0.0, %v1565
      %v1567 = vpop.f32.mrf.mxu0
      %v1568 = vpop.f32.mrf.mxu0
      %v1569 = vadd.f32 0.0, %v1568
      %v1570 = vpop.f32.mrf.mxu0
      %1571 = vmatprep.mubr.bf16.mxu0 0
      %1572 = vmatmul.mubr.bf16.gmra.mxu0 %v594
      %v1573 = vpop.f32.mrf.mxu0
      %v1574 = vadd.f32 0.0, %v1573
      %v1575 = vpop.f32.mrf.mxu0
      %v1576 = vpop.f32.mrf.mxu0
      %v1577 = vadd.f32 0.0, %v1576
      %v1578 = vpop.f32.mrf.mxu0
      %1579 = vmatprep.mubr.bf16.mxu0 0
      %1580 = vmatmul.mubr.bf16.gmra.mxu0 %v1457
      %v1581 = vpop.f32.mrf.mxu0
      %v1582 = vadd.f32 0.0, %v1581
      %v1583 = vpop.f32.mrf.mxu0
      %v1584 = vpop.f32.mrf.mxu0
      %v1585 = vadd.f32 0.0, %v1584
      %v1586 = vpop.f32.mrf.mxu0
      %1587 = vdwg.mxu0
      %v1588 = vadd.f32 %v1445, %v1558
      %v1589 = vadd.f32 %v1446, %v1561
      %v1590 = vadd.f32 %v1447, %v1566
      %v1591 = vadd.f32 %v1448, %v1569
      %v1592 = vadd.f32 %v1449, %v1574
      %v1593 = vadd.f32 %v1450, %v1577
      %v1594 = vadd.f32 %v1451, %v1582
      %v1595 = vadd.f32 %v1452, %v1585
      %v1596 = vld [vmem:[%s2] sm:$0x1]
      %v1598 = vlaneseq
      %v1599 = vshrl.u32 %v1598, 7
      %v1600 = vsub.s32 0, %v1599
      %v1601 = vrot.slane %v1596, %v1600
      %v1603 = vadd.f32 %v1588, %v1601
      %v1604 = vadd.f32 %v1589, %v1601
      %v1605 = vadd.f32 %v1590, %v1601
      %v1606 = vadd.f32 %v1591, %v1601
      %v1607 = vadd.f32 %v1592, %v1601
      %v1608 = vadd.f32 %v1593, %v1601
      %v1609 = vadd.f32 %v1594, %v1601
      %v1610 = vadd.f32 %v1595, %v1601
      %v1611 = vld [vmem:[%s213] sm:$0xff]
      %v1612 = vld [vmem:[%s213 + $0x8] sm:$0xff]
      %v1613 = vld [vmem:[%s213 + $0x10] sm:$0xff]
      %v1614 = vld [vmem:[%s213 + $0x18] sm:$0xff]
      %v1615 = vld [vmem:[%s213 + $0x20] sm:$0xff]
      %v1616 = vld [vmem:[%s213 + $0x28] sm:$0xff]
      %v1617 = vld [vmem:[%s213 + $0x30] sm:$0xff]
      %v1618 = vld [vmem:[%s213 + $0x38] sm:$0xff]
      %v1619 = vadd.f32 %v1603, %v1611
      %v1620 = vadd.f32 %v1604, %v1612
      %v1621 = vadd.f32 %v1605, %v1613
      %v1622 = vadd.f32 %v1606, %v1614
      %v1623 = vadd.f32 %v1607, %v1615
      %v1624 = vadd.f32 %v1608, %v1616
      %v1625 = vadd.f32 %v1609, %v1617
      %v1626 = vadd.f32 %v1610, %v1618
      %1627 = vst [vmem:[%s219] sm:$0xff] %v1619
      %1628 = vst [vmem:[%s219 + $0x8] sm:$0xff] %v1620
      %1629 = vst [vmem:[%s219 + $0x10] sm:$0xff] %v1621
      %1630 = vst [vmem:[%s219 + $0x18] sm:$0xff] %v1622
      %1631 = vst [vmem:[%s219 + $0x20] sm:$0xff] %v1623
      %1632 = vst [vmem:[%s219 + $0x28] sm:$0xff] %v1624
      %1633 = vst [vmem:[%s219 + $0x30] sm:$0xff] %v1625
      %1634 = vst [vmem:[%s219 + $0x38] sm:$0xff] %v1626
      %s1635 = smul.u32 8, %s15
      %p1636 = scmp.lt.s32.totalorder %s1635, 15
      %s1637 = scalar_select %p1636, %s1635, 15
      %s1638 = smul.addr %s1637, 8
      %s1639 = scalar_lea.vmem %s4, %s1638
      // Predicated region
      $region37: #{residual_feature_net.17} parent=35 // pred_check
        %p1640 = pneg %p127
      $region38: #{residual_feature_net.17} parent=35 // pred_check_branch
        %1642 = sbr.rel (%p1640) target = $region40
      $region39: #{residual_feature_net.17} parent=35 // pred_region
        %s1643 = smul.u32 8, %s15
      $region40: #{residual_feature_net.17} parent=35 // pred_fallthru
        _
    $region36: #{residual_feature_net.17} parent=5 // pred_fallthru
      _
    %p1644 = scmp.le.s32.totalorder 2, %s10
    // Predicated region
    $region41: #{residual_feature_net.17} parent=5 // pred_check
      %p1645 = pneg %p1644
    $region42: #{residual_feature_net.17} parent=5 // pred_check_branch
      %1647 = sbr.rel (%p1645) target = $region44
    $region43: #{residual_feature_net.17} parent=5 // pred_region
      %s1648 = ssub.s32 %s10, 2
      // Predicated region
      $region45: #{residual_feature_net.17} parent=43 // pred_check
        %p1649 = pneg %p133
      $region46: #{residual_feature_net.17} parent=43 // pred_check_branch
        %1651 = sbr.rel (%p1649) target = $region48
      $region47: #{residual_feature_net.17} parent=43 // pred_region
        %s1652 = smul.u32 8, %s16
        %p1653 = scmp.lt.s32.totalorder %s1652, 15
        %s1654 = scalar_select %p1653, %s1652, 15
        %s1655 = smul.addr %s1654, 8
        %s1656 = scalar_lea.vmem %s4, %s1655
      $region48: #{residual_feature_net.17} parent=43 // pred_fallthru
        _
    $region44: #{residual_feature_net.17} parent=5 // pred_fallthru
      _
  $region6: #{residual_feature_net.17} parent=0 // loop_footer
    %s14 = sadd.s32 1, %s10
  $region7: #{residual_feature_net.17} parent=0 // loop_footer_branch
    %9 = sbr.rel target = $region3
  $region8: #{residual_feature_net.17} parent=0 // loop_exit
    _

// kernel: residual_feature_net.16
$region0: #{residual_feature_net.16}
  #allocation0 [shape = 'u32[]', space=smem, size = 0x4, offset = 0x4, fixed_abs, tag = 'smem constant byte address 0x4 - core index']
  #allocation1 [shape = 'u32[144,128]{1,0:T(1,128)}', space=vmem, size = 0x12000, scoped, tag = 'internal scratch']
  %s0 = inlined_call_operand.vmem [shape: f32[2,10,10,128], index: 0, kind: input, shape index: {}]
  %s1 = inlined_call_operand.vmem [shape: bf16[9,128,128], index: 1, kind: input, shape index: {}]
  %s2 = inlined_call_operand.vmem [shape: f32[1,128], index: 2, kind: input, shape index: {}]
  %s3 = inlined_call_operand.vmem [shape: f32[128,128], index: 3, kind: output, shape index: {}]
  %s4 = sld [smem:[#allocation0]]
  $region45: #{residual_feature_net.16} parent=0
    _
  %s6 = ssub.s32 1, %s4
  %s7 = scalar_select 0, %s6, %s4
  loop: start=0, step=1, limit=4
  $region2: #{residual_feature_net.16} parent=0 // loop_pre_header
    _
  $region3: #{residual_feature_net.16} parent=0 // loop_header
    %s9 = sphi 0, %s13
    %p10 = scmp.ge.s32.totalorder %s9, 4
    %s19 = sphi 0, %s21
    %s22 = sphi 0, %s19
    %s23 = sphi 0, %s22
    %s39 = sphi 0, %s23
    %s43 = sphi 0, %s43
    %s45 = sphi 0, %s43
    %s46 = sphi 0, %s45
    %s60 = sphi 0, %s46
    %s64 = sphi 0, %s64
    %s66 = sphi 0, %s64
    %s67 = sphi 0, %s66
    %s81 = sphi 0, %s67
    %s87 = sphi 0, %s89
    %s90 = sphi 0, %s87
    %s91 = sphi 0, %s90
    %s107 = sphi 0, %s91
  $region4: #{residual_feature_net.16} parent=0 // loop_header_branch
    %12 = sbr.rel (%p10) target = $region8
  $region5: #{residual_feature_net.16} parent=0 // loop_body
    %s14 = ssub.s32 %s9, 1
    %s15 = ssub.s32 %s9, 2
    %s16 = sadd.s32 %s9, 1
    %s17 = ssub.s32 %s9, %s16
    %p18 = scmp.eq.s32.totalorder %s17, 0
    %s20 = sadd.s32 %s19, 1
    %s21 = scalar_select %p18, %s19, %s20
    %p24 = pneg %p18
    %p25 = scmp.eq.s32.totalorder %s9, 1
    %p26 = por %p24, %p25
    %p27 = scmp.ne.s32.totalorder %s19, %s22
    %p28 = scmp.eq.s32.totalorder %s9, 0
    %p29 = por %p27, %p28
    %p30 = scmp.ne.s32.totalorder %s19, %s22
    %p31 = scmp.eq.s32.totalorder %s14, 1
    %p32 = por %p30, %p31
    %p33 = scmp.ne.s32.totalorder %s22, %s23
    %p34 = scmp.eq.s32.totalorder %s14, 0
    %p35 = por %p33, %p34
    %p36 = scmp.ne.s32.totalorder %s22, %s23
    %p37 = scmp.eq.s32.totalorder %s15, 1
    %p38 = por %p36, %p37
    %p40 = scmp.ne.s32.totalorder %s23, %s39
    %p41 = scmp.eq.s32.totalorder %s15, 0
    %p42 = por %p40, %p41
    %s44 = sadd.s32 %s43, 1
    %p47 = scmp.eq.s32.totalorder %s9, 1
    %p48 = scmp.ne.s32.totalorder %s43, %s45
    %p49 = scmp.eq.s32.totalorder %s9, 0
    %p50 = por %p48, %p49
    %p51 = scmp.ne.s32.totalorder %s43, %s45
    %p52 = scmp.eq.s32.totalorder %s14, 1
    %p53 = por %p51, %p52
    %p54 = scmp.ne.s32.totalorder %s45, %s46
    %p55 = scmp.eq.s32.totalorder %s14, 0
    %p56 = por %p54, %p55
    %p57 = scmp.ne.s32.totalorder %s45, %s46
    %p58 = scmp.eq.s32.totalorder %s15, 1
    %p59 = por %p57, %p58
    %p61 = scmp.ne.s32.totalorder %s46, %s60
    %p62 = scmp.eq.s32.totalorder %s15, 0
    %p63 = por %p61, %p62
    %s65 = sadd.s32 %s64, 1
    %p68 = scmp.eq.s32.totalorder %s9, 1
    %p69 = scmp.ne.s32.totalorder %s64, %s66
    %p70 = scmp.eq.s32.totalorder %s9, 0
    %p71 = por %p69, %p70
    %p72 = scmp.ne.s32.totalorder %s64, %s66
    %p73 = scmp.eq.s32.totalorder %s14, 1
    %p74 = por %p72, %p73
    %p75 = scmp.ne.s32.totalorder %s66, %s67
    %p76 = scmp.eq.s32.totalorder %s14, 0
    %p77 = por %p75, %p76
    %p78 = scmp.ne.s32.totalorder %s66, %s67
    %p79 = scmp.eq.s32.totalorder %s15, 1
    %p80 = por %p78, %p79
    %p82 = scmp.ne.s32.totalorder %s67, %s81
    %p83 = scmp.eq.s32.totalorder %s15, 0
    %p84 = por %p82, %p83
    %s85 = ssub.s32 %s9, %s16
    %p86 = scmp.eq.s32.totalorder %s85, 0
    %s88 = sadd.s32 %s87, 1
    %s89 = scalar_select %p86, %s87, %s88
    %p92 = pneg %p86
    %p93 = scmp.eq.s32.totalorder %s9, 1
    %p94 = por %p92, %p93
    %p95 = scmp.ne.s32.totalorder %s87, %s90
    %p96 = scmp.eq.s32.totalorder %s9, 0
    %p97 = por %p95, %p96
    %p98 = scmp.ne.s32.totalorder %s87, %s90
    %p99 = scmp.eq.s32.totalorder %s14, 1
    %p100 = por %p98, %p99
    %p101 = scmp.ne.s32.totalorder %s90, %s91
    %p102 = scmp.eq.s32.totalorder %s14, 0
    %p103 = por %p101, %p102
    %p104 = scmp.ne.s32.totalorder %s90, %s91
    %p105 = scmp.eq.s32.totalorder %s15, 1
    %p106 = por %p104, %p105
    %p108 = scmp.ne.s32.totalorder %s91, %s107
    %p109 = scmp.eq.s32.totalorder %s15, 0
    %p110 = por %p108, %p109
    %p111 = scmp.le.s32.totalorder 1, %s9
    %p112 = scmp.lt.s32.totalorder %s9, 3
    %p113 = pnand %p111, %p112
    %p114 = pneg %p113
    // Predicated region
    $region9: #{residual_feature_net.16} parent=5 // pred_check
      _
    $region10: #{residual_feature_net.16} parent=5 // pred_check_branch
      %116 = sbr.rel (%p113) target = $region12
    $region11: #{residual_feature_net.16} parent=5 // pred_region
      %s117 = ssub.s32 %s9, 1
      // Predicated region
      $region13: #{residual_feature_net.16} parent=11 // pred_check
        %p118 = pneg %p56
      $region14: #{residual_feature_net.16} parent=11 // pred_check_branch
        %120 = sbr.rel (%p118) target = $region16
      $region15: #{residual_feature_net.16} parent=11 // pred_region
        _
      $region16: #{residual_feature_net.16} parent=11 // pred_fallthru
        _
      // Predicated region
      $region17: #{residual_feature_net.16} parent=11 // pred_check
        %p121 = pneg %p77
      $region18: #{residual_feature_net.16} parent=11 // pred_check_branch
        %123 = sbr.rel (%p121) target = $region20
      $region19: #{residual_feature_net.16} parent=11 // pred_region
        _
      $region20: #{residual_feature_net.16} parent=11 // pred_fallthru
        _
    $region12: #{residual_feature_net.16} parent=5 // pred_fallthru
      _
    %p124 = scmp.lt.s32.totalorder %s9, 2
    // Predicated region
    $region21: #{residual_feature_net.16} parent=5 // pred_check
      %p125 = pneg %p124
    $region22: #{residual_feature_net.16} parent=5 // pred_check_branch
      %127 = sbr.rel (%p125) target = $region24
    $region23: #{residual_feature_net.16} parent=5 // pred_region
      // Predicated region
      $region25: #{residual_feature_net.16} parent=23 // pred_check
        %p128 = pneg %p29
      $region26: #{residual_feature_net.16} parent=23 // pred_check_branch
        %130 = sbr.rel (%p128) target = $region28
      $region27: #{residual_feature_net.16} parent=23 // pred_region
        %p131 = scmp.lt.s32.totalorder %s9, 1
        %s132 = scalar_select %p131, %s9, 1
        %s133 = smul.addr %s132, 20
        %s134 = smul.addr %s133, 8
        %s135 = scalar_lea.vmem %s0, %s134
      $region28: #{residual_feature_net.16} parent=23 // pred_fallthru
        _
    $region24: #{residual_feature_net.16} parent=5 // pred_fallthru
      _
    %p136 = scmp.le.s32.totalorder 1, %s9
    %p137 = scmp.lt.s32.totalorder %s9, 3
    %p138 = pnand %p136, %p137
    %p139 = pneg %p138
    // Predicated region
    $region29: #{residual_feature_net.16} parent=5 // pred_check
      _
    $region30: #{residual_feature_net.16} parent=5 // pred_check_branch
      %141 = sbr.rel (%p138) target = $region32
    $region31: #{residual_feature_net.16} parent=5 // pred_region
      %s142 = ssub.s32 %s9, 1
      %p143 = scmp.lt.s32.totalorder %s14, 1
      %s144 = scalar_select %p143, %s14, 1
      %s145 = smul.addr %s144, 20
      %s146 = smul.addr %s145, 8
      %s147 = scalar_lea.vmem %s0, %s146
      %p148 = pneg %p35
      %p149 = pneg %p32
      %p150 = pneg %p56
      %p151 = pneg %p53
      %p152 = pneg %p77
      %p153 = pneg %p74
      %p154 = pneg %p103
      %p155 = pneg %p100
      %s156 = smul.u32 8, %s14
      %p157 = scmp.lt.s32.totalorder %s156, 15
      %s158 = scalar_select %p157, %s156, 15
      %s159 = smul.addr %s158, 8
      %s160 = scalar_lea.vmem %s3, %s159
      %p161 = scmp.lt.s32.totalorder %s14, 1
      %s162 = scalar_select %p161, %s14, 1
      %s163 = smul.addr %s162, 20
      %s164 = smul.addr %s163, 8
      %s165 = scalar_lea.vmem %s0, %s164
      %s166 = smul.u32 8, %s14
      %p167 = scmp.lt.s32.totalorder %s166, 15
      %s168 = scalar_select %p167, %s166, 15
      %s169 = smul.addr %s168, 8
      %s170 = scalar_lea.vmem %s3, %s169
      %s171 = smul.u32 8, %s14
      %v173 = vld [vmem:[%s165] sm:$0xff]
      %v174 = vld [vmem:[%s165 + $0x8] sm:$0x3]
      %v175 = vld [vmem:[%s165 + $0x10] sm:$0xff]
      %v176 = vld [vmem:[%s165 + $0x18] sm:$0x3]
      %v177 = vld [vmem:[%s165 + $0x20] sm:$0xff]
      %v178 = vld [vmem:[%s165 + $0x28] sm:$0x3]
      %v179 = vld [vmem:[%s165 + $0x30] sm:$0xff]
      %v180 = vld [vmem:[%s165 + $0x38] sm:$0x3]
      %v181 = vld [vmem:[%s165 + $0x40] sm:$0xff]
      %v182 = vld [vmem:[%s165 + $0x48] sm:$0x3]
      %v183 = vld [vmem:[%s165 + $0x50] sm:$0xff]
      %v184 = vld [vmem:[%s165 + $0x58] sm:$0x3]
      %v185 = vld [vmem:[%s165 + $0x60] sm:$0xff]
      %v186 = vld [vmem:[%s165 + $0x68] sm:$0x3]
      %v187 = vld [vmem:[%s165 + $0x70] sm:$0xff]
      %v188 = vld [vmem:[%s165 + $0x78] sm:$0x3]
      %v189 = vld [vmem:[%s165 + $0x80] sm:$0xff]
      %v190 = vld [vmem:[%s165 + $0x88] sm:$0x3]
      %v191 = vld [vmem:[%s165 + $0x90] sm:$0xff]
      %v192 = vld [vmem:[%s165 + $0x98] sm:$0x3]
      %v193 = vpack.c.bf16 %v175, %v173
      %v194 = vpack.c.bf16 %v179, %v177
      %v195 = vpack.c.bf16 %v183, %v181
      %v196 = vpack.c.bf16 %v187, %v185
      %v197 = vld [vmem:[%s1] sm:$0xf]
      %v198 = vld [vmem:[%s1 + $0x4] sm:$0xf]
      %v199 = vld [vmem:[%s1 + $0x8] sm:$0xf]
      %v200 = vld [vmem:[%s1 + $0xc] sm:$0xf]
      %v201 = vld [vmem:[%s1 + $0x10] sm:$0xf]
      %v202 = vld [vmem:[%s1 + $0x14] sm:$0xf]
      %v203 = vld [vmem:[%s1 + $0x18] sm:$0xf]
      %v204 = vld [vmem:[%s1 + $0x1c] sm:$0xf]
      %v205 = vld [vmem:[%s1 + $0x20] sm:$0xf]
      %v206 = vld [vmem:[%s1 + $0x24] sm:$0xf]
      %v207 = vld [vmem:[%s1 + $0x28] sm:$0xf]
      %v208 = vld [vmem:[%s1 + $0x2c] sm:$0xf]
      %v209 = vld [vmem:[%s1 + $0x30] sm:$0xf]
      %v210 = vld [vmem:[%s1 + $0x34] sm:$0xf]
      %v211 = vld [vmem:[%s1 + $0x38] sm:$0xf]
      %v212 = vld [vmem:[%s1 + $0x3c] sm:$0xf]
      %vm229 = vcmask 1046528
      %v230 = vrot.slane %v173, 1
      %v231 = vrot.slane %v174, 1
      %v232 = vsel %vm229, %v230, %v231
      %v233 = vrot.slane %v175, 1
      %v234 = vrot.slane %v176, 1
      %v235 = vsel %vm229, %v233, %v234
      %v236 = vrot.slane %v177, 1
      %v237 = vrot.slane %v178, 1
      %v238 = vsel %vm229, %v236, %v237
      %v239 = vrot.slane %v179, 1
      %v240 = vrot.slane %v180, 1
      %v241 = vsel %vm229, %v239, %v240
      %v242 = vrot.slane %v181, 1
      %v243 = vrot.slane %v182, 1
      %v244 = vsel %vm229, %v242, %v243
      %v245 = vrot.slane %v183, 1
      %v246 = vrot.slane %v184, 1
      %v247 = vsel %vm229, %v245, %v246
      %v248 = vrot.slane %v185, 1
      %v249 = vrot.slane %v186, 1
      %v250 = vsel %vm229, %v248, %v249
      %v251 = vrot.slane %v187, 1
      %v252 = vrot.slane %v188, 1
      %v253 = vsel %vm229, %v251, %v252
      %v262 = vpack.c.bf16 %v235, %v232
      %v263 = vpack.c.bf16 %v241, %v238
      %v264 = vpack.c.bf16 %v247, %v244
      %v265 = vpack.c.bf16 %v253, %v250
      %s266 = scalar_lea.vmem %s1, 64
      %v267 = vld [vmem:[%s266] sm:$0xf]
      %v268 = vld [vmem:[%s266 + $0x4] sm:$0xf]
      %v269 = vld [vmem:[%s266 + $0x8] sm:$0xf]
      %v270 = vld [vmem:[%s266 + $0xc] sm:$0xf]
      %v271 = vld [vmem:[%s266 + $0x10] sm:$0xf]
      %v272 = vld [vmem:[%s266 + $0x14] sm:$0xf]
      %v273 = vld [vmem:[%s266 + $0x18] sm:$0xf]
      %v274 = vld [vmem:[%s266 + $0x1c] sm:$0xf]
      %v275 = vld [vmem:[%s266 + $0x20] sm:$0xf]
      %v276 = vld [vmem:[%s266 + $0x24] sm:$0xf]
      %v277 = vld [vmem:[%s266 + $0x28] sm:$0xf]
      %v278 = vld [vmem:[%s266 + $0x2c] sm:$0xf]
      %v279 = vld [vmem:[%s266 + $0x30] sm:$0xf]
      %v280 = vld [vmem:[%s266 + $0x34] sm:$0xf]
      %v281 = vld [vmem:[%s266 + $0x38] sm:$0xf]
      %v282 = vld [vmem:[%s266 + $0x3c] sm:$0xf]
      %v299 = vunpack.c.l.b16 %v267
      %v300 = vunpack.c.l.b16 %v268
      %v301 = vunpack.c.l.b16 %v269
      %v302 = vunpack.c.l.b16 %v270
      %v303 = vunpack.c.l.b16 %v271
      %v304 = vunpack.c.l.b16 %v272
      %v305 = vunpack.c.l.b16 %v273
      %v306 = vunpack.c.l.b16 %v274
      %v307 = vunpack.c.l.b16 %v275
      %v308 = vunpack.c.l.b16 %v276
      %v309 = vunpack.c.l.b16 %v277
      %v310 = vunpack.c.l.b16 %v278
      %v311 = vunpack.c.l.b16 %v279
      %v312 = vunpack.c.l.b16 %v280
      %v313 = vunpack.c.l.b16 %v281
      %v314 = vunpack.c.l.b16 %v282
      %v315 = vpack.c.b16 %v300, %v299
      %v316 = vpack.c.b16 %v302, %v301
      %v317 = vpack.c.b16 %v304, %v303
      %v318 = vpack.c.b16 %v306, %v305
      %v319 = vpack.c.b16 %v308, %v307
      %v320 = vpack.c.b16 %v310, %v309
      %v321 = vpack.c.b16 %v312, %v311
      %v322 = vpack.c.b16 %v314, %v313
      %331 = vmatprep.subr.bf16.mxu0 0
      %332 = vmatpush1.bf16.msra.mxu0 %v322
      %333 = vmatprep.subr.bf16.mxu0 0
      %334 = vmatpush1.bf16.msra.mxu0 %v321
      %335 = vmatprep.subr.bf16.mxu0 0
      %336 = vmatpush1.bf16.msra.mxu0 %v320
      %337 = vmatprep.subr.bf16.mxu0 0
      %338 = vmatpush1.bf16.msra.mxu0 %v319
      %339 = vmatprep.subr.bf16.mxu0 0
      %340 = vmatpush1.bf16.msra.mxu0 %v318
      %341 = vmatprep.subr.bf16.mxu0 0
      %342 = vmatpush1.bf16.msra.mxu0 %v317
      %343 = vmatprep.subr.bf16.mxu0 0
      %344 = vmatpush1.bf16.msra.mxu0 %v316
      %345 = vmatprep.subr.bf16.mxu0 0
      %346 = vmatpush1.bf16.msra.mxu0 %v315
      %347 = vmatprep.subr.bf16.mxu0 0
      %348 = vmatpush2.bf16.msra.mxu0 0
      %349 = vmatprep.subr.bf16.mxu0 0
      %350 = vmatpush2.bf16.msra.mxu0 0
      %351 = vmatprep.subr.bf16.mxu0 0
      %352 = vmatpush2.bf16.msra.mxu0 0
      %353 = vmatprep.subr.bf16.mxu0 0
      %354 = vmatpush2.bf16.msra.mxu0 0
      %355 = vmatprep.subr.bf16.mxu0 0
      %356 = vmatpush2.bf16.msra.mxu0 0
      %357 = vmatprep.subr.bf16.mxu0 0
      %358 = vmatpush2.bf16.msra.mxu0 0
      %359 = vmatprep.subr.bf16.mxu0 0
      %360 = vmatpush2.bf16.msra.mxu0 0
      %361 = vmatprep.subr.bf16.mxu0 0
      %362 = vmatpush2.bf16.msra.mxu0 0
      %363 = vmatprep.mubr.bf16.mxu0 0
      %364 = vmatmul.mubr.bf16.gmra.mxu0 %v262
      %v365 = vpop.f32.mrf.mxu0
      %v366 = vadd.f32 0.0, %v365
      %v367 = vpop.f32.mrf.mxu0
      %v368 = vpop.f32.mrf.mxu0
      %v369 = vadd.f32 0.0, %v368
      %v370 = vpop.f32.mrf.mxu0
      %371 = vmatprep.mubr.bf16.mxu0 0
      %372 = vmatmul.mubr.bf16.gmra.mxu0 %v263
      %v373 = vpop.f32.mrf.mxu0
      %v374 = vadd.f32 0.0, %v373
      %v375 = vpop.f32.mrf.mxu0
      %v376 = vpop.f32.mrf.mxu0
      %v377 = vadd.f32 0.0, %v376
      %v378 = vpop.f32.mrf.mxu0
      %379 = vmatprep.mubr.bf16.mxu0 0
      %380 = vmatmul.mubr.bf16.gmra.mxu0 %v264
      %v381 = vpop.f32.mrf.mxu0
      %v382 = vadd.f32 0.0, %v381
      %v383 = vpop.f32.mrf.mxu0
      %v384 = vpop.f32.mrf.mxu0
      %v385 = vadd.f32 0.0, %v384
      %v386 = vpop.f32.mrf.mxu0
      %387 = vmatprep.mubr.bf16.mxu0 0
      %388 = vmatmul.mubr.bf16.gmra.mxu0 %v265
      %v389 = vpop.f32.mrf.mxu0
      %v390 = vadd.f32 0.0, %v389
      %v391 = vpop.f32.mrf.mxu0
      %v392 = vpop.f32.mrf.mxu0
      %v393 = vadd.f32 0.0, %v392
      %v394 = vpop.f32.mrf.mxu0
      %395 = vdwg.mxu0
      %v412 = vunpack.c.l.b16 %v197
      %v413 = vunpack.c.l.b16 %v198
      %v414 = vunpack.c.l.b16 %v199
      %v415 = vunpack.c.l.b16 %v200
      %v416 = vunpack.c.l.b16 %v201
      %v417 = vunpack.c.l.b16 %v202
      %v418 = vunpack.c.l.b16 %v203
      %v419 = vunpack.c.l.b16 %v204
      %v420 = vunpack.c.l.b16 %v205
      %v421 = vunpack.c.l.b16 %v206
      %v422 = vunpack.c.l.b16 %v207
      %v423 = vunpack.c.l.b16 %v208
      %v424 = vunpack.c.l.b16 %v209
      %v425 = vunpack.c.l.b16 %v210
      %v426 = vunpack.c.l.b16 %v211
      %v427 = vunpack.c.l.b16 %v212
      %v428 = vpack.c.b16 %v413, %v412
      %v429 = vpack.c.b16 %v415, %v414
      %v430 = vpack.c.b16 %v417, %v416
      %v431 = vpack.c.b16 %v419, %v418
      %v432 = vpack.c.b16 %v421, %v420
      %v433 = vpack.c.b16 %v423, %v422
      %v434 = vpack.c.b16 %v425, %v424
      %v435 = vpack.c.b16 %v427, %v426
      %444 = vmatprep.subr.bf16.mxu0 0
      %445 = vmatpush1.bf16.msra.mxu0 %v435
      %446 = vmatprep.subr.bf16.mxu0 0
      %447 = vmatpush1.bf16.msra.mxu0 %v434
      %448 = vmatprep.subr.bf16.mxu0 0
      %449 = vmatpush1.bf16.msra.mxu0 %v433
      %450 = vmatprep.subr.bf16.mxu0 0
      %451 = vmatpush1.bf16.msra.mxu0 %v432
      %452 = vmatprep.subr.bf16.mxu0 0
      %453 = vmatpush1.bf16.msra.mxu0 %v431
      %454 = vmatprep.subr.bf16.mxu0 0
      %455 = vmatpush1.bf16.msra.mxu0 %v430
      %456 = vmatprep.subr.bf16.mxu0 0
      %457 = vmatpush1.bf16.msra.mxu0 %v429
      %458 = vmatprep.subr.bf16.mxu0 0
      %459 = vmatpush1.bf16.msra.mxu0 %v428
      %460 = vmatprep.subr.bf16.mxu0 0
      %461 = vmatpush2.bf16.msra.mxu0 0
      %462 = vmatprep.subr.bf16.mxu0 0
      %463 = vmatpush2.bf16.msra.mxu0 0
      %464 = vmatprep.subr.bf16.mxu0 0
      %465 = vmatpush2.bf16.msra.mxu0 0
      %466 = vmatprep.subr.bf16.mxu0 0
      %467 = vmatpush2.bf16.msra.mxu0 0
      %468 = vmatprep.subr.bf16.mxu0 0
      %469 = vmatpush2.bf16.msra.mxu0 0
      %470 = vmatprep.subr.bf16.mxu0 0
      %471 = vmatpush2.bf16.msra.mxu0 0
      %472 = vmatprep.subr.bf16.mxu0 0
      %473 = vmatpush2.bf16.msra.mxu0 0
      %474 = vmatprep.subr.bf16.mxu0 0
      %475 = vmatpush2.bf16.msra.mxu0 0
      %476 = vmatprep.mubr.bf16.mxu0 0
      %477 = vmatmul.mubr.bf16.gmra.mxu0 %v193
      %v478 = vpop.f32.mrf.mxu0
      %v479 = vadd.f32 %v366, %v478
      %v480 = vpop.f32.mrf.mxu0
      %v481 = vpop.f32.mrf.mxu0
      %v482 = vadd.f32 %v369, %v481
      %v483 = vpop.f32.mrf.mxu0
      %484 = vmatprep.mubr.bf16.mxu0 0
      %485 = vmatmul.mubr.bf16.gmra.mxu0 %v194
      %v486 = vpop.f32.mrf.mxu0
      %v487 = vadd.f32 %v374, %v486
      %v488 = vpop.f32.mrf.mxu0
      %v489 = vpop.f32.mrf.mxu0
      %v490 = vadd.f32 %v377, %v489
      %v491 = vpop.f32.mrf.mxu0
      %492 = vmatprep.mubr.bf16.mxu0 0
      %493 = vmatmul.mubr.bf16.gmra.mxu0 %v195
      %v494 = vpop.f32.mrf.mxu0
      %v495 = vadd.f32 %v382, %v494
      %v496 = vpop.f32.mrf.mxu0
      %v497 = vpop.f32.mrf.mxu0
      %v498 = vadd.f32 %v385, %v497
      %v499 = vpop.f32.mrf.mxu0
      %500 = vmatprep.mubr.bf16.mxu0 0
      %501 = vmatmul.mubr.bf16.gmra.mxu0 %v196
      %v502 = vpop.f32.mrf.mxu0
      %v503 = vadd.f32 %v390, %v502
      %v504 = vpop.f32.mrf.mxu0
      %v505 = vpop.f32.mrf.mxu0
      %v506 = vadd.f32 %v393, %v505
      %v507 = vpop.f32.mrf.mxu0
      %508 = vdwg.mxu0
      %vm509 = vcmask 1045504
      %v510 = vrot.slane %v173, 2
      %v511 = vrot.slane %v174, 2
      %v512 = vsel %vm509, %v510, %v511
      %v513 = vrot.slane %v175, 2
      %v514 = vrot.slane %v176, 2
      %v515 = vsel %vm509, %v513, %v514
      %v516 = vrot.slane %v177, 2
      %v517 = vrot.slane %v178, 2
      %v518 = vsel %vm509, %v516, %v517
      %v519 = vrot.slane %v179, 2
      %v520 = vrot.slane %v180, 2
      %v521 = vsel %vm509, %v519, %v520
      %v522 = vrot.slane %v181, 2
      %v523 = vrot.slane %v182, 2
      %v524 = vsel %vm509, %v522, %v523
      %v525 = vrot.slane %v183, 2
      %v526 = vrot.slane %v184, 2
      %v527 = vsel %vm509, %v525, %v526
      %v528 = vrot.slane %v185, 2
      %v529 = vrot.slane %v186, 2
      %v530 = vsel %vm509, %v528, %v529
      %v531 = vrot.slane %v187, 2
      %v532 = vrot.slane %v188, 2
      %v533 = vsel %vm509, %v531, %v532
      %v542 = vpack.c.bf16 %v515, %v512
      %v543 = vpack.c.bf16 %v521, %v518
      %v544 = vpack.c.bf16 %v527, %v524
      %v545 = vpack.c.bf16 %v533, %v530
      %s546 = scalar_lea.vmem %s1, 128
      %v547 = vld [vmem:[%s546] sm:$0xf]
      %v548 = vld [vmem:[%s546 + $0x4] sm:$0xf]
      %v549 = vld [vmem:[%s546 + $0x8] sm:$0xf]
      %v550 = vld [vmem:[%s546 + $0xc] sm:$0xf]
      %v551 = vld [vmem:[%s546 + $0x10] sm:$0xf]
      %v552 = vld [vmem:[%s546 + $0x14] sm:$0xf]
      %v553 = vld [vmem:[%s546 + $0x18] sm:$0xf]
      %v554 = vld [vmem:[%s546 + $0x1c] sm:$0xf]
      %v555 = vld [vmem:[%s546 + $0x20] sm:$0xf]
      %v556 = vld [vmem:[%s546 + $0x24] sm:$0xf]
      %v557 = vld [vmem:[%s546 + $0x28] sm:$0xf]
      %v558 = vld [vmem:[%s546 + $0x2c] sm:$0xf]
      %v559 = vld [vmem:[%s546 + $0x30] sm:$0xf]
      %v560 = vld [vmem:[%s546 + $0x34] sm:$0xf]
      %v561 = vld [vmem:[%s546 + $0x38] sm:$0xf]
      %v562 = vld [vmem:[%s546 + $0x3c] sm:$0xf]
      %v579 = vunpack.c.l.b16 %v547
      %v580 = vunpack.c.l.b16 %v548
      %v581 = vunpack.c.l.b16 %v549
      %v582 = vunpack.c.l.b16 %v550
      %v583 = vunpack.c.l.b16 %v551
      %v584 = vunpack.c.l.b16 %v552
      %v585 = vunpack.c.l.b16 %v553
      %v586 = vunpack.c.l.b16 %v554
      %v587 = vunpack.c.l.b16 %v555
      %v588 = vunpack.c.l.b16 %v556
      %v589 = vunpack.c.l.b16 %v557
      %v590 = vunpack.c.l.b16 %v558
      %v591 = vunpack.c.l.b16 %v559
      %v592 = vunpack.c.l.b16 %v560
      %v593 = vunpack.c.l.b16 %v561
      %v594 = vunpack.c.l.b16 %v562
      %v595 = vpack.c.b16 %v580, %v579
      %v596 = vpack.c.b16 %v582, %v581
      %v597 = vpack.c.b16 %v584, %v583
      %v598 = vpack.c.b16 %v586, %v585
      %v599 = vpack.c.b16 %v588, %v587
      %v600 = vpack.c.b16 %v590, %v589
      %v601 = vpack.c.b16 %v592, %v591
      %v602 = vpack.c.b16 %v594, %v593
      %611 = vmatprep.subr.bf16.mxu0 0
      %612 = vmatpush1.bf16.msra.mxu0 %v602
      %613 = vmatprep.subr.bf16.mxu0 0
      %614 = vmatpush1.bf16.msra.mxu0 %v601
      %615 = vmatprep.subr.bf16.mxu0 0
      %616 = vmatpush1.bf16.msra.mxu0 %v600
      %617 = vmatprep.subr.bf16.mxu0 0
      %618 = vmatpush1.bf16.msra.mxu0 %v599
      %619 = vmatprep.subr.bf16.mxu0 0
      %620 = vmatpush1.bf16.msra.mxu0 %v598
      %621 = vmatprep.subr.bf16.mxu0 0
      %622 = vmatpush1.bf16.msra.mxu0 %v597
      %623 = vmatprep.subr.bf16.mxu0 0
      %624 = vmatpush1.bf16.msra.mxu0 %v596
      %625 = vmatprep.subr.bf16.mxu0 0
      %626 = vmatpush1.bf16.msra.mxu0 %v595
      %627 = vmatprep.subr.bf16.mxu0 0
      %628 = vmatpush2.bf16.msra.mxu0 0
      %629 = vmatprep.subr.bf16.mxu0 0
      %630 = vmatpush2.bf16.msra.mxu0 0
      %631 = vmatprep.subr.bf16.mxu0 0
      %632 = vmatpush2.bf16.msra.mxu0 0
      %633 = vmatprep.subr.bf16.mxu0 0
      %634 = vmatpush2.bf16.msra.mxu0 0
      %635 = vmatprep.subr.bf16.mxu0 0
      %636 = vmatpush2.bf16.msra.mxu0 0
      %637 = vmatprep.subr.bf16.mxu0 0
      %638 = vmatpush2.bf16.msra.mxu0 0
      %639 = vmatprep.subr.bf16.mxu0 0
      %640 = vmatpush2.bf16.msra.mxu0 0
      %641 = vmatprep.subr.bf16.mxu0 0
      %642 = vmatpush2.bf16.msra.mxu0 0
      %643 = vmatprep.mubr.bf16.mxu0 0
      %644 = vmatmul.mubr.bf16.gmra.mxu0 %v542
      %v645 = vpop.f32.mrf.mxu0
      %v646 = vadd.f32 0.0, %v645
      %v647 = vpop.f32.mrf.mxu0
      %v648 = vpop.f32.mrf.mxu0
      %v649 = vadd.f32 0.0, %v648
      %v650 = vpop.f32.mrf.mxu0
      %651 = vmatprep.mubr.bf16.mxu0 0
      %652 = vmatmul.mubr.bf16.gmra.mxu0 %v543
      %v653 = vpop.f32.mrf.mxu0
      %v654 = vadd.f32 0.0, %v653
      %v655 = vpop.f32.mrf.mxu0
      %v656 = vpop.f32.mrf.mxu0
      %v657 = vadd.f32 0.0, %v656
      %v658 = vpop.f32.mrf.mxu0
      %659 = vmatprep.mubr.bf16.mxu0 0
      %660 = vmatmul.mubr.bf16.gmra.mxu0 %v544
      %v661 = vpop.f32.mrf.mxu0
      %v662 = vadd.f32 0.0, %v661
      %v663 = vpop.f32.mrf.mxu0
      %v664 = vpop.f32.mrf.mxu0
      %v665 = vadd.f32 0.0, %v664
      %v666 = vpop.f32.mrf.mxu0
      %667 = vmatprep.mubr.bf16.mxu0 0
      %668 = vmatmul.mubr.bf16.gmra.mxu0 %v545
      %v669 = vpop.f32.mrf.mxu0
      %v670 = vadd.f32 0.0, %v669
      %v671 = vpop.f32.mrf.mxu0
      %v672 = vpop.f32.mrf.mxu0
      %v673 = vadd.f32 0.0, %v672
      %v674 = vpop.f32.mrf.mxu0
      %675 = vdwg.mxu0
      %v676 = vadd.f32 %v479, %v646
      %v677 = vadd.f32 %v482, %v649
      %v678 = vadd.f32 %v487, %v654
      %v679 = vadd.f32 %v490, %v657
      %v680 = vadd.f32 %v495, %v662
      %v681 = vadd.f32 %v498, %v665
      %v682 = vadd.f32 %v503, %v670
      %v683 = vadd.f32 %v506, %v673
      %v684 = vpack.c.bf16 %v177, %v175
      %v685 = vpack.c.bf16 %v181, %v179
      %v686 = vpack.c.bf16 %v185, %v183
      %v687 = vpack.c.bf16 %v189, %v187
      %s688 = scalar_lea.vmem %s1, 192
      %v689 = vld [vmem:[%s688] sm:$0xf]
      %v690 = vld [vmem:[%s688 + $0x4] sm:$0xf]
      %v691 = vld [vmem:[%s688 + $0x8] sm:$0xf]
      %v692 = vld [vmem:[%s688 + $0xc] sm:$0xf]
      %v693 = vld [vmem:[%s688 + $0x10] sm:$0xf]
      %v694 = vld [vmem:[%s688 + $0x14] sm:$0xf]
      %v695 = vld [vmem:[%s688 + $0x18] sm:$0xf]
      %v696 = vld [vmem:[%s688 + $0x1c] sm:$0xf]
      %v697 = vld [vmem:[%s688 + $0x20] sm:$0xf]
      %v698 = vld [vmem:[%s688 + $0x24] sm:$0xf]
      %v699 = vld [vmem:[%s688 + $0x28] sm:$0xf]
      %v700 = vld [vmem:[%s688 + $0x2c] sm:$0xf]
      %v701 = vld [vmem:[%s688 + $0x30] sm:$0xf]
      %v702 = vld [vmem:[%s688 + $0x34] sm:$0xf]
      %v703 = vld [vmem:[%s688 + $0x38] sm:$0xf]
      %v704 = vld [vmem:[%s688 + $0x3c] sm:$0xf]
      %v721 = vunpack.c.l.b16 %v689
      %v722 = vunpack.c.l.b16 %v690
      %v723 = vunpack.c.l.b16 %v691
      %v724 = vunpack.c.l.b16 %v692
      %v725 = vunpack.c.l.b16 %v693
      %v726 = vunpack.c.l.b16 %v694
      %v727 = vunpack.c.l.b16 %v695
      %v728 = vunpack.c.l.b16 %v696
      %v729 = vunpack.c.l.b16 %v697
      %v730 = vunpack.c.l.b16 %v698
      %v731 = vunpack.c.l.b16 %v699
      %v732 = vunpack.c.l.b16 %v700
      %v733 = vunpack.c.l.b16 %v701
      %v734 = vunpack.c.l.b16 %v702
      %v735 = vunpack.c.l.b16 %v703
      %v736 = vunpack.c.l.b16 %v704
      %v737 = vpack.c.b16 %v722, %v721
      %v738 = vpack.c.b16 %v724, %v723
      %v739 = vpack.c.b16 %v726, %v725
      %v740 = vpack.c.b16 %v728, %v727
      %v741 = vpack.c.b16 %v730, %v729
      %v742 = vpack.c.b16 %v732, %v731
      %v743 = vpack.c.b16 %v734, %v733
      %v744 = vpack.c.b16 %v736, %v735
      %753 = vmatprep.subr.bf16.mxu0 0
      %754 = vmatpush1.bf16.msra.mxu0 %v744
      %755 = vmatprep.subr.bf16.mxu0 0
      %756 = vmatpush1.bf16.msra.mxu0 %v743
      %757 = vmatprep.subr.bf16.mxu0 0
      %758 = vmatpush1.bf16.msra.mxu0 %v742
      %759 = vmatprep.subr.bf16.mxu0 0
      %760 = vmatpush1.bf16.msra.mxu0 %v741
      %761 = vmatprep.subr.bf16.mxu0 0
      %762 = vmatpush1.bf16.msra.mxu0 %v740
      %763 = vmatprep.subr.bf16.mxu0 0
      %764 = vmatpush1.bf16.msra.mxu0 %v739
      %765 = vmatprep.subr.bf16.mxu0 0
      %766 = vmatpush1.bf16.msra.mxu0 %v738
      %767 = vmatprep.subr.bf16.mxu0 0
      %768 = vmatpush1.bf16.msra.mxu0 %v737
      %769 = vmatprep.subr.bf16.mxu0 0
      %770 = vmatpush2.bf16.msra.mxu0 0
      %771 = vmatprep.subr.bf16.mxu0 0
      %772 = vmatpush2.bf16.msra.mxu0 0
      %773 = vmatprep.subr.bf16.mxu0 0
      %774 = vmatpush2.bf16.msra.mxu0 0
      %775 = vmatprep.subr.bf16.mxu0 0
      %776 = vmatpush2.bf16.msra.mxu0 0
      %777 = vmatprep.subr.bf16.mxu0 0
      %778 = vmatpush2.bf16.msra.mxu0 0
      %779 = vmatprep.subr.bf16.mxu0 0
      %780 = vmatpush2.bf16.msra.mxu0 0
      %781 = vmatprep.subr.bf16.mxu0 0
      %782 = vmatpush2.bf16.msra.mxu0 0
      %783 = vmatprep.subr.bf16.mxu0 0
      %784 = vmatpush2.bf16.msra.mxu0 0
      %785 = vmatprep.mubr.bf16.mxu0 0
      %786 = vmatmul.mubr.bf16.gmra.mxu0 %v684
      %v787 = vpop.f32.mrf.mxu0
      %v788 = vadd.f32 0.0, %v787
      %v789 = vpop.f32.mrf.mxu0
      %v790 = vpop.f32.mrf.mxu0
      %v791 = vadd.f32 0.0, %v790
      %v792 = vpop.f32.mrf.mxu0
      %793 = vmatprep.mubr.bf16.mxu0 0
      %794 = vmatmul.mubr.bf16.gmra.mxu0 %v685
      %v795 = vpop.f32.mrf.mxu0
      %v796 = vadd.f32 0.0, %v795
      %v797 = vpop.f32.mrf.mxu0
      %v798 = vpop.f32.mrf.mxu0
      %v799 = vadd.f32 0.0, %v798
      %v800 = vpop.f32.mrf.mxu0
      %801 = vmatprep.mubr.bf16.mxu0 0
      %802 = vmatmul.mubr.bf16.gmra.mxu0 %v686
      %v803 = vpop.f32.mrf.mxu0
      %v804 = vadd.f32 0.0, %v803
      %v805 = vpop.f32.mrf.mxu0
      %v806 = vpop.f32.mrf.mxu0
      %v807 = vadd.f32 0.0, %v806
      %v808 = vpop.f32.mrf.mxu0
      %809 = vmatprep.mubr.bf16.mxu0 0
      %810 = vmatmul.mubr.bf16.gmra.mxu0 %v687
      %v811 = vpop.f32.mrf.mxu0
      %v812 = vadd.f32 0.0, %v811
      %v813 = vpop.f32.mrf.mxu0
      %v814 = vpop.f32.mrf.mxu0
      %v815 = vadd.f32 0.0, %v814
      %v816 = vpop.f32.mrf.mxu0
      %817 = vdwg.mxu0
      %v818 = vadd.f32 %v676, %v788
      %v819 = vadd.f32 %v677, %v791
      %v820 = vadd.f32 %v678, %v796
      %v821 = vadd.f32 %v679, %v799
      %v822 = vadd.f32 %v680, %v804
      %v823 = vadd.f32 %v681, %v807
      %v824 = vadd.f32 %v682, %v812
      %v825 = vadd.f32 %v683, %v815
      %v828 = vrot.slane %v189, 1
      %v829 = vrot.slane %v190, 1
      %v830 = vsel %vm229, %v828, %v829
      %v832 = vpack.c.bf16 %v238, %v235
      %v833 = vpack.c.bf16 %v244, %v241
      %v834 = vpack.c.bf16 %v250, %v247
      %v835 = vpack.c.bf16 %v830, %v253
      %s836 = scalar_lea.vmem %s1, 256
      %v837 = vld [vmem:[%s836] sm:$0xf]
      %v838 = vld [vmem:[%s836 + $0x4] sm:$0xf]
      %v839 = vld [vmem:[%s836 + $0x8] sm:$0xf]
      %v840 = vld [vmem:[%s836 + $0xc] sm:$0xf]
      %v841 = vld [vmem:[%s836 + $0x10] sm:$0xf]
      %v842 = vld [vmem:[%s836 + $0x14] sm:$0xf]
      %v843 = vld [vmem:[%s836 + $0x18] sm:$0xf]
      %v844 = vld [vmem:[%s836 + $0x1c] sm:$0xf]
      %v845 = vld [vmem:[%s836 + $0x20] sm:$0xf]
      %v846 = vld [vmem:[%s836 + $0x24] sm:$0xf]
      %v847 = vld [vmem:[%s836 + $0x28] sm:$0xf]
      %v848 = vld [vmem:[%s836 + $0x2c] sm:$0xf]
      %v849 = vld [vmem:[%s836 + $0x30] sm:$0xf]
      %v850 = vld [vmem:[%s836 + $0x34] sm:$0xf]
      %v851 = vld [vmem:[%s836 + $0x38] sm:$0xf]
      %v852 = vld [vmem:[%s836 + $0x3c] sm:$0xf]
      %v869 = vunpack.c.l.b16 %v837
      %v870 = vunpack.c.l.b16 %v838
      %v871 = vunpack.c.l.b16 %v839
      %v872 = vunpack.c.l.b16 %v840
      %v873 = vunpack.c.l.b16 %v841
      %v874 = vunpack.c.l.b16 %v842
      %v875 = vunpack.c.l.b16 %v843
      %v876 = vunpack.c.l.b16 %v844
      %v877 = vunpack.c.l.b16 %v845
      %v878 = vunpack.c.l.b16 %v846
      %v879 = vunpack.c.l.b16 %v847
      %v880 = vunpack.c.l.b16 %v848
      %v881 = vunpack.c.l.b16 %v849
      %v882 = vunpack.c.l.b16 %v850
      %v883 = vunpack.c.l.b16 %v851
      %v884 = vunpack.c.l.b16 %v852
      %v885 = vpack.c.b16 %v870, %v869
      %v886 = vpack.c.b16 %v872, %v871
      %v887 = vpack.c.b16 %v874, %v873
      %v888 = vpack.c.b16 %v876, %v875
      %v889 = vpack.c.b16 %v878, %v877
      %v890 = vpack.c.b16 %v880, %v879
      %v891 = vpack.c.b16 %v882, %v881
      %v892 = vpack.c.b16 %v884, %v883
      %901 = vmatprep.subr.bf16.mxu0 0
      %902 = vmatpush1.bf16.msra.mxu0 %v892
      %903 = vmatprep.subr.bf16.mxu0 0
      %904 = vmatpush1.bf16.msra.mxu0 %v891
      %905 = vmatprep.subr.bf16.mxu0 0
      %906 = vmatpush1.bf16.msra.mxu0 %v890
      %907 = vmatprep.subr.bf16.mxu0 0
      %908 = vmatpush1.bf16.msra.mxu0 %v889
      %909 = vmatprep.subr.bf16.mxu0 0
      %910 = vmatpush1.bf16.msra.mxu0 %v888
      %911 = vmatprep.subr.bf16.mxu0 0
      %912 = vmatpush1.bf16.msra.mxu0 %v887
      %913 = vmatprep.subr.bf16.mxu0 0
      %914 = vmatpush1.bf16.msra.mxu0 %v886
      %915 = vmatprep.subr.bf16.mxu0 0
      %916 = vmatpush1.bf16.msra.mxu0 %v885
      %917 = vmatprep.subr.bf16.mxu0 0
      %918 = vmatpush2.bf16.msra.mxu0 0
      %919 = vmatprep.subr.bf16.mxu0 0
      %920 = vmatpush2.bf16.msra.mxu0 0
      %921 = vmatprep.subr.bf16.mxu0 0
      %922 = vmatpush2.bf16.msra.mxu0 0
      %923 = vmatprep.subr.bf16.mxu0 0
      %924 = vmatpush2.bf16.msra.mxu0 0
      %925 = vmatprep.subr.bf16.mxu0 0
      %926 = vmatpush2.bf16.msra.mxu0 0
      %927 = vmatprep.subr.bf16.mxu0 0
      %928 = vmatpush2.bf16.msra.mxu0 0
      %929 = vmatprep.subr.bf16.mxu0 0
      %930 = vmatpush2.bf16.msra.mxu0 0
      %931 = vmatprep.subr.bf16.mxu0 0
      %932 = vmatpush2.bf16.msra.mxu0 0
      %933 = vmatprep.mubr.bf16.mxu0 0
      %934 = vmatmul.mubr.bf16.gmra.mxu0 %v832
      %v935 = vpop.f32.mrf.mxu0
      %v936 = vadd.f32 0.0, %v935
      %v937 = vpop.f32.mrf.mxu0
      %v938 = vpop.f32.mrf.mxu0
      %v939 = vadd.f32 0.0, %v938
      %v940 = vpop.f32.mrf.mxu0
      %941 = vmatprep.mubr.bf16.mxu0 0
      %942 = vmatmul.mubr.bf16.gmra.mxu0 %v833
      %v943 = vpop.f32.mrf.mxu0
      %v944 = vadd.f32 0.0, %v943
      %v945 = vpop.f32.mrf.mxu0
      %v946 = vpop.f32.mrf.mxu0
      %v947 = vadd.f32 0.0, %v946
      %v948 = vpop.f32.mrf.mxu0
      %949 = vmatprep.mubr.bf16.mxu0 0
      %950 = vmatmul.mubr.bf16.gmra.mxu0 %v834
      %v951 = vpop.f32.mrf.mxu0
      %v952 = vadd.f32 0.0, %v951
      %v953 = vpop.f32.mrf.mxu0
      %v954 = vpop.f32.mrf.mxu0
      %v955 = vadd.f32 0.0, %v954
      %v956 = vpop.f32.mrf.mxu0
      %957 = vmatprep.mubr.bf16.mxu0 0
      %958 = vmatmul.mubr.bf16.gmra.mxu0 %v835
      %v959 = vpop.f32.mrf.mxu0
      %v960 = vadd.f32 0.0, %v959
      %v961 = vpop.f32.mrf.mxu0
      %v962 = vpop.f32.mrf.mxu0
      %v963 = vadd.f32 0.0, %v962
      %v964 = vpop.f32.mrf.mxu0
      %965 = vdwg.mxu0
      %v966 = vadd.f32 %v818, %v936
      %v967 = vadd.f32 %v819, %v939
      %v968 = vadd.f32 %v820, %v944
      %v969 = vadd.f32 %v821, %v947
      %v970 = vadd.f32 %v822, %v952
      %v971 = vadd.f32 %v823, %v955
      %v972 = vadd.f32 %v824, %v960
      %v973 = vadd.f32 %v825, %v963
      %v974 = vrot.slane %v189, 2
      %v975 = vrot.slane %v190, 2
      %v976 = vsel %vm509, %v974, %v975
      %v978 = vpack.c.bf16 %v518, %v515
      %v979 = vpack.c.bf16 %v524, %v521
      %v980 = vpack.c.bf16 %v530, %v527
      %v981 = vpack.c.bf16 %v976, %v533
      %s982 = scalar_lea.vmem %s1, 320
      %v983 = vld [vmem:[%s982] sm:$0xf]
      %v984 = vld [vmem:[%s982 + $0x4] sm:$0xf]
      %v985 = vld [vmem:[%s982 + $0x8] sm:$0xf]
      %v986 = vld [vmem:[%s982 + $0xc] sm:$0xf]
      %v987 = vld [vmem:[%s982 + $0x10] sm:$0xf]
      %v988 = vld [vmem:[%s982 + $0x14] sm:$0xf]
      %v989 = vld [vmem:[%s982 + $0x18] sm:$0xf]
      %v990 = vld [vmem:[%s982 + $0x1c] sm:$0xf]
      %v991 = vld [vmem:[%s982 + $0x20] sm:$0xf]
      %v992 = vld [vmem:[%s982 + $0x24] sm:$0xf]
      %v993 = vld [vmem:[%s982 + $0x28] sm:$0xf]
      %v994 = vld [vmem:[%s982 + $0x2c] sm:$0xf]
      %v995 = vld [vmem:[%s982 + $0x30] sm:$0xf]
      %v996 = vld [vmem:[%s982 + $0x34] sm:$0xf]
      %v997 = vld [vmem:[%s982 + $0x38] sm:$0xf]
      %v998 = vld [vmem:[%s982 + $0x3c] sm:$0xf]
      %v1015 = vunpack.c.l.b16 %v983
      %v1016 = vunpack.c.l.b16 %v984
      %v1017 = vunpack.c.l.b16 %v985
      %v1018 = vunpack.c.l.b16 %v986
      %v1019 = vunpack.c.l.b16 %v987
      %v1020 = vunpack.c.l.b16 %v988
      %v1021 = vunpack.c.l.b16 %v989
      %v1022 = vunpack.c.l.b16 %v990
      %v1023 = vunpack.c.l.b16 %v991
      %v1024 = vunpack.c.l.b16 %v992
      %v1025 = vunpack.c.l.b16 %v993
      %v1026 = vunpack.c.l.b16 %v994
      %v1027 = vunpack.c.l.b16 %v995
      %v1028 = vunpack.c.l.b16 %v996
      %v1029 = vunpack.c.l.b16 %v997
      %v1030 = vunpack.c.l.b16 %v998
      %v1031 = vpack.c.b16 %v1016, %v1015
      %v1032 = vpack.c.b16 %v1018, %v1017
      %v1033 = vpack.c.b16 %v1020, %v1019
      %v1034 = vpack.c.b16 %v1022, %v1021
      %v1035 = vpack.c.b16 %v1024, %v1023
      %v1036 = vpack.c.b16 %v1026, %v1025
      %v1037 = vpack.c.b16 %v1028, %v1027
      %v1038 = vpack.c.b16 %v1030, %v1029
      %1047 = vmatprep.subr.bf16.mxu0 0
      %1048 = vmatpush1.bf16.msra.mxu0 %v1038
      %1049 = vmatprep.subr.bf16.mxu0 0
      %1050 = vmatpush1.bf16.msra.mxu0 %v1037
      %1051 = vmatprep.subr.bf16.mxu0 0
      %1052 = vmatpush1.bf16.msra.mxu0 %v1036
      %1053 = vmatprep.subr.bf16.mxu0 0
      %1054 = vmatpush1.bf16.msra.mxu0 %v1035
      %1055 = vmatprep.subr.bf16.mxu0 0
      %1056 = vmatpush1.bf16.msra.mxu0 %v1034
      %1057 = vmatprep.subr.bf16.mxu0 0
      %1058 = vmatpush1.bf16.msra.mxu0 %v1033
      %1059 = vmatprep.subr.bf16.mxu0 0
      %1060 = vmatpush1.bf16.msra.mxu0 %v1032
      %1061 = vmatprep.subr.bf16.mxu0 0
      %1062 = vmatpush1.bf16.msra.mxu0 %v1031
      %1063 = vmatprep.subr.bf16.mxu0 0
      %1064 = vmatpush2.bf16.msra.mxu0 0
      %1065 = vmatprep.subr.bf16.mxu0 0
      %1066 = vmatpush2.bf16.msra.mxu0 0
      %1067 = vmatprep.subr.bf16.mxu0 0
      %1068 = vmatpush2.bf16.msra.mxu0 0
      %1069 = vmatprep.subr.bf16.mxu0 0
      %1070 = vmatpush2.bf16.msra.mxu0 0
      %1071 = vmatprep.subr.bf16.mxu0 0
      %1072 = vmatpush2.bf16.msra.mxu0 0
      %1073 = vmatprep.subr.bf16.mxu0 0
      %1074 = vmatpush2.bf16.msra.mxu0 0
      %1075 = vmatprep.subr.bf16.mxu0 0
      %1076 = vmatpush2.bf16.msra.mxu0 0
      %1077 = vmatprep.subr.bf16.mxu0 0
      %1078 = vmatpush2.bf16.msra.mxu0 0
      %1079 = vmatprep.mubr.bf16.mxu0 0
      %1080 = vmatmul.mubr.bf16.gmra.mxu0 %v978
      %v1081 = vpop.f32.mrf.mxu0
      %v1082 = vadd.f32 0.0, %v1081
      %v1083 = vpop.f32.mrf.mxu0
      %v1084 = vpop.f32.mrf.mxu0
      %v1085 = vadd.f32 0.0, %v1084
      %v1086 = vpop.f32.mrf.mxu0
      %1087 = vmatprep.mubr.bf16.mxu0 0
      %1088 = vmatmul.mubr.bf16.gmra.mxu0 %v979
      %v1089 = vpop.f32.mrf.mxu0
      %v1090 = vadd.f32 0.0, %v1089
      %v1091 = vpop.f32.mrf.mxu0
      %v1092 = vpop.f32.mrf.mxu0
      %v1093 = vadd.f32 0.0, %v1092
      %v1094 = vpop.f32.mrf.mxu0
      %1095 = vmatprep.mubr.bf16.mxu0 0
      %1096 = vmatmul.mubr.bf16.gmra.mxu0 %v980
      %v1097 = vpop.f32.mrf.mxu0
      %v1098 = vadd.f32 0.0, %v1097
      %v1099 = vpop.f32.mrf.mxu0
      %v1100 = vpop.f32.mrf.mxu0
      %v1101 = vadd.f32 0.0, %v1100
      %v1102 = vpop.f32.mrf.mxu0
      %1103 = vmatprep.mubr.bf16.mxu0 0
      %1104 = vmatmul.mubr.bf16.gmra.mxu0 %v981
      %v1105 = vpop.f32.mrf.mxu0
      %v1106 = vadd.f32 0.0, %v1105
      %v1107 = vpop.f32.mrf.mxu0
      %v1108 = vpop.f32.mrf.mxu0
      %v1109 = vadd.f32 0.0, %v1108
      %v1110 = vpop.f32.mrf.mxu0
      %1111 = vdwg.mxu0
      %v1112 = vadd.f32 %v966, %v1082
      %v1113 = vadd.f32 %v967, %v1085
      %v1114 = vadd.f32 %v968, %v1090
      %v1115 = vadd.f32 %v969, %v1093
      %v1116 = vadd.f32 %v970, %v1098
      %v1117 = vadd.f32 %v971, %v1101
      %v1118 = vadd.f32 %v972, %v1106
      %v1119 = vadd.f32 %v973, %v1109
      %v1120 = vpack.c.bf16 %v191, %v189
      %s1121 = scalar_lea.vmem %s1, 384
      %v1122 = vld [vmem:[%s1121] sm:$0xf]
      %v1123 = vld [vmem:[%s1121 + $0x4] sm:$0xf]
      %v1124 = vld [vmem:[%s1121 + $0x8] sm:$0xf]
      %v1125 = vld [vmem:[%s1121 + $0xc] sm:$0xf]
      %v1126 = vld [vmem:[%s1121 + $0x10] sm:$0xf]
      %v1127 = vld [vmem:[%s1121 + $0x14] sm:$0xf]
      %v1128 = vld [vmem:[%s1121 + $0x18] sm:$0xf]
      %v1129 = vld [vmem:[%s1121 + $0x1c] sm:$0xf]
      %v1130 = vld [vmem:[%s1121 + $0x20] sm:$0xf]
      %v1131 = vld [vmem:[%s1121 + $0x24] sm:$0xf]
      %v1132 = vld [vmem:[%s1121 + $0x28] sm:$0xf]
      %v1133 = vld [vmem:[%s1121 + $0x2c] sm:$0xf]
      %v1134 = vld [vmem:[%s1121 + $0x30] sm:$0xf]
      %v1135 = vld [vmem:[%s1121 + $0x34] sm:$0xf]
      %v1136 = vld [vmem:[%s1121 + $0x38] sm:$0xf]
      %v1137 = vld [vmem:[%s1121 + $0x3c] sm:$0xf]
      %v1154 = vunpack.c.l.b16 %v1122
      %v1155 = vunpack.c.l.b16 %v1123
      %v1156 = vunpack.c.l.b16 %v1124
      %v1157 = vunpack.c.l.b16 %v1125
      %v1158 = vunpack.c.l.b16 %v1126
      %v1159 = vunpack.c.l.b16 %v1127
      %v1160 = vunpack.c.l.b16 %v1128
      %v1161 = vunpack.c.l.b16 %v1129
      %v1162 = vunpack.c.l.b16 %v1130
      %v1163 = vunpack.c.l.b16 %v1131
      %v1164 = vunpack.c.l.b16 %v1132
      %v1165 = vunpack.c.l.b16 %v1133
      %v1166 = vunpack.c.l.b16 %v1134
      %v1167 = vunpack.c.l.b16 %v1135
      %v1168 = vunpack.c.l.b16 %v1136
      %v1169 = vunpack.c.l.b16 %v1137
      %v1170 = vpack.c.b16 %v1155, %v1154
      %v1171 = vpack.c.b16 %v1157, %v1156
      %v1172 = vpack.c.b16 %v1159, %v1158
      %v1173 = vpack.c.b16 %v1161, %v1160
      %v1174 = vpack.c.b16 %v1163, %v1162
      %v1175 = vpack.c.b16 %v1165, %v1164
      %v1176 = vpack.c.b16 %v1167, %v1166
      %v1177 = vpack.c.b16 %v1169, %v1168
      %1186 = vmatprep.subr.bf16.mxu0 0
      %1187 = vmatpush1.bf16.msra.mxu0 %v1177
      %1188 = vmatprep.subr.bf16.mxu0 0
      %1189 = vmatpush1.bf16.msra.mxu0 %v1176
      %1190 = vmatprep.subr.bf16.mxu0 0
      %1191 = vmatpush1.bf16.msra.mxu0 %v1175
      %1192 = vmatprep.subr.bf16.mxu0 0
      %1193 = vmatpush1.bf16.msra.mxu0 %v1174
      %1194 = vmatprep.subr.bf16.mxu0 0
      %1195 = vmatpush1.bf16.msra.mxu0 %v1173
      %1196 = vmatprep.subr.bf16.mxu0 0
      %1197 = vmatpush1.bf16.msra.mxu0 %v1172
      %1198 = vmatprep.subr.bf16.mxu0 0
      %1199 = vmatpush1.bf16.msra.mxu0 %v1171
      %1200 = vmatprep.subr.bf16.mxu0 0
      %1201 = vmatpush1.bf16.msra.mxu0 %v1170
      %1202 = vmatprep.subr.bf16.mxu0 0
      %1203 = vmatpush2.bf16.msra.mxu0 0
      %1204 = vmatprep.subr.bf16.mxu0 0
      %1205 = vmatpush2.bf16.msra.mxu0 0
      %1206 = vmatprep.subr.bf16.mxu0 0
      %1207 = vmatpush2.bf16.msra.mxu0 0
      %1208 = vmatprep.subr.bf16.mxu0 0
      %1209 = vmatpush2.bf16.msra.mxu0 0
      %1210 = vmatprep.subr.bf16.mxu0 0
      %1211 = vmatpush2.bf16.msra.mxu0 0
      %1212 = vmatprep.subr.bf16.mxu0 0
      %1213 = vmatpush2.bf16.msra.mxu0 0
      %1214 = vmatprep.subr.bf16.mxu0 0
      %1215 = vmatpush2.bf16.msra.mxu0 0
      %1216 = vmatprep.subr.bf16.mxu0 0
      %1217 = vmatpush2.bf16.msra.mxu0 0
      %1218 = vmatprep.mubr.bf16.mxu0 0
      %1219 = vmatmul.mubr.bf16.gmra.mxu0 %v194
      %v1220 = vpop.f32.mrf.mxu0
      %v1221 = vadd.f32 0.0, %v1220
      %v1222 = vpop.f32.mrf.mxu0
      %v1223 = vpop.f32.mrf.mxu0
      %v1224 = vadd.f32 0.0, %v1223
      %v1225 = vpop.f32.mrf.mxu0
      %1226 = vmatprep.mubr.bf16.mxu0 0
      %1227 = vmatmul.mubr.bf16.gmra.mxu0 %v195
      %v1228 = vpop.f32.mrf.mxu0
      %v1229 = vadd.f32 0.0, %v1228
      %v1230 = vpop.f32.mrf.mxu0
      %v1231 = vpop.f32.mrf.mxu0
      %v1232 = vadd.f32 0.0, %v1231
      %v1233 = vpop.f32.mrf.mxu0
      %1234 = vmatprep.mubr.bf16.mxu0 0
      %1235 = vmatmul.mubr.bf16.gmra.mxu0 %v196
      %v1236 = vpop.f32.mrf.mxu0
      %v1237 = vadd.f32 0.0, %v1236
      %v1238 = vpop.f32.mrf.mxu0
      %v1239 = vpop.f32.mrf.mxu0
      %v1240 = vadd.f32 0.0, %v1239
      %v1241 = vpop.f32.mrf.mxu0
      %1242 = vmatprep.mubr.bf16.mxu0 0
      %1243 = vmatmul.mubr.bf16.gmra.mxu0 %v1120
      %v1244 = vpop.f32.mrf.mxu0
      %v1245 = vadd.f32 0.0, %v1244
      %v1246 = vpop.f32.mrf.mxu0
      %v1247 = vpop.f32.mrf.mxu0
      %v1248 = vadd.f32 0.0, %v1247
      %v1249 = vpop.f32.mrf.mxu0
      %1250 = vdwg.mxu0
      %v1251 = vadd.f32 %v1112, %v1221
      %v1252 = vadd.f32 %v1113, %v1224
      %v1253 = vadd.f32 %v1114, %v1229
      %v1254 = vadd.f32 %v1115, %v1232
      %v1255 = vadd.f32 %v1116, %v1237
      %v1256 = vadd.f32 %v1117, %v1240
      %v1257 = vadd.f32 %v1118, %v1245
      %v1258 = vadd.f32 %v1119, %v1248
      %v1261 = vrot.slane %v191, 1
      %v1262 = vrot.slane %v192, 1
      %v1263 = vsel %vm229, %v1261, %v1262
      %v1265 = vpack.c.bf16 %v1263, %v830
      %s1266 = scalar_lea.vmem %s1, 448
      %v1267 = vld [vmem:[%s1266] sm:$0xf]
      %v1268 = vld [vmem:[%s1266 + $0x4] sm:$0xf]
      %v1269 = vld [vmem:[%s1266 + $0x8] sm:$0xf]
      %v1270 = vld [vmem:[%s1266 + $0xc] sm:$0xf]
      %v1271 = vld [vmem:[%s1266 + $0x10] sm:$0xf]
      %v1272 = vld [vmem:[%s1266 + $0x14] sm:$0xf]
      %v1273 = vld [vmem:[%s1266 + $0x18] sm:$0xf]
      %v1274 = vld [vmem:[%s1266 + $0x1c] sm:$0xf]
      %v1275 = vld [vmem:[%s1266 + $0x20] sm:$0xf]
      %v1276 = vld [vmem:[%s1266 + $0x24] sm:$0xf]
      %v1277 = vld [vmem:[%s1266 + $0x28] sm:$0xf]
      %v1278 = vld [vmem:[%s1266 + $0x2c] sm:$0xf]
      %v1279 = vld [vmem:[%s1266 + $0x30] sm:$0xf]
      %v1280 = vld [vmem:[%s1266 + $0x34] sm:$0xf]
      %v1281 = vld [vmem:[%s1266 + $0x38] sm:$0xf]
      %v1282 = vld [vmem:[%s1266 + $0x3c] sm:$0xf]
      %v1299 = vunpack.c.l.b16 %v1267
      %v1300 = vunpack.c.l.b16 %v1268
      %v1301 = vunpack.c.l.b16 %v1269
      %v1302 = vunpack.c.l.b16 %v1270
      %v1303 = vunpack.c.l.b16 %v1271
      %v1304 = vunpack.c.l.b16 %v1272
      %v1305 = vunpack.c.l.b16 %v1273
      %v1306 = vunpack.c.l.b16 %v1274
      %v1307 = vunpack.c.l.b16 %v1275
      %v1308 = vunpack.c.l.b16 %v1276
      %v1309 = vunpack.c.l.b16 %v1277
      %v1310 = vunpack.c.l.b16 %v1278
      %v1311 = vunpack.c.l.b16 %v1279
      %v1312 = vunpack.c.l.b16 %v1280
      %v1313 = vunpack.c.l.b16 %v1281
      %v1314 = vunpack.c.l.b16 %v1282
      %v1315 = vpack.c.b16 %v1300, %v1299
      %v1316 = vpack.c.b16 %v1302, %v1301
      %v1317 = vpack.c.b16 %v1304, %v1303
      %v1318 = vpack.c.b16 %v1306, %v1305
      %v1319 = vpack.c.b16 %v1308, %v1307
      %v1320 = vpack.c.b16 %v1310, %v1309
      %v1321 = vpack.c.b16 %v1312, %v1311
      %v1322 = vpack.c.b16 %v1314, %v1313
      %1331 = vmatprep.subr.bf16.mxu0 0
      %1332 = vmatpush1.bf16.msra.mxu0 %v1322
      %1333 = vmatprep.subr.bf16.mxu0 0
      %1334 = vmatpush1.bf16.msra.mxu0 %v1321
      %1335 = vmatprep.subr.bf16.mxu0 0
      %1336 = vmatpush1.bf16.msra.mxu0 %v1320
      %1337 = vmatprep.subr.bf16.mxu0 0
      %1338 = vmatpush1.bf16.msra.mxu0 %v1319
      %1339 = vmatprep.subr.bf16.mxu0 0
      %1340 = vmatpush1.bf16.msra.mxu0 %v1318
      %1341 = vmatprep.subr.bf16.mxu0 0
      %1342 = vmatpush1.bf16.msra.mxu0 %v1317
      %1343 = vmatprep.subr.bf16.mxu0 0
      %1344 = vmatpush1.bf16.msra.mxu0 %v1316
      %1345 = vmatprep.subr.bf16.mxu0 0
      %1346 = vmatpush1.bf16.msra.mxu0 %v1315
      %1347 = vmatprep.subr.bf16.mxu0 0
      %1348 = vmatpush2.bf16.msra.mxu0 0
      %1349 = vmatprep.subr.bf16.mxu0 0
      %1350 = vmatpush2.bf16.msra.mxu0 0
      %1351 = vmatprep.subr.bf16.mxu0 0
      %1352 = vmatpush2.bf16.msra.mxu0 0
      %1353 = vmatprep.subr.bf16.mxu0 0
      %1354 = vmatpush2.bf16.msra.mxu0 0
      %1355 = vmatprep.subr.bf16.mxu0 0
      %1356 = vmatpush2.bf16.msra.mxu0 0
      %1357 = vmatprep.subr.bf16.mxu0 0
      %1358 = vmatpush2.bf16.msra.mxu0 0
      %1359 = vmatprep.subr.bf16.mxu0 0
      %1360 = vmatpush2.bf16.msra.mxu0 0
      %1361 = vmatprep.subr.bf16.mxu0 0
      %1362 = vmatpush2.bf16.msra.mxu0 0
      %1363 = vmatprep.mubr.bf16.mxu0 0
      %1364 = vmatmul.mubr.bf16.gmra.mxu0 %v263
      %v1365 = vpop.f32.mrf.mxu0
      %v1366 = vadd.f32 0.0, %v1365
      %v1367 = vpop.f32.mrf.mxu0
      %v1368 = vpop.f32.mrf.mxu0
      %v1369 = vadd.f32 0.0, %v1368
      %v1370 = vpop.f32.mrf.mxu0
      %1371 = vmatprep.mubr.bf16.mxu0 0
      %1372 = vmatmul.mubr.bf16.gmra.mxu0 %v264
      %v1373 = vpop.f32.mrf.mxu0
      %v1374 = vadd.f32 0.0, %v1373
      %v1375 = vpop.f32.mrf.mxu0
      %v1376 = vpop.f32.mrf.mxu0
      %v1377 = vadd.f32 0.0, %v1376
      %v1378 = vpop.f32.mrf.mxu0
      %1379 = vmatprep.mubr.bf16.mxu0 0
      %1380 = vmatmul.mubr.bf16.gmra.mxu0 %v265
      %v1381 = vpop.f32.mrf.mxu0
      %v1382 = vadd.f32 0.0, %v1381
      %v1383 = vpop.f32.mrf.mxu0
      %v1384 = vpop.f32.mrf.mxu0
      %v1385 = vadd.f32 0.0, %v1384
      %v1386 = vpop.f32.mrf.mxu0
      %1387 = vmatprep.mubr.bf16.mxu0 0
      %1388 = vmatmul.mubr.bf16.gmra.mxu0 %v1265
      %v1389 = vpop.f32.mrf.mxu0
      %v1390 = vadd.f32 0.0, %v1389
      %v1391 = vpop.f32.mrf.mxu0
      %v1392 = vpop.f32.mrf.mxu0
      %v1393 = vadd.f32 0.0, %v1392
      %v1394 = vpop.f32.mrf.mxu0
      %1395 = vdwg.mxu0
      %v1396 = vadd.f32 %v1251, %v1366
      %v1397 = vadd.f32 %v1252, %v1369
      %v1398 = vadd.f32 %v1253, %v1374
      %v1399 = vadd.f32 %v1254, %v1377
      %v1400 = vadd.f32 %v1255, %v1382
      %v1401 = vadd.f32 %v1256, %v1385
      %v1402 = vadd.f32 %v1257, %v1390
      %v1403 = vadd.f32 %v1258, %v1393
      %v1404 = vrot.slane %v191, 2
      %v1405 = vrot.slane %v192, 2
      %v1406 = vsel %vm509, %v1404, %v1405
      %v1408 = vpack.c.bf16 %v1406, %v976
      %s1409 = scalar_lea.vmem %s1, 512
      %v1410 = vld [vmem:[%s1409] sm:$0xf]
      %v1411 = vld [vmem:[%s1409 + $0x4] sm:$0xf]
      %v1412 = vld [vmem:[%s1409 + $0x8] sm:$0xf]
      %v1413 = vld [vmem:[%s1409 + $0xc] sm:$0xf]
      %v1414 = vld [vmem:[%s1409 + $0x10] sm:$0xf]
      %v1415 = vld [vmem:[%s1409 + $0x14] sm:$0xf]
      %v1416 = vld [vmem:[%s1409 + $0x18] sm:$0xf]
      %v1417 = vld [vmem:[%s1409 + $0x1c] sm:$0xf]
      %v1418 = vld [vmem:[%s1409 + $0x20] sm:$0xf]
      %v1419 = vld [vmem:[%s1409 + $0x24] sm:$0xf]
      %v1420 = vld [vmem:[%s1409 + $0x28] sm:$0xf]
      %v1421 = vld [vmem:[%s1409 + $0x2c] sm:$0xf]
      %v1422 = vld [vmem:[%s1409 + $0x30] sm:$0xf]
      %v1423 = vld [vmem:[%s1409 + $0x34] sm:$0xf]
      %v1424 = vld [vmem:[%s1409 + $0x38] sm:$0xf]
      %v1425 = vld [vmem:[%s1409 + $0x3c] sm:$0xf]
      %v1442 = vunpack.c.l.b16 %v1410
      %v1443 = vunpack.c.l.b16 %v1411
      %v1444 = vunpack.c.l.b16 %v1412
      %v1445 = vunpack.c.l.b16 %v1413
      %v1446 = vunpack.c.l.b16 %v1414
      %v1447 = vunpack.c.l.b16 %v1415
      %v1448 = vunpack.c.l.b16 %v1416
      %v1449 = vunpack.c.l.b16 %v1417
      %v1450 = vunpack.c.l.b16 %v1418
      %v1451 = vunpack.c.l.b16 %v1419
      %v1452 = vunpack.c.l.b16 %v1420
      %v1453 = vunpack.c.l.b16 %v1421
      %v1454 = vunpack.c.l.b16 %v1422
      %v1455 = vunpack.c.l.b16 %v1423
      %v1456 = vunpack.c.l.b16 %v1424
      %v1457 = vunpack.c.l.b16 %v1425
      %v1458 = vpack.c.b16 %v1443, %v1442
      %v1459 = vpack.c.b16 %v1445, %v1444
      %v1460 = vpack.c.b16 %v1447, %v1446
      %v1461 = vpack.c.b16 %v1449, %v1448
      %v1462 = vpack.c.b16 %v1451, %v1450
      %v1463 = vpack.c.b16 %v1453, %v1452
      %v1464 = vpack.c.b16 %v1455, %v1454
      %v1465 = vpack.c.b16 %v1457, %v1456
      %1474 = vmatprep.subr.bf16.mxu0 0
      %1475 = vmatpush1.bf16.msra.mxu0 %v1465
      %1476 = vmatprep.subr.bf16.mxu0 0
      %1477 = vmatpush1.bf16.msra.mxu0 %v1464
      %1478 = vmatprep.subr.bf16.mxu0 0
      %1479 = vmatpush1.bf16.msra.mxu0 %v1463
      %1480 = vmatprep.subr.bf16.mxu0 0
      %1481 = vmatpush1.bf16.msra.mxu0 %v1462
      %1482 = vmatprep.subr.bf16.mxu0 0
      %1483 = vmatpush1.bf16.msra.mxu0 %v1461
      %1484 = vmatprep.subr.bf16.mxu0 0
      %1485 = vmatpush1.bf16.msra.mxu0 %v1460
      %1486 = vmatprep.subr.bf16.mxu0 0
      %1487 = vmatpush1.bf16.msra.mxu0 %v1459
      %1488 = vmatprep.subr.bf16.mxu0 0
      %1489 = vmatpush1.bf16.msra.mxu0 %v1458
      %1490 = vmatprep.subr.bf16.mxu0 0
      %1491 = vmatpush2.bf16.msra.mxu0 0
      %1492 = vmatprep.subr.bf16.mxu0 0
      %1493 = vmatpush2.bf16.msra.mxu0 0
      %1494 = vmatprep.subr.bf16.mxu0 0
      %1495 = vmatpush2.bf16.msra.mxu0 0
      %1496 = vmatprep.subr.bf16.mxu0 0
      %1497 = vmatpush2.bf16.msra.mxu0 0
      %1498 = vmatprep.subr.bf16.mxu0 0
      %1499 = vmatpush2.bf16.msra.mxu0 0
      %1500 = vmatprep.subr.bf16.mxu0 0
      %1501 = vmatpush2.bf16.msra.mxu0 0
      %1502 = vmatprep.subr.bf16.mxu0 0
      %1503 = vmatpush2.bf16.msra.mxu0 0
      %1504 = vmatprep.subr.bf16.mxu0 0
      %1505 = vmatpush2.bf16.msra.mxu0 0
      %1506 = vmatprep.mubr.bf16.mxu0 0
      %1507 = vmatmul.mubr.bf16.gmra.mxu0 %v543
      %v1508 = vpop.f32.mrf.mxu0
      %v1509 = vadd.f32 0.0, %v1508
      %v1510 = vpop.f32.mrf.mxu0
      %v1511 = vpop.f32.mrf.mxu0
      %v1512 = vadd.f32 0.0, %v1511
      %v1513 = vpop.f32.mrf.mxu0
      %1514 = vmatprep.mubr.bf16.mxu0 0
      %1515 = vmatmul.mubr.bf16.gmra.mxu0 %v544
      %v1516 = vpop.f32.mrf.mxu0
      %v1517 = vadd.f32 0.0, %v1516
      %v1518 = vpop.f32.mrf.mxu0
      %v1519 = vpop.f32.mrf.mxu0
      %v1520 = vadd.f32 0.0, %v1519
      %v1521 = vpop.f32.mrf.mxu0
      %1522 = vmatprep.mubr.bf16.mxu0 0
      %1523 = vmatmul.mubr.bf16.gmra.mxu0 %v545
      %v1524 = vpop.f32.mrf.mxu0
      %v1525 = vadd.f32 0.0, %v1524
      %v1526 = vpop.f32.mrf.mxu0
      %v1527 = vpop.f32.mrf.mxu0
      %v1528 = vadd.f32 0.0, %v1527
      %v1529 = vpop.f32.mrf.mxu0
      %1530 = vmatprep.mubr.bf16.mxu0 0
      %1531 = vmatmul.mubr.bf16.gmra.mxu0 %v1408
      %v1532 = vpop.f32.mrf.mxu0
      %v1533 = vadd.f32 0.0, %v1532
      %v1534 = vpop.f32.mrf.mxu0
      %v1535 = vpop.f32.mrf.mxu0
      %v1536 = vadd.f32 0.0, %v1535
      %v1537 = vpop.f32.mrf.mxu0
      %1538 = vdwg.mxu0
      %v1539 = vadd.f32 %v1396, %v1509
      %v1540 = vadd.f32 %v1397, %v1512
      %v1541 = vadd.f32 %v1398, %v1517
      %v1542 = vadd.f32 %v1399, %v1520
      %v1543 = vadd.f32 %v1400, %v1525
      %v1544 = vadd.f32 %v1401, %v1528
      %v1545 = vadd.f32 %v1402, %v1533
      %v1546 = vadd.f32 %v1403, %v1536
      %v1547 = vld [vmem:[%s2] sm:$0x1]
      %v1549 = vlaneseq
      %v1550 = vshrl.u32 %v1549, 7
      %v1551 = vsub.s32 0, %v1550
      %v1552 = vrot.slane %v1547, %v1551
      %v1554 = vadd.f32 %v1539, %v1552
      %v1555 = vadd.f32 %v1540, %v1552
      %v1556 = vadd.f32 %v1541, %v1552
      %v1557 = vadd.f32 %v1542, %v1552
      %v1558 = vadd.f32 %v1543, %v1552
      %v1559 = vadd.f32 %v1544, %v1552
      %v1560 = vadd.f32 %v1545, %v1552
      %v1561 = vadd.f32 %v1546, %v1552
      %v1562 = vmax.f32 %v1554, 0.0
      %v1563 = vmax.f32 %v1555, 0.0
      %v1564 = vmax.f32 %v1556, 0.0
      %v1565 = vmax.f32 %v1557, 0.0
      %v1566 = vmax.f32 %v1558, 0.0
      %v1567 = vmax.f32 %v1559, 0.0
      %v1568 = vmax.f32 %v1560, 0.0
      %v1569 = vmax.f32 %v1561, 0.0
      %1570 = vst [vmem:[%s170] sm:$0xff] %v1562
      %1571 = vst [vmem:[%s170 + $0x8] sm:$0xff] %v1563
      %1572 = vst [vmem:[%s170 + $0x10] sm:$0xff] %v1564
      %1573 = vst [vmem:[%s170 + $0x18] sm:$0xff] %v1565
      %1574 = vst [vmem:[%s170 + $0x20] sm:$0xff] %v1566
      %1575 = vst [vmem:[%s170 + $0x28] sm:$0xff] %v1567
      %1576 = vst [vmem:[%s170 + $0x30] sm:$0xff] %v1568
      %1577 = vst [vmem:[%s170 + $0x38] sm:$0xff] %v1569
      %s1578 = smul.u32 8, %s14
      %p1579 = scmp.lt.s32.totalorder %s1578, 15
      %s1580 = scalar_select %p1579, %s1578, 15
      %s1581 = smul.addr %s1580, 8
      %s1582 = scalar_lea.vmem %s3, %s1581
      // Predicated region
      $region33: #{residual_feature_net.16} parent=31 // pred_check
        %p1583 = pneg %p100
      $region34: #{residual_feature_net.16} parent=31 // pred_check_branch
        %1585 = sbr.rel (%p1583) target = $region36
      $region35: #{residual_feature_net.16} parent=31 // pred_region
        %s1586 = smul.u32 8, %s14
      $region36: #{residual_feature_net.16} parent=31 // pred_fallthru
        _
    $region32: #{residual_feature_net.16} parent=5 // pred_fallthru
      _
    %p1587 = scmp.le.s32.totalorder 2, %s9
    // Predicated region
    $region37: #{residual_feature_net.16} parent=5 // pred_check
      %p1588 = pneg %p1587
    $region38: #{residual_feature_net.16} parent=5 // pred_check_branch
      %1590 = sbr.rel (%p1588) target = $region40
    $region39: #{residual_feature_net.16} parent=5 // pred_region
      %s1591 = ssub.s32 %s9, 2
      // Predicated region
      $region41: #{residual_feature_net.16} parent=39 // pred_check
        %p1592 = pneg %p106
      $region42: #{residual_feature_net.16} parent=39 // pred_check_branch
        %1594 = sbr.rel (%p1592) target = $region44
      $region43: #{residual_feature_net.16} parent=39 // pred_region
        %s1595 = smul.u32 8, %s15
        %p1596 = scmp.lt.s32.totalorder %s1595, 15
        %s1597 = scalar_select %p1596, %s1595, 15
        %s1598 = smul.addr %s1597, 8
        %s1599 = scalar_lea.vmem %s3, %s1598
      $region44: #{residual_feature_net.16} parent=39 // pred_fallthru
        _
    $region40: #{residual_feature_net.16} parent=5 // pred_fallthru
      _
  $region6: #{residual_feature_net.16} parent=0 // loop_footer
    %s13 = sadd.s32 1, %s9
  $region7: #{residual_feature_net.16} parent=0 // loop_footer_branch
    %8 = sbr.rel target = $region3
  $region8: #{residual_feature_net.16} parent=0 // loop_exit
    _

// kernel: residual_feature_net.25
$region0: #{residual_feature_net.25}
  #allocation0 [shape = 'u32[]', space=smem, size = 0x4, offset = 0x4, fixed_abs, tag = 'smem constant byte address 0x4 - core index']
  #allocation1 [shape = 'u32[144,128]{1,0:T(1,128)}', space=vmem, size = 0x12000, scoped, tag = 'internal scratch']
  %s0 = inlined_call_operand.vmem [shape: f32[2,8,8,64], index: 0, kind: input, shape index: {}]
  %s1 = inlined_call_operand.vmem [shape: bf16[1,64,128], index: 1, kind: input, shape index: {}]
  %s2 = inlined_call_operand.vmem [shape: f32[1,128], index: 2, kind: input, shape index: {}]
  %s3 = inlined_call_operand.vmem [shape: f32[128,128], index: 3, kind: output, shape index: {}]
  %s4 = sld [smem:[#allocation0]]
  $region45: #{residual_feature_net.25} parent=0
    _
  %s6 = ssub.s32 1, %s4
  %s7 = scalar_select 0, %s6, %s4
  loop: start=0, step=1, limit=4
  $region2: #{residual_feature_net.25} parent=0 // loop_pre_header
    _
  $region3: #{residual_feature_net.25} parent=0 // loop_header
    %s9 = sphi 0, %s13
    %p10 = scmp.ge.s32.totalorder %s9, 4
    %s19 = sphi 0, %s21
    %s22 = sphi 0, %s19
    %s23 = sphi 0, %s22
    %s39 = sphi 0, %s23
    %s43 = sphi 0, %s43
    %s45 = sphi 0, %s43
    %s46 = sphi 0, %s45
    %s60 = sphi 0, %s46
    %s64 = sphi 0, %s64
    %s66 = sphi 0, %s64
    %s67 = sphi 0, %s66
    %s81 = sphi 0, %s67
    %s87 = sphi 0, %s89
    %s90 = sphi 0, %s87
    %s91 = sphi 0, %s90
    %s107 = sphi 0, %s91
  $region4: #{residual_feature_net.25} parent=0 // loop_header_branch
    %12 = sbr.rel (%p10) target = $region8
  $region5: #{residual_feature_net.25} parent=0 // loop_body
    %s14 = ssub.s32 %s9, 1
    %s15 = ssub.s32 %s9, 2
    %s16 = sadd.s32 %s9, 1
    %s17 = ssub.s32 %s9, %s16
    %p18 = scmp.eq.s32.totalorder %s17, 0
    %s20 = sadd.s32 %s19, 1
    %s21 = scalar_select %p18, %s19, %s20
    %p24 = pneg %p18
    %p25 = scmp.eq.s32.totalorder %s9, 1
    %p26 = por %p24, %p25
    %p27 = scmp.ne.s32.totalorder %s19, %s22
    %p28 = scmp.eq.s32.totalorder %s9, 0
    %p29 = por %p27, %p28
    %p30 = scmp.ne.s32.totalorder %s19, %s22
    %p31 = scmp.eq.s32.totalorder %s14, 1
    %p32 = por %p30, %p31
    %p33 = scmp.ne.s32.totalorder %s22, %s23
    %p34 = scmp.eq.s32.totalorder %s14, 0
    %p35 = por %p33, %p34
    %p36 = scmp.ne.s32.totalorder %s22, %s23
    %p37 = scmp.eq.s32.totalorder %s15, 1
    %p38 = por %p36, %p37
    %p40 = scmp.ne.s32.totalorder %s23, %s39
    %p41 = scmp.eq.s32.totalorder %s15, 0
    %p42 = por %p40, %p41
    %s44 = sadd.s32 %s43, 1
    %p47 = scmp.eq.s32.totalorder %s9, 1
    %p48 = scmp.ne.s32.totalorder %s43, %s45
    %p49 = scmp.eq.s32.totalorder %s9, 0
    %p50 = por %p48, %p49
    %p51 = scmp.ne.s32.totalorder %s43, %s45
    %p52 = scmp.eq.s32.totalorder %s14, 1
    %p53 = por %p51, %p52
    %p54 = scmp.ne.s32.totalorder %s45, %s46
    %p55 = scmp.eq.s32.totalorder %s14, 0
    %p56 = por %p54, %p55
    %p57 = scmp.ne.s32.totalorder %s45, %s46
    %p58 = scmp.eq.s32.totalorder %s15, 1
    %p59 = por %p57, %p58
    %p61 = scmp.ne.s32.totalorder %s46, %s60
    %p62 = scmp.eq.s32.totalorder %s15, 0
    %p63 = por %p61, %p62
    %s65 = sadd.s32 %s64, 1
    %p68 = scmp.eq.s32.totalorder %s9, 1
    %p69 = scmp.ne.s32.totalorder %s64, %s66
    %p70 = scmp.eq.s32.totalorder %s9, 0
    %p71 = por %p69, %p70
    %p72 = scmp.ne.s32.totalorder %s64, %s66
    %p73 = scmp.eq.s32.totalorder %s14, 1
    %p74 = por %p72, %p73
    %p75 = scmp.ne.s32.totalorder %s66, %s67
    %p76 = scmp.eq.s32.totalorder %s14, 0
    %p77 = por %p75, %p76
    %p78 = scmp.ne.s32.totalorder %s66, %s67
    %p79 = scmp.eq.s32.totalorder %s15, 1
    %p80 = por %p78, %p79
    %p82 = scmp.ne.s32.totalorder %s67, %s81
    %p83 = scmp.eq.s32.totalorder %s15, 0
    %p84 = por %p82, %p83
    %s85 = ssub.s32 %s9, %s16
    %p86 = scmp.eq.s32.totalorder %s85, 0
    %s88 = sadd.s32 %s87, 1
    %s89 = scalar_select %p86, %s87, %s88
    %p92 = pneg %p86
    %p93 = scmp.eq.s32.totalorder %s9, 1
    %p94 = por %p92, %p93
    %p95 = scmp.ne.s32.totalorder %s87, %s90
    %p96 = scmp.eq.s32.totalorder %s9, 0
    %p97 = por %p95, %p96
    %p98 = scmp.ne.s32.totalorder %s87, %s90
    %p99 = scmp.eq.s32.totalorder %s14, 1
    %p100 = por %p98, %p99
    %p101 = scmp.ne.s32.totalorder %s90, %s91
    %p102 = scmp.eq.s32.totalorder %s14, 0
    %p103 = por %p101, %p102
    %p104 = scmp.ne.s32.totalorder %s90, %s91
    %p105 = scmp.eq.s32.totalorder %s15, 1
    %p106 = por %p104, %p105
    %p108 = scmp.ne.s32.totalorder %s91, %s107
    %p109 = scmp.eq.s32.totalorder %s15, 0
    %p110 = por %p108, %p109
    %p111 = scmp.le.s32.totalorder 1, %s9
    %p112 = scmp.lt.s32.totalorder %s9, 3
    %p113 = pnand %p111, %p112
    %p114 = pneg %p113
    // Predicated region
    $region9: #{residual_feature_net.25} parent=5 // pred_check
      _
    $region10: #{residual_feature_net.25} parent=5 // pred_check_branch
      %116 = sbr.rel (%p113) target = $region12
    $region11: #{residual_feature_net.25} parent=5 // pred_region
      %s117 = ssub.s32 %s9, 1
      // Predicated region
      $region13: #{residual_feature_net.25} parent=11 // pred_check
        %p118 = pneg %p56
      $region14: #{residual_feature_net.25} parent=11 // pred_check_branch
        %120 = sbr.rel (%p118) target = $region16
      $region15: #{residual_feature_net.25} parent=11 // pred_region
        _
      $region16: #{residual_feature_net.25} parent=11 // pred_fallthru
        _
      // Predicated region
      $region17: #{residual_feature_net.25} parent=11 // pred_check
        %p121 = pneg %p77
      $region18: #{residual_feature_net.25} parent=11 // pred_check_branch
        %123 = sbr.rel (%p121) target = $region20
      $region19: #{residual_feature_net.25} parent=11 // pred_region
        _
      $region20: #{residual_feature_net.25} parent=11 // pred_fallthru
        _
    $region12: #{residual_feature_net.25} parent=5 // pred_fallthru
      _
    %p124 = scmp.lt.s32.totalorder %s9, 2
    // Predicated region
    $region21: #{residual_feature_net.25} parent=5 // pred_check
      %p125 = pneg %p124
    $region22: #{residual_feature_net.25} parent=5 // pred_check_branch
      %127 = sbr.rel (%p125) target = $region24
    $region23: #{residual_feature_net.25} parent=5 // pred_region
      // Predicated region
      $region25: #{residual_feature_net.25} parent=23 // pred_check
        %p128 = pneg %p29
      $region26: #{residual_feature_net.25} parent=23 // pred_check_branch
        %130 = sbr.rel (%p128) target = $region28
      $region27: #{residual_feature_net.25} parent=23 // pred_region
        %p131 = scmp.lt.s32.totalorder %s9, 1
        %s132 = scalar_select %p131, %s9, 1
        %s133 = smul.addr %s132, 8
        %s134 = smul.addr %s133, 8
        %s135 = scalar_lea.vmem %s0, %s134
      $region28: #{residual_feature_net.25} parent=23 // pred_fallthru
        _
    $region24: #{residual_feature_net.25} parent=5 // pred_fallthru
      _
    %p136 = scmp.le.s32.totalorder 1, %s9
    %p137 = scmp.lt.s32.totalorder %s9, 3
    %p138 = pnand %p136, %p137
    %p139 = pneg %p138
    // Predicated region
    $region29: #{residual_feature_net.25} parent=5 // pred_check
      _
    $region30: #{residual_feature_net.25} parent=5 // pred_check_branch
      %141 = sbr.rel (%p138) target = $region32
    $region31: #{residual_feature_net.25} parent=5 // pred_region
      %s142 = ssub.s32 %s9, 1
      %p143 = scmp.lt.s32.totalorder %s14, 1
      %s144 = scalar_select %p143, %s14, 1
      %s145 = smul.addr %s144, 8
      %s146 = smul.addr %s145, 8
      %s147 = scalar_lea.vmem %s0, %s146
      %p148 = pneg %p35
      %p149 = pneg %p32
      %p150 = pneg %p56
      %p151 = pneg %p53
      %p152 = pneg %p77
      %p153 = pneg %p74
      %p154 = pneg %p103
      %p155 = pneg %p100
      %s156 = smul.u32 8, %s14
      %p157 = scmp.lt.s32.totalorder %s156, 15
      %s158 = scalar_select %p157, %s156, 15
      %s159 = smul.addr %s158, 8
      %s160 = scalar_lea.vmem %s3, %s159
      %p161 = scmp.lt.s32.totalorder %s14, 1
      %s162 = scalar_select %p161, %s14, 1
      %s163 = smul.addr %s162, 8
      %s164 = smul.addr %s163, 8
      %s165 = scalar_lea.vmem %s0, %s164
      %s166 = smul.u32 8, %s14
      %p167 = scmp.lt.s32.totalorder %s166, 15
      %s168 = scalar_select %p167, %s166, 15
      %s169 = smul.addr %s168, 8
      %s170 = scalar_lea.vmem %s3, %s169
      %s171 = smul.u32 8, %s14
      %v173 = vld [vmem:[%s165] sm:$0xff]
      %v174 = vld [vmem:[%s165 + $0x8] sm:$0xff]
      %v175 = vld [vmem:[%s165 + $0x10] sm:$0xff]
      %v176 = vld [vmem:[%s165 + $0x18] sm:$0xff]
      %v177 = vld [vmem:[%s165 + $0x20] sm:$0xff]
      %v178 = vld [vmem:[%s165 + $0x28] sm:$0xff]
      %v179 = vld [vmem:[%s165 + $0x30] sm:$0xff]
      %v180 = vld [vmem:[%s165 + $0x38] sm:$0xff]
      %v181 = vpack.c.bf16 %v174, %v173
      %v182 = vpack.c.bf16 %v176, %v175
      %v183 = vpack.c.bf16 %v178, %v177
      %v184 = vpack.c.bf16 %v180, %v179
      %v185 = vld [vmem:[%s1] sm:$0xf]
      %v186 = vld [vmem:[%s1 + $0x4] sm:$0xf]
      %v187 = vld [vmem:[%s1 + $0x8] sm:$0xf]
      %v188 = vld [vmem:[%s1 + $0xc] sm:$0xf]
      %v189 = vld [vmem:[%s1 + $0x10] sm:$0xf]
      %v190 = vld [vmem:[%s1 + $0x14] sm:$0xf]
      %v191 = vld [vmem:[%s1 + $0x18] sm:$0xf]
      %v192 = vld [vmem:[%s1 + $0x1c] sm:$0xf]
      %v193 = vld [vmem:[%s2] sm:$0x1]
      %v195 = vlaneseq
      %v196 = vshrl.u32 %v195, 7
      %v197 = vsub.s32 0, %v196
      %v198 = vrot.slane %v193, %v197
      %v208 = vunpack.c.l.b16 %v185
      %v209 = vunpack.c.l.b16 %v186
      %v210 = vunpack.c.l.b16 %v187
      %v211 = vunpack.c.l.b16 %v188
      %v212 = vunpack.c.l.b16 %v189
      %v213 = vunpack.c.l.b16 %v190
      %v214 = vunpack.c.l.b16 %v191
      %v215 = vunpack.c.l.b16 %v192
      %v216 = vpack.c.b16 %v209, %v208
      %v217 = vpack.c.b16 %v211, %v210
      %v218 = vpack.c.b16 %v213, %v212
      %v219 = vpack.c.b16 %v215, %v214
      %vm224 = vcmask 523264
      %v226 = vsel %vm224, %v181, 0
      %v229 = vsel %vm224, %v182, 0
      %v232 = vsel %vm224, %v183, 0
      %v235 = vsel %vm224, %v184, 0
      %237 = vmatprep.subr.bf16.mxu0 0
      %238 = vmatpush1.bf16.msra.mxu0 0
      %239 = vmatprep.subr.bf16.mxu0 0
      %240 = vmatpush1.bf16.msra.mxu0 0
      %241 = vmatprep.subr.bf16.mxu0 0
      %242 = vmatpush1.bf16.msra.mxu0 0
      %243 = vmatprep.subr.bf16.mxu0 0
      %244 = vmatpush1.bf16.msra.mxu0 0
      %245 = vmatprep.subr.bf16.mxu0 0
      %246 = vmatpush1.bf16.msra.mxu0 %v219
      %247 = vmatprep.subr.bf16.mxu0 0
      %248 = vmatpush1.bf16.msra.mxu0 %v218
      %249 = vmatprep.subr.bf16.mxu0 0
      %250 = vmatpush1.bf16.msra.mxu0 %v217
      %251 = vmatprep.subr.bf16.mxu0 0
      %252 = vmatpush1.bf16.msra.mxu0 %v216
      %253 = vmatprep.subr.bf16.mxu0 0
      %254 = vmatpush2.bf16.msra.mxu0 0
      %255 = vmatprep.subr.bf16.mxu0 0
      %256 = vmatpush2.bf16.msra.mxu0 0
      %257 = vmatprep.subr.bf16.mxu0 0
      %258 = vmatpush2.bf16.msra.mxu0 0
      %259 = vmatprep.subr.bf16.mxu0 0
      %260 = vmatpush2.bf16.msra.mxu0 0
      %261 = vmatprep.subr.bf16.mxu0 0
      %262 = vmatpush2.bf16.msra.mxu0 0
      %263 = vmatprep.subr.bf16.mxu0 0
      %264 = vmatpush2.bf16.msra.mxu0 0
      %265 = vmatprep.subr.bf16.mxu0 0
      %266 = vmatpush2.bf16.msra.mxu0 0
      %267 = vmatprep.subr.bf16.mxu0 0
      %268 = vmatpush2.bf16.msra.mxu0 0
      %269 = vmatprep.mubr.bf16.mxu0 0
      %270 = vmatmul.mubr.bf16.gmra.mxu0 %v226
      %v271 = vpop.f32.mrf.mxu0
      %v272 = vadd.f32 %v198, %v271
      %v273 = vpop.f32.mrf.mxu0
      %v274 = vpop.f32.mrf.mxu0
      %v275 = vadd.f32 %v198, %v274
      %v276 = vpop.f32.mrf.mxu0
      %277 = vmatprep.mubr.bf16.mxu0 0
      %278 = vmatmul.mubr.bf16.gmra.mxu0 %v229
      %v279 = vpop.f32.mrf.mxu0
      %v280 = vadd.f32 %v198, %v279
      %v281 = vpop.f32.mrf.mxu0
      %v282 = vpop.f32.mrf.mxu0
      %v283 = vadd.f32 %v198, %v282
      %v284 = vpop.f32.mrf.mxu0
      %285 = vmatprep.mubr.bf16.mxu0 0
      %286 = vmatmul.mubr.bf16.gmra.mxu0 %v232
      %v287 = vpop.f32.mrf.mxu0
      %v288 = vadd.f32 %v198, %v287
      %v289 = vpop.f32.mrf.mxu0
      %v290 = vpop.f32.mrf.mxu0
      %v291 = vadd.f32 %v198, %v290
      %v292 = vpop.f32.mrf.mxu0
      %293 = vmatprep.mubr.bf16.mxu0 0
      %294 = vmatmul.mubr.bf16.gmra.mxu0 %v235
      %v295 = vpop.f32.mrf.mxu0
      %v296 = vadd.f32 %v198, %v295
      %v297 = vpop.f32.mrf.mxu0
      %v298 = vpop.f32.mrf.mxu0
      %v299 = vadd.f32 %v198, %v298
      %v300 = vpop.f32.mrf.mxu0
      %301 = vdwg.mxu0
      %v302 = vmax.f32 %v272, 0.0
      %v303 = vmax.f32 %v275, 0.0
      %v304 = vmax.f32 %v280, 0.0
      %v305 = vmax.f32 %v283, 0.0
      %v306 = vmax.f32 %v288, 0.0
      %v307 = vmax.f32 %v291, 0.0
      %v308 = vmax.f32 %v296, 0.0
      %v309 = vmax.f32 %v299, 0.0
      %310 = vst [vmem:[%s170] sm:$0xff] %v302
      %311 = vst [vmem:[%s170 + $0x8] sm:$0xff] %v303
      %312 = vst [vmem:[%s170 + $0x10] sm:$0xff] %v304
      %313 = vst [vmem:[%s170 + $0x18] sm:$0xff] %v305
      %314 = vst [vmem:[%s170 + $0x20] sm:$0xff] %v306
      %315 = vst [vmem:[%s170 + $0x28] sm:$0xff] %v307
      %316 = vst [vmem:[%s170 + $0x30] sm:$0xff] %v308
      %317 = vst [vmem:[%s170 + $0x38] sm:$0xff] %v309
      %s318 = smul.u32 8, %s14
      %p319 = scmp.lt.s32.totalorder %s318, 15
      %s320 = scalar_select %p319, %s318, 15
      %s321 = smul.addr %s320, 8
      %s322 = scalar_lea.vmem %s3, %s321
      // Predicated region
      $region33: #{residual_feature_net.25} parent=31 // pred_check
        %p323 = pneg %p100
      $region34: #{residual_feature_net.25} parent=31 // pred_check_branch
        %325 = sbr.rel (%p323) target = $region36
      $region35: #{residual_feature_net.25} parent=31 // pred_region
        %s326 = smul.u32 8, %s14
      $region36: #{residual_feature_net.25} parent=31 // pred_fallthru
        _
    $region32: #{residual_feature_net.25} parent=5 // pred_fallthru
      _
    %p327 = scmp.le.s32.totalorder 2, %s9
    // Predicated region
    $region37: #{residual_feature_net.25} parent=5 // pred_check
      %p328 = pneg %p327
    $region38: #{residual_feature_net.25} parent=5 // pred_check_branch
      %330 = sbr.rel (%p328) target = $region40
    $region39: #{residual_feature_net.25} parent=5 // pred_region
      %s331 = ssub.s32 %s9, 2
      // Predicated region
      $region41: #{residual_feature_net.25} parent=39 // pred_check
        %p332 = pneg %p106
      $region42: #{residual_feature_net.25} parent=39 // pred_check_branch
        %334 = sbr.rel (%p332) target = $region44
      $region43: #{residual_feature_net.25} parent=39 // pred_region
        %s335 = smul.u32 8, %s15
        %p336 = scmp.lt.s32.totalorder %s335, 15
        %s337 = scalar_select %p336, %s335, 15
        %s338 = smul.addr %s337, 8
        %s339 = scalar_lea.vmem %s3, %s338
      $region44: #{residual_feature_net.25} parent=39 // pred_fallthru
        _
    $region40: #{residual_feature_net.25} parent=5 // pred_fallthru
      _
  $region6: #{residual_feature_net.25} parent=0 // loop_footer
    %s13 = sadd.s32 1, %s9
  $region7: #{residual_feature_net.25} parent=0 // loop_footer_branch
    %8 = sbr.rel target = $region3
  $region8: #{residual_feature_net.25} parent=0 // loop_exit
    _

// kernel: residual_feature_net.24
$region0: #{residual_feature_net.24}
  #allocation0 [shape = 'u32[]', space=smem, size = 0x4, offset = 0x4, fixed_abs, tag = 'smem constant byte address 0x4 - core index']
  #allocation1 [shape = 'u32[144,128]{1,0:T(1,128)}', space=vmem, size = 0x12000, scoped, tag = 'internal scratch']
  %s0 = inlined_call_operand.vmem [shape: f32[2,10,10,128], index: 0, kind: input, shape index: {}]
  %s1 = inlined_call_operand.vmem [shape: bf16[9,128,64], index: 1, kind: input, shape index: {}]
  %s2 = inlined_call_operand.vmem [shape: f32[1,64], index: 2, kind: input, shape index: {}]
  %s3 = inlined_call_operand.vmem [shape: f32[128,64], index: 3, kind: output, shape index: {}]
  %s4 = sld [smem:[#allocation0]]
  $region45: #{residual_feature_net.24} parent=0
    _
  %s6 = ssub.s32 1, %s4
  %s7 = scalar_select 0, %s6, %s4
  loop: start=0, step=1, limit=4
  $region2: #{residual_feature_net.24} parent=0 // loop_pre_header
    _
  $region3: #{residual_feature_net.24} parent=0 // loop_header
    %s9 = sphi 0, %s13
    %p10 = scmp.ge.s32.totalorder %s9, 4
    %s19 = sphi 0, %s21
    %s22 = sphi 0, %s19
    %s23 = sphi 0, %s22
    %s39 = sphi 0, %s23
    %s43 = sphi 0, %s43
    %s45 = sphi 0, %s43
    %s46 = sphi 0, %s45
    %s60 = sphi 0, %s46
    %s64 = sphi 0, %s64
    %s66 = sphi 0, %s64
    %s67 = sphi 0, %s66
    %s81 = sphi 0, %s67
    %s87 = sphi 0, %s89
    %s90 = sphi 0, %s87
    %s91 = sphi 0, %s90
    %s107 = sphi 0, %s91
  $region4: #{residual_feature_net.24} parent=0 // loop_header_branch
    %12 = sbr.rel (%p10) target = $region8
  $region5: #{residual_feature_net.24} parent=0 // loop_body
    %s14 = ssub.s32 %s9, 1
    %s15 = ssub.s32 %s9, 2
    %s16 = sadd.s32 %s9, 1
    %s17 = ssub.s32 %s9, %s16
    %p18 = scmp.eq.s32.totalorder %s17, 0
    %s20 = sadd.s32 %s19, 1
    %s21 = scalar_select %p18, %s19, %s20
    %p24 = pneg %p18
    %p25 = scmp.eq.s32.totalorder %s9, 1
    %p26 = por %p24, %p25
    %p27 = scmp.ne.s32.totalorder %s19, %s22
    %p28 = scmp.eq.s32.totalorder %s9, 0
    %p29 = por %p27, %p28
    %p30 = scmp.ne.s32.totalorder %s19, %s22
    %p31 = scmp.eq.s32.totalorder %s14, 1
    %p32 = por %p30, %p31
    %p33 = scmp.ne.s32.totalorder %s22, %s23
    %p34 = scmp.eq.s32.totalorder %s14, 0
    %p35 = por %p33, %p34
    %p36 = scmp.ne.s32.totalorder %s22, %s23
    %p37 = scmp.eq.s32.totalorder %s15, 1
    %p38 = por %p36, %p37
    %p40 = scmp.ne.s32.totalorder %s23, %s39
    %p41 = scmp.eq.s32.totalorder %s15, 0
    %p42 = por %p40, %p41
    %s44 = sadd.s32 %s43, 1
    %p47 = scmp.eq.s32.totalorder %s9, 1
    %p48 = scmp.ne.s32.totalorder %s43, %s45
    %p49 = scmp.eq.s32.totalorder %s9, 0
    %p50 = por %p48, %p49
    %p51 = scmp.ne.s32.totalorder %s43, %s45
    %p52 = scmp.eq.s32.totalorder %s14, 1
    %p53 = por %p51, %p52
    %p54 = scmp.ne.s32.totalorder %s45, %s46
    %p55 = scmp.eq.s32.totalorder %s14, 0
    %p56 = por %p54, %p55
    %p57 = scmp.ne.s32.totalorder %s45, %s46
    %p58 = scmp.eq.s32.totalorder %s15, 1
    %p59 = por %p57, %p58
    %p61 = scmp.ne.s32.totalorder %s46, %s60
    %p62 = scmp.eq.s32.totalorder %s15, 0
    %p63 = por %p61, %p62
    %s65 = sadd.s32 %s64, 1
    %p68 = scmp.eq.s32.totalorder %s9, 1
    %p69 = scmp.ne.s32.totalorder %s64, %s66
    %p70 = scmp.eq.s32.totalorder %s9, 0
    %p71 = por %p69, %p70
    %p72 = scmp.ne.s32.totalorder %s64, %s66
    %p73 = scmp.eq.s32.totalorder %s14, 1
    %p74 = por %p72, %p73
    %p75 = scmp.ne.s32.totalorder %s66, %s67
    %p76 = scmp.eq.s32.totalorder %s14, 0
    %p77 = por %p75, %p76
    %p78 = scmp.ne.s32.totalorder %s66, %s67
    %p79 = scmp.eq.s32.totalorder %s15, 1
    %p80 = por %p78, %p79
    %p82 = scmp.ne.s32.totalorder %s67, %s81
    %p83 = scmp.eq.s32.totalorder %s15, 0
    %p84 = por %p82, %p83
    %s85 = ssub.s32 %s9, %s16
    %p86 = scmp.eq.s32.totalorder %s85, 0
    %s88 = sadd.s32 %s87, 1
    %s89 = scalar_select %p86, %s87, %s88
    %p92 = pneg %p86
    %p93 = scmp.eq.s32.totalorder %s9, 1
    %p94 = por %p92, %p93
    %p95 = scmp.ne.s32.totalorder %s87, %s90
    %p96 = scmp.eq.s32.totalorder %s9, 0
    %p97 = por %p95, %p96
    %p98 = scmp.ne.s32.totalorder %s87, %s90
    %p99 = scmp.eq.s32.totalorder %s14, 1
    %p100 = por %p98, %p99
    %p101 = scmp.ne.s32.totalorder %s90, %s91
    %p102 = scmp.eq.s32.totalorder %s14, 0
    %p103 = por %p101, %p102
    %p104 = scmp.ne.s32.totalorder %s90, %s91
    %p105 = scmp.eq.s32.totalorder %s15, 1
    %p106 = por %p104, %p105
    %p108 = scmp.ne.s32.totalorder %s91, %s107
    %p109 = scmp.eq.s32.totalorder %s15, 0
    %p110 = por %p108, %p109
    %p111 = scmp.le.s32.totalorder 1, %s9
    %p112 = scmp.lt.s32.totalorder %s9, 3
    %p113 = pnand %p111, %p112
    %p114 = pneg %p113
    // Predicated region
    $region9: #{residual_feature_net.24} parent=5 // pred_check
      _
    $region10: #{residual_feature_net.24} parent=5 // pred_check_branch
      %116 = sbr.rel (%p113) target = $region12
    $region11: #{residual_feature_net.24} parent=5 // pred_region
      %s117 = ssub.s32 %s9, 1
      // Predicated region
      $region13: #{residual_feature_net.24} parent=11 // pred_check
        %p118 = pneg %p56
      $region14: #{residual_feature_net.24} parent=11 // pred_check_branch
        %120 = sbr.rel (%p118) target = $region16
      $region15: #{residual_feature_net.24} parent=11 // pred_region
        _
      $region16: #{residual_feature_net.24} parent=11 // pred_fallthru
        _
      // Predicated region
      $region17: #{residual_feature_net.24} parent=11 // pred_check
        %p121 = pneg %p77
      $region18: #{residual_feature_net.24} parent=11 // pred_check_branch
        %123 = sbr.rel (%p121) target = $region20
      $region19: #{residual_feature_net.24} parent=11 // pred_region
        _
      $region20: #{residual_feature_net.24} parent=11 // pred_fallthru
        _
    $region12: #{residual_feature_net.24} parent=5 // pred_fallthru
      _
    %p124 = scmp.lt.s32.totalorder %s9, 2
    // Predicated region
    $region21: #{residual_feature_net.24} parent=5 // pred_check
      %p125 = pneg %p124
    $region22: #{residual_feature_net.24} parent=5 // pred_check_branch
      %127 = sbr.rel (%p125) target = $region24
    $region23: #{residual_feature_net.24} parent=5 // pred_region
      // Predicated region
      $region25: #{residual_feature_net.24} parent=23 // pred_check
        %p128 = pneg %p29
      $region26: #{residual_feature_net.24} parent=23 // pred_check_branch
        %130 = sbr.rel (%p128) target = $region28
      $region27: #{residual_feature_net.24} parent=23 // pred_region
        %p131 = scmp.lt.s32.totalorder %s9, 1
        %s132 = scalar_select %p131, %s9, 1
        %s133 = smul.addr %s132, 20
        %s134 = smul.addr %s133, 8
        %s135 = scalar_lea.vmem %s0, %s134
      $region28: #{residual_feature_net.24} parent=23 // pred_fallthru
        _
    $region24: #{residual_feature_net.24} parent=5 // pred_fallthru
      _
    %p136 = scmp.le.s32.totalorder 1, %s9
    %p137 = scmp.lt.s32.totalorder %s9, 3
    %p138 = pnand %p136, %p137
    %p139 = pneg %p138
    // Predicated region
    $region29: #{residual_feature_net.24} parent=5 // pred_check
      _
    $region30: #{residual_feature_net.24} parent=5 // pred_check_branch
      %141 = sbr.rel (%p138) target = $region32
    $region31: #{residual_feature_net.24} parent=5 // pred_region
      %s142 = ssub.s32 %s9, 1
      %p143 = scmp.lt.s32.totalorder %s14, 1
      %s144 = scalar_select %p143, %s14, 1
      %s145 = smul.addr %s144, 20
      %s146 = smul.addr %s145, 8
      %s147 = scalar_lea.vmem %s0, %s146
      %p148 = pneg %p35
      %p149 = pneg %p32
      %p150 = pneg %p56
      %p151 = pneg %p53
      %p152 = pneg %p77
      %p153 = pneg %p74
      %p154 = pneg %p103
      %p155 = pneg %p100
      %s156 = smul.u32 8, %s14
      %p157 = scmp.lt.s32.totalorder %s156, 15
      %s158 = scalar_select %p157, %s156, 15
      %s159 = smul.addr %s158, 8
      %s160 = scalar_lea.vmem %s3, %s159
      %p161 = scmp.lt.s32.totalorder %s14, 1
      %s162 = scalar_select %p161, %s14, 1
      %s163 = smul.addr %s162, 20
      %s164 = smul.addr %s163, 8
      %s165 = scalar_lea.vmem %s0, %s164
      %s166 = smul.u32 8, %s14
      %p167 = scmp.lt.s32.totalorder %s166, 15
      %s168 = scalar_select %p167, %s166, 15
      %s169 = smul.addr %s168, 8
      %s170 = scalar_lea.vmem %s3, %s169
      %s171 = smul.u32 8, %s14
      %v173 = vld [vmem:[%s165] sm:$0xff]
      %v174 = vld [vmem:[%s165 + $0x8] sm:$0x3]
      %v175 = vld [vmem:[%s165 + $0x10] sm:$0xff]
      %v176 = vld [vmem:[%s165 + $0x18] sm:$0x3]
      %v177 = vld [vmem:[%s165 + $0x20] sm:$0xff]
      %v178 = vld [vmem:[%s165 + $0x28] sm:$0x3]
      %v179 = vld [vmem:[%s165 + $0x30] sm:$0xff]
      %v180 = vld [vmem:[%s165 + $0x38] sm:$0x3]
      %v181 = vld [vmem:[%s165 + $0x40] sm:$0xff]
      %v182 = vld [vmem:[%s165 + $0x48] sm:$0x3]
      %v183 = vld [vmem:[%s165 + $0x50] sm:$0xff]
      %v184 = vld [vmem:[%s165 + $0x58] sm:$0x3]
      %v185 = vld [vmem:[%s165 + $0x60] sm:$0xff]
      %v186 = vld [vmem:[%s165 + $0x68] sm:$0x3]
      %v187 = vld [vmem:[%s165 + $0x70] sm:$0xff]
      %v188 = vld [vmem:[%s165 + $0x78] sm:$0x3]
      %v189 = vld [vmem:[%s165 + $0x80] sm:$0xff]
      %v190 = vld [vmem:[%s165 + $0x88] sm:$0x3]
      %v191 = vld [vmem:[%s165 + $0x90] sm:$0xff]
      %v192 = vld [vmem:[%s165 + $0x98] sm:$0x3]
      %v193 = vpack.c.bf16 %v175, %v173
      %v194 = vpack.c.bf16 %v179, %v177
      %v195 = vpack.c.bf16 %v183, %v181
      %v196 = vpack.c.bf16 %v187, %v185
      %v197 = vld [vmem:[%s1] sm:$0xf]
      %v198 = vld [vmem:[%s1 + $0x4] sm:$0xf]
      %v199 = vld [vmem:[%s1 + $0x8] sm:$0xf]
      %v200 = vld [vmem:[%s1 + $0xc] sm:$0xf]
      %v201 = vld [vmem:[%s1 + $0x10] sm:$0xf]
      %v202 = vld [vmem:[%s1 + $0x14] sm:$0xf]
      %v203 = vld [vmem:[%s1 + $0x18] sm:$0xf]
      %v204 = vld [vmem:[%s1 + $0x1c] sm:$0xf]
      %v205 = vld [vmem:[%s1 + $0x20] sm:$0xf]
      %v206 = vld [vmem:[%s1 + $0x24] sm:$0xf]
      %v207 = vld [vmem:[%s1 + $0x28] sm:$0xf]
      %v208 = vld [vmem:[%s1 + $0x2c] sm:$0xf]
      %v209 = vld [vmem:[%s1 + $0x30] sm:$0xf]
      %v210 = vld [vmem:[%s1 + $0x34] sm:$0xf]
      %v211 = vld [vmem:[%s1 + $0x38] sm:$0xf]
      %v212 = vld [vmem:[%s1 + $0x3c] sm:$0xf]
      %vm229 = vcmask 1046528
      %v230 = vrot.slane %v173, 1
      %v231 = vrot.slane %v174, 1
      %v232 = vsel %vm229, %v230, %v231
      %v233 = vrot.slane %v175, 1
      %v234 = vrot.slane %v176, 1
      %v235 = vsel %vm229, %v233, %v234
      %v236 = vrot.slane %v177, 1
      %v237 = vrot.slane %v178, 1
      %v238 = vsel %vm229, %v236, %v237
      %v239 = vrot.slane %v179, 1
      %v240 = vrot.slane %v180, 1
      %v241 = vsel %vm229, %v239, %v240
      %v242 = vrot.slane %v181, 1
      %v243 = vrot.slane %v182, 1
      %v244 = vsel %vm229, %v242, %v243
      %v245 = vrot.slane %v183, 1
      %v246 = vrot.slane %v184, 1
      %v247 = vsel %vm229, %v245, %v246
      %v248 = vrot.slane %v185, 1
      %v249 = vrot.slane %v186, 1
      %v250 = vsel %vm229, %v248, %v249
      %v251 = vrot.slane %v187, 1
      %v252 = vrot.slane %v188, 1
      %v253 = vsel %vm229, %v251, %v252
      %v262 = vpack.c.bf16 %v235, %v232
      %v263 = vpack.c.bf16 %v241, %v238
      %v264 = vpack.c.bf16 %v247, %v244
      %v265 = vpack.c.bf16 %v253, %v250
      %s266 = scalar_lea.vmem %s1, 64
      %v267 = vld [vmem:[%s266] sm:$0xf]
      %v268 = vld [vmem:[%s266 + $0x4] sm:$0xf]
      %v269 = vld [vmem:[%s266 + $0x8] sm:$0xf]
      %v270 = vld [vmem:[%s266 + $0xc] sm:$0xf]
      %v271 = vld [vmem:[%s266 + $0x10] sm:$0xf]
      %v272 = vld [vmem:[%s266 + $0x14] sm:$0xf]
      %v273 = vld [vmem:[%s266 + $0x18] sm:$0xf]
      %v274 = vld [vmem:[%s266 + $0x1c] sm:$0xf]
      %v275 = vld [vmem:[%s266 + $0x20] sm:$0xf]
      %v276 = vld [vmem:[%s266 + $0x24] sm:$0xf]
      %v277 = vld [vmem:[%s266 + $0x28] sm:$0xf]
      %v278 = vld [vmem:[%s266 + $0x2c] sm:$0xf]
      %v279 = vld [vmem:[%s266 + $0x30] sm:$0xf]
      %v280 = vld [vmem:[%s266 + $0x34] sm:$0xf]
      %v281 = vld [vmem:[%s266 + $0x38] sm:$0xf]
      %v282 = vld [vmem:[%s266 + $0x3c] sm:$0xf]
      %v299 = vunpack.c.l.b16 %v267
      %v300 = vunpack.c.l.b16 %v268
      %v301 = vunpack.c.l.b16 %v269
      %v302 = vunpack.c.l.b16 %v270
      %v303 = vunpack.c.l.b16 %v271
      %v304 = vunpack.c.l.b16 %v272
      %v305 = vunpack.c.l.b16 %v273
      %v306 = vunpack.c.l.b16 %v274
      %v307 = vunpack.c.l.b16 %v275
      %v308 = vunpack.c.l.b16 %v276
      %v309 = vunpack.c.l.b16 %v277
      %v310 = vunpack.c.l.b16 %v278
      %v311 = vunpack.c.l.b16 %v279
      %v312 = vunpack.c.l.b16 %v280
      %v313 = vunpack.c.l.b16 %v281
      %v314 = vunpack.c.l.b16 %v282
      %v315 = vpack.c.b16 %v300, %v299
      %v316 = vpack.c.b16 %v302, %v301
      %v317 = vpack.c.b16 %v304, %v303
      %v318 = vpack.c.b16 %v306, %v305
      %v319 = vpack.c.b16 %v308, %v307
      %v320 = vpack.c.b16 %v310, %v309
      %v321 = vpack.c.b16 %v312, %v311
      %v322 = vpack.c.b16 %v314, %v313
      %331 = vmatprep.subr.bf16.mxu0 0
      %332 = vmatpush1.bf16.msra.mxu0 %v322
      %333 = vmatprep.subr.bf16.mxu0 0
      %334 = vmatpush1.bf16.msra.mxu0 %v321
      %335 = vmatprep.subr.bf16.mxu0 0
      %336 = vmatpush1.bf16.msra.mxu0 %v320
      %337 = vmatprep.subr.bf16.mxu0 0
      %338 = vmatpush1.bf16.msra.mxu0 %v319
      %339 = vmatprep.subr.bf16.mxu0 0
      %340 = vmatpush1.bf16.msra.mxu0 %v318
      %341 = vmatprep.subr.bf16.mxu0 0
      %342 = vmatpush1.bf16.msra.mxu0 %v317
      %343 = vmatprep.subr.bf16.mxu0 0
      %344 = vmatpush1.bf16.msra.mxu0 %v316
      %345 = vmatprep.subr.bf16.mxu0 0
      %346 = vmatpush1.bf16.msra.mxu0 %v315
      %347 = vmatprep.subr.bf16.mxu0 0
      %348 = vmatpush2.bf16.msra.mxu0 0
      %349 = vmatprep.subr.bf16.mxu0 0
      %350 = vmatpush2.bf16.msra.mxu0 0
      %351 = vmatprep.subr.bf16.mxu0 0
      %352 = vmatpush2.bf16.msra.mxu0 0
      %353 = vmatprep.subr.bf16.mxu0 0
      %354 = vmatpush2.bf16.msra.mxu0 0
      %355 = vmatprep.subr.bf16.mxu0 0
      %356 = vmatpush2.bf16.msra.mxu0 0
      %357 = vmatprep.subr.bf16.mxu0 0
      %358 = vmatpush2.bf16.msra.mxu0 0
      %359 = vmatprep.subr.bf16.mxu0 0
      %360 = vmatpush2.bf16.msra.mxu0 0
      %361 = vmatprep.subr.bf16.mxu0 0
      %362 = vmatpush2.bf16.msra.mxu0 0
      %363 = vmatprep.mubr.bf16.mxu0 0
      %364 = vmatmul.mubr.bf16.gmra.mxu0 %v262
      %v365 = vpop.f32.mrf.mxu0
      %v366 = vadd.f32 0.0, %v365
      %v367 = vpop.f32.mrf.mxu0
      %v368 = vpop.f32.mrf.mxu0
      %v369 = vadd.f32 0.0, %v368
      %v370 = vpop.f32.mrf.mxu0
      %371 = vmatprep.mubr.bf16.mxu0 0
      %372 = vmatmul.mubr.bf16.gmra.mxu0 %v263
      %v373 = vpop.f32.mrf.mxu0
      %v374 = vadd.f32 0.0, %v373
      %v375 = vpop.f32.mrf.mxu0
      %v376 = vpop.f32.mrf.mxu0
      %v377 = vadd.f32 0.0, %v376
      %v378 = vpop.f32.mrf.mxu0
      %379 = vmatprep.mubr.bf16.mxu0 0
      %380 = vmatmul.mubr.bf16.gmra.mxu0 %v264
      %v381 = vpop.f32.mrf.mxu0
      %v382 = vadd.f32 0.0, %v381
      %v383 = vpop.f32.mrf.mxu0
      %v384 = vpop.f32.mrf.mxu0
      %v385 = vadd.f32 0.0, %v384
      %v386 = vpop.f32.mrf.mxu0
      %387 = vmatprep.mubr.bf16.mxu0 0
      %388 = vmatmul.mubr.bf16.gmra.mxu0 %v265
      %v389 = vpop.f32.mrf.mxu0
      %v390 = vadd.f32 0.0, %v389
      %v391 = vpop.f32.mrf.mxu0
      %v392 = vpop.f32.mrf.mxu0
      %v393 = vadd.f32 0.0, %v392
      %v394 = vpop.f32.mrf.mxu0
      %395 = vdwg.mxu0
      %v412 = vunpack.c.l.b16 %v197
      %v413 = vunpack.c.l.b16 %v198
      %v414 = vunpack.c.l.b16 %v199
      %v415 = vunpack.c.l.b16 %v200
      %v416 = vunpack.c.l.b16 %v201
      %v417 = vunpack.c.l.b16 %v202
      %v418 = vunpack.c.l.b16 %v203
      %v419 = vunpack.c.l.b16 %v204
      %v420 = vunpack.c.l.b16 %v205
      %v421 = vunpack.c.l.b16 %v206
      %v422 = vunpack.c.l.b16 %v207
      %v423 = vunpack.c.l.b16 %v208
      %v424 = vunpack.c.l.b16 %v209
      %v425 = vunpack.c.l.b16 %v210
      %v426 = vunpack.c.l.b16 %v211
      %v427 = vunpack.c.l.b16 %v212
      %v428 = vpack.c.b16 %v413, %v412
      %v429 = vpack.c.b16 %v415, %v414
      %v430 = vpack.c.b16 %v417, %v416
      %v431 = vpack.c.b16 %v419, %v418
      %v432 = vpack.c.b16 %v421, %v420
      %v433 = vpack.c.b16 %v423, %v422
      %v434 = vpack.c.b16 %v425, %v424
      %v435 = vpack.c.b16 %v427, %v426
      %444 = vmatprep.subr.bf16.mxu0 0
      %445 = vmatpush1.bf16.msra.mxu0 %v435
      %446 = vmatprep.subr.bf16.mxu0 0
      %447 = vmatpush1.bf16.msra.mxu0 %v434
      %448 = vmatprep.subr.bf16.mxu0 0
      %449 = vmatpush1.bf16.msra.mxu0 %v433
      %450 = vmatprep.subr.bf16.mxu0 0
      %451 = vmatpush1.bf16.msra.mxu0 %v432
      %452 = vmatprep.subr.bf16.mxu0 0
      %453 = vmatpush1.bf16.msra.mxu0 %v431
      %454 = vmatprep.subr.bf16.mxu0 0
      %455 = vmatpush1.bf16.msra.mxu0 %v430
      %456 = vmatprep.subr.bf16.mxu0 0
      %457 = vmatpush1.bf16.msra.mxu0 %v429
      %458 = vmatprep.subr.bf16.mxu0 0
      %459 = vmatpush1.bf16.msra.mxu0 %v428
      %460 = vmatprep.subr.bf16.mxu0 0
      %461 = vmatpush2.bf16.msra.mxu0 0
      %462 = vmatprep.subr.bf16.mxu0 0
      %463 = vmatpush2.bf16.msra.mxu0 0
      %464 = vmatprep.subr.bf16.mxu0 0
      %465 = vmatpush2.bf16.msra.mxu0 0
      %466 = vmatprep.subr.bf16.mxu0 0
      %467 = vmatpush2.bf16.msra.mxu0 0
      %468 = vmatprep.subr.bf16.mxu0 0
      %469 = vmatpush2.bf16.msra.mxu0 0
      %470 = vmatprep.subr.bf16.mxu0 0
      %471 = vmatpush2.bf16.msra.mxu0 0
      %472 = vmatprep.subr.bf16.mxu0 0
      %473 = vmatpush2.bf16.msra.mxu0 0
      %474 = vmatprep.subr.bf16.mxu0 0
      %475 = vmatpush2.bf16.msra.mxu0 0
      %476 = vmatprep.mubr.bf16.mxu0 0
      %477 = vmatmul.mubr.bf16.gmra.mxu0 %v193
      %v478 = vpop.f32.mrf.mxu0
      %v479 = vadd.f32 %v366, %v478
      %v480 = vpop.f32.mrf.mxu0
      %v481 = vpop.f32.mrf.mxu0
      %v482 = vadd.f32 %v369, %v481
      %v483 = vpop.f32.mrf.mxu0
      %484 = vmatprep.mubr.bf16.mxu0 0
      %485 = vmatmul.mubr.bf16.gmra.mxu0 %v194
      %v486 = vpop.f32.mrf.mxu0
      %v487 = vadd.f32 %v374, %v486
      %v488 = vpop.f32.mrf.mxu0
      %v489 = vpop.f32.mrf.mxu0
      %v490 = vadd.f32 %v377, %v489
      %v491 = vpop.f32.mrf.mxu0
      %492 = vmatprep.mubr.bf16.mxu0 0
      %493 = vmatmul.mubr.bf16.gmra.mxu0 %v195
      %v494 = vpop.f32.mrf.mxu0
      %v495 = vadd.f32 %v382, %v494
      %v496 = vpop.f32.mrf.mxu0
      %v497 = vpop.f32.mrf.mxu0
      %v498 = vadd.f32 %v385, %v497
      %v499 = vpop.f32.mrf.mxu0
      %500 = vmatprep.mubr.bf16.mxu0 0
      %501 = vmatmul.mubr.bf16.gmra.mxu0 %v196
      %v502 = vpop.f32.mrf.mxu0
      %v503 = vadd.f32 %v390, %v502
      %v504 = vpop.f32.mrf.mxu0
      %v505 = vpop.f32.mrf.mxu0
      %v506 = vadd.f32 %v393, %v505
      %v507 = vpop.f32.mrf.mxu0
      %508 = vdwg.mxu0
      %vm509 = vcmask 1045504
      %v510 = vrot.slane %v173, 2
      %v511 = vrot.slane %v174, 2
      %v512 = vsel %vm509, %v510, %v511
      %v513 = vrot.slane %v175, 2
      %v514 = vrot.slane %v176, 2
      %v515 = vsel %vm509, %v513, %v514
      %v516 = vrot.slane %v177, 2
      %v517 = vrot.slane %v178, 2
      %v518 = vsel %vm509, %v516, %v517
      %v519 = vrot.slane %v179, 2
      %v520 = vrot.slane %v180, 2
      %v521 = vsel %vm509, %v519, %v520
      %v522 = vrot.slane %v181, 2
      %v523 = vrot.slane %v182, 2
      %v524 = vsel %vm509, %v522, %v523
      %v525 = vrot.slane %v183, 2
      %v526 = vrot.slane %v184, 2
      %v527 = vsel %vm509, %v525, %v526
      %v528 = vrot.slane %v185, 2
      %v529 = vrot.slane %v186, 2
      %v530 = vsel %vm509, %v528, %v529
      %v531 = vrot.slane %v187, 2
      %v532 = vrot.slane %v188, 2
      %v533 = vsel %vm509, %v531, %v532
      %v542 = vpack.c.bf16 %v515, %v512
      %v543 = vpack.c.bf16 %v521, %v518
      %v544 = vpack.c.bf16 %v527, %v524
      %v545 = vpack.c.bf16 %v533, %v530
      %s546 = scalar_lea.vmem %s1, 128
      %v547 = vld [vmem:[%s546] sm:$0xf]
      %v548 = vld [vmem:[%s546 + $0x4] sm:$0xf]
      %v549 = vld [vmem:[%s546 + $0x8] sm:$0xf]
      %v550 = vld [vmem:[%s546 + $0xc] sm:$0xf]
      %v551 = vld [vmem:[%s546 + $0x10] sm:$0xf]
      %v552 = vld [vmem:[%s546 + $0x14] sm:$0xf]
      %v553 = vld [vmem:[%s546 + $0x18] sm:$0xf]
      %v554 = vld [vmem:[%s546 + $0x1c] sm:$0xf]
      %v555 = vld [vmem:[%s546 + $0x20] sm:$0xf]
      %v556 = vld [vmem:[%s546 + $0x24] sm:$0xf]
      %v557 = vld [vmem:[%s546 + $0x28] sm:$0xf]
      %v558 = vld [vmem:[%s546 + $0x2c] sm:$0xf]
      %v559 = vld [vmem:[%s546 + $0x30] sm:$0xf]
      %v560 = vld [vmem:[%s546 + $0x34] sm:$0xf]
      %v561 = vld [vmem:[%s546 + $0x38] sm:$0xf]
      %v562 = vld [vmem:[%s546 + $0x3c] sm:$0xf]
      %v579 = vunpack.c.l.b16 %v547
      %v580 = vunpack.c.l.b16 %v548
      %v581 = vunpack.c.l.b16 %v549
      %v582 = vunpack.c.l.b16 %v550
      %v583 = vunpack.c.l.b16 %v551
      %v584 = vunpack.c.l.b16 %v552
      %v585 = vunpack.c.l.b16 %v553
      %v586 = vunpack.c.l.b16 %v554
      %v587 = vunpack.c.l.b16 %v555
      %v588 = vunpack.c.l.b16 %v556
      %v589 = vunpack.c.l.b16 %v557
      %v590 = vunpack.c.l.b16 %v558
      %v591 = vunpack.c.l.b16 %v559
      %v592 = vunpack.c.l.b16 %v560
      %v593 = vunpack.c.l.b16 %v561
      %v594 = vunpack.c.l.b16 %v562
      %v595 = vpack.c.b16 %v580, %v579
      %v596 = vpack.c.b16 %v582, %v581
      %v597 = vpack.c.b16 %v584, %v583
      %v598 = vpack.c.b16 %v586, %v585
      %v599 = vpack.c.b16 %v588, %v587
      %v600 = vpack.c.b16 %v590, %v589
      %v601 = vpack.c.b16 %v592, %v591
      %v602 = vpack.c.b16 %v594, %v593
      %611 = vmatprep.subr.bf16.mxu0 0
      %612 = vmatpush1.bf16.msra.mxu0 %v602
      %613 = vmatprep.subr.bf16.mxu0 0
      %614 = vmatpush1.bf16.msra.mxu0 %v601
      %615 = vmatprep.subr.bf16.mxu0 0
      %616 = vmatpush1.bf16.msra.mxu0 %v600
      %617 = vmatprep.subr.bf16.mxu0 0
      %618 = vmatpush1.bf16.msra.mxu0 %v599
      %619 = vmatprep.subr.bf16.mxu0 0
      %620 = vmatpush1.bf16.msra.mxu0 %v598
      %621 = vmatprep.subr.bf16.mxu0 0
      %622 = vmatpush1.bf16.msra.mxu0 %v597
      %623 = vmatprep.subr.bf16.mxu0 0
      %624 = vmatpush1.bf16.msra.mxu0 %v596
      %625 = vmatprep.subr.bf16.mxu0 0
      %626 = vmatpush1.bf16.msra.mxu0 %v595
      %627 = vmatprep.subr.bf16.mxu0 0
      %628 = vmatpush2.bf16.msra.mxu0 0
      %629 = vmatprep.subr.bf16.mxu0 0
      %630 = vmatpush2.bf16.msra.mxu0 0
      %631 = vmatprep.subr.bf16.mxu0 0
      %632 = vmatpush2.bf16.msra.mxu0 0
      %633 = vmatprep.subr.bf16.mxu0 0
      %634 = vmatpush2.bf16.msra.mxu0 0
      %635 = vmatprep.subr.bf16.mxu0 0
      %636 = vmatpush2.bf16.msra.mxu0 0
      %637 = vmatprep.subr.bf16.mxu0 0
      %638 = vmatpush2.bf16.msra.mxu0 0
      %639 = vmatprep.subr.bf16.mxu0 0
      %640 = vmatpush2.bf16.msra.mxu0 0
      %641 = vmatprep.subr.bf16.mxu0 0
      %642 = vmatpush2.bf16.msra.mxu0 0
      %643 = vmatprep.mubr.bf16.mxu0 0
      %644 = vmatmul.mubr.bf16.gmra.mxu0 %v542
      %v645 = vpop.f32.mrf.mxu0
      %v646 = vadd.f32 0.0, %v645
      %v647 = vpop.f32.mrf.mxu0
      %v648 = vpop.f32.mrf.mxu0
      %v649 = vadd.f32 0.0, %v648
      %v650 = vpop.f32.mrf.mxu0
      %651 = vmatprep.mubr.bf16.mxu0 0
      %652 = vmatmul.mubr.bf16.gmra.mxu0 %v543
      %v653 = vpop.f32.mrf.mxu0
      %v654 = vadd.f32 0.0, %v653
      %v655 = vpop.f32.mrf.mxu0
      %v656 = vpop.f32.mrf.mxu0
      %v657 = vadd.f32 0.0, %v656
      %v658 = vpop.f32.mrf.mxu0
      %659 = vmatprep.mubr.bf16.mxu0 0
      %660 = vmatmul.mubr.bf16.gmra.mxu0 %v544
      %v661 = vpop.f32.mrf.mxu0
      %v662 = vadd.f32 0.0, %v661
      %v663 = vpop.f32.mrf.mxu0
      %v664 = vpop.f32.mrf.mxu0
      %v665 = vadd.f32 0.0, %v664
      %v666 = vpop.f32.mrf.mxu0
      %667 = vmatprep.mubr.bf16.mxu0 0
      %668 = vmatmul.mubr.bf16.gmra.mxu0 %v545
      %v669 = vpop.f32.mrf.mxu0
      %v670 = vadd.f32 0.0, %v669
      %v671 = vpop.f32.mrf.mxu0
      %v672 = vpop.f32.mrf.mxu0
      %v673 = vadd.f32 0.0, %v672
      %v674 = vpop.f32.mrf.mxu0
      %675 = vdwg.mxu0
      %v676 = vadd.f32 %v479, %v646
      %v677 = vadd.f32 %v482, %v649
      %v678 = vadd.f32 %v487, %v654
      %v679 = vadd.f32 %v490, %v657
      %v680 = vadd.f32 %v495, %v662
      %v681 = vadd.f32 %v498, %v665
      %v682 = vadd.f32 %v503, %v670
      %v683 = vadd.f32 %v506, %v673
      %v684 = vpack.c.bf16 %v177, %v175
      %v685 = vpack.c.bf16 %v181, %v179
      %v686 = vpack.c.bf16 %v185, %v183
      %v687 = vpack.c.bf16 %v189, %v187
      %s688 = scalar_lea.vmem %s1, 192
      %v689 = vld [vmem:[%s688] sm:$0xf]
      %v690 = vld [vmem:[%s688 + $0x4] sm:$0xf]
      %v691 = vld [vmem:[%s688 + $0x8] sm:$0xf]
      %v692 = vld [vmem:[%s688 + $0xc] sm:$0xf]
      %v693 = vld [vmem:[%s688 + $0x10] sm:$0xf]
      %v694 = vld [vmem:[%s688 + $0x14] sm:$0xf]
      %v695 = vld [vmem:[%s688 + $0x18] sm:$0xf]
      %v696 = vld [vmem:[%s688 + $0x1c] sm:$0xf]
      %v697 = vld [vmem:[%s688 + $0x20] sm:$0xf]
      %v698 = vld [vmem:[%s688 + $0x24] sm:$0xf]
      %v699 = vld [vmem:[%s688 + $0x28] sm:$0xf]
      %v700 = vld [vmem:[%s688 + $0x2c] sm:$0xf]
      %v701 = vld [vmem:[%s688 + $0x30] sm:$0xf]
      %v702 = vld [vmem:[%s688 + $0x34] sm:$0xf]
      %v703 = vld [vmem:[%s688 + $0x38] sm:$0xf]
      %v704 = vld [vmem:[%s688 + $0x3c] sm:$0xf]
      %v721 = vunpack.c.l.b16 %v689
      %v722 = vunpack.c.l.b16 %v690
      %v723 = vunpack.c.l.b16 %v691
      %v724 = vunpack.c.l.b16 %v692
      %v725 = vunpack.c.l.b16 %v693
      %v726 = vunpack.c.l.b16 %v694
      %v727 = vunpack.c.l.b16 %v695
      %v728 = vunpack.c.l.b16 %v696
      %v729 = vunpack.c.l.b16 %v697
      %v730 = vunpack.c.l.b16 %v698
      %v731 = vunpack.c.l.b16 %v699
      %v732 = vunpack.c.l.b16 %v700
      %v733 = vunpack.c.l.b16 %v701
      %v734 = vunpack.c.l.b16 %v702
      %v735 = vunpack.c.l.b16 %v703
      %v736 = vunpack.c.l.b16 %v704
      %v737 = vpack.c.b16 %v722, %v721
      %v738 = vpack.c.b16 %v724, %v723
      %v739 = vpack.c.b16 %v726, %v725
      %v740 = vpack.c.b16 %v728, %v727
      %v741 = vpack.c.b16 %v730, %v729
      %v742 = vpack.c.b16 %v732, %v731
      %v743 = vpack.c.b16 %v734, %v733
      %v744 = vpack.c.b16 %v736, %v735
      %753 = vmatprep.subr.bf16.mxu0 0
      %754 = vmatpush1.bf16.msra.mxu0 %v744
      %755 = vmatprep.subr.bf16.mxu0 0
      %756 = vmatpush1.bf16.msra.mxu0 %v743
      %757 = vmatprep.subr.bf16.mxu0 0
      %758 = vmatpush1.bf16.msra.mxu0 %v742
      %759 = vmatprep.subr.bf16.mxu0 0
      %760 = vmatpush1.bf16.msra.mxu0 %v741
      %761 = vmatprep.subr.bf16.mxu0 0
      %762 = vmatpush1.bf16.msra.mxu0 %v740
      %763 = vmatprep.subr.bf16.mxu0 0
      %764 = vmatpush1.bf16.msra.mxu0 %v739
      %765 = vmatprep.subr.bf16.mxu0 0
      %766 = vmatpush1.bf16.msra.mxu0 %v738
      %767 = vmatprep.subr.bf16.mxu0 0
      %768 = vmatpush1.bf16.msra.mxu0 %v737
      %769 = vmatprep.subr.bf16.mxu0 0
      %770 = vmatpush2.bf16.msra.mxu0 0
      %771 = vmatprep.subr.bf16.mxu0 0
      %772 = vmatpush2.bf16.msra.mxu0 0
      %773 = vmatprep.subr.bf16.mxu0 0
      %774 = vmatpush2.bf16.msra.mxu0 0
      %775 = vmatprep.subr.bf16.mxu0 0
      %776 = vmatpush2.bf16.msra.mxu0 0
      %777 = vmatprep.subr.bf16.mxu0 0
      %778 = vmatpush2.bf16.msra.mxu0 0
      %779 = vmatprep.subr.bf16.mxu0 0
      %780 = vmatpush2.bf16.msra.mxu0 0
      %781 = vmatprep.subr.bf16.mxu0 0
      %782 = vmatpush2.bf16.msra.mxu0 0
      %783 = vmatprep.subr.bf16.mxu0 0
      %784 = vmatpush2.bf16.msra.mxu0 0
      %785 = vmatprep.mubr.bf16.mxu0 0
      %786 = vmatmul.mubr.bf16.gmra.mxu0 %v684
      %v787 = vpop.f32.mrf.mxu0
      %v788 = vadd.f32 0.0, %v787
      %v789 = vpop.f32.mrf.mxu0
      %v790 = vpop.f32.mrf.mxu0
      %v791 = vadd.f32 0.0, %v790
      %v792 = vpop.f32.mrf.mxu0
      %793 = vmatprep.mubr.bf16.mxu0 0
      %794 = vmatmul.mubr.bf16.gmra.mxu0 %v685
      %v795 = vpop.f32.mrf.mxu0
      %v796 = vadd.f32 0.0, %v795
      %v797 = vpop.f32.mrf.mxu0
      %v798 = vpop.f32.mrf.mxu0
      %v799 = vadd.f32 0.0, %v798
      %v800 = vpop.f32.mrf.mxu0
      %801 = vmatprep.mubr.bf16.mxu0 0
      %802 = vmatmul.mubr.bf16.gmra.mxu0 %v686
      %v803 = vpop.f32.mrf.mxu0
      %v804 = vadd.f32 0.0, %v803
      %v805 = vpop.f32.mrf.mxu0
      %v806 = vpop.f32.mrf.mxu0
      %v807 = vadd.f32 0.0, %v806
      %v808 = vpop.f32.mrf.mxu0
      %809 = vmatprep.mubr.bf16.mxu0 0
      %810 = vmatmul.mubr.bf16.gmra.mxu0 %v687
      %v811 = vpop.f32.mrf.mxu0
      %v812 = vadd.f32 0.0, %v811
      %v813 = vpop.f32.mrf.mxu0
      %v814 = vpop.f32.mrf.mxu0
      %v815 = vadd.f32 0.0, %v814
      %v816 = vpop.f32.mrf.mxu0
      %817 = vdwg.mxu0
      %v818 = vadd.f32 %v676, %v788
      %v819 = vadd.f32 %v677, %v791
      %v820 = vadd.f32 %v678, %v796
      %v821 = vadd.f32 %v679, %v799
      %v822 = vadd.f32 %v680, %v804
      %v823 = vadd.f32 %v681, %v807
      %v824 = vadd.f32 %v682, %v812
      %v825 = vadd.f32 %v683, %v815
      %v828 = vrot.slane %v189, 1
      %v829 = vrot.slane %v190, 1
      %v830 = vsel %vm229, %v828, %v829
      %v832 = vpack.c.bf16 %v238, %v235
      %v833 = vpack.c.bf16 %v244, %v241
      %v834 = vpack.c.bf16 %v250, %v247
      %v835 = vpack.c.bf16 %v830, %v253
      %s836 = scalar_lea.vmem %s1, 256
      %v837 = vld [vmem:[%s836] sm:$0xf]
      %v838 = vld [vmem:[%s836 + $0x4] sm:$0xf]
      %v839 = vld [vmem:[%s836 + $0x8] sm:$0xf]
      %v840 = vld [vmem:[%s836 + $0xc] sm:$0xf]
      %v841 = vld [vmem:[%s836 + $0x10] sm:$0xf]
      %v842 = vld [vmem:[%s836 + $0x14] sm:$0xf]
      %v843 = vld [vmem:[%s836 + $0x18] sm:$0xf]
      %v844 = vld [vmem:[%s836 + $0x1c] sm:$0xf]
      %v845 = vld [vmem:[%s836 + $0x20] sm:$0xf]
      %v846 = vld [vmem:[%s836 + $0x24] sm:$0xf]
      %v847 = vld [vmem:[%s836 + $0x28] sm:$0xf]
      %v848 = vld [vmem:[%s836 + $0x2c] sm:$0xf]
      %v849 = vld [vmem:[%s836 + $0x30] sm:$0xf]
      %v850 = vld [vmem:[%s836 + $0x34] sm:$0xf]
      %v851 = vld [vmem:[%s836 + $0x38] sm:$0xf]
      %v852 = vld [vmem:[%s836 + $0x3c] sm:$0xf]
      %v869 = vunpack.c.l.b16 %v837
      %v870 = vunpack.c.l.b16 %v838
      %v871 = vunpack.c.l.b16 %v839
      %v872 = vunpack.c.l.b16 %v840
      %v873 = vunpack.c.l.b16 %v841
      %v874 = vunpack.c.l.b16 %v842
      %v875 = vunpack.c.l.b16 %v843
      %v876 = vunpack.c.l.b16 %v844
      %v877 = vunpack.c.l.b16 %v845
      %v878 = vunpack.c.l.b16 %v846
      %v879 = vunpack.c.l.b16 %v847
      %v880 = vunpack.c.l.b16 %v848
      %v881 = vunpack.c.l.b16 %v849
      %v882 = vunpack.c.l.b16 %v850
      %v883 = vunpack.c.l.b16 %v851
      %v884 = vunpack.c.l.b16 %v852
      %v885 = vpack.c.b16 %v870, %v869
      %v886 = vpack.c.b16 %v872, %v871
      %v887 = vpack.c.b16 %v874, %v873
      %v888 = vpack.c.b16 %v876, %v875
      %v889 = vpack.c.b16 %v878, %v877
      %v890 = vpack.c.b16 %v880, %v879
      %v891 = vpack.c.b16 %v882, %v881
      %v892 = vpack.c.b16 %v884, %v883
      %901 = vmatprep.subr.bf16.mxu0 0
      %902 = vmatpush1.bf16.msra.mxu0 %v892
      %903 = vmatprep.subr.bf16.mxu0 0
      %904 = vmatpush1.bf16.msra.mxu0 %v891
      %905 = vmatprep.subr.bf16.mxu0 0
      %906 = vmatpush1.bf16.msra.mxu0 %v890
      %907 = vmatprep.subr.bf16.mxu0 0
      %908 = vmatpush1.bf16.msra.mxu0 %v889
      %909 = vmatprep.subr.bf16.mxu0 0
      %910 = vmatpush1.bf16.msra.mxu0 %v888
      %911 = vmatprep.subr.bf16.mxu0 0
      %912 = vmatpush1.bf16.msra.mxu0 %v887
      %913 = vmatprep.subr.bf16.mxu0 0
      %914 = vmatpush1.bf16.msra.mxu0 %v886
      %915 = vmatprep.subr.bf16.mxu0 0
      %916 = vmatpush1.bf16.msra.mxu0 %v885
      %917 = vmatprep.subr.bf16.mxu0 0
      %918 = vmatpush2.bf16.msra.mxu0 0
      %919 = vmatprep.subr.bf16.mxu0 0
      %920 = vmatpush2.bf16.msra.mxu0 0
      %921 = vmatprep.subr.bf16.mxu0 0
      %922 = vmatpush2.bf16.msra.mxu0 0
      %923 = vmatprep.subr.bf16.mxu0 0
      %924 = vmatpush2.bf16.msra.mxu0 0
      %925 = vmatprep.subr.bf16.mxu0 0
      %926 = vmatpush2.bf16.msra.mxu0 0
      %927 = vmatprep.subr.bf16.mxu0 0
      %928 = vmatpush2.bf16.msra.mxu0 0
      %929 = vmatprep.subr.bf16.mxu0 0
      %930 = vmatpush2.bf16.msra.mxu0 0
      %931 = vmatprep.subr.bf16.mxu0 0
      %932 = vmatpush2.bf16.msra.mxu0 0
      %933 = vmatprep.mubr.bf16.mxu0 0
      %934 = vmatmul.mubr.bf16.gmra.mxu0 %v832
      %v935 = vpop.f32.mrf.mxu0
      %v936 = vadd.f32 0.0, %v935
      %v937 = vpop.f32.mrf.mxu0
      %v938 = vpop.f32.mrf.mxu0
      %v939 = vadd.f32 0.0, %v938
      %v940 = vpop.f32.mrf.mxu0
      %941 = vmatprep.mubr.bf16.mxu0 0
      %942 = vmatmul.mubr.bf16.gmra.mxu0 %v833
      %v943 = vpop.f32.mrf.mxu0
      %v944 = vadd.f32 0.0, %v943
      %v945 = vpop.f32.mrf.mxu0
      %v946 = vpop.f32.mrf.mxu0
      %v947 = vadd.f32 0.0, %v946
      %v948 = vpop.f32.mrf.mxu0
      %949 = vmatprep.mubr.bf16.mxu0 0
      %950 = vmatmul.mubr.bf16.gmra.mxu0 %v834
      %v951 = vpop.f32.mrf.mxu0
      %v952 = vadd.f32 0.0, %v951
      %v953 = vpop.f32.mrf.mxu0
      %v954 = vpop.f32.mrf.mxu0
      %v955 = vadd.f32 0.0, %v954
      %v956 = vpop.f32.mrf.mxu0
      %957 = vmatprep.mubr.bf16.mxu0 0
      %958 = vmatmul.mubr.bf16.gmra.mxu0 %v835
      %v959 = vpop.f32.mrf.mxu0
      %v960 = vadd.f32 0.0, %v959
      %v961 = vpop.f32.mrf.mxu0
      %v962 = vpop.f32.mrf.mxu0
      %v963 = vadd.f32 0.0, %v962
      %v964 = vpop.f32.mrf.mxu0
      %965 = vdwg.mxu0
      %v966 = vadd.f32 %v818, %v936
      %v967 = vadd.f32 %v819, %v939
      %v968 = vadd.f32 %v820, %v944
      %v969 = vadd.f32 %v821, %v947
      %v970 = vadd.f32 %v822, %v952
      %v971 = vadd.f32 %v823, %v955
      %v972 = vadd.f32 %v824, %v960
      %v973 = vadd.f32 %v825, %v963
      %v974 = vrot.slane %v189, 2
      %v975 = vrot.slane %v190, 2
      %v976 = vsel %vm509, %v974, %v975
      %v978 = vpack.c.bf16 %v518, %v515
      %v979 = vpack.c.bf16 %v524, %v521
      %v980 = vpack.c.bf16 %v530, %v527
      %v981 = vpack.c.bf16 %v976, %v533
      %s982 = scalar_lea.vmem %s1, 320
      %v983 = vld [vmem:[%s982] sm:$0xf]
      %v984 = vld [vmem:[%s982 + $0x4] sm:$0xf]
      %v985 = vld [vmem:[%s982 + $0x8] sm:$0xf]
      %v986 = vld [vmem:[%s982 + $0xc] sm:$0xf]
      %v987 = vld [vmem:[%s982 + $0x10] sm:$0xf]
      %v988 = vld [vmem:[%s982 + $0x14] sm:$0xf]
      %v989 = vld [vmem:[%s982 + $0x18] sm:$0xf]
      %v990 = vld [vmem:[%s982 + $0x1c] sm:$0xf]
      %v991 = vld [vmem:[%s982 + $0x20] sm:$0xf]
      %v992 = vld [vmem:[%s982 + $0x24] sm:$0xf]
      %v993 = vld [vmem:[%s982 + $0x28] sm:$0xf]
      %v994 = vld [vmem:[%s982 + $0x2c] sm:$0xf]
      %v995 = vld [vmem:[%s982 + $0x30] sm:$0xf]
      %v996 = vld [vmem:[%s982 + $0x34] sm:$0xf]
      %v997 = vld [vmem:[%s982 + $0x38] sm:$0xf]
      %v998 = vld [vmem:[%s982 + $0x3c] sm:$0xf]
      %v1015 = vunpack.c.l.b16 %v983
      %v1016 = vunpack.c.l.b16 %v984
      %v1017 = vunpack.c.l.b16 %v985
      %v1018 = vunpack.c.l.b16 %v986
      %v1019 = vunpack.c.l.b16 %v987
      %v1020 = vunpack.c.l.b16 %v988
      %v1021 = vunpack.c.l.b16 %v989
      %v1022 = vunpack.c.l.b16 %v990
      %v1023 = vunpack.c.l.b16 %v991
      %v1024 = vunpack.c.l.b16 %v992
      %v1025 = vunpack.c.l.b16 %v993
      %v1026 = vunpack.c.l.b16 %v994
      %v1027 = vunpack.c.l.b16 %v995
      %v1028 = vunpack.c.l.b16 %v996
      %v1029 = vunpack.c.l.b16 %v997
      %v1030 = vunpack.c.l.b16 %v998
      %v1031 = vpack.c.b16 %v1016, %v1015
      %v1032 = vpack.c.b16 %v1018, %v1017
      %v1033 = vpack.c.b16 %v1020, %v1019
      %v1034 = vpack.c.b16 %v1022, %v1021
      %v1035 = vpack.c.b16 %v1024, %v1023
      %v1036 = vpack.c.b16 %v1026, %v1025
      %v1037 = vpack.c.b16 %v1028, %v1027
      %v1038 = vpack.c.b16 %v1030, %v1029
      %1047 = vmatprep.subr.bf16.mxu0 0
      %1048 = vmatpush1.bf16.msra.mxu0 %v1038
      %1049 = vmatprep.subr.bf16.mxu0 0
      %1050 = vmatpush1.bf16.msra.mxu0 %v1037
      %1051 = vmatprep.subr.bf16.mxu0 0
      %1052 = vmatpush1.bf16.msra.mxu0 %v1036
      %1053 = vmatprep.subr.bf16.mxu0 0
      %1054 = vmatpush1.bf16.msra.mxu0 %v1035
      %1055 = vmatprep.subr.bf16.mxu0 0
      %1056 = vmatpush1.bf16.msra.mxu0 %v1034
      %1057 = vmatprep.subr.bf16.mxu0 0
      %1058 = vmatpush1.bf16.msra.mxu0 %v1033
      %1059 = vmatprep.subr.bf16.mxu0 0
      %1060 = vmatpush1.bf16.msra.mxu0 %v1032
      %1061 = vmatprep.subr.bf16.mxu0 0
      %1062 = vmatpush1.bf16.msra.mxu0 %v1031
      %1063 = vmatprep.subr.bf16.mxu0 0
      %1064 = vmatpush2.bf16.msra.mxu0 0
      %1065 = vmatprep.subr.bf16.mxu0 0
      %1066 = vmatpush2.bf16.msra.mxu0 0
      %1067 = vmatprep.subr.bf16.mxu0 0
      %1068 = vmatpush2.bf16.msra.mxu0 0
      %1069 = vmatprep.subr.bf16.mxu0 0
      %1070 = vmatpush2.bf16.msra.mxu0 0
      %1071 = vmatprep.subr.bf16.mxu0 0
      %1072 = vmatpush2.bf16.msra.mxu0 0
      %1073 = vmatprep.subr.bf16.mxu0 0
      %1074 = vmatpush2.bf16.msra.mxu0 0
      %1075 = vmatprep.subr.bf16.mxu0 0
      %1076 = vmatpush2.bf16.msra.mxu0 0
      %1077 = vmatprep.subr.bf16.mxu0 0
      %1078 = vmatpush2.bf16.msra.mxu0 0
      %1079 = vmatprep.mubr.bf16.mxu0 0
      %1080 = vmatmul.mubr.bf16.gmra.mxu0 %v978
      %v1081 = vpop.f32.mrf.mxu0
      %v1082 = vadd.f32 0.0, %v1081
      %v1083 = vpop.f32.mrf.mxu0
      %v1084 = vpop.f32.mrf.mxu0
      %v1085 = vadd.f32 0.0, %v1084
      %v1086 = vpop.f32.mrf.mxu0
      %1087 = vmatprep.mubr.bf16.mxu0 0
      %1088 = vmatmul.mubr.bf16.gmra.mxu0 %v979
      %v1089 = vpop.f32.mrf.mxu0
      %v1090 = vadd.f32 0.0, %v1089
      %v1091 = vpop.f32.mrf.mxu0
      %v1092 = vpop.f32.mrf.mxu0
      %v1093 = vadd.f32 0.0, %v1092
      %v1094 = vpop.f32.mrf.mxu0
      %1095 = vmatprep.mubr.bf16.mxu0 0
      %1096 = vmatmul.mubr.bf16.gmra.mxu0 %v980
      %v1097 = vpop.f32.mrf.mxu0
      %v1098 = vadd.f32 0.0, %v1097
      %v1099 = vpop.f32.mrf.mxu0
      %v1100 = vpop.f32.mrf.mxu0
      %v1101 = vadd.f32 0.0, %v1100
      %v1102 = vpop.f32.mrf.mxu0
      %1103 = vmatprep.mubr.bf16.mxu0 0
      %1104 = vmatmul.mubr.bf16.gmra.mxu0 %v981
      %v1105 = vpop.f32.mrf.mxu0
      %v1106 = vadd.f32 0.0, %v1105
      %v1107 = vpop.f32.mrf.mxu0
      %v1108 = vpop.f32.mrf.mxu0
      %v1109 = vadd.f32 0.0, %v1108
      %v1110 = vpop.f32.mrf.mxu0
      %1111 = vdwg.mxu0
      %v1112 = vadd.f32 %v966, %v1082
      %v1113 = vadd.f32 %v967, %v1085
      %v1114 = vadd.f32 %v968, %v1090
      %v1115 = vadd.f32 %v969, %v1093
      %v1116 = vadd.f32 %v970, %v1098
      %v1117 = vadd.f32 %v971, %v1101
      %v1118 = vadd.f32 %v972, %v1106
      %v1119 = vadd.f32 %v973, %v1109
      %v1120 = vpack.c.bf16 %v191, %v189
      %s1121 = scalar_lea.vmem %s1, 384
      %v1122 = vld [vmem:[%s1121] sm:$0xf]
      %v1123 = vld [vmem:[%s1121 + $0x4] sm:$0xf]
      %v1124 = vld [vmem:[%s1121 + $0x8] sm:$0xf]
      %v1125 = vld [vmem:[%s1121 + $0xc] sm:$0xf]
      %v1126 = vld [vmem:[%s1121 + $0x10] sm:$0xf]
      %v1127 = vld [vmem:[%s1121 + $0x14] sm:$0xf]
      %v1128 = vld [vmem:[%s1121 + $0x18] sm:$0xf]
      %v1129 = vld [vmem:[%s1121 + $0x1c] sm:$0xf]
      %v1130 = vld [vmem:[%s1121 + $0x20] sm:$0xf]
      %v1131 = vld [vmem:[%s1121 + $0x24] sm:$0xf]
      %v1132 = vld [vmem:[%s1121 + $0x28] sm:$0xf]
      %v1133 = vld [vmem:[%s1121 + $0x2c] sm:$0xf]
      %v1134 = vld [vmem:[%s1121 + $0x30] sm:$0xf]
      %v1135 = vld [vmem:[%s1121 + $0x34] sm:$0xf]
      %v1136 = vld [vmem:[%s1121 + $0x38] sm:$0xf]
      %v1137 = vld [vmem:[%s1121 + $0x3c] sm:$0xf]
      %v1154 = vunpack.c.l.b16 %v1122
      %v1155 = vunpack.c.l.b16 %v1123
      %v1156 = vunpack.c.l.b16 %v1124
      %v1157 = vunpack.c.l.b16 %v1125
      %v1158 = vunpack.c.l.b16 %v1126
      %v1159 = vunpack.c.l.b16 %v1127
      %v1160 = vunpack.c.l.b16 %v1128
      %v1161 = vunpack.c.l.b16 %v1129
      %v1162 = vunpack.c.l.b16 %v1130
      %v1163 = vunpack.c.l.b16 %v1131
      %v1164 = vunpack.c.l.b16 %v1132
      %v1165 = vunpack.c.l.b16 %v1133
      %v1166 = vunpack.c.l.b16 %v1134
      %v1167 = vunpack.c.l.b16 %v1135
      %v1168 = vunpack.c.l.b16 %v1136
      %v1169 = vunpack.c.l.b16 %v1137
      %v1170 = vpack.c.b16 %v1155, %v1154
      %v1171 = vpack.c.b16 %v1157, %v1156
      %v1172 = vpack.c.b16 %v1159, %v1158
      %v1173 = vpack.c.b16 %v1161, %v1160
      %v1174 = vpack.c.b16 %v1163, %v1162
      %v1175 = vpack.c.b16 %v1165, %v1164
      %v1176 = vpack.c.b16 %v1167, %v1166
      %v1177 = vpack.c.b16 %v1169, %v1168
      %1186 = vmatprep.subr.bf16.mxu0 0
      %1187 = vmatpush1.bf16.msra.mxu0 %v1177
      %1188 = vmatprep.subr.bf16.mxu0 0
      %1189 = vmatpush1.bf16.msra.mxu0 %v1176
      %1190 = vmatprep.subr.bf16.mxu0 0
      %1191 = vmatpush1.bf16.msra.mxu0 %v1175
      %1192 = vmatprep.subr.bf16.mxu0 0
      %1193 = vmatpush1.bf16.msra.mxu0 %v1174
      %1194 = vmatprep.subr.bf16.mxu0 0
      %1195 = vmatpush1.bf16.msra.mxu0 %v1173
      %1196 = vmatprep.subr.bf16.mxu0 0
      %1197 = vmatpush1.bf16.msra.mxu0 %v1172
      %1198 = vmatprep.subr.bf16.mxu0 0
      %1199 = vmatpush1.bf16.msra.mxu0 %v1171
      %1200 = vmatprep.subr.bf16.mxu0 0
      %1201 = vmatpush1.bf16.msra.mxu0 %v1170
      %1202 = vmatprep.subr.bf16.mxu0 0
      %1203 = vmatpush2.bf16.msra.mxu0 0
      %1204 = vmatprep.subr.bf16.mxu0 0
      %1205 = vmatpush2.bf16.msra.mxu0 0
      %1206 = vmatprep.subr.bf16.mxu0 0
      %1207 = vmatpush2.bf16.msra.mxu0 0
      %1208 = vmatprep.subr.bf16.mxu0 0
      %1209 = vmatpush2.bf16.msra.mxu0 0
      %1210 = vmatprep.subr.bf16.mxu0 0
      %1211 = vmatpush2.bf16.msra.mxu0 0
      %1212 = vmatprep.subr.bf16.mxu0 0
      %1213 = vmatpush2.bf16.msra.mxu0 0
      %1214 = vmatprep.subr.bf16.mxu0 0
      %1215 = vmatpush2.bf16.msra.mxu0 0
      %1216 = vmatprep.subr.bf16.mxu0 0
      %1217 = vmatpush2.bf16.msra.mxu0 0
      %1218 = vmatprep.mubr.bf16.mxu0 0
      %1219 = vmatmul.mubr.bf16.gmra.mxu0 %v194
      %v1220 = vpop.f32.mrf.mxu0
      %v1221 = vadd.f32 0.0, %v1220
      %v1222 = vpop.f32.mrf.mxu0
      %v1223 = vpop.f32.mrf.mxu0
      %v1224 = vadd.f32 0.0, %v1223
      %v1225 = vpop.f32.mrf.mxu0
      %1226 = vmatprep.mubr.bf16.mxu0 0
      %1227 = vmatmul.mubr.bf16.gmra.mxu0 %v195
      %v1228 = vpop.f32.mrf.mxu0
      %v1229 = vadd.f32 0.0, %v1228
      %v1230 = vpop.f32.mrf.mxu0
      %v1231 = vpop.f32.mrf.mxu0
      %v1232 = vadd.f32 0.0, %v1231
      %v1233 = vpop.f32.mrf.mxu0
      %1234 = vmatprep.mubr.bf16.mxu0 0
      %1235 = vmatmul.mubr.bf16.gmra.mxu0 %v196
      %v1236 = vpop.f32.mrf.mxu0
      %v1237 = vadd.f32 0.0, %v1236
      %v1238 = vpop.f32.mrf.mxu0
      %v1239 = vpop.f32.mrf.mxu0
      %v1240 = vadd.f32 0.0, %v1239
      %v1241 = vpop.f32.mrf.mxu0
      %1242 = vmatprep.mubr.bf16.mxu0 0
      %1243 = vmatmul.mubr.bf16.gmra.mxu0 %v1120
      %v1244 = vpop.f32.mrf.mxu0
      %v1245 = vadd.f32 0.0, %v1244
      %v1246 = vpop.f32.mrf.mxu0
      %v1247 = vpop.f32.mrf.mxu0
      %v1248 = vadd.f32 0.0, %v1247
      %v1249 = vpop.f32.mrf.mxu0
      %1250 = vdwg.mxu0
      %v1251 = vadd.f32 %v1112, %v1221
      %v1252 = vadd.f32 %v1113, %v1224
      %v1253 = vadd.f32 %v1114, %v1229
      %v1254 = vadd.f32 %v1115, %v1232
      %v1255 = vadd.f32 %v1116, %v1237
      %v1256 = vadd.f32 %v1117, %v1240
      %v1257 = vadd.f32 %v1118, %v1245
      %v1258 = vadd.f32 %v1119, %v1248
      %v1261 = vrot.slane %v191, 1
      %v1262 = vrot.slane %v192, 1
      %v1263 = vsel %vm229, %v1261, %v1262
      %v1265 = vpack.c.bf16 %v1263, %v830
      %s1266 = scalar_lea.vmem %s1, 448
      %v1267 = vld [vmem:[%s1266] sm:$0xf]
      %v1268 = vld [vmem:[%s1266 + $0x4] sm:$0xf]
      %v1269 = vld [vmem:[%s1266 + $0x8] sm:$0xf]
      %v1270 = vld [vmem:[%s1266 + $0xc] sm:$0xf]
      %v1271 = vld [vmem:[%s1266 + $0x10] sm:$0xf]
      %v1272 = vld [vmem:[%s1266 + $0x14] sm:$0xf]
      %v1273 = vld [vmem:[%s1266 + $0x18] sm:$0xf]
      %v1274 = vld [vmem:[%s1266 + $0x1c] sm:$0xf]
      %v1275 = vld [vmem:[%s1266 + $0x20] sm:$0xf]
      %v1276 = vld [vmem:[%s1266 + $0x24] sm:$0xf]
      %v1277 = vld [vmem:[%s1266 + $0x28] sm:$0xf]
      %v1278 = vld [vmem:[%s1266 + $0x2c] sm:$0xf]
      %v1279 = vld [vmem:[%s1266 + $0x30] sm:$0xf]
      %v1280 = vld [vmem:[%s1266 + $0x34] sm:$0xf]
      %v1281 = vld [vmem:[%s1266 + $0x38] sm:$0xf]
      %v1282 = vld [vmem:[%s1266 + $0x3c] sm:$0xf]
      %v1299 = vunpack.c.l.b16 %v1267
      %v1300 = vunpack.c.l.b16 %v1268
      %v1301 = vunpack.c.l.b16 %v1269
      %v1302 = vunpack.c.l.b16 %v1270
      %v1303 = vunpack.c.l.b16 %v1271
      %v1304 = vunpack.c.l.b16 %v1272
      %v1305 = vunpack.c.l.b16 %v1273
      %v1306 = vunpack.c.l.b16 %v1274
      %v1307 = vunpack.c.l.b16 %v1275
      %v1308 = vunpack.c.l.b16 %v1276
      %v1309 = vunpack.c.l.b16 %v1277
      %v1310 = vunpack.c.l.b16 %v1278
      %v1311 = vunpack.c.l.b16 %v1279
      %v1312 = vunpack.c.l.b16 %v1280
      %v1313 = vunpack.c.l.b16 %v1281
      %v1314 = vunpack.c.l.b16 %v1282
      %v1315 = vpack.c.b16 %v1300, %v1299
      %v1316 = vpack.c.b16 %v1302, %v1301
      %v1317 = vpack.c.b16 %v1304, %v1303
      %v1318 = vpack.c.b16 %v1306, %v1305
      %v1319 = vpack.c.b16 %v1308, %v1307
      %v1320 = vpack.c.b16 %v1310, %v1309
      %v1321 = vpack.c.b16 %v1312, %v1311
      %v1322 = vpack.c.b16 %v1314, %v1313
      %1331 = vmatprep.subr.bf16.mxu0 0
      %1332 = vmatpush1.bf16.msra.mxu0 %v1322
      %1333 = vmatprep.subr.bf16.mxu0 0
      %1334 = vmatpush1.bf16.msra.mxu0 %v1321
      %1335 = vmatprep.subr.bf16.mxu0 0
      %1336 = vmatpush1.bf16.msra.mxu0 %v1320
      %1337 = vmatprep.subr.bf16.mxu0 0
      %1338 = vmatpush1.bf16.msra.mxu0 %v1319
      %1339 = vmatprep.subr.bf16.mxu0 0
      %1340 = vmatpush1.bf16.msra.mxu0 %v1318
      %1341 = vmatprep.subr.bf16.mxu0 0
      %1342 = vmatpush1.bf16.msra.mxu0 %v1317
      %1343 = vmatprep.subr.bf16.mxu0 0
      %1344 = vmatpush1.bf16.msra.mxu0 %v1316
      %1345 = vmatprep.subr.bf16.mxu0 0
      %1346 = vmatpush1.bf16.msra.mxu0 %v1315
      %1347 = vmatprep.subr.bf16.mxu0 0
      %1348 = vmatpush2.bf16.msra.mxu0 0
      %1349 = vmatprep.subr.bf16.mxu0 0
      %1350 = vmatpush2.bf16.msra.mxu0 0
      %1351 = vmatprep.subr.bf16.mxu0 0
      %1352 = vmatpush2.bf16.msra.mxu0 0
      %1353 = vmatprep.subr.bf16.mxu0 0
      %1354 = vmatpush2.bf16.msra.mxu0 0
      %1355 = vmatprep.subr.bf16.mxu0 0
      %1356 = vmatpush2.bf16.msra.mxu0 0
      %1357 = vmatprep.subr.bf16.mxu0 0
      %1358 = vmatpush2.bf16.msra.mxu0 0
      %1359 = vmatprep.subr.bf16.mxu0 0
      %1360 = vmatpush2.bf16.msra.mxu0 0
      %1361 = vmatprep.subr.bf16.mxu0 0
      %1362 = vmatpush2.bf16.msra.mxu0 0
      %1363 = vmatprep.mubr.bf16.mxu0 0
      %1364 = vmatmul.mubr.bf16.gmra.mxu0 %v263
      %v1365 = vpop.f32.mrf.mxu0
      %v1366 = vadd.f32 0.0, %v1365
      %v1367 = vpop.f32.mrf.mxu0
      %v1368 = vpop.f32.mrf.mxu0
      %v1369 = vadd.f32 0.0, %v1368
      %v1370 = vpop.f32.mrf.mxu0
      %1371 = vmatprep.mubr.bf16.mxu0 0
      %1372 = vmatmul.mubr.bf16.gmra.mxu0 %v264
      %v1373 = vpop.f32.mrf.mxu0
      %v1374 = vadd.f32 0.0, %v1373
      %v1375 = vpop.f32.mrf.mxu0
      %v1376 = vpop.f32.mrf.mxu0
      %v1377 = vadd.f32 0.0, %v1376
      %v1378 = vpop.f32.mrf.mxu0
      %1379 = vmatprep.mubr.bf16.mxu0 0
      %1380 = vmatmul.mubr.bf16.gmra.mxu0 %v265
      %v1381 = vpop.f32.mrf.mxu0
      %v1382 = vadd.f32 0.0, %v1381
      %v1383 = vpop.f32.mrf.mxu0
      %v1384 = vpop.f32.mrf.mxu0
      %v1385 = vadd.f32 0.0, %v1384
      %v1386 = vpop.f32.mrf.mxu0
      %1387 = vmatprep.mubr.bf16.mxu0 0
      %1388 = vmatmul.mubr.bf16.gmra.mxu0 %v1265
      %v1389 = vpop.f32.mrf.mxu0
      %v1390 = vadd.f32 0.0, %v1389
      %v1391 = vpop.f32.mrf.mxu0
      %v1392 = vpop.f32.mrf.mxu0
      %v1393 = vadd.f32 0.0, %v1392
      %v1394 = vpop.f32.mrf.mxu0
      %1395 = vdwg.mxu0
      %v1396 = vadd.f32 %v1251, %v1366
      %v1397 = vadd.f32 %v1252, %v1369
      %v1398 = vadd.f32 %v1253, %v1374
      %v1399 = vadd.f32 %v1254, %v1377
      %v1400 = vadd.f32 %v1255, %v1382
      %v1401 = vadd.f32 %v1256, %v1385
      %v1402 = vadd.f32 %v1257, %v1390
      %v1403 = vadd.f32 %v1258, %v1393
      %v1404 = vrot.slane %v191, 2
      %v1405 = vrot.slane %v192, 2
      %v1406 = vsel %vm509, %v1404, %v1405
      %v1408 = vpack.c.bf16 %v1406, %v976
      %s1409 = scalar_lea.vmem %s1, 512
      %v1410 = vld [vmem:[%s1409] sm:$0xf]
      %v1411 = vld [vmem:[%s1409 + $0x4] sm:$0xf]
      %v1412 = vld [vmem:[%s1409 + $0x8] sm:$0xf]
      %v1413 = vld [vmem:[%s1409 + $0xc] sm:$0xf]
      %v1414 = vld [vmem:[%s1409 + $0x10] sm:$0xf]
      %v1415 = vld [vmem:[%s1409 + $0x14] sm:$0xf]
      %v1416 = vld [vmem:[%s1409 + $0x18] sm:$0xf]
      %v1417 = vld [vmem:[%s1409 + $0x1c] sm:$0xf]
      %v1418 = vld [vmem:[%s1409 + $0x20] sm:$0xf]
      %v1419 = vld [vmem:[%s1409 + $0x24] sm:$0xf]
      %v1420 = vld [vmem:[%s1409 + $0x28] sm:$0xf]
      %v1421 = vld [vmem:[%s1409 + $0x2c] sm:$0xf]
      %v1422 = vld [vmem:[%s1409 + $0x30] sm:$0xf]
      %v1423 = vld [vmem:[%s1409 + $0x34] sm:$0xf]
      %v1424 = vld [vmem:[%s1409 + $0x38] sm:$0xf]
      %v1425 = vld [vmem:[%s1409 + $0x3c] sm:$0xf]
      %v1442 = vunpack.c.l.b16 %v1410
      %v1443 = vunpack.c.l.b16 %v1411
      %v1444 = vunpack.c.l.b16 %v1412
      %v1445 = vunpack.c.l.b16 %v1413
      %v1446 = vunpack.c.l.b16 %v1414
      %v1447 = vunpack.c.l.b16 %v1415
      %v1448 = vunpack.c.l.b16 %v1416
      %v1449 = vunpack.c.l.b16 %v1417
      %v1450 = vunpack.c.l.b16 %v1418
      %v1451 = vunpack.c.l.b16 %v1419
      %v1452 = vunpack.c.l.b16 %v1420
      %v1453 = vunpack.c.l.b16 %v1421
      %v1454 = vunpack.c.l.b16 %v1422
      %v1455 = vunpack.c.l.b16 %v1423
      %v1456 = vunpack.c.l.b16 %v1424
      %v1457 = vunpack.c.l.b16 %v1425
      %v1458 = vpack.c.b16 %v1443, %v1442
      %v1459 = vpack.c.b16 %v1445, %v1444
      %v1460 = vpack.c.b16 %v1447, %v1446
      %v1461 = vpack.c.b16 %v1449, %v1448
      %v1462 = vpack.c.b16 %v1451, %v1450
      %v1463 = vpack.c.b16 %v1453, %v1452
      %v1464 = vpack.c.b16 %v1455, %v1454
      %v1465 = vpack.c.b16 %v1457, %v1456
      %1474 = vmatprep.subr.bf16.mxu0 0
      %1475 = vmatpush1.bf16.msra.mxu0 %v1465
      %1476 = vmatprep.subr.bf16.mxu0 0
      %1477 = vmatpush1.bf16.msra.mxu0 %v1464
      %1478 = vmatprep.subr.bf16.mxu0 0
      %1479 = vmatpush1.bf16.msra.mxu0 %v1463
      %1480 = vmatprep.subr.bf16.mxu0 0
      %1481 = vmatpush1.bf16.msra.mxu0 %v1462
      %1482 = vmatprep.subr.bf16.mxu0 0
      %1483 = vmatpush1.bf16.msra.mxu0 %v1461
      %1484 = vmatprep.subr.bf16.mxu0 0
      %1485 = vmatpush1.bf16.msra.mxu0 %v1460
      %1486 = vmatprep.subr.bf16.mxu0 0
      %1487 = vmatpush1.bf16.msra.mxu0 %v1459
      %1488 = vmatprep.subr.bf16.mxu0 0
      %1489 = vmatpush1.bf16.msra.mxu0 %v1458
      %1490 = vmatprep.subr.bf16.mxu0 0
      %1491 = vmatpush2.bf16.msra.mxu0 0
      %1492 = vmatprep.subr.bf16.mxu0 0
      %1493 = vmatpush2.bf16.msra.mxu0 0
      %1494 = vmatprep.subr.bf16.mxu0 0
      %1495 = vmatpush2.bf16.msra.mxu0 0
      %1496 = vmatprep.subr.bf16.mxu0 0
      %1497 = vmatpush2.bf16.msra.mxu0 0
      %1498 = vmatprep.subr.bf16.mxu0 0
      %1499 = vmatpush2.bf16.msra.mxu0 0
      %1500 = vmatprep.subr.bf16.mxu0 0
      %1501 = vmatpush2.bf16.msra.mxu0 0
      %1502 = vmatprep.subr.bf16.mxu0 0
      %1503 = vmatpush2.bf16.msra.mxu0 0
      %1504 = vmatprep.subr.bf16.mxu0 0
      %1505 = vmatpush2.bf16.msra.mxu0 0
      %1506 = vmatprep.mubr.bf16.mxu0 0
      %1507 = vmatmul.mubr.bf16.gmra.mxu0 %v543
      %v1508 = vpop.f32.mrf.mxu0
      %v1509 = vadd.f32 0.0, %v1508
      %v1510 = vpop.f32.mrf.mxu0
      %v1511 = vpop.f32.mrf.mxu0
      %v1512 = vadd.f32 0.0, %v1511
      %v1513 = vpop.f32.mrf.mxu0
      %1514 = vmatprep.mubr.bf16.mxu0 0
      %1515 = vmatmul.mubr.bf16.gmra.mxu0 %v544
      %v1516 = vpop.f32.mrf.mxu0
      %v1517 = vadd.f32 0.0, %v1516
      %v1518 = vpop.f32.mrf.mxu0
      %v1519 = vpop.f32.mrf.mxu0
      %v1520 = vadd.f32 0.0, %v1519
      %v1521 = vpop.f32.mrf.mxu0
      %1522 = vmatprep.mubr.bf16.mxu0 0
      %1523 = vmatmul.mubr.bf16.gmra.mxu0 %v545
      %v1524 = vpop.f32.mrf.mxu0
      %v1525 = vadd.f32 0.0, %v1524
      %v1526 = vpop.f32.mrf.mxu0
      %v1527 = vpop.f32.mrf.mxu0
      %v1528 = vadd.f32 0.0, %v1527
      %v1529 = vpop.f32.mrf.mxu0
      %1530 = vmatprep.mubr.bf16.mxu0 0
      %1531 = vmatmul.mubr.bf16.gmra.mxu0 %v1408
      %v1532 = vpop.f32.mrf.mxu0
      %v1533 = vadd.f32 0.0, %v1532
      %v1534 = vpop.f32.mrf.mxu0
      %v1535 = vpop.f32.mrf.mxu0
      %v1536 = vadd.f32 0.0, %v1535
      %v1537 = vpop.f32.mrf.mxu0
      %1538 = vdwg.mxu0
      %v1539 = vadd.f32 %v1396, %v1509
      %v1540 = vadd.f32 %v1397, %v1512
      %v1541 = vadd.f32 %v1398, %v1517
      %v1542 = vadd.f32 %v1399, %v1520
      %v1543 = vadd.f32 %v1400, %v1525
      %v1544 = vadd.f32 %v1401, %v1528
      %v1545 = vadd.f32 %v1402, %v1533
      %v1546 = vadd.f32 %v1403, %v1536
      %v1547 = vld [vmem:[%s2] sm:$0x1]
      %v1549 = vlaneseq
      %v1550 = vshrl.u32 %v1549, 7
      %v1551 = vsub.s32 0, %v1550
      %v1552 = vrot.slane %v1547, %v1551
      %v1554 = vadd.f32 %v1539, %v1552
      %v1555 = vadd.f32 %v1540, %v1552
      %v1556 = vadd.f32 %v1541, %v1552
      %v1557 = vadd.f32 %v1542, %v1552
      %v1558 = vadd.f32 %v1543, %v1552
      %v1559 = vadd.f32 %v1544, %v1552
      %v1560 = vadd.f32 %v1545, %v1552
      %v1561 = vadd.f32 %v1546, %v1552
      %v1562 = vmax.f32 %v1554, 0.0
      %v1563 = vmax.f32 %v1555, 0.0
      %v1564 = vmax.f32 %v1556, 0.0
      %v1565 = vmax.f32 %v1557, 0.0
      %v1566 = vmax.f32 %v1558, 0.0
      %v1567 = vmax.f32 %v1559, 0.0
      %v1568 = vmax.f32 %v1560, 0.0
      %v1569 = vmax.f32 %v1561, 0.0
      %vm1570 = vcmask 523264
      %1571 = vst.msk [vmem:[%s170] sm:$0xff] %vm1570, %v1562
      %1572 = vst.msk [vmem:[%s170 + $0x8] sm:$0xff] %vm1570, %v1563
      %1573 = vst.msk [vmem:[%s170 + $0x10] sm:$0xff] %vm1570, %v1564
      %1574 = vst.msk [vmem:[%s170 + $0x18] sm:$0xff] %vm1570, %v1565
      %1575 = vst.msk [vmem:[%s170 + $0x20] sm:$0xff] %vm1570, %v1566
      %1576 = vst.msk [vmem:[%s170 + $0x28] sm:$0xff] %vm1570, %v1567
      %1577 = vst.msk [vmem:[%s170 + $0x30] sm:$0xff] %vm1570, %v1568
      %1578 = vst.msk [vmem:[%s170 + $0x38] sm:$0xff] %vm1570, %v1569
      %s1579 = smul.u32 8, %s14
      %p1580 = scmp.lt.s32.totalorder %s1579, 15
      %s1581 = scalar_select %p1580, %s1579, 15
      %s1582 = smul.addr %s1581, 8
      %s1583 = scalar_lea.vmem %s3, %s1582
      // Predicated region
      $region33: #{residual_feature_net.24} parent=31 // pred_check
        %p1584 = pneg %p100
      $region34: #{residual_feature_net.24} parent=31 // pred_check_branch
        %1586 = sbr.rel (%p1584) target = $region36
      $region35: #{residual_feature_net.24} parent=31 // pred_region
        %s1587 = smul.u32 8, %s14
      $region36: #{residual_feature_net.24} parent=31 // pred_fallthru
        _
    $region32: #{residual_feature_net.24} parent=5 // pred_fallthru
      _
    %p1588 = scmp.le.s32.totalorder 2, %s9
    // Predicated region
    $region37: #{residual_feature_net.24} parent=5 // pred_check
      %p1589 = pneg %p1588
    $region38: #{residual_feature_net.24} parent=5 // pred_check_branch
      %1591 = sbr.rel (%p1589) target = $region40
    $region39: #{residual_feature_net.24} parent=5 // pred_region
      %s1592 = ssub.s32 %s9, 2
      // Predicated region
      $region41: #{residual_feature_net.24} parent=39 // pred_check
        %p1593 = pneg %p106
      $region42: #{residual_feature_net.24} parent=39 // pred_check_branch
        %1595 = sbr.rel (%p1593) target = $region44
      $region43: #{residual_feature_net.24} parent=39 // pred_region
        %s1596 = smul.u32 8, %s15
        %p1597 = scmp.lt.s32.totalorder %s1596, 15
        %s1598 = scalar_select %p1597, %s1596, 15
        %s1599 = smul.addr %s1598, 8
        %s1600 = scalar_lea.vmem %s3, %s1599
      $region44: #{residual_feature_net.24} parent=39 // pred_fallthru
        _
    $region40: #{residual_feature_net.24} parent=5 // pred_fallthru
      _
  $region6: #{residual_feature_net.24} parent=0 // loop_footer
    %s13 = sadd.s32 1, %s9
  $region7: #{residual_feature_net.24} parent=0 // loop_footer_branch
    %8 = sbr.rel target = $region3
  $region8: #{residual_feature_net.24} parent=0 // loop_exit
    _

</llo_original>
